<compile_context>
chip_gen: v7x
topology: tpu7x:2x2x1
jax: 0.10.0
libtpu: 0.0.40
codegen_flags: <defaults>
</compile_context>

<pallas_src>
import functools

import jax
import jax.numpy as jnp
from jax.experimental import pallas as pl
from jax.experimental.pallas import tpu as pltpu

_CIN0 = 8     # RGB zero-padded to 8 input channels
_LANE = 128   # lane-dense channel width for block outputs


# ----------------------------------------------------------------------------
# Pallas kernel: one fused ResidualBlock (one batch image per grid step)
# ----------------------------------------------------------------------------
def _res_block_kernel(p1_ref, xs_ref, w1_ref, b1_ref, w2_ref, b2_ref,
                      wsc_ref, bsc_ref, *rest, Ho, Wo, Cout, with_head):
    """Fused ResidualBlock (+ optional pooling/FC/normalize head).

    p1_ref : (1, Ho*Wo, 9*Cin) bf16  conv1 im2col patches (stride folded in glue)
    xs_ref : (1, Ho*Wo, Cin)   bf16  stride-subsampled input (1x1 shortcut)
    w*_ref : bf16 weights, BN scale already folded in
    b*_ref : (1, Cout) f32 folded BN biases
    rest   : [wfc_ref, bfc_ref,] o_ref, h1p_ref(scratch, (Ho+2, Wo+2, Cout) f32)
    """
    if with_head:
        wfc_ref, bfc_ref, o_ref, h1p_ref = rest
    else:
        o_ref, h1p_ref = rest
    M = Ho * Wo

    # ---- conv1 (3x3, stride) + folded BN + ReLU ---------------------------
    h1 = jnp.dot(p1_ref[0], w1_ref[...], preferred_element_type=jnp.float32)
    h1 = jnp.maximum(h1 + b1_ref[...], 0.0)                     # (M, Cout) f32

    # keep h1 resident in VMEM, with a zero ring for the stride-1 3x3 conv2
    h1p_ref[...] = jnp.zeros_like(h1p_ref)
    h1p_ref[1:Ho + 1, 1:Wo + 1, :] = h1.reshape(Ho, Wo, Cout)

    # ---- 1x1(stride) projection shortcut + folded BN ----------------------
    sc = jnp.dot(xs_ref[0], wsc_ref[...], preferred_element_type=jnp.float32)

    # ---- conv2 (3x3, stride 1, pad 1) + folded BN: 9 in-VMEM tap matmuls --
    acc = sc + bsc_ref[...] + b2_ref[...]
    for kh in range(3):
        for kw in range(3):
            tap = h1p_ref[kh:kh + Ho, kw:kw + Wo, :].reshape(M, Cout)
            acc = acc + jnp.dot(tap.astype(jnp.bfloat16),
                                w2_ref[3 * kh + kw],
                                preferred_element_type=jnp.float32)
    y = jnp.maximum(acc, 0.0)                                   # (M, Cout) f32

    if with_head:
        # AdaptiveAvgPool2d((1,1)) + Linear + L2 normalize (rsqrt on the EUP)
        pooled = jnp.mean(y, axis=0, keepdims=True)             # (1, Cout)
        z = jnp.dot(pooled.astype(jnp.bfloat16), wfc_ref[...],
                    preferred_element_type=jnp.float32) + bfc_ref[...]
        ss = jnp.sum(z * z, axis=-1, keepdims=True)
        o_ref[0] = (z * jax.lax.rsqrt(jnp.maximum(ss, 1e-24))).astype(o_ref.dtype)
    else:
        o_ref[0] = y.astype(o_ref.dtype)


# ----------------------------------------------------------------------------
# Glue: conv1 patch extraction (pure XLA data movement, no compute)
# ----------------------------------------------------------------------------
def _conv1_operands(x, stride):
    """x: (N, H, W, C) -> patches (N, Ho*Wo, 9*C), strided centre (N, Ho*Wo, C)."""
    N, H, W, C = x.shape
    Ho = (H - 1) // stride + 1
    Wo = (W - 1) // stride + 1
    xp = jnp.pad(x, ((0, 0), (1, 1), (1, 1), (0, 0)))
    taps = [xp[:, kh:kh + stride * Ho:stride, kw:kw + stride * Wo:stride, :]
            for kh in range(3) for kw in range(3)]
    p1 = jnp.concatenate(taps, axis=-1).reshape(N, Ho * Wo, 9 * C)
    xs = taps[4].reshape(N, Ho * Wo, C)          # centre tap == x[:, ::s, ::s, :]
    return p1, xs, Ho, Wo


# ----------------------------------------------------------------------------
# Wrapper: one pallas_call per residual block (batch-parallel grid)
# ----------------------------------------------------------------------------
def fused_residual_block(x, bp, stride, head=None):
    """x: (N, H, W, Cin_p) bf16 NHWC -> (N, Ho, Wo, Cout_p) bf16,
    or (N, feature_dim) f32 when the pool+fc+normalize head is fused in."""
    N, H, W, Cin = x.shape
    Cout = bp["b1"].shape[-1]
    p1, xs, Ho, Wo = _conv1_operands(x, stride)
    M = Ho * Wo
    K1 = 9 * Cin

    in_specs = [
        pl.BlockSpec((1, M, K1), lambda n: (n, 0, 0)),
        pl.BlockSpec((1, M, Cin), lambda n: (n, 0, 0)),
        pl.BlockSpec((K1, Cout), lambda n: (0, 0)),
        pl.BlockSpec((1, Cout), lambda n: (0, 0)),
        pl.BlockSpec((9, Cout, Cout), lambda n: (0, 0, 0)),
        pl.BlockSpec((1, Cout), lambda n: (0, 0)),
        pl.BlockSpec((Cin, Cout), lambda n: (0, 0)),
        pl.BlockSpec((1, Cout), lambda n: (0, 0)),
    ]
    args = [p1, xs, bp["w1"], bp["b1"], bp["w2"], bp["b2"], bp["wsc"], bp["bsc"]]

    if head is not None:
        w_fc, b_fc = head
        Fd = w_fc.shape[-1]
        in_specs += [pl.BlockSpec((Cout, Fd), lambda n: (0, 0)),
                     pl.BlockSpec((1, Fd), lambda n: (0, 0))]
        args += [w_fc, b_fc]
        out_specs = pl.BlockSpec((1, 1, Fd), lambda n: (n, 0, 0))
        out_shape = jax.ShapeDtypeStruct((N, 1, Fd), jnp.float32)
    else:
        out_specs = pl.BlockSpec((1, M, Cout), lambda n: (n, 0, 0))
        out_shape = jax.ShapeDtypeStruct((N, M, Cout), jnp.bfloat16)

    out = pl.pallas_call(
        functools.partial(_res_block_kernel, Ho=Ho, Wo=Wo, Cout=Cout,
                          with_head=head is not None),
        grid=(N,),
        in_specs=in_specs,
        out_specs=out_specs,
        out_shape=out_shape,
        scratch_shapes=[pltpu.VMEM((Ho + 2, Wo + 2, Cout), jnp.float32)],
        compiler_params=pltpu.CompilerParams(
            dimension_semantics=("parallel",),
            vmem_limit_bytes=32 * 1024 * 1024),
    )(*args)

    if head is not None:
        return out.reshape(N, w_fc.shape[-1])
    return out.reshape(N, Ho, Wo, Cout)


def encoder_forward(x_nchw, dp):
    x = jnp.transpose(x_nchw, (0, 2, 3, 1)).astype(jnp.bfloat16)   # NCHW -> NHWC
    x = _pad_axis(x, 3, _CIN0)                                     # RGB -> 8 chans
    x = fused_residual_block(x, dp["block1"], stride=2)            # (N, 8, 8, 128)
    x = fused_residual_block(x, dp["block2"], stride=2)            # (N, 4, 4, 128)
    return fused_residual_block(x, dp["block3"], stride=2,
                                head=(dp["w_fc"], dp["b_fc"]))     # (N, feat)


# ----------------------------------------------------------------------------
# Deterministic parameter construction (logical, PyTorch-equivalent layout)
# ----------------------------------------------------------------------------
def _round_up(x, m):
    return ((x + m - 1) // m) * m


def _pad_axis(a, axis, size):
    if a.shape[axis] >= size:
        return a
    widths = [(0, 0)] * a.ndim
    widths[axis] = (0, size - a.shape[axis])
    return jnp.pad(a, widths)


def _fold_bn(key, cout):
    k1, k2, k3, k4 = jax.random.split(key, 4)
    gamma = 1.0 + 0.1 * jax.random.normal(k1, (cout,))
    beta = 0.1 * jax.random.normal(k2, (cout,))
    mean = 0.1 * jax.random.normal(k3, (cout,))
    var = jax.random.uniform(k4, (cout,), minval=0.5, maxval=1.5)
    scale = gamma / jnp.sqrt(var + 1e-5)
    bias = beta - mean * scale
    return scale.astype(jnp.float32), bias.astype(jnp.float32)


def _conv_w(key, kh, kw, cin, cout):
    std = (2.0 / (kh * kw * cin)) ** 0.5
    return (std * jax.random.normal(key, (kh, kw, cin, cout))).astype(jnp.float32)


def _block_params(key, cin, cout):
    ks = jax.random.split(key, 6)
    s1, b1 = _fold_bn(ks[1], cout)
    s2, b2 = _fold_bn(ks[3], cout)
    ssc, bsc = _fold_bn(ks[5], cout)
    return dict(
        w1=_conv_w(ks[0], 3, 3, cin, cout), s1=s1, b1=b1,
        w2=_conv_w(ks[2], 3, 3, cout, cout), s2=s2, b2=b2,
        wsc=_conv_w(ks[4], 1, 1, cin, cout), ssc=ssc, bsc=bsc,
    )


def init_params(key, feature_dim=128):
    k1, k2, k3, k4, k5 = jax.random.split(key, 5)
    return dict(
        block1=_block_params(k1, 3, 64),
        block2=_block_params(k2, 64, 128),
        block3=_block_params(k3, 128, 256),
        w_fc=((1.0 / 256.0 ** 0.5) *
              jax.random.normal(k4, (256, feature_dim))).astype(jnp.float32),
        b_fc=(0.01 * jax.random.normal(k5, (feature_dim,))).astype(jnp.float32),
    )


# ----------------------------------------------------------------------------
# Parameter prep: fold BN scale into weights, pad channels lane-dense, cast bf16
# ----------------------------------------------------------------------------
def _prepare_block(bp, cin_p, cout_p):
    _, _, cin, cout = bp["w1"].shape
    w1 = _pad_axis(_pad_axis(bp["w1"] * bp["s1"], 2, cin_p), 3, cout_p)
    w2 = _pad_axis(_pad_axis(bp["w2"] * bp["s2"], 2, cout_p), 3, cout_p)
    wsc = _pad_axis(_pad_axis(bp["wsc"].reshape(cin, cout) * bp["ssc"],
                              0, cin_p), 1, cout_p)

    def bias(b):
        return _pad_axis(b, 0, cout_p).reshape(1, cout_p).astype(jnp.float32)

    return dict(
        w1=w1.reshape(9 * cin_p, cout_p).astype(jnp.bfloat16), b1=bias(bp["b1"]),
        w2=w2.reshape(9, cout_p, cout_p).astype(jnp.bfloat16), b2=bias(bp["b2"]),
        wsc=wsc.astype(jnp.bfloat16), bsc=bias(bp["bsc"]),
    )


def prepare_params(params):
    c1 = _round_up(64, _LANE)   # block1 output padded to 128 lanes (zeros)
    return dict(
        block1=_prepare_block(params["block1"], _CIN0, c1),
        block2=_prepare_block(params["block2"], c1, 128),
        block3=_prepare_block(params["block3"], 128, 256),
        w_fc=params["w_fc"].astype(jnp.bfloat16),
        b_fc=params["b_fc"].reshape(1, -1).astype(jnp.float32),
    )


# ----------------------------------------------------------------------------
if __name__ == "__main__":
    key = jax.random.PRNGKey(0)
    kx, kp = jax.random.split(key)
    # module-consistent small shapes: batch=2, RGB, 16x16 spatial
    x = jax.random.normal(kx, (2, 3, 16, 16), dtype=jnp.float32)
    params = init_params(kp, feature_dim=128)
    dev_params = prepare_params(params)

    fwd = jax.jit(encoder_forward)
    out = jax.block_until_ready(fwd(x, dev_params))
    assert out.shape == (2, 128), out.shape
    # rows are L2-normalized
    norms = jnp.linalg.norm(out, axis=1)
    assert bool(jnp.all(jnp.abs(norms - 1.0) < 1e-3)), norms
    print("KERNEL_OK")
</pallas_src>

<mosaic_0001>
module attributes {stable_mosaic.version = 11 : i64} {
  func.func @_res_block_kernel(%arg0: i32, %arg1: memref<1x64x72xbf16, #tpu.memory_space<vmem>>, %arg2: memref<1x64x8xbf16, #tpu.memory_space<vmem>>, %arg3: memref<72x128xbf16, #tpu.memory_space<vmem>>, %arg4: memref<1x128xf32, #tpu.memory_space<vmem>>, %arg5: memref<9x128x128xbf16, #tpu.memory_space<vmem>>, %arg6: memref<1x128xf32, #tpu.memory_space<vmem>>, %arg7: memref<8x128xbf16, #tpu.memory_space<vmem>>, %arg8: memref<1x128xf32, #tpu.memory_space<vmem>>, %arg9: memref<1x64x128xbf16, #tpu.memory_space<vmem>>, %arg10: memref<10x10x128xf32, #tpu.memory_space<vmem>>) attributes {dimension_semantics = [#tpu.dimension_semantics<parallel>], iteration_bounds = array<i64: 2>, scalar_prefetch = 0 : i64, scratch_operands = 1 : i64, tpu.core_type = #tpu.core_type<tc>, window_params = [{transform_indices = @transform_0, window_bounds = array<i64: 1, 64, 72>}, {transform_indices = @transform_1, window_bounds = array<i64: 1, 64, 8>}, {pipeline_mode = #tpu.pipeline_mode<synchronous>, transform_indices = @transform_2, window_bounds = array<i64: 72, 128>}, {pipeline_mode = #tpu.pipeline_mode<synchronous>, transform_indices = @transform_3, window_bounds = array<i64: 1, 128>}, {pipeline_mode = #tpu.pipeline_mode<synchronous>, transform_indices = @transform_4, window_bounds = array<i64: 9, 128, 128>}, {pipeline_mode = #tpu.pipeline_mode<synchronous>, transform_indices = @transform_5, window_bounds = array<i64: 1, 128>}, {pipeline_mode = #tpu.pipeline_mode<synchronous>, transform_indices = @transform_6, window_bounds = array<i64: 8, 128>}, {pipeline_mode = #tpu.pipeline_mode<synchronous>, transform_indices = @transform_7, window_bounds = array<i64: 1, 128>}, {transform_indices = @transform_8, window_bounds = array<i64: 1, 64, 128>}]} {
    %c0 = arith.constant 0 : index
    %c0_0 = arith.constant 0 : index
    %c0_1 = arith.constant 0 : index
    %0 = vector.load %arg1[%c0, %c0_0, %c0_1] : memref<1x64x72xbf16, #tpu.memory_space<vmem>>, vector<1x64x72xbf16>
    %1 = vector.shape_cast %0 : vector<1x64x72xbf16> to vector<64x72xbf16>
    %c0_2 = arith.constant 0 : index
    %c0_3 = arith.constant 0 : index
    %2 = vector.load %arg3[%c0_2, %c0_3] : memref<72x128xbf16, #tpu.memory_space<vmem>>, vector<72x128xbf16>
    %cst = arith.constant dense<0.000000e+00> : vector<64x128xf32>
    %3 = tpu.matmul %1, %2, %cst {dimension_numbers = #tpu.dot_dimension_numbers<[1], [0], [0], [1], [0, 0, 1, 1], [], []>} : vector<64x72xbf16>, vector<72x128xbf16>, vector<64x128xf32> -> vector<64x128xf32>
    %c0_4 = arith.constant 0 : index
    %c0_5 = arith.constant 0 : index
    %4 = vector.load %arg4[%c0_4, %c0_5] : memref<1x128xf32, #tpu.memory_space<vmem>>, vector<1x128xf32>
    %5 = vector.broadcast %4 : vector<1x128xf32> to vector<64x128xf32>
    %6 = arith.addf %3, %5 : vector<64x128xf32>
    %cst_6 = arith.constant 0.000000e+00 : f32
    %7 = vector.broadcast %cst_6 : f32 to vector<64x128xf32>
    %8 = arith.maximumf %6, %7 : vector<64x128xf32>
    %cst_7 = arith.constant 0.000000e+00 : f32
    %9 = vector.broadcast %cst_7 : f32 to vector<10x10x128xf32>
    %c0_8 = arith.constant 0 : index
    %c0_9 = arith.constant 0 : index
    %c0_10 = arith.constant 0 : index
    %10 = vector.load %arg10[%c0_8, %c0_9, %c0_10] : memref<10x10x128xf32, #tpu.memory_space<vmem>>, vector<10x10x128xf32>
    tpu.vector_store %arg10[%c0_8, %c0_9, %c0_10], %9 {strides = array<i32>} : memref<10x10x128xf32, #tpu.memory_space<vmem>>, vector<10x10x128xf32>,
    %11 = vector.shape_cast %8 : vector<64x128xf32> to vector<8x8x128xf32>
    %c1 = arith.constant 1 : index
    %c1_11 = arith.constant 1 : index
    %c0_12 = arith.constant 0 : index
    %12 = vector.load %arg10[%c1, %c1_11, %c0_12] : memref<10x10x128xf32, #tpu.memory_space<vmem>>, vector<8x8x128xf32>
    tpu.vector_store %arg10[%c1, %c1_11, %c0_12], %11 {strides = array<i32>} : memref<10x10x128xf32, #tpu.memory_space<vmem>>, vector<8x8x128xf32>,
    %c0_13 = arith.constant 0 : index
    %c0_14 = arith.constant 0 : index
    %c0_15 = arith.constant 0 : index
    %13 = vector.load %arg2[%c0_13, %c0_14, %c0_15] : memref<1x64x8xbf16, #tpu.memory_space<vmem>>, vector<1x64x8xbf16>
    %14 = vector.shape_cast %13 : vector<1x64x8xbf16> to vector<64x8xbf16>
    %c0_16 = arith.constant 0 : index
    %c0_17 = arith.constant 0 : index
    %15 = vector.load %arg7[%c0_16, %c0_17] : memref<8x128xbf16, #tpu.memory_space<vmem>>, vector<8x128xbf16>
    %cst_18 = arith.constant dense<0.000000e+00> : vector<64x128xf32>
    %16 = tpu.matmul %14, %15, %cst_18 {dimension_numbers = #tpu.dot_dimension_numbers<[1], [0], [0], [1], [0, 0, 1, 1], [], []>} : vector<64x8xbf16>, vector<8x128xbf16>, vector<64x128xf32> -> vector<64x128xf32>
    %c0_19 = arith.constant 0 : index
    %c0_20 = arith.constant 0 : index
    %17 = vector.load %arg8[%c0_19, %c0_20] : memref<1x128xf32, #tpu.memory_space<vmem>>, vector<1x128xf32>
    %18 = vector.broadcast %17 : vector<1x128xf32> to vector<64x128xf32>
    %19 = arith.addf %16, %18 : vector<64x128xf32>
    %c0_21 = arith.constant 0 : index
    %c0_22 = arith.constant 0 : index
    %20 = vector.load %arg6[%c0_21, %c0_22] : memref<1x128xf32, #tpu.memory_space<vmem>>, vector<1x128xf32>
    %21 = vector.broadcast %20 : vector<1x128xf32> to vector<64x128xf32>
    %22 = arith.addf %19, %21 : vector<64x128xf32>
    %c0_23 = arith.constant 0 : index
    %c0_24 = arith.constant 0 : index
    %c0_25 = arith.constant 0 : index
    %23 = vector.load %arg10[%c0_23, %c0_24, %c0_25] : memref<10x10x128xf32, #tpu.memory_space<vmem>>, vector<8x8x128xf32>
    %24 = vector.shape_cast %23 : vector<8x8x128xf32> to vector<64x128xf32>
    %25 = arith.truncf %24 : vector<64x128xf32> to vector<64x128xbf16>
    %c0_26 = arith.constant 0 : index
    %c0_27 = arith.constant 0 : index
    %c0_28 = arith.constant 0 : index
    %26 = vector.load %arg5[%c0_26, %c0_27, %c0_28] : memref<9x128x128xbf16, #tpu.memory_space<vmem>>, vector<1x128x128xbf16>
    %27 = vector.shape_cast %26 : vector<1x128x128xbf16> to vector<128x128xbf16>
    %cst_29 = arith.constant dense<0.000000e+00> : vector<64x128xf32>
    %28 = tpu.matmul %25, %27, %cst_29 {dimension_numbers = #tpu.dot_dimension_numbers<[1], [0], [0], [1], [0, 0, 1, 1], [], []>} : vector<64x128xbf16>, vector<128x128xbf16>, vector<64x128xf32> -> vector<64x128xf32>
    %29 = arith.addf %22, %28 : vector<64x128xf32>
    %c0_30 = arith.constant 0 : index
    %c1_31 = arith.constant 1 : index
    %c0_32 = arith.constant 0 : index
    %30 = vector.load %arg10[%c0_30, %c1_31, %c0_32] : memref<10x10x128xf32, #tpu.memory_space<vmem>>, vector<8x8x128xf32>
    %31 = vector.shape_cast %30 : vector<8x8x128xf32> to vector<64x128xf32>
    %32 = arith.truncf %31 : vector<64x128xf32> to vector<64x128xbf16>
    %c1_33 = arith.constant 1 : index
    %c0_34 = arith.constant 0 : index
    %c0_35 = arith.constant 0 : index
    %33 = vector.load %arg5[%c1_33, %c0_34, %c0_35] : memref<9x128x128xbf16, #tpu.memory_space<vmem>>, vector<1x128x128xbf16>
    %34 = vector.shape_cast %33 : vector<1x128x128xbf16> to vector<128x128xbf16>
    %cst_36 = arith.constant dense<0.000000e+00> : vector<64x128xf32>
    %35 = tpu.matmul %32, %34, %cst_36 {dimension_numbers = #tpu.dot_dimension_numbers<[1], [0], [0], [1], [0, 0, 1, 1], [], []>} : vector<64x128xbf16>, vector<128x128xbf16>, vector<64x128xf32> -> vector<64x128xf32>
    %36 = arith.addf %29, %35 : vector<64x128xf32>
    %c0_37 = arith.constant 0 : index
    %c2 = arith.constant 2 : index
    %c0_38 = arith.constant 0 : index
    %37 = vector.load %arg10[%c0_37, %c2, %c0_38] : memref<10x10x128xf32, #tpu.memory_space<vmem>>, vector<8x8x128xf32>
    %38 = vector.shape_cast %37 : vector<8x8x128xf32> to vector<64x128xf32>
    %39 = arith.truncf %38 : vector<64x128xf32> to vector<64x128xbf16>
    %c2_39 = arith.constant 2 : index
    %c0_40 = arith.constant 0 : index
    %c0_41 = arith.constant 0 : index
    %40 = vector.load %arg5[%c2_39, %c0_40, %c0_41] : memref<9x128x128xbf16, #tpu.memory_space<vmem>>, vector<1x128x128xbf16>
    %41 = vector.shape_cast %40 : vector<1x128x128xbf16> to vector<128x128xbf16>
    %cst_42 = arith.constant dense<0.000000e+00> : vector<64x128xf32>
    %42 = tpu.matmul %39, %41, %cst_42 {dimension_numbers = #tpu.dot_dimension_numbers<[1], [0], [0], [1], [0, 0, 1, 1], [], []>} : vector<64x128xbf16>, vector<128x128xbf16>, vector<64x128xf32> -> vector<64x128xf32>
    %43 = arith.addf %36, %42 : vector<64x128xf32>
    %c1_43 = arith.constant 1 : index
    %c0_44 = arith.constant 0 : index
    %c0_45 = arith.constant 0 : index
    %44 = vector.load %arg10[%c1_43, %c0_44, %c0_45] : memref<10x10x128xf32, #tpu.memory_space<vmem>>, vector<8x8x128xf32>
    %45 = vector.shape_cast %44 : vector<8x8x128xf32> to vector<64x128xf32>
    %46 = arith.truncf %45 : vector<64x128xf32> to vector<64x128xbf16>
    %c3 = arith.constant 3 : index
    %c0_46 = arith.constant 0 : index
    %c0_47 = arith.constant 0 : index
    %47 = vector.load %arg5[%c3, %c0_46, %c0_47] : memref<9x128x128xbf16, #tpu.memory_space<vmem>>, vector<1x128x128xbf16>
    %48 = vector.shape_cast %47 : vector<1x128x128xbf16> to vector<128x128xbf16>
    %cst_48 = arith.constant dense<0.000000e+00> : vector<64x128xf32>
    %49 = tpu.matmul %46, %48, %cst_48 {dimension_numbers = #tpu.dot_dimension_numbers<[1], [0], [0], [1], [0, 0, 1, 1], [], []>} : vector<64x128xbf16>, vector<128x128xbf16>, vector<64x128xf32> -> vector<64x128xf32>
    %50 = arith.addf %43, %49 : vector<64x128xf32>
    %c1_49 = arith.constant 1 : index
    %c1_50 = arith.constant 1 : index
    %c0_51 = arith.constant 0 : index
    %51 = vector.load %arg10[%c1_49, %c1_50, %c0_51] : memref<10x10x128xf32, #tpu.memory_space<vmem>>, vector<8x8x128xf32>
    %52 = vector.shape_cast %51 : vector<8x8x128xf32> to vector<64x128xf32>
    %53 = arith.truncf %52 : vector<64x128xf32> to vector<64x128xbf16>
    %c4 = arith.constant 4 : index
    %c0_52 = arith.constant 0 : index
    %c0_53 = arith.constant 0 : index
    %54 = vector.load %arg5[%c4, %c0_52, %c0_53] : memref<9x128x128xbf16, #tpu.memory_space<vmem>>, vector<1x128x128xbf16>
    %55 = vector.shape_cast %54 : vector<1x128x128xbf16> to vector<128x128xbf16>
    %cst_54 = arith.constant dense<0.000000e+00> : vector<64x128xf32>
    %56 = tpu.matmul %53, %55, %cst_54 {dimension_numbers = #tpu.dot_dimension_numbers<[1], [0], [0], [1], [0, 0, 1, 1], [], []>} : vector<64x128xbf16>, vector<128x128xbf16>, vector<64x128xf32> -> vector<64x128xf32>
    %57 = arith.addf %50, %56 : vector<64x128xf32>
    %c1_55 = arith.constant 1 : index
    %c2_56 = arith.constant 2 : index
    %c0_57 = arith.constant 0 : index
    %58 = vector.load %arg10[%c1_55, %c2_56, %c0_57] : memref<10x10x128xf32, #tpu.memory_space<vmem>>, vector<8x8x128xf32>
    %59 = vector.shape_cast %58 : vector<8x8x128xf32> to vector<64x128xf32>
    %60 = arith.truncf %59 : vector<64x128xf32> to vector<64x128xbf16>
    %c5 = arith.constant 5 : index
    %c0_58 = arith.constant 0 : index
    %c0_59 = arith.constant 0 : index
    %61 = vector.load %arg5[%c5, %c0_58, %c0_59] : memref<9x128x128xbf16, #tpu.memory_space<vmem>>, vector<1x128x128xbf16>
    %62 = vector.shape_cast %61 : vector<1x128x128xbf16> to vector<128x128xbf16>
    %cst_60 = arith.constant dense<0.000000e+00> : vector<64x128xf32>
    %63 = tpu.matmul %60, %62, %cst_60 {dimension_numbers = #tpu.dot_dimension_numbers<[1], [0], [0], [1], [0, 0, 1, 1], [], []>} : vector<64x128xbf16>, vector<128x128xbf16>, vector<64x128xf32> -> vector<64x128xf32>
    %64 = arith.addf %57, %63 : vector<64x128xf32>
    %c2_61 = arith.constant 2 : index
    %c0_62 = arith.constant 0 : index
    %c0_63 = arith.constant 0 : index
    %65 = vector.load %arg10[%c2_61, %c0_62, %c0_63] : memref<10x10x128xf32, #tpu.memory_space<vmem>>, vector<8x8x128xf32>
    %66 = vector.shape_cast %65 : vector<8x8x128xf32> to vector<64x128xf32>
    %67 = arith.truncf %66 : vector<64x128xf32> to vector<64x128xbf16>
    %c6 = arith.constant 6 : index
    %c0_64 = arith.constant 0 : index
    %c0_65 = arith.constant 0 : index
    %68 = vector.load %arg5[%c6, %c0_64, %c0_65] : memref<9x128x128xbf16, #tpu.memory_space<vmem>>, vector<1x128x128xbf16>
    %69 = vector.shape_cast %68 : vector<1x128x128xbf16> to vector<128x128xbf16>
    %cst_66 = arith.constant dense<0.000000e+00> : vector<64x128xf32>
    %70 = tpu.matmul %67, %69, %cst_66 {dimension_numbers = #tpu.dot_dimension_numbers<[1], [0], [0], [1], [0, 0, 1, 1], [], []>} : vector<64x128xbf16>, vector<128x128xbf16>, vector<64x128xf32> -> vector<64x128xf32>
    %71 = arith.addf %64, %70 : vector<64x128xf32>
    %c2_67 = arith.constant 2 : index
    %c1_68 = arith.constant 1 : index
    %c0_69 = arith.constant 0 : index
    %72 = vector.load %arg10[%c2_67, %c1_68, %c0_69] : memref<10x10x128xf32, #tpu.memory_space<vmem>>, vector<8x8x128xf32>
    %73 = vector.shape_cast %72 : vector<8x8x128xf32> to vector<64x128xf32>
    %74 = arith.truncf %73 : vector<64x128xf32> to vector<64x128xbf16>
    %c7 = arith.constant 7 : index
    %c0_70 = arith.constant 0 : index
    %c0_71 = arith.constant 0 : index
    %75 = vector.load %arg5[%c7, %c0_70, %c0_71] : memref<9x128x128xbf16, #tpu.memory_space<vmem>>, vector<1x128x128xbf16>
    %76 = vector.shape_cast %75 : vector<1x128x128xbf16> to vector<128x128xbf16>
    %cst_72 = arith.constant dense<0.000000e+00> : vector<64x128xf32>
    %77 = tpu.matmul %74, %76, %cst_72 {dimension_numbers = #tpu.dot_dimension_numbers<[1], [0], [0], [1], [0, 0, 1, 1], [], []>} : vector<64x128xbf16>, vector<128x128xbf16>, vector<64x128xf32> -> vector<64x128xf32>
    %78 = arith.addf %71, %77 : vector<64x128xf32>
    %c2_73 = arith.constant 2 : index
    %c2_74 = arith.constant 2 : index
    %c0_75 = arith.constant 0 : index
    %79 = vector.load %arg10[%c2_73, %c2_74, %c0_75] : memref<10x10x128xf32, #tpu.memory_space<vmem>>, vector<8x8x128xf32>
    %80 = vector.shape_cast %79 : vector<8x8x128xf32> to vector<64x128xf32>
    %81 = arith.truncf %80 : vector<64x128xf32> to vector<64x128xbf16>
    %c8 = arith.constant 8 : index
    %c0_76 = arith.constant 0 : index
    %c0_77 = arith.constant 0 : index
    %82 = vector.load %arg5[%c8, %c0_76, %c0_77] : memref<9x128x128xbf16, #tpu.memory_space<vmem>>, vector<1x128x128xbf16>
    %83 = vector.shape_cast %82 : vector<1x128x128xbf16> to vector<128x128xbf16>
    %cst_78 = arith.constant dense<0.000000e+00> : vector<64x128xf32>
    %84 = tpu.matmul %81, %83, %cst_78 {dimension_numbers = #tpu.dot_dimension_numbers<[1], [0], [0], [1], [0, 0, 1, 1], [], []>} : vector<64x128xbf16>, vector<128x128xbf16>, vector<64x128xf32> -> vector<64x128xf32>
    %85 = arith.addf %78, %84 : vector<64x128xf32>
    %cst_79 = arith.constant 0.000000e+00 : f32
    %86 = vector.broadcast %cst_79 : f32 to vector<64x128xf32>
    %87 = arith.maximumf %85, %86 : vector<64x128xf32>
    %88 = arith.truncf %87 : vector<64x128xf32> to vector<64x128xbf16>
    %c0_80 = arith.constant 0 : index
    %c0_81 = arith.constant 0 : index
    %c0_82 = arith.constant 0 : index
    %89 = vector.load %arg9[%c0_80, %c0_81, %c0_82] : memref<1x64x128xbf16, #tpu.memory_space<vmem>>, vector<1x64x128xbf16>
    %90 = vector.shape_cast %89 : vector<1x64x128xbf16> to vector<64x128xbf16>
    %91 = vector.shape_cast %88 : vector<64x128xbf16> to vector<1x64x128xbf16>
    tpu.vector_store %arg9[%c0_80, %c0_81, %c0_82], %91 {strides = array<i32>} : memref<1x64x128xbf16, #tpu.memory_space<vmem>>, vector<1x64x128xbf16>,
    return
  }
  func.func @transform_0(%arg0: i32) -> (i32, i32, i32) {
    %c0_i32 = arith.constant 0 : i32
    %c0_i32_0 = arith.constant 0 : i32
    %c0_i32_1 = arith.constant 0 : i32
    return %arg0, %c0_i32, %c0_i32_0 : i32, i32, i32
  }
  func.func @transform_1(%arg0: i32) -> (i32, i32, i32) {
    %c0_i32 = arith.constant 0 : i32
    %c0_i32_0 = arith.constant 0 : i32
    %c0_i32_1 = arith.constant 0 : i32
    return %arg0, %c0_i32, %c0_i32_0 : i32, i32, i32
  }
  func.func @transform_2(%arg0: i32) -> (i32, i32) {
    %c0_i32 = arith.constant 0 : i32
    %c0_i32_0 = arith.constant 0 : i32
    %c0_i32_1 = arith.constant 0 : i32
    return %c0_i32, %c0_i32_0 : i32, i32
  }
  func.func @transform_3(%arg0: i32) -> (i32, i32) {
    %c0_i32 = arith.constant 0 : i32
    %c0_i32_0 = arith.constant 0 : i32
    %c0_i32_1 = arith.constant 0 : i32
    return %c0_i32, %c0_i32_0 : i32, i32
  }
  func.func @transform_4(%arg0: i32) -> (i32, i32, i32) {
    %c0_i32 = arith.constant 0 : i32
    %c0_i32_0 = arith.constant 0 : i32
    %c0_i32_1 = arith.constant 0 : i32
    %c0_i32_2 = arith.constant 0 : i32
    return %c0_i32, %c0_i32_0, %c0_i32_1 : i32, i32, i32
  }
  func.func @transform_5(%arg0: i32) -> (i32, i32) {
    %c0_i32 = arith.constant 0 : i32
    %c0_i32_0 = arith.constant 0 : i32
    %c0_i32_1 = arith.constant 0 : i32
    return %c0_i32, %c0_i32_0 : i32, i32
  }
  func.func @transform_6(%arg0: i32) -> (i32, i32) {
    %c0_i32 = arith.constant 0 : i32
    %c0_i32_0 = arith.constant 0 : i32
    %c0_i32_1 = arith.constant 0 : i32
    return %c0_i32, %c0_i32_0 : i32, i32
  }
  func.func @transform_7(%arg0: i32) -> (i32, i32) {
    %c0_i32 = arith.constant 0 : i32
    %c0_i32_0 = arith.constant 0 : i32
    %c0_i32_1 = arith.constant 0 : i32
    return %c0_i32, %c0_i32_0 : i32, i32
  }
  func.func @transform_8(%arg0: i32) -> (i32, i32, i32) {
    %c0_i32 = arith.constant 0 : i32
    %c0_i32_0 = arith.constant 0 : i32
    %c0_i32_1 = arith.constant 0 : i32
    return %arg0, %c0_i32, %c0_i32_0 : i32, i32, i32
  }
}

module attributes {stable_mosaic.version = 11 : i64} {
  func.func @_res_block_kernel(%arg0: i32, %arg1: memref<1x16x1152xbf16, #tpu.memory_space<vmem>>, %arg2: memref<1x16x128xbf16, #tpu.memory_space<vmem>>, %arg3: memref<1152x128xbf16, #tpu.memory_space<vmem>>, %arg4: memref<1x128xf32, #tpu.memory_space<vmem>>, %arg5: memref<9x128x128xbf16, #tpu.memory_space<vmem>>, %arg6: memref<1x128xf32, #tpu.memory_space<vmem>>, %arg7: memref<128x128xbf16, #tpu.memory_space<vmem>>, %arg8: memref<1x128xf32, #tpu.memory_space<vmem>>, %arg9: memref<1x16x128xbf16, #tpu.memory_space<vmem>>, %arg10: memref<6x6x128xf32, #tpu.memory_space<vmem>>) attributes {dimension_semantics = [#tpu.dimension_semantics<parallel>], iteration_bounds = array<i64: 2>, scalar_prefetch = 0 : i64, scratch_operands = 1 : i64, tpu.core_type = #tpu.core_type<tc>, window_params = [{transform_indices = @transform_0, window_bounds = array<i64: 1, 16, 1152>}, {transform_indices = @transform_1, window_bounds = array<i64: 1, 16, 128>}, {pipeline_mode = #tpu.pipeline_mode<synchronous>, transform_indices = @transform_2, window_bounds = array<i64: 1152, 128>}, {pipeline_mode = #tpu.pipeline_mode<synchronous>, transform_indices = @transform_3, window_bounds = array<i64: 1, 128>}, {pipeline_mode = #tpu.pipeline_mode<synchronous>, transform_indices = @transform_4, window_bounds = array<i64: 9, 128, 128>}, {pipeline_mode = #tpu.pipeline_mode<synchronous>, transform_indices = @transform_5, window_bounds = array<i64: 1, 128>}, {pipeline_mode = #tpu.pipeline_mode<synchronous>, transform_indices = @transform_6, window_bounds = array<i64: 128, 128>}, {pipeline_mode = #tpu.pipeline_mode<synchronous>, transform_indices = @transform_7, window_bounds = array<i64: 1, 128>}, {transform_indices = @transform_8, window_bounds = array<i64: 1, 16, 128>}]} {
    %c0 = arith.constant 0 : index
    %c0_0 = arith.constant 0 : index
    %c0_1 = arith.constant 0 : index
    %0 = vector.load %arg1[%c0, %c0_0, %c0_1] : memref<1x16x1152xbf16, #tpu.memory_space<vmem>>, vector<1x16x1152xbf16>
    %1 = vector.shape_cast %0 : vector<1x16x1152xbf16> to vector<16x1152xbf16>
    %c0_2 = arith.constant 0 : index
    %c0_3 = arith.constant 0 : index
    %2 = vector.load %arg3[%c0_2, %c0_3] : memref<1152x128xbf16, #tpu.memory_space<vmem>>, vector<1152x128xbf16>
    %cst = arith.constant dense<0.000000e+00> : vector<16x128xf32>
    %3 = tpu.matmul %1, %2, %cst {dimension_numbers = #tpu.dot_dimension_numbers<[1], [0], [0], [1], [0, 0, 1, 1], [], []>} : vector<16x1152xbf16>, vector<1152x128xbf16>, vector<16x128xf32> -> vector<16x128xf32>
    %c0_4 = arith.constant 0 : index
    %c0_5 = arith.constant 0 : index
    %4 = vector.load %arg4[%c0_4, %c0_5] : memref<1x128xf32, #tpu.memory_space<vmem>>, vector<1x128xf32>
    %5 = vector.broadcast %4 : vector<1x128xf32> to vector<16x128xf32>
    %6 = arith.addf %3, %5 : vector<16x128xf32>
    %cst_6 = arith.constant 0.000000e+00 : f32
    %7 = vector.broadcast %cst_6 : f32 to vector<16x128xf32>
    %8 = arith.maximumf %6, %7 : vector<16x128xf32>
    %cst_7 = arith.constant 0.000000e+00 : f32
    %9 = vector.broadcast %cst_7 : f32 to vector<6x6x128xf32>
    %c0_8 = arith.constant 0 : index
    %c0_9 = arith.constant 0 : index
    %c0_10 = arith.constant 0 : index
    %10 = vector.load %arg10[%c0_8, %c0_9, %c0_10] : memref<6x6x128xf32, #tpu.memory_space<vmem>>, vector<6x6x128xf32>
    tpu.vector_store %arg10[%c0_8, %c0_9, %c0_10], %9 {strides = array<i32>} : memref<6x6x128xf32, #tpu.memory_space<vmem>>, vector<6x6x128xf32>,
    %11 = vector.shape_cast %8 : vector<16x128xf32> to vector<4x4x128xf32>
    %c1 = arith.constant 1 : index
    %c1_11 = arith.constant 1 : index
    %c0_12 = arith.constant 0 : index
    %12 = vector.load %arg10[%c1, %c1_11, %c0_12] : memref<6x6x128xf32, #tpu.memory_space<vmem>>, vector<4x4x128xf32>
    tpu.vector_store %arg10[%c1, %c1_11, %c0_12], %11 {strides = array<i32>} : memref<6x6x128xf32, #tpu.memory_space<vmem>>, vector<4x4x128xf32>,
    %c0_13 = arith.constant 0 : index
    %c0_14 = arith.constant 0 : index
    %c0_15 = arith.constant 0 : index
    %13 = vector.load %arg2[%c0_13, %c0_14, %c0_15] : memref<1x16x128xbf16, #tpu.memory_space<vmem>>, vector<1x16x128xbf16>
    %14 = vector.shape_cast %13 : vector<1x16x128xbf16> to vector<16x128xbf16>
    %c0_16 = arith.constant 0 : index
    %c0_17 = arith.constant 0 : index
    %15 = vector.load %arg7[%c0_16, %c0_17] : memref<128x128xbf16, #tpu.memory_space<vmem>>, vector<128x128xbf16>
    %cst_18 = arith.constant dense<0.000000e+00> : vector<16x128xf32>
    %16 = tpu.matmul %14, %15, %cst_18 {dimension_numbers = #tpu.dot_dimension_numbers<[1], [0], [0], [1], [0, 0, 1, 1], [], []>} : vector<16x128xbf16>, vector<128x128xbf16>, vector<16x128xf32> -> vector<16x128xf32>
    %c0_19 = arith.constant 0 : index
    %c0_20 = arith.constant 0 : index
    %17 = vector.load %arg8[%c0_19, %c0_20] : memref<1x128xf32, #tpu.memory_space<vmem>>, vector<1x128xf32>
    %18 = vector.broadcast %17 : vector<1x128xf32> to vector<16x128xf32>
    %19 = arith.addf %16, %18 : vector<16x128xf32>
    %c0_21 = arith.constant 0 : index
    %c0_22 = arith.constant 0 : index
    %20 = vector.load %arg6[%c0_21, %c0_22] : memref<1x128xf32, #tpu.memory_space<vmem>>, vector<1x128xf32>
    %21 = vector.broadcast %20 : vector<1x128xf32> to vector<16x128xf32>
    %22 = arith.addf %19, %21 : vector<16x128xf32>
    %c0_23 = arith.constant 0 : index
    %c0_24 = arith.constant 0 : index
    %c0_25 = arith.constant 0 : index
    %23 = vector.load %arg10[%c0_23, %c0_24, %c0_25] : memref<6x6x128xf32, #tpu.memory_space<vmem>>, vector<4x4x128xf32>
    %24 = vector.shape_cast %23 : vector<4x4x128xf32> to vector<16x128xf32>
    %25 = arith.truncf %24 : vector<16x128xf32> to vector<16x128xbf16>
    %c0_26 = arith.constant 0 : index
    %c0_27 = arith.constant 0 : index
    %c0_28 = arith.constant 0 : index
    %26 = vector.load %arg5[%c0_26, %c0_27, %c0_28] : memref<9x128x128xbf16, #tpu.memory_space<vmem>>, vector<1x128x128xbf16>
    %27 = vector.shape_cast %26 : vector<1x128x128xbf16> to vector<128x128xbf16>
    %cst_29 = arith.constant dense<0.000000e+00> : vector<16x128xf32>
    %28 = tpu.matmul %25, %27, %cst_29 {dimension_numbers = #tpu.dot_dimension_numbers<[1], [0], [0], [1], [0, 0, 1, 1], [], []>} : vector<16x128xbf16>, vector<128x128xbf16>, vector<16x128xf32> -> vector<16x128xf32>
    %29 = arith.addf %22, %28 : vector<16x128xf32>
    %c0_30 = arith.constant 0 : index
    %c1_31 = arith.constant 1 : index
    %c0_32 = arith.constant 0 : index
    %30 = vector.load %arg10[%c0_30, %c1_31, %c0_32] : memref<6x6x128xf32, #tpu.memory_space<vmem>>, vector<4x4x128xf32>
    %31 = vector.shape_cast %30 : vector<4x4x128xf32> to vector<16x128xf32>
    %32 = arith.truncf %31 : vector<16x128xf32> to vector<16x128xbf16>
    %c1_33 = arith.constant 1 : index
    %c0_34 = arith.constant 0 : index
    %c0_35 = arith.constant 0 : index
    %33 = vector.load %arg5[%c1_33, %c0_34, %c0_35] : memref<9x128x128xbf16, #tpu.memory_space<vmem>>, vector<1x128x128xbf16>
    %34 = vector.shape_cast %33 : vector<1x128x128xbf16> to vector<128x128xbf16>
    %cst_36 = arith.constant dense<0.000000e+00> : vector<16x128xf32>
    %35 = tpu.matmul %32, %34, %cst_36 {dimension_numbers = #tpu.dot_dimension_numbers<[1], [0], [0], [1], [0, 0, 1, 1], [], []>} : vector<16x128xbf16>, vector<128x128xbf16>, vector<16x128xf32> -> vector<16x128xf32>
    %36 = arith.addf %29, %35 : vector<16x128xf32>
    %c0_37 = arith.constant 0 : index
    %c2 = arith.constant 2 : index
    %c0_38 = arith.constant 0 : index
    %37 = vector.load %arg10[%c0_37, %c2, %c0_38] : memref<6x6x128xf32, #tpu.memory_space<vmem>>, vector<4x4x128xf32>
    %38 = vector.shape_cast %37 : vector<4x4x128xf32> to vector<16x128xf32>
    %39 = arith.truncf %38 : vector<16x128xf32> to vector<16x128xbf16>
    %c2_39 = arith.constant 2 : index
    %c0_40 = arith.constant 0 : index
    %c0_41 = arith.constant 0 : index
    %40 = vector.load %arg5[%c2_39, %c0_40, %c0_41] : memref<9x128x128xbf16, #tpu.memory_space<vmem>>, vector<1x128x128xbf16>
    %41 = vector.shape_cast %40 : vector<1x128x128xbf16> to vector<128x128xbf16>
    %cst_42 = arith.constant dense<0.000000e+00> : vector<16x128xf32>
    %42 = tpu.matmul %39, %41, %cst_42 {dimension_numbers = #tpu.dot_dimension_numbers<[1], [0], [0], [1], [0, 0, 1, 1], [], []>} : vector<16x128xbf16>, vector<128x128xbf16>, vector<16x128xf32> -> vector<16x128xf32>
    %43 = arith.addf %36, %42 : vector<16x128xf32>
    %c1_43 = arith.constant 1 : index
    %c0_44 = arith.constant 0 : index
    %c0_45 = arith.constant 0 : index
    %44 = vector.load %arg10[%c1_43, %c0_44, %c0_45] : memref<6x6x128xf32, #tpu.memory_space<vmem>>, vector<4x4x128xf32>
    %45 = vector.shape_cast %44 : vector<4x4x128xf32> to vector<16x128xf32>
    %46 = arith.truncf %45 : vector<16x128xf32> to vector<16x128xbf16>
    %c3 = arith.constant 3 : index
    %c0_46 = arith.constant 0 : index
    %c0_47 = arith.constant 0 : index
    %47 = vector.load %arg5[%c3, %c0_46, %c0_47] : memref<9x128x128xbf16, #tpu.memory_space<vmem>>, vector<1x128x128xbf16>
    %48 = vector.shape_cast %47 : vector<1x128x128xbf16> to vector<128x128xbf16>
    %cst_48 = arith.constant dense<0.000000e+00> : vector<16x128xf32>
    %49 = tpu.matmul %46, %48, %cst_48 {dimension_numbers = #tpu.dot_dimension_numbers<[1], [0], [0], [1], [0, 0, 1, 1], [], []>} : vector<16x128xbf16>, vector<128x128xbf16>, vector<16x128xf32> -> vector<16x128xf32>
    %50 = arith.addf %43, %49 : vector<16x128xf32>
    %c1_49 = arith.constant 1 : index
    %c1_50 = arith.constant 1 : index
    %c0_51 = arith.constant 0 : index
    %51 = vector.load %arg10[%c1_49, %c1_50, %c0_51] : memref<6x6x128xf32, #tpu.memory_space<vmem>>, vector<4x4x128xf32>
    %52 = vector.shape_cast %51 : vector<4x4x128xf32> to vector<16x128xf32>
    %53 = arith.truncf %52 : vector<16x128xf32> to vector<16x128xbf16>
    %c4 = arith.constant 4 : index
    %c0_52 = arith.constant 0 : index
    %c0_53 = arith.constant 0 : index
    %54 = vector.load %arg5[%c4, %c0_52, %c0_53] : memref<9x128x128xbf16, #tpu.memory_space<vmem>>, vector<1x128x128xbf16>
    %55 = vector.shape_cast %54 : vector<1x128x128xbf16> to vector<128x128xbf16>
    %cst_54 = arith.constant dense<0.000000e+00> : vector<16x128xf32>
    %56 = tpu.matmul %53, %55, %cst_54 {dimension_numbers = #tpu.dot_dimension_numbers<[1], [0], [0], [1], [0, 0, 1, 1], [], []>} : vector<16x128xbf16>, vector<128x128xbf16>, vector<16x128xf32> -> vector<16x128xf32>
    %57 = arith.addf %50, %56 : vector<16x128xf32>
    %c1_55 = arith.constant 1 : index
    %c2_56 = arith.constant 2 : index
    %c0_57 = arith.constant 0 : index
    %58 = vector.load %arg10[%c1_55, %c2_56, %c0_57] : memref<6x6x128xf32, #tpu.memory_space<vmem>>, vector<4x4x128xf32>
    %59 = vector.shape_cast %58 : vector<4x4x128xf32> to vector<16x128xf32>
    %60 = arith.truncf %59 : vector<16x128xf32> to vector<16x128xbf16>
    %c5 = arith.constant 5 : index
    %c0_58 = arith.constant 0 : index
    %c0_59 = arith.constant 0 : index
    %61 = vector.load %arg5[%c5, %c0_58, %c0_59] : memref<9x128x128xbf16, #tpu.memory_space<vmem>>, vector<1x128x128xbf16>
    %62 = vector.shape_cast %61 : vector<1x128x128xbf16> to vector<128x128xbf16>
    %cst_60 = arith.constant dense<0.000000e+00> : vector<16x128xf32>
    %63 = tpu.matmul %60, %62, %cst_60 {dimension_numbers = #tpu.dot_dimension_numbers<[1], [0], [0], [1], [0, 0, 1, 1], [], []>} : vector<16x128xbf16>, vector<128x128xbf16>, vector<16x128xf32> -> vector<16x128xf32>
    %64 = arith.addf %57, %63 : vector<16x128xf32>
    %c2_61 = arith.constant 2 : index
    %c0_62 = arith.constant 0 : index
    %c0_63 = arith.constant 0 : index
    %65 = vector.load %arg10[%c2_61, %c0_62, %c0_63] : memref<6x6x128xf32, #tpu.memory_space<vmem>>, vector<4x4x128xf32>
    %66 = vector.shape_cast %65 : vector<4x4x128xf32> to vector<16x128xf32>
    %67 = arith.truncf %66 : vector<16x128xf32> to vector<16x128xbf16>
    %c6 = arith.constant 6 : index
    %c0_64 = arith.constant 0 : index
    %c0_65 = arith.constant 0 : index
    %68 = vector.load %arg5[%c6, %c0_64, %c0_65] : memref<9x128x128xbf16, #tpu.memory_space<vmem>>, vector<1x128x128xbf16>
    %69 = vector.shape_cast %68 : vector<1x128x128xbf16> to vector<128x128xbf16>
    %cst_66 = arith.constant dense<0.000000e+00> : vector<16x128xf32>
    %70 = tpu.matmul %67, %69, %cst_66 {dimension_numbers = #tpu.dot_dimension_numbers<[1], [0], [0], [1], [0, 0, 1, 1], [], []>} : vector<16x128xbf16>, vector<128x128xbf16>, vector<16x128xf32> -> vector<16x128xf32>
    %71 = arith.addf %64, %70 : vector<16x128xf32>
    %c2_67 = arith.constant 2 : index
    %c1_68 = arith.constant 1 : index
    %c0_69 = arith.constant 0 : index
    %72 = vector.load %arg10[%c2_67, %c1_68, %c0_69] : memref<6x6x128xf32, #tpu.memory_space<vmem>>, vector<4x4x128xf32>
    %73 = vector.shape_cast %72 : vector<4x4x128xf32> to vector<16x128xf32>
    %74 = arith.truncf %73 : vector<16x128xf32> to vector<16x128xbf16>
    %c7 = arith.constant 7 : index
    %c0_70 = arith.constant 0 : index
    %c0_71 = arith.constant 0 : index
    %75 = vector.load %arg5[%c7, %c0_70, %c0_71] : memref<9x128x128xbf16, #tpu.memory_space<vmem>>, vector<1x128x128xbf16>
    %76 = vector.shape_cast %75 : vector<1x128x128xbf16> to vector<128x128xbf16>
    %cst_72 = arith.constant dense<0.000000e+00> : vector<16x128xf32>
    %77 = tpu.matmul %74, %76, %cst_72 {dimension_numbers = #tpu.dot_dimension_numbers<[1], [0], [0], [1], [0, 0, 1, 1], [], []>} : vector<16x128xbf16>, vector<128x128xbf16>, vector<16x128xf32> -> vector<16x128xf32>
    %78 = arith.addf %71, %77 : vector<16x128xf32>
    %c2_73 = arith.constant 2 : index
    %c2_74 = arith.constant 2 : index
    %c0_75 = arith.constant 0 : index
    %79 = vector.load %arg10[%c2_73, %c2_74, %c0_75] : memref<6x6x128xf32, #tpu.memory_space<vmem>>, vector<4x4x128xf32>
    %80 = vector.shape_cast %79 : vector<4x4x128xf32> to vector<16x128xf32>
    %81 = arith.truncf %80 : vector<16x128xf32> to vector<16x128xbf16>
    %c8 = arith.constant 8 : index
    %c0_76 = arith.constant 0 : index
    %c0_77 = arith.constant 0 : index
    %82 = vector.load %arg5[%c8, %c0_76, %c0_77] : memref<9x128x128xbf16, #tpu.memory_space<vmem>>, vector<1x128x128xbf16>
    %83 = vector.shape_cast %82 : vector<1x128x128xbf16> to vector<128x128xbf16>
    %cst_78 = arith.constant dense<0.000000e+00> : vector<16x128xf32>
    %84 = tpu.matmul %81, %83, %cst_78 {dimension_numbers = #tpu.dot_dimension_numbers<[1], [0], [0], [1], [0, 0, 1, 1], [], []>} : vector<16x128xbf16>, vector<128x128xbf16>, vector<16x128xf32> -> vector<16x128xf32>
    %85 = arith.addf %78, %84 : vector<16x128xf32>
    %cst_79 = arith.constant 0.000000e+00 : f32
    %86 = vector.broadcast %cst_79 : f32 to vector<16x128xf32>
    %87 = arith.maximumf %85, %86 : vector<16x128xf32>
    %88 = arith.truncf %87 : vector<16x128xf32> to vector<16x128xbf16>
    %c0_80 = arith.constant 0 : index
    %c0_81 = arith.constant 0 : index
    %c0_82 = arith.constant 0 : index
    %89 = vector.load %arg9[%c0_80, %c0_81, %c0_82] : memref<1x16x128xbf16, #tpu.memory_space<vmem>>, vector<1x16x128xbf16>
    %90 = vector.shape_cast %89 : vector<1x16x128xbf16> to vector<16x128xbf16>
    %91 = vector.shape_cast %88 : vector<16x128xbf16> to vector<1x16x128xbf16>
    tpu.vector_store %arg9[%c0_80, %c0_81, %c0_82], %91 {strides = array<i32>} : memref<1x16x128xbf16, #tpu.memory_space<vmem>>, vector<1x16x128xbf16>,
    return
  }
  func.func @transform_0(%arg0: i32) -> (i32, i32, i32) {
    %c0_i32 = arith.constant 0 : i32
    %c0_i32_0 = arith.constant 0 : i32
    %c0_i32_1 = arith.constant 0 : i32
    return %arg0, %c0_i32, %c0_i32_0 : i32, i32, i32
  }
  func.func @transform_1(%arg0: i32) -> (i32, i32, i32) {
    %c0_i32 = arith.constant 0 : i32
    %c0_i32_0 = arith.constant 0 : i32
    %c0_i32_1 = arith.constant 0 : i32
    return %arg0, %c0_i32, %c0_i32_0 : i32, i32, i32
  }
  func.func @transform_2(%arg0: i32) -> (i32, i32) {
    %c0_i32 = arith.constant 0 : i32
    %c0_i32_0 = arith.constant 0 : i32
    %c0_i32_1 = arith.constant 0 : i32
    return %c0_i32, %c0_i32_0 : i32, i32
  }
  func.func @transform_3(%arg0: i32) -> (i32, i32) {
    %c0_i32 = arith.constant 0 : i32
    %c0_i32_0 = arith.constant 0 : i32
    %c0_i32_1 = arith.constant 0 : i32
    return %c0_i32, %c0_i32_0 : i32, i32
  }
  func.func @transform_4(%arg0: i32) -> (i32, i32, i32) {
    %c0_i32 = arith.constant 0 : i32
    %c0_i32_0 = arith.constant 0 : i32
    %c0_i32_1 = arith.constant 0 : i32
    %c0_i32_2 = arith.constant 0 : i32
    return %c0_i32, %c0_i32_0, %c0_i32_1 : i32, i32, i32
  }
  func.func @transform_5(%arg0: i32) -> (i32, i32) {
    %c0_i32 = arith.constant 0 : i32
    %c0_i32_0 = arith.constant 0 : i32
    %c0_i32_1 = arith.constant 0 : i32
    return %c0_i32, %c0_i32_0 : i32, i32
  }
  func.func @transform_6(%arg0: i32) -> (i32, i32) {
    %c0_i32 = arith.constant 0 : i32
    %c0_i32_0 = arith.constant 0 : i32
    %c0_i32_1 = arith.constant 0 : i32
    return %c0_i32, %c0_i32_0 : i32, i32
  }
  func.func @transform_7(%arg0: i32) -> (i32, i32) {
    %c0_i32 = arith.constant 0 : i32
    %c0_i32_0 = arith.constant 0 : i32
    %c0_i32_1 = arith.constant 0 : i32
    return %c0_i32, %c0_i32_0 : i32, i32
  }
  func.func @transform_8(%arg0: i32) -> (i32, i32, i32) {
    %c0_i32 = arith.constant 0 : i32
    %c0_i32_0 = arith.constant 0 : i32
    %c0_i32_1 = arith.constant 0 : i32
    return %arg0, %c0_i32, %c0_i32_0 : i32, i32, i32
  }
}

module attributes {stable_mosaic.version = 11 : i64} {
  func.func @_res_block_kernel(%arg0: i32, %arg1: memref<1x4x1152xbf16, #tpu.memory_space<vmem>>, %arg2: memref<1x4x128xbf16, #tpu.memory_space<vmem>>, %arg3: memref<1152x256xbf16, #tpu.memory_space<vmem>>, %arg4: memref<1x256xf32, #tpu.memory_space<vmem>>, %arg5: memref<9x256x256xbf16, #tpu.memory_space<vmem>>, %arg6: memref<1x256xf32, #tpu.memory_space<vmem>>, %arg7: memref<128x256xbf16, #tpu.memory_space<vmem>>, %arg8: memref<1x256xf32, #tpu.memory_space<vmem>>, %arg9: memref<256x128xbf16, #tpu.memory_space<vmem>>, %arg10: memref<1x128xf32, #tpu.memory_space<vmem>>, %arg11: memref<1x1x128xf32, #tpu.memory_space<vmem>>, %arg12: memref<4x4x256xf32, #tpu.memory_space<vmem>>) attributes {dimension_semantics = [#tpu.dimension_semantics<parallel>], iteration_bounds = array<i64: 2>, scalar_prefetch = 0 : i64, scratch_operands = 1 : i64, tpu.core_type = #tpu.core_type<tc>, window_params = [{transform_indices = @transform_0, window_bounds = array<i64: 1, 4, 1152>}, {transform_indices = @transform_1, window_bounds = array<i64: 1, 4, 128>}, {pipeline_mode = #tpu.pipeline_mode<synchronous>, transform_indices = @transform_2, window_bounds = array<i64: 1152, 256>}, {pipeline_mode = #tpu.pipeline_mode<synchronous>, transform_indices = @transform_3, window_bounds = array<i64: 1, 256>}, {pipeline_mode = #tpu.pipeline_mode<synchronous>, transform_indices = @transform_4, window_bounds = array<i64: 9, 256, 256>}, {pipeline_mode = #tpu.pipeline_mode<synchronous>, transform_indices = @transform_5, window_bounds = array<i64: 1, 256>}, {pipeline_mode = #tpu.pipeline_mode<synchronous>, transform_indices = @transform_6, window_bounds = array<i64: 128, 256>}, {pipeline_mode = #tpu.pipeline_mode<synchronous>, transform_indices = @transform_7, window_bounds = array<i64: 1, 256>}, {pipeline_mode = #tpu.pipeline_mode<synchronous>, transform_indices = @transform_8, window_bounds = array<i64: 256, 128>}, {pipeline_mode = #tpu.pipeline_mode<synchronous>, transform_indices = @transform_9, window_bounds = array<i64: 1, 128>}, {transform_indices = @transform_10, window_bounds = array<i64: 1, 1, 128>}]} {
    %c0 = arith.constant 0 : index
    %c0_0 = arith.constant 0 : index
    %c0_1 = arith.constant 0 : index
    %0 = vector.load %arg1[%c0, %c0_0, %c0_1] : memref<1x4x1152xbf16, #tpu.memory_space<vmem>>, vector<1x4x1152xbf16>
    %1 = vector.shape_cast %0 : vector<1x4x1152xbf16> to vector<4x1152xbf16>
    %c0_2 = arith.constant 0 : index
    %c0_3 = arith.constant 0 : index
    %2 = vector.load %arg3[%c0_2, %c0_3] : memref<1152x256xbf16, #tpu.memory_space<vmem>>, vector<1152x256xbf16>
    %cst = arith.constant dense<0.000000e+00> : vector<4x256xf32>
    %3 = tpu.matmul %1, %2, %cst {dimension_numbers = #tpu.dot_dimension_numbers<[1], [0], [0], [1], [0, 0, 1, 1], [], []>} : vector<4x1152xbf16>, vector<1152x256xbf16>, vector<4x256xf32> -> vector<4x256xf32>
    %c0_4 = arith.constant 0 : index
    %c0_5 = arith.constant 0 : index
    %4 = vector.load %arg4[%c0_4, %c0_5] : memref<1x256xf32, #tpu.memory_space<vmem>>, vector<1x256xf32>
    %5 = vector.broadcast %4 : vector<1x256xf32> to vector<4x256xf32>
    %6 = arith.addf %3, %5 : vector<4x256xf32>
    %cst_6 = arith.constant 0.000000e+00 : f32
    %7 = vector.broadcast %cst_6 : f32 to vector<4x256xf32>
    %8 = arith.maximumf %6, %7 : vector<4x256xf32>
    %cst_7 = arith.constant 0.000000e+00 : f32
    %9 = vector.broadcast %cst_7 : f32 to vector<4x4x256xf32>
    %c0_8 = arith.constant 0 : index
    %c0_9 = arith.constant 0 : index
    %c0_10 = arith.constant 0 : index
    %10 = vector.load %arg12[%c0_8, %c0_9, %c0_10] : memref<4x4x256xf32, #tpu.memory_space<vmem>>, vector<4x4x256xf32>
    tpu.vector_store %arg12[%c0_8, %c0_9, %c0_10], %9 {strides = array<i32>} : memref<4x4x256xf32, #tpu.memory_space<vmem>>, vector<4x4x256xf32>,
    %11 = vector.shape_cast %8 : vector<4x256xf32> to vector<2x2x256xf32>
    %c1 = arith.constant 1 : index
    %c1_11 = arith.constant 1 : index
    %c0_12 = arith.constant 0 : index
    %12 = vector.load %arg12[%c1, %c1_11, %c0_12] : memref<4x4x256xf32, #tpu.memory_space<vmem>>, vector<2x2x256xf32>
    tpu.vector_store %arg12[%c1, %c1_11, %c0_12], %11 {strides = array<i32>} : memref<4x4x256xf32, #tpu.memory_space<vmem>>, vector<2x2x256xf32>,
    %c0_13 = arith.constant 0 : index
    %c0_14 = arith.constant 0 : index
    %c0_15 = arith.constant 0 : index
    %13 = vector.load %arg2[%c0_13, %c0_14, %c0_15] : memref<1x4x128xbf16, #tpu.memory_space<vmem>>, vector<1x4x128xbf16>
    %14 = vector.shape_cast %13 : vector<1x4x128xbf16> to vector<4x128xbf16>
    %c0_16 = arith.constant 0 : index
    %c0_17 = arith.constant 0 : index
    %15 = vector.load %arg7[%c0_16, %c0_17] : memref<128x256xbf16, #tpu.memory_space<vmem>>, vector<128x256xbf16>
    %cst_18 = arith.constant dense<0.000000e+00> : vector<4x256xf32>
    %16 = tpu.matmul %14, %15, %cst_18 {dimension_numbers = #tpu.dot_dimension_numbers<[1], [0], [0], [1], [0, 0, 1, 1], [], []>} : vector<4x128xbf16>, vector<128x256xbf16>, vector<4x256xf32> -> vector<4x256xf32>
    %c0_19 = arith.constant 0 : index
    %c0_20 = arith.constant 0 : index
    %17 = vector.load %arg8[%c0_19, %c0_20] : memref<1x256xf32, #tpu.memory_space<vmem>>, vector<1x256xf32>
    %18 = vector.broadcast %17 : vector<1x256xf32> to vector<4x256xf32>
    %19 = arith.addf %16, %18 : vector<4x256xf32>
    %c0_21 = arith.constant 0 : index
    %c0_22 = arith.constant 0 : index
    %20 = vector.load %arg6[%c0_21, %c0_22] : memref<1x256xf32, #tpu.memory_space<vmem>>, vector<1x256xf32>
    %21 = vector.broadcast %20 : vector<1x256xf32> to vector<4x256xf32>
    %22 = arith.addf %19, %21 : vector<4x256xf32>
    %c0_23 = arith.constant 0 : index
    %c0_24 = arith.constant 0 : index
    %c0_25 = arith.constant 0 : index
    %23 = vector.load %arg12[%c0_23, %c0_24, %c0_25] : memref<4x4x256xf32, #tpu.memory_space<vmem>>, vector<2x2x256xf32>
    %24 = vector.shape_cast %23 : vector<2x2x256xf32> to vector<4x256xf32>
    %25 = arith.truncf %24 : vector<4x256xf32> to vector<4x256xbf16>
    %c0_26 = arith.constant 0 : index
    %c0_27 = arith.constant 0 : index
    %c0_28 = arith.constant 0 : index
    %26 = vector.load %arg5[%c0_26, %c0_27, %c0_28] : memref<9x256x256xbf16, #tpu.memory_space<vmem>>, vector<1x256x256xbf16>
    %27 = vector.shape_cast %26 : vector<1x256x256xbf16> to vector<256x256xbf16>
    %cst_29 = arith.constant dense<0.000000e+00> : vector<4x256xf32>
    %28 = tpu.matmul %25, %27, %cst_29 {dimension_numbers = #tpu.dot_dimension_numbers<[1], [0], [0], [1], [0, 0, 1, 1], [], []>} : vector<4x256xbf16>, vector<256x256xbf16>, vector<4x256xf32> -> vector<4x256xf32>
    %29 = arith.addf %22, %28 : vector<4x256xf32>
    %c0_30 = arith.constant 0 : index
    %c1_31 = arith.constant 1 : index
    %c0_32 = arith.constant 0 : index
    %30 = vector.load %arg12[%c0_30, %c1_31, %c0_32] : memref<4x4x256xf32, #tpu.memory_space<vmem>>, vector<2x2x256xf32>
    %31 = vector.shape_cast %30 : vector<2x2x256xf32> to vector<4x256xf32>
    %32 = arith.truncf %31 : vector<4x256xf32> to vector<4x256xbf16>
    %c1_33 = arith.constant 1 : index
    %c0_34 = arith.constant 0 : index
    %c0_35 = arith.constant 0 : index
    %33 = vector.load %arg5[%c1_33, %c0_34, %c0_35] : memref<9x256x256xbf16, #tpu.memory_space<vmem>>, vector<1x256x256xbf16>
    %34 = vector.shape_cast %33 : vector<1x256x256xbf16> to vector<256x256xbf16>
    %cst_36 = arith.constant dense<0.000000e+00> : vector<4x256xf32>
    %35 = tpu.matmul %32, %34, %cst_36 {dimension_numbers = #tpu.dot_dimension_numbers<[1], [0], [0], [1], [0, 0, 1, 1], [], []>} : vector<4x256xbf16>, vector<256x256xbf16>, vector<4x256xf32> -> vector<4x256xf32>
    %36 = arith.addf %29, %35 : vector<4x256xf32>
    %c0_37 = arith.constant 0 : index
    %c2 = arith.constant 2 : index
    %c0_38 = arith.constant 0 : index
    %37 = vector.load %arg12[%c0_37, %c2, %c0_38] : memref<4x4x256xf32, #tpu.memory_space<vmem>>, vector<2x2x256xf32>
    %38 = vector.shape_cast %37 : vector<2x2x256xf32> to vector<4x256xf32>
    %39 = arith.truncf %38 : vector<4x256xf32> to vector<4x256xbf16>
    %c2_39 = arith.constant 2 : index
    %c0_40 = arith.constant 0 : index
    %c0_41 = arith.constant 0 : index
    %40 = vector.load %arg5[%c2_39, %c0_40, %c0_41] : memref<9x256x256xbf16, #tpu.memory_space<vmem>>, vector<1x256x256xbf16>
    %41 = vector.shape_cast %40 : vector<1x256x256xbf16> to vector<256x256xbf16>
    %cst_42 = arith.constant dense<0.000000e+00> : vector<4x256xf32>
    %42 = tpu.matmul %39, %41, %cst_42 {dimension_numbers = #tpu.dot_dimension_numbers<[1], [0], [0], [1], [0, 0, 1, 1], [], []>} : vector<4x256xbf16>, vector<256x256xbf16>, vector<4x256xf32> -> vector<4x256xf32>
    %43 = arith.addf %36, %42 : vector<4x256xf32>
    %c1_43 = arith.constant 1 : index
    %c0_44 = arith.constant 0 : index
    %c0_45 = arith.constant 0 : index
    %44 = vector.load %arg12[%c1_43, %c0_44, %c0_45] : memref<4x4x256xf32, #tpu.memory_space<vmem>>, vector<2x2x256xf32>
    %45 = vector.shape_cast %44 : vector<2x2x256xf32> to vector<4x256xf32>
    %46 = arith.truncf %45 : vector<4x256xf32> to vector<4x256xbf16>
    %c3 = arith.constant 3 : index
    %c0_46 = arith.constant 0 : index
    %c0_47 = arith.constant 0 : index
    %47 = vector.load %arg5[%c3, %c0_46, %c0_47] : memref<9x256x256xbf16, #tpu.memory_space<vmem>>, vector<1x256x256xbf16>
    %48 = vector.shape_cast %47 : vector<1x256x256xbf16> to vector<256x256xbf16>
    %cst_48 = arith.constant dense<0.000000e+00> : vector<4x256xf32>
    %49 = tpu.matmul %46, %48, %cst_48 {dimension_numbers = #tpu.dot_dimension_numbers<[1], [0], [0], [1], [0, 0, 1, 1], [], []>} : vector<4x256xbf16>, vector<256x256xbf16>, vector<4x256xf32> -> vector<4x256xf32>
    %50 = arith.addf %43, %49 : vector<4x256xf32>
    %c1_49 = arith.constant 1 : index
    %c1_50 = arith.constant 1 : index
    %c0_51 = arith.constant 0 : index
    %51 = vector.load %arg12[%c1_49, %c1_50, %c0_51] : memref<4x4x256xf32, #tpu.memory_space<vmem>>, vector<2x2x256xf32>
    %52 = vector.shape_cast %51 : vector<2x2x256xf32> to vector<4x256xf32>
    %53 = arith.truncf %52 : vector<4x256xf32> to vector<4x256xbf16>
    %c4 = arith.constant 4 : index
    %c0_52 = arith.constant 0 : index
    %c0_53 = arith.constant 0 : index
    %54 = vector.load %arg5[%c4, %c0_52, %c0_53] : memref<9x256x256xbf16, #tpu.memory_space<vmem>>, vector<1x256x256xbf16>
    %55 = vector.shape_cast %54 : vector<1x256x256xbf16> to vector<256x256xbf16>
    %cst_54 = arith.constant dense<0.000000e+00> : vector<4x256xf32>
    %56 = tpu.matmul %53, %55, %cst_54 {dimension_numbers = #tpu.dot_dimension_numbers<[1], [0], [0], [1], [0, 0, 1, 1], [], []>} : vector<4x256xbf16>, vector<256x256xbf16>, vector<4x256xf32> -> vector<4x256xf32>
    %57 = arith.addf %50, %56 : vector<4x256xf32>
    %c1_55 = arith.constant 1 : index
    %c2_56 = arith.constant 2 : index
    %c0_57 = arith.constant 0 : index
    %58 = vector.load %arg12[%c1_55, %c2_56, %c0_57] : memref<4x4x256xf32, #tpu.memory_space<vmem>>, vector<2x2x256xf32>
    %59 = vector.shape_cast %58 : vector<2x2x256xf32> to vector<4x256xf32>
    %60 = arith.truncf %59 : vector<4x256xf32> to vector<4x256xbf16>
    %c5 = arith.constant 5 : index
    %c0_58 = arith.constant 0 : index
    %c0_59 = arith.constant 0 : index
    %61 = vector.load %arg5[%c5, %c0_58, %c0_59] : memref<9x256x256xbf16, #tpu.memory_space<vmem>>, vector<1x256x256xbf16>
    %62 = vector.shape_cast %61 : vector<1x256x256xbf16> to vector<256x256xbf16>
    %cst_60 = arith.constant dense<0.000000e+00> : vector<4x256xf32>
    %63 = tpu.matmul %60, %62, %cst_60 {dimension_numbers = #tpu.dot_dimension_numbers<[1], [0], [0], [1], [0, 0, 1, 1], [], []>} : vector<4x256xbf16>, vector<256x256xbf16>, vector<4x256xf32> -> vector<4x256xf32>
    %64 = arith.addf %57, %63 : vector<4x256xf32>
    %c2_61 = arith.constant 2 : index
    %c0_62 = arith.constant 0 : index
    %c0_63 = arith.constant 0 : index
    %65 = vector.load %arg12[%c2_61, %c0_62, %c0_63] : memref<4x4x256xf32, #tpu.memory_space<vmem>>, vector<2x2x256xf32>
    %66 = vector.shape_cast %65 : vector<2x2x256xf32> to vector<4x256xf32>
    %67 = arith.truncf %66 : vector<4x256xf32> to vector<4x256xbf16>
    %c6 = arith.constant 6 : index
    %c0_64 = arith.constant 0 : index
    %c0_65 = arith.constant 0 : index
    %68 = vector.load %arg5[%c6, %c0_64, %c0_65] : memref<9x256x256xbf16, #tpu.memory_space<vmem>>, vector<1x256x256xbf16>
    %69 = vector.shape_cast %68 : vector<1x256x256xbf16> to vector<256x256xbf16>
    %cst_66 = arith.constant dense<0.000000e+00> : vector<4x256xf32>
    %70 = tpu.matmul %67, %69, %cst_66 {dimension_numbers = #tpu.dot_dimension_numbers<[1], [0], [0], [1], [0, 0, 1, 1], [], []>} : vector<4x256xbf16>, vector<256x256xbf16>, vector<4x256xf32> -> vector<4x256xf32>
    %71 = arith.addf %64, %70 : vector<4x256xf32>
    %c2_67 = arith.constant 2 : index
    %c1_68 = arith.constant 1 : index
    %c0_69 = arith.constant 0 : index
    %72 = vector.load %arg12[%c2_67, %c1_68, %c0_69] : memref<4x4x256xf32, #tpu.memory_space<vmem>>, vector<2x2x256xf32>
    %73 = vector.shape_cast %72 : vector<2x2x256xf32> to vector<4x256xf32>
    %74 = arith.truncf %73 : vector<4x256xf32> to vector<4x256xbf16>
    %c7 = arith.constant 7 : index
    %c0_70 = arith.constant 0 : index
    %c0_71 = arith.constant 0 : index
    %75 = vector.load %arg5[%c7, %c0_70, %c0_71] : memref<9x256x256xbf16, #tpu.memory_space<vmem>>, vector<1x256x256xbf16>
    %76 = vector.shape_cast %75 : vector<1x256x256xbf16> to vector<256x256xbf16>
    %cst_72 = arith.constant dense<0.000000e+00> : vector<4x256xf32>
    %77 = tpu.matmul %74, %76, %cst_72 {dimension_numbers = #tpu.dot_dimension_numbers<[1], [0], [0], [1], [0, 0, 1, 1], [], []>} : vector<4x256xbf16>, vector<256x256xbf16>, vector<4x256xf32> -> vector<4x256xf32>
    %78 = arith.addf %71, %77 : vector<4x256xf32>
    %c2_73 = arith.constant 2 : index
    %c2_74 = arith.constant 2 : index
    %c0_75 = arith.constant 0 : index
    %79 = vector.load %arg12[%c2_73, %c2_74, %c0_75] : memref<4x4x256xf32, #tpu.memory_space<vmem>>, vector<2x2x256xf32>
    %80 = vector.shape_cast %79 : vector<2x2x256xf32> to vector<4x256xf32>
    %81 = arith.truncf %80 : vector<4x256xf32> to vector<4x256xbf16>
    %c8 = arith.constant 8 : index
    %c0_76 = arith.constant 0 : index
    %c0_77 = arith.constant 0 : index
    %82 = vector.load %arg5[%c8, %c0_76, %c0_77] : memref<9x256x256xbf16, #tpu.memory_space<vmem>>, vector<1x256x256xbf16>
    %83 = vector.shape_cast %82 : vector<1x256x256xbf16> to vector<256x256xbf16>
    %cst_78 = arith.constant dense<0.000000e+00> : vector<4x256xf32>
    %84 = tpu.matmul %81, %83, %cst_78 {dimension_numbers = #tpu.dot_dimension_numbers<[1], [0], [0], [1], [0, 0, 1, 1], [], []>} : vector<4x256xbf16>, vector<256x256xbf16>, vector<4x256xf32> -> vector<4x256xf32>
    %85 = arith.addf %78, %84 : vector<4x256xf32>
    %cst_79 = arith.constant 0.000000e+00 : f32
    %86 = vector.broadcast %cst_79 : f32 to vector<4x256xf32>
    %87 = arith.maximumf %85, %86 : vector<4x256xf32>
    %cst_80 = arith.constant dense<0.000000e+00> : vector<256xf32>
    %88 = vector.multi_reduction <add>, %87, %cst_80 [0] : vector<4x256xf32> to vector<256xf32>
    %89 = vector.shape_cast %88 : vector<256xf32> to vector<1x256xf32>
    %cst_81 = arith.constant 4.000000e+00 : f32
    %90 = vector.broadcast %cst_81 : f32 to vector<1x256xf32>
    %91 = arith.divf %89, %90 : vector<1x256xf32>
    %92 = arith.truncf %91 : vector<1x256xf32> to vector<1x256xbf16>
    %c0_82 = arith.constant 0 : index
    %c0_83 = arith.constant 0 : index
    %93 = vector.load %arg9[%c0_82, %c0_83] : memref<256x128xbf16, #tpu.memory_space<vmem>>, vector<256x128xbf16>
    %cst_84 = arith.constant dense<0.000000e+00> : vector<1x128xf32>
    %94 = tpu.matmul %92, %93, %cst_84 {dimension_numbers = #tpu.dot_dimension_numbers<[1], [0], [0], [1], [0, 0, 1, 1], [], []>} : vector<1x256xbf16>, vector<256x128xbf16>, vector<1x128xf32> -> vector<1x128xf32>
    %c0_85 = arith.constant 0 : index
    %c0_86 = arith.constant 0 : index
    %95 = vector.load %arg10[%c0_85, %c0_86] : memref<1x128xf32, #tpu.memory_space<vmem>>, vector<1x128xf32>
    %96 = arith.addf %94, %95 : vector<1x128xf32>
    %97 = arith.mulf %96, %96 : vector<1x128xf32>
    %cst_87 = arith.constant dense<0.000000e+00> : vector<1xf32>
    %98 = vector.multi_reduction <add>, %97, %cst_87 [1] : vector<1x128xf32> to vector<1xf32>
    %99 = vector.shape_cast %98 : vector<1xf32> to vector<1x1xf32>
    %cst_88 = arith.constant 1.000000e-24 : f32
    %100 = vector.broadcast %cst_88 : f32 to vector<1x1xf32>
    %101 = arith.maximumf %99, %100 : vector<1x1xf32>
    %102 = math.rsqrt %101 : vector<1x1xf32>
    %103 = vector.broadcast %102 : vector<1x1xf32> to vector<1x128xf32>
    %104 = arith.mulf %96, %103 : vector<1x128xf32>
    %c0_89 = arith.constant 0 : index
    %c0_90 = arith.constant 0 : index
    %c0_91 = arith.constant 0 : index
    %105 = vector.load %arg11[%c0_89, %c0_90, %c0_91] : memref<1x1x128xf32, #tpu.memory_space<vmem>>, vector<1x1x128xf32>
    %106 = vector.shape_cast %105 : vector<1x1x128xf32> to vector<1x128xf32>
    %107 = vector.shape_cast %104 : vector<1x128xf32> to vector<1x1x128xf32>
    tpu.vector_store %arg11[%c0_89, %c0_90, %c0_91], %107 {strides = array<i32>} : memref<1x1x128xf32, #tpu.memory_space<vmem>>, vector<1x1x128xf32>,
    return
  }
  func.func @transform_0(%arg0: i32) -> (i32, i32, i32) {
    %c0_i32 = arith.constant 0 : i32
    %c0_i32_0 = arith.constant 0 : i32
    %c0_i32_1 = arith.constant 0 : i32
    return %arg0, %c0_i32, %c0_i32_0 : i32, i32, i32
  }
  func.func @transform_1(%arg0: i32) -> (i32, i32, i32) {
    %c0_i32 = arith.constant 0 : i32
    %c0_i32_0 = arith.constant 0 : i32
    %c0_i32_1 = arith.constant 0 : i32
    return %arg0, %c0_i32, %c0_i32_0 : i32, i32, i32
  }
  func.func @transform_2(%arg0: i32) -> (i32, i32) {
    %c0_i32 = arith.constant 0 : i32
    %c0_i32_0 = arith.constant 0 : i32
    %c0_i32_1 = arith.constant 0 : i32
    return %c0_i32, %c0_i32_0 : i32, i32
  }
  func.func @transform_3(%arg0: i32) -> (i32, i32) {
    %c0_i32 = arith.constant 0 : i32
    %c0_i32_0 = arith.constant 0 : i32
    %c0_i32_1 = arith.constant 0 : i32
    return %c0_i32, %c0_i32_0 : i32, i32
  }
  func.func @transform_4(%arg0: i32) -> (i32, i32, i32) {
    %c0_i32 = arith.constant 0 : i32
    %c0_i32_0 = arith.constant 0 : i32
    %c0_i32_1 = arith.constant 0 : i32
    %c0_i32_2 = arith.constant 0 : i32
    return %c0_i32, %c0_i32_0, %c0_i32_1 : i32, i32, i32
  }
  func.func @transform_5(%arg0: i32) -> (i32, i32) {
    %c0_i32 = arith.constant 0 : i32
    %c0_i32_0 = arith.constant 0 : i32
    %c0_i32_1 = arith.constant 0 : i32
    return %c0_i32, %c0_i32_0 : i32, i32
  }
  func.func @transform_6(%arg0: i32) -> (i32, i32) {
    %c0_i32 = arith.constant 0 : i32
    %c0_i32_0 = arith.constant 0 : i32
    %c0_i32_1 = arith.constant 0 : i32
    return %c0_i32, %c0_i32_0 : i32, i32
  }
  func.func @transform_7(%arg0: i32) -> (i32, i32) {
    %c0_i32 = arith.constant 0 : i32
    %c0_i32_0 = arith.constant 0 : i32
    %c0_i32_1 = arith.constant 0 : i32
    return %c0_i32, %c0_i32_0 : i32, i32
  }
  func.func @transform_8(%arg0: i32) -> (i32, i32) {
    %c0_i32 = arith.constant 0 : i32
    %c0_i32_0 = arith.constant 0 : i32
    %c0_i32_1 = arith.constant 0 : i32
    return %c0_i32, %c0_i32_0 : i32, i32
  }
  func.func @transform_9(%arg0: i32) -> (i32, i32) {
    %c0_i32 = arith.constant 0 : i32
    %c0_i32_0 = arith.constant 0 : i32
    %c0_i32_1 = arith.constant 0 : i32
    return %c0_i32, %c0_i32_0 : i32, i32
  }
  func.func @transform_10(%arg0: i32) -> (i32, i32, i32) {
    %c0_i32 = arith.constant 0 : i32
    %c0_i32_0 = arith.constant 0 : i32
    %c0_i32_1 = arith.constant 0 : i32
    return %arg0, %c0_i32, %c0_i32_0 : i32, i32, i32
  }
}

</mosaic_0001>

<llo_original>
// kernel: encoder_forward.3
$region0: #{encoder_forward.3}
  #allocation0 [shape = 'u32[]', space=smem, size = 0x4, offset = 0x4, fixed_abs, tag = 'smem constant byte address 0x4 - core index']
  #allocation1 [shape = 'u32[144,128]{1,0:T(1,128)}', space=vmem, size = 0x12000, scoped, tag = 'internal scratch']
  #allocation2 [shape = 'f32[10,10,128]{2,1,0:T(8,128)}', space=vmem, size = 0x14000, scoped, tag = 'scratch operand']
  %s0 = inlined_call_operand.vmem [shape: bf16[2,64,72], index: 0, kind: input, shape index: {}]
  %s1 = inlined_call_operand.vmem [shape: bf16[2,64,8], index: 1, kind: input, shape index: {}]
  %s2 = inlined_call_operand.vmem [shape: bf16[72,128], index: 2, kind: input, shape index: {}]
  %s3 = inlined_call_operand.vmem [shape: f32[1,128], index: 3, kind: input, shape index: {}]
  %s4 = inlined_call_operand.vmem [shape: bf16[9,128,128], index: 4, kind: input, shape index: {}]
  %s5 = inlined_call_operand.vmem [shape: f32[1,128], index: 5, kind: input, shape index: {}]
  %s6 = inlined_call_operand.vmem [shape: bf16[8,128], index: 6, kind: input, shape index: {}]
  %s7 = inlined_call_operand.vmem [shape: f32[1,128], index: 7, kind: input, shape index: {}]
  %s8 = inlined_call_operand.vmem [shape: bf16[2,64,128], index: 8, kind: output, shape index: {}]
  %s9 = sld [smem:[#allocation0]]
  $region65: #{encoder_forward.3} parent=0
    _
  %s11 = ssub.s32 1, %s9
  %s12 = scalar_select 0, %s11, %s9
  loop: start=0, step=1, limit=4
  $region2: #{encoder_forward.3} parent=0 // loop_pre_header
    _
  $region3: #{encoder_forward.3} parent=0 // loop_header
    %s14 = sphi 0, %s18
    %p15 = scmp.ge.s32.totalorder %s14, 4
    %s24 = sphi 0, %s26
    %s27 = sphi 0, %s24
    %s28 = sphi 0, %s27
    %s44 = sphi 0, %s28
    %s50 = sphi 0, %s52
    %s53 = sphi 0, %s50
    %s54 = sphi 0, %s53
    %s70 = sphi 0, %s54
    %s74 = sphi 0, %s74
    %s76 = sphi 0, %s74
    %s77 = sphi 0, %s76
    %s91 = sphi 0, %s77
    %s95 = sphi 0, %s95
    %s97 = sphi 0, %s95
    %s98 = sphi 0, %s97
    %s112 = sphi 0, %s98
    %s116 = sphi 0, %s116
    %s118 = sphi 0, %s116
    %s119 = sphi 0, %s118
    %s133 = sphi 0, %s119
    %s137 = sphi 0, %s137
    %s139 = sphi 0, %s137
    %s140 = sphi 0, %s139
    %s154 = sphi 0, %s140
    %s158 = sphi 0, %s158
    %s160 = sphi 0, %s158
    %s161 = sphi 0, %s160
    %s175 = sphi 0, %s161
    %s179 = sphi 0, %s179
    %s181 = sphi 0, %s179
    %s182 = sphi 0, %s181
    %s196 = sphi 0, %s182
    %s202 = sphi 0, %s204
    %s205 = sphi 0, %s202
    %s206 = sphi 0, %s205
    %s222 = sphi 0, %s206
  $region4: #{encoder_forward.3} parent=0 // loop_header_branch
    %17 = sbr.rel (%p15) target = $region8
  $region5: #{encoder_forward.3} parent=0 // loop_body
    %s19 = ssub.s32 %s14, 1
    %s20 = ssub.s32 %s14, 2
    %s21 = sadd.s32 %s14, 1
    %s22 = ssub.s32 %s14, %s21
    %p23 = scmp.eq.s32.totalorder %s22, 0
    %s25 = sadd.s32 %s24, 1
    %s26 = scalar_select %p23, %s24, %s25
    %p29 = pneg %p23
    %p30 = scmp.eq.s32.totalorder %s14, 1
    %p31 = por %p29, %p30
    %p32 = scmp.ne.s32.totalorder %s24, %s27
    %p33 = scmp.eq.s32.totalorder %s14, 0
    %p34 = por %p32, %p33
    %p35 = scmp.ne.s32.totalorder %s24, %s27
    %p36 = scmp.eq.s32.totalorder %s19, 1
    %p37 = por %p35, %p36
    %p38 = scmp.ne.s32.totalorder %s27, %s28
    %p39 = scmp.eq.s32.totalorder %s19, 0
    %p40 = por %p38, %p39
    %p41 = scmp.ne.s32.totalorder %s27, %s28
    %p42 = scmp.eq.s32.totalorder %s20, 1
    %p43 = por %p41, %p42
    %p45 = scmp.ne.s32.totalorder %s28, %s44
    %p46 = scmp.eq.s32.totalorder %s20, 0
    %p47 = por %p45, %p46
    %s48 = ssub.s32 %s14, %s21
    %p49 = scmp.eq.s32.totalorder %s48, 0
    %s51 = sadd.s32 %s50, 1
    %s52 = scalar_select %p49, %s50, %s51
    %p55 = pneg %p49
    %p56 = scmp.eq.s32.totalorder %s14, 1
    %p57 = por %p55, %p56
    %p58 = scmp.ne.s32.totalorder %s50, %s53
    %p59 = scmp.eq.s32.totalorder %s14, 0
    %p60 = por %p58, %p59
    %p61 = scmp.ne.s32.totalorder %s50, %s53
    %p62 = scmp.eq.s32.totalorder %s19, 1
    %p63 = por %p61, %p62
    %p64 = scmp.ne.s32.totalorder %s53, %s54
    %p65 = scmp.eq.s32.totalorder %s19, 0
    %p66 = por %p64, %p65
    %p67 = scmp.ne.s32.totalorder %s53, %s54
    %p68 = scmp.eq.s32.totalorder %s20, 1
    %p69 = por %p67, %p68
    %p71 = scmp.ne.s32.totalorder %s54, %s70
    %p72 = scmp.eq.s32.totalorder %s20, 0
    %p73 = por %p71, %p72
    %s75 = sadd.s32 %s74, 1
    %p78 = scmp.eq.s32.totalorder %s14, 1
    %p79 = scmp.ne.s32.totalorder %s74, %s76
    %p80 = scmp.eq.s32.totalorder %s14, 0
    %p81 = por %p79, %p80
    %p82 = scmp.ne.s32.totalorder %s74, %s76
    %p83 = scmp.eq.s32.totalorder %s19, 1
    %p84 = por %p82, %p83
    %p85 = scmp.ne.s32.totalorder %s76, %s77
    %p86 = scmp.eq.s32.totalorder %s19, 0
    %p87 = por %p85, %p86
    %p88 = scmp.ne.s32.totalorder %s76, %s77
    %p89 = scmp.eq.s32.totalorder %s20, 1
    %p90 = por %p88, %p89
    %p92 = scmp.ne.s32.totalorder %s77, %s91
    %p93 = scmp.eq.s32.totalorder %s20, 0
    %p94 = por %p92, %p93
    %s96 = sadd.s32 %s95, 1
    %p99 = scmp.eq.s32.totalorder %s14, 1
    %p100 = scmp.ne.s32.totalorder %s95, %s97
    %p101 = scmp.eq.s32.totalorder %s14, 0
    %p102 = por %p100, %p101
    %p103 = scmp.ne.s32.totalorder %s95, %s97
    %p104 = scmp.eq.s32.totalorder %s19, 1
    %p105 = por %p103, %p104
    %p106 = scmp.ne.s32.totalorder %s97, %s98
    %p107 = scmp.eq.s32.totalorder %s19, 0
    %p108 = por %p106, %p107
    %p109 = scmp.ne.s32.totalorder %s97, %s98
    %p110 = scmp.eq.s32.totalorder %s20, 1
    %p111 = por %p109, %p110
    %p113 = scmp.ne.s32.totalorder %s98, %s112
    %p114 = scmp.eq.s32.totalorder %s20, 0
    %p115 = por %p113, %p114
    %s117 = sadd.s32 %s116, 1
    %p120 = scmp.eq.s32.totalorder %s14, 1
    %p121 = scmp.ne.s32.totalorder %s116, %s118
    %p122 = scmp.eq.s32.totalorder %s14, 0
    %p123 = por %p121, %p122
    %p124 = scmp.ne.s32.totalorder %s116, %s118
    %p125 = scmp.eq.s32.totalorder %s19, 1
    %p126 = por %p124, %p125
    %p127 = scmp.ne.s32.totalorder %s118, %s119
    %p128 = scmp.eq.s32.totalorder %s19, 0
    %p129 = por %p127, %p128
    %p130 = scmp.ne.s32.totalorder %s118, %s119
    %p131 = scmp.eq.s32.totalorder %s20, 1
    %p132 = por %p130, %p131
    %p134 = scmp.ne.s32.totalorder %s119, %s133
    %p135 = scmp.eq.s32.totalorder %s20, 0
    %p136 = por %p134, %p135
    %s138 = sadd.s32 %s137, 1
    %p141 = scmp.eq.s32.totalorder %s14, 1
    %p142 = scmp.ne.s32.totalorder %s137, %s139
    %p143 = scmp.eq.s32.totalorder %s14, 0
    %p144 = por %p142, %p143
    %p145 = scmp.ne.s32.totalorder %s137, %s139
    %p146 = scmp.eq.s32.totalorder %s19, 1
    %p147 = por %p145, %p146
    %p148 = scmp.ne.s32.totalorder %s139, %s140
    %p149 = scmp.eq.s32.totalorder %s19, 0
    %p150 = por %p148, %p149
    %p151 = scmp.ne.s32.totalorder %s139, %s140
    %p152 = scmp.eq.s32.totalorder %s20, 1
    %p153 = por %p151, %p152
    %p155 = scmp.ne.s32.totalorder %s140, %s154
    %p156 = scmp.eq.s32.totalorder %s20, 0
    %p157 = por %p155, %p156
    %s159 = sadd.s32 %s158, 1
    %p162 = scmp.eq.s32.totalorder %s14, 1
    %p163 = scmp.ne.s32.totalorder %s158, %s160
    %p164 = scmp.eq.s32.totalorder %s14, 0
    %p165 = por %p163, %p164
    %p166 = scmp.ne.s32.totalorder %s158, %s160
    %p167 = scmp.eq.s32.totalorder %s19, 1
    %p168 = por %p166, %p167
    %p169 = scmp.ne.s32.totalorder %s160, %s161
    %p170 = scmp.eq.s32.totalorder %s19, 0
    %p171 = por %p169, %p170
    %p172 = scmp.ne.s32.totalorder %s160, %s161
    %p173 = scmp.eq.s32.totalorder %s20, 1
    %p174 = por %p172, %p173
    %p176 = scmp.ne.s32.totalorder %s161, %s175
    %p177 = scmp.eq.s32.totalorder %s20, 0
    %p178 = por %p176, %p177
    %s180 = sadd.s32 %s179, 1
    %p183 = scmp.eq.s32.totalorder %s14, 1
    %p184 = scmp.ne.s32.totalorder %s179, %s181
    %p185 = scmp.eq.s32.totalorder %s14, 0
    %p186 = por %p184, %p185
    %p187 = scmp.ne.s32.totalorder %s179, %s181
    %p188 = scmp.eq.s32.totalorder %s19, 1
    %p189 = por %p187, %p188
    %p190 = scmp.ne.s32.totalorder %s181, %s182
    %p191 = scmp.eq.s32.totalorder %s19, 0
    %p192 = por %p190, %p191
    %p193 = scmp.ne.s32.totalorder %s181, %s182
    %p194 = scmp.eq.s32.totalorder %s20, 1
    %p195 = por %p193, %p194
    %p197 = scmp.ne.s32.totalorder %s182, %s196
    %p198 = scmp.eq.s32.totalorder %s20, 0
    %p199 = por %p197, %p198
    %s200 = ssub.s32 %s14, %s21
    %p201 = scmp.eq.s32.totalorder %s200, 0
    %s203 = sadd.s32 %s202, 1
    %s204 = scalar_select %p201, %s202, %s203
    %p207 = pneg %p201
    %p208 = scmp.eq.s32.totalorder %s14, 1
    %p209 = por %p207, %p208
    %p210 = scmp.ne.s32.totalorder %s202, %s205
    %p211 = scmp.eq.s32.totalorder %s14, 0
    %p212 = por %p210, %p211
    %p213 = scmp.ne.s32.totalorder %s202, %s205
    %p214 = scmp.eq.s32.totalorder %s19, 1
    %p215 = por %p213, %p214
    %p216 = scmp.ne.s32.totalorder %s205, %s206
    %p217 = scmp.eq.s32.totalorder %s19, 0
    %p218 = por %p216, %p217
    %p219 = scmp.ne.s32.totalorder %s205, %s206
    %p220 = scmp.eq.s32.totalorder %s20, 1
    %p221 = por %p219, %p220
    %p223 = scmp.ne.s32.totalorder %s206, %s222
    %p224 = scmp.eq.s32.totalorder %s20, 0
    %p225 = por %p223, %p224
    %p226 = scmp.le.s32.totalorder 1, %s14
    %p227 = scmp.lt.s32.totalorder %s14, 3
    %p228 = pnand %p226, %p227
    %p229 = pneg %p228
    // Predicated region
    $region9: #{encoder_forward.3} parent=5 // pred_check
      _
    $region10: #{encoder_forward.3} parent=5 // pred_check_branch
      %231 = sbr.rel (%p228) target = $region12
    $region11: #{encoder_forward.3} parent=5 // pred_region
      %s232 = ssub.s32 %s14, 1
      // Predicated region
      $region13: #{encoder_forward.3} parent=11 // pred_check
        %p233 = pneg %p87
      $region14: #{encoder_forward.3} parent=11 // pred_check_branch
        %235 = sbr.rel (%p233) target = $region16
      $region15: #{encoder_forward.3} parent=11 // pred_region
        _
      $region16: #{encoder_forward.3} parent=11 // pred_fallthru
        _
      // Predicated region
      $region17: #{encoder_forward.3} parent=11 // pred_check
        %p236 = pneg %p108
      $region18: #{encoder_forward.3} parent=11 // pred_check_branch
        %238 = sbr.rel (%p236) target = $region20
      $region19: #{encoder_forward.3} parent=11 // pred_region
        _
      $region20: #{encoder_forward.3} parent=11 // pred_fallthru
        _
      // Predicated region
      $region21: #{encoder_forward.3} parent=11 // pred_check
        %p239 = pneg %p129
      $region22: #{encoder_forward.3} parent=11 // pred_check_branch
        %241 = sbr.rel (%p239) target = $region24
      $region23: #{encoder_forward.3} parent=11 // pred_region
        _
      $region24: #{encoder_forward.3} parent=11 // pred_fallthru
        _
      // Predicated region
      $region25: #{encoder_forward.3} parent=11 // pred_check
        %p242 = pneg %p150
      $region26: #{encoder_forward.3} parent=11 // pred_check_branch
        %244 = sbr.rel (%p242) target = $region28
      $region27: #{encoder_forward.3} parent=11 // pred_region
        _
      $region28: #{encoder_forward.3} parent=11 // pred_fallthru
        _
      // Predicated region
      $region29: #{encoder_forward.3} parent=11 // pred_check
        %p245 = pneg %p171
      $region30: #{encoder_forward.3} parent=11 // pred_check_branch
        %247 = sbr.rel (%p245) target = $region32
      $region31: #{encoder_forward.3} parent=11 // pred_region
        _
      $region32: #{encoder_forward.3} parent=11 // pred_fallthru
        _
      // Predicated region
      $region33: #{encoder_forward.3} parent=11 // pred_check
        %p248 = pneg %p192
      $region34: #{encoder_forward.3} parent=11 // pred_check_branch
        %250 = sbr.rel (%p248) target = $region36
      $region35: #{encoder_forward.3} parent=11 // pred_region
        _
      $region36: #{encoder_forward.3} parent=11 // pred_fallthru
        _
    $region12: #{encoder_forward.3} parent=5 // pred_fallthru
      _
    %p251 = scmp.lt.s32.totalorder %s14, 2
    // Predicated region
    $region37: #{encoder_forward.3} parent=5 // pred_check
      %p252 = pneg %p251
    $region38: #{encoder_forward.3} parent=5 // pred_check_branch
      %254 = sbr.rel (%p252) target = $region40
    $region39: #{encoder_forward.3} parent=5 // pred_region
      // Predicated region
      $region41: #{encoder_forward.3} parent=39 // pred_check
        %p255 = pneg %p34
      $region42: #{encoder_forward.3} parent=39 // pred_check_branch
        %257 = sbr.rel (%p255) target = $region44
      $region43: #{encoder_forward.3} parent=39 // pred_region
        %p258 = scmp.lt.s32.totalorder %s14, 1
        %s259 = scalar_select %p258, %s14, 1
        %s260 = smul.addr %s259, 8
        %s261 = smul.addr %s260, 4
        %s262 = scalar_lea.vmem %s0, %s261
      $region44: #{encoder_forward.3} parent=39 // pred_fallthru
        _
      // Predicated region
      $region45: #{encoder_forward.3} parent=39 // pred_check
        %p263 = pneg %p60
      $region46: #{encoder_forward.3} parent=39 // pred_check_branch
        %265 = sbr.rel (%p263) target = $region48
      $region47: #{encoder_forward.3} parent=39 // pred_region
        %p266 = scmp.lt.s32.totalorder %s14, 1
        %s267 = scalar_select %p266, %s14, 1
        %s268 = smul.addr %s267, 8
        %s269 = smul.addr %s268, 4
        %s270 = scalar_lea.vmem %s1, %s269
      $region48: #{encoder_forward.3} parent=39 // pred_fallthru
        _
    $region40: #{encoder_forward.3} parent=5 // pred_fallthru
      _
    %p271 = scmp.le.s32.totalorder 1, %s14
    %p272 = scmp.lt.s32.totalorder %s14, 3
    %p273 = pnand %p271, %p272
    %p274 = pneg %p273
    // Predicated region
    $region49: #{encoder_forward.3} parent=5 // pred_check
      _
    $region50: #{encoder_forward.3} parent=5 // pred_check_branch
      %276 = sbr.rel (%p273) target = $region52
    $region51: #{encoder_forward.3} parent=5 // pred_region
      %s277 = ssub.s32 %s14, 1
      %p278 = scmp.lt.s32.totalorder %s19, 1
      %s279 = scalar_select %p278, %s19, 1
      %s280 = smul.addr %s279, 8
      %s281 = smul.addr %s280, 4
      %s282 = scalar_lea.vmem %s0, %s281
      %p283 = pneg %p40
      %p284 = pneg %p37
      %p285 = scmp.lt.s32.totalorder %s19, 1
      %s286 = scalar_select %p285, %s19, 1
      %s287 = smul.addr %s286, 8
      %s288 = smul.addr %s287, 4
      %s289 = scalar_lea.vmem %s1, %s288
      %p290 = pneg %p66
      %p291 = pneg %p63
      %p292 = pneg %p87
      %p293 = pneg %p84
      %p294 = pneg %p108
      %p295 = pneg %p105
      %p296 = pneg %p129
      %p297 = pneg %p126
      %p298 = pneg %p150
      %p299 = pneg %p147
      %p300 = pneg %p171
      %p301 = pneg %p168
      %p302 = pneg %p192
      %p303 = pneg %p189
      %p304 = pneg %p218
      %p305 = pneg %p215
      %p306 = scmp.lt.s32.totalorder %s19, 1
      %s307 = scalar_select %p306, %s19, 1
      %s308 = smul.addr %s307, 8
      %s309 = smul.addr %s308, 4
      %s310 = scalar_lea.vmem %s8, %s309
      %p311 = scmp.lt.s32.totalorder %s19, 1
      %s312 = scalar_select %p311, %s19, 1
      %s313 = smul.addr %s312, 8
      %s314 = smul.addr %s313, 4
      %s315 = scalar_lea.vmem %s0, %s314
      %p316 = scmp.lt.s32.totalorder %s19, 1
      %s317 = scalar_select %p316, %s19, 1
      %s318 = smul.addr %s317, 8
      %s319 = smul.addr %s318, 4
      %s320 = scalar_lea.vmem %s1, %s319
      %p321 = scmp.lt.s32.totalorder %s19, 1
      %s322 = scalar_select %p321, %s19, 1
      %s323 = smul.addr %s322, 8
      %s324 = smul.addr %s323, 4
      %s325 = scalar_lea.vmem %s8, %s324
      %v327 = vld [vmem:[%s315] sm:$0xf]
      %v328 = vld [vmem:[%s315 + $0x4] sm:$0xf]
      %v329 = vld [vmem:[%s315 + $0x8] sm:$0xf]
      %v330 = vld [vmem:[%s315 + $0xc] sm:$0xf]
      %v331 = vld [vmem:[%s315 + $0x10] sm:$0xf]
      %v332 = vld [vmem:[%s315 + $0x14] sm:$0xf]
      %v333 = vld [vmem:[%s315 + $0x18] sm:$0xf]
      %v334 = vld [vmem:[%s315 + $0x1c] sm:$0xf]
      %v335 = vld [vmem:[%s2] sm:$0xf]
      %v336 = vld [vmem:[%s2 + $0x4] sm:$0xf]
      %v337 = vld [vmem:[%s2 + $0x8] sm:$0xf]
      %v338 = vld [vmem:[%s2 + $0xc] sm:$0xf]
      %v339 = vld [vmem:[%s2 + $0x10] sm:$0xf]
      %v340 = vld [vmem:[%s2 + $0x14] sm:$0xf]
      %v341 = vld [vmem:[%s2 + $0x18] sm:$0xf]
      %v342 = vld [vmem:[%s2 + $0x1c] sm:$0xf]
      %v343 = vld [vmem:[%s2 + $0x20] sm:$0xf]
      %v344 = vld [vmem:[%s3] sm:$0x1]
      %v346 = vlaneseq
      %v347 = vshrl.u32 %v346, 7
      %v348 = vsub.s32 0, %v347
      %v349 = vrot.slane %v344, %v348
      %v359 = vunpack.c.l.b16 %v327
      %v360 = vunpack.c.l.b16 %v328
      %v361 = vunpack.c.l.b16 %v329
      %v362 = vunpack.c.l.b16 %v330
      %v363 = vunpack.c.l.b16 %v331
      %v364 = vunpack.c.l.b16 %v332
      %v365 = vunpack.c.l.b16 %v333
      %v366 = vunpack.c.l.b16 %v334
      %v367 = vpack.c.b16 %v360, %v359
      %v368 = vpack.c.b16 %v362, %v361
      %v369 = vpack.c.b16 %v364, %v363
      %v370 = vpack.c.b16 %v366, %v365
      %v380 = vunpack.c.l.b16 %v335
      %v381 = vunpack.c.l.b16 %v336
      %v382 = vunpack.c.l.b16 %v337
      %v383 = vunpack.c.l.b16 %v338
      %v384 = vunpack.c.l.b16 %v339
      %v385 = vunpack.c.l.b16 %v340
      %v386 = vunpack.c.l.b16 %v341
      %v387 = vunpack.c.l.b16 %v342
      %v388 = vunpack.c.l.b16 %v343
      %v389 = vpack.c.b16 %v381, %v380
      %v390 = vpack.c.b16 %v383, %v382
      %v391 = vpack.c.b16 %v385, %v384
      %v392 = vpack.c.b16 %v387, %v386
      %v393 = vpack.c.b16 %v388, %v388
      %vm398 = vcmask 588800
      %v400 = vsel %vm398, %v367, 0
      %v403 = vsel %vm398, %v368, 0
      %v406 = vsel %vm398, %v369, 0
      %v409 = vsel %vm398, %v370, 0
      %vm411 = vcmask 1043456
      %v413 = vsel %vm411, %v393, 0
      %415 = vmatprep.subr.bf16.mxu0 0
      %416 = vmatpush1.bf16.msra.mxu0 %v389
      %417 = vmatprep.subr.bf16.mxu0 0
      %418 = vmatpush1.bf16.msra.mxu0 %v390
      %419 = vmatprep.subr.bf16.mxu0 0
      %420 = vmatpush1.bf16.msra.mxu0 %v391
      %421 = vmatprep.subr.bf16.mxu0 0
      %422 = vmatpush1.bf16.msra.mxu0 %v392
      %423 = vmatprep.subr.bf16.mxu0 0
      %424 = vmatpush1.bf16.msra.mxu0 %v413
      %425 = vmatprep.subr.bf16.mxu0 0
      %426 = vmatpush1.bf16.msra.mxu0 0
      %427 = vmatprep.subr.bf16.mxu0 0
      %428 = vmatpush1.bf16.msra.mxu0 0
      %429 = vmatprep.subr.bf16.mxu0 0
      %430 = vmatpush1.bf16.msra.mxu0 0
      %431 = vmatprep.subr.bf16.mxu0 0
      %432 = vmatpush1.bf16.msra.mxu0 0
      %433 = vmatprep.subr.bf16.mxu0 0
      %434 = vmatpush1.bf16.msra.mxu0 0
      %435 = vmatprep.subr.bf16.mxu0 0
      %436 = vmatpush1.bf16.msra.mxu0 0
      %437 = vmatprep.subr.bf16.mxu0 0
      %438 = vmatpush1.bf16.msra.mxu0 0
      %439 = vmatprep.subr.bf16.mxu0 0
      %440 = vmatpush1.bf16.msra.mxu0 0
      %441 = vmatprep.subr.bf16.mxu0 0
      %442 = vmatpush1.bf16.msra.mxu0 0
      %443 = vmatprep.subr.bf16.mxu0 0
      %444 = vmatpush1.bf16.msra.mxu0 0
      %445 = vmatprep.subr.bf16.mxu0 0
      %446 = vmatpush1.bf16.msra.mxu0 0
      %447 = vmatprep.mubr.bf16.mxu0 0
      %448 = vmatmul.mubr.bf16.gmra.mrb[0].mxu0 %v400
      %v449 = vpop.f32.mrb[0].mxu0
      %v450 = vadd.f32 %v349, %v449
      %v451 = vpop.f32.mrb[0].mxu0
      %v452 = vpop.f32.mrb[0].mxu0
      %v453 = vadd.f32 %v349, %v452
      %v454 = vpop.f32.mrb[0].mxu0
      %455 = vmatprep.mubr.bf16.mxu0 0
      %456 = vmatmul.mubr.bf16.gmra.mrb[0].mxu0 %v403
      %v457 = vpop.f32.mrb[0].mxu0
      %v458 = vadd.f32 %v349, %v457
      %v459 = vpop.f32.mrb[0].mxu0
      %v460 = vpop.f32.mrb[0].mxu0
      %v461 = vadd.f32 %v349, %v460
      %v462 = vpop.f32.mrb[0].mxu0
      %463 = vmatprep.mubr.bf16.mxu0 0
      %464 = vmatmul.mubr.bf16.gmra.mrb[0].mxu0 %v406
      %v465 = vpop.f32.mrb[0].mxu0
      %v466 = vadd.f32 %v349, %v465
      %v467 = vpop.f32.mrb[0].mxu0
      %v468 = vpop.f32.mrb[0].mxu0
      %v469 = vadd.f32 %v349, %v468
      %v470 = vpop.f32.mrb[0].mxu0
      %471 = vmatprep.mubr.bf16.mxu0 0
      %472 = vmatmul.mubr.bf16.gmra.mrb[0].mxu0 %v409
      %v473 = vpop.f32.mrb[0].mxu0
      %v474 = vadd.f32 %v349, %v473
      %v475 = vpop.f32.mrb[0].mxu0
      %v476 = vpop.f32.mrb[0].mxu0
      %v477 = vadd.f32 %v349, %v476
      %v478 = vpop.f32.mrb[0].mxu0
      %479 = vdwg.mxu0
      %v480 = vmax.f32 %v450, 0.0
      %v481 = vmax.f32 %v453, 0.0
      %v482 = vmax.f32 %v458, 0.0
      %v483 = vmax.f32 %v461, 0.0
      %v484 = vmax.f32 %v466, 0.0
      %v485 = vmax.f32 %v469, 0.0
      %v486 = vmax.f32 %v474, 0.0
      %v487 = vmax.f32 %v477, 0.0
      %488 = vst [vmem:[#allocation2] sm:$0xff] 0.0
      %489 = vst [vmem:[#allocation2 + $0x8] sm:$0x3] 0.0
      %490 = vst [vmem:[#allocation2 + $0x10] sm:$0xff] 0.0
      %491 = vst [vmem:[#allocation2 + $0x18] sm:$0x3] 0.0
      %492 = vst [vmem:[#allocation2 + $0x20] sm:$0xff] 0.0
      %493 = vst [vmem:[#allocation2 + $0x28] sm:$0x3] 0.0
      %494 = vst [vmem:[#allocation2 + $0x30] sm:$0xff] 0.0
      %495 = vst [vmem:[#allocation2 + $0x38] sm:$0x3] 0.0
      %496 = vst [vmem:[#allocation2 + $0x40] sm:$0xff] 0.0
      %497 = vst [vmem:[#allocation2 + $0x48] sm:$0x3] 0.0
      %498 = vst [vmem:[#allocation2 + $0x50] sm:$0xff] 0.0
      %499 = vst [vmem:[#allocation2 + $0x58] sm:$0x3] 0.0
      %500 = vst [vmem:[#allocation2 + $0x60] sm:$0xff] 0.0
      %501 = vst [vmem:[#allocation2 + $0x68] sm:$0x3] 0.0
      %502 = vst [vmem:[#allocation2 + $0x70] sm:$0xff] 0.0
      %503 = vst [vmem:[#allocation2 + $0x78] sm:$0x3] 0.0
      %504 = vst [vmem:[#allocation2 + $0x80] sm:$0xff] 0.0
      %505 = vst [vmem:[#allocation2 + $0x88] sm:$0x3] 0.0
      %506 = vst [vmem:[#allocation2 + $0x90] sm:$0xff] 0.0
      %507 = vst [vmem:[#allocation2 + $0x98] sm:$0x3] 0.0
      %s508 = scalar_lea.vmem [#allocation2], 16
      %509 = vst [vmem:[%s508 + $0x1] sm:$0xff] %v480
      %510 = vst [vmem:[%s508 + $0x11] sm:$0xff] %v481
      %511 = vst [vmem:[%s508 + $0x21] sm:$0xff] %v482
      %512 = vst [vmem:[%s508 + $0x31] sm:$0xff] %v483
      %513 = vst [vmem:[%s508 + $0x41] sm:$0xff] %v484
      %514 = vst [vmem:[%s508 + $0x51] sm:$0xff] %v485
      %515 = vst [vmem:[%s508 + $0x61] sm:$0xff] %v486
      %516 = vst [vmem:[%s508 + $0x71] sm:$0xff] %v487
      %v517 = vld [vmem:[%s320] sm:$0xf]
      %v518 = vld [vmem:[%s320 + $0x4] sm:$0xf]
      %v519 = vld [vmem:[%s320 + $0x8] sm:$0xf]
      %v520 = vld [vmem:[%s320 + $0xc] sm:$0xf]
      %v521 = vld [vmem:[%s320 + $0x10] sm:$0xf]
      %v522 = vld [vmem:[%s320 + $0x14] sm:$0xf]
      %v523 = vld [vmem:[%s320 + $0x18] sm:$0xf]
      %v524 = vld [vmem:[%s320 + $0x1c] sm:$0xf]
      %v525 = vld [vmem:[%s6] sm:$0xf]
      %v526 = vld [vmem:[%s7] sm:$0x1]
      %v528 = vlaneseq
      %v529 = vshrl.u32 %v528, 7
      %v530 = vsub.s32 0, %v529
      %v531 = vrot.slane %v526, %v530
      %v541 = vunpack.c.l.b16 %v517
      %v542 = vunpack.c.l.b16 %v518
      %v543 = vunpack.c.l.b16 %v519
      %v544 = vunpack.c.l.b16 %v520
      %v545 = vunpack.c.l.b16 %v521
      %v546 = vunpack.c.l.b16 %v522
      %v547 = vunpack.c.l.b16 %v523
      %v548 = vunpack.c.l.b16 %v524
      %v549 = vpack.c.b16 %v542, %v541
      %v550 = vpack.c.b16 %v544, %v543
      %v551 = vpack.c.b16 %v546, %v545
      %v552 = vpack.c.b16 %v548, %v547
      %vm553 = vcmask 64512
      %v555 = vsel %vm553, %v549, 0
      %v558 = vsel %vm553, %v550, 0
      %v561 = vsel %vm553, %v551, 0
      %v564 = vsel %vm553, %v552, 0
      %v567 = vsel %vm411, %v525, 0
      %569 = vmatprep.subr.bf16.mxu0 0
      %570 = vmatpush1.bf16.msra.mxu0 %v567
      %571 = vmatprep.subr.bf16.mxu0 0
      %572 = vmatpush1.bf16.msra.mxu0 0
      %573 = vmatprep.subr.bf16.mxu0 0
      %574 = vmatpush1.bf16.msra.mxu0 0
      %575 = vmatprep.subr.bf16.mxu0 0
      %576 = vmatpush1.bf16.msra.mxu0 0
      %577 = vmatprep.subr.bf16.mxu0 0
      %578 = vmatpush1.bf16.msra.mxu0 0
      %579 = vmatprep.subr.bf16.mxu0 0
      %580 = vmatpush1.bf16.msra.mxu0 0
      %581 = vmatprep.subr.bf16.mxu0 0
      %582 = vmatpush1.bf16.msra.mxu0 0
      %583 = vmatprep.subr.bf16.mxu0 0
      %584 = vmatpush1.bf16.msra.mxu0 0
      %585 = vmatprep.subr.bf16.mxu0 0
      %586 = vmatpush1.bf16.msra.mxu0 0
      %587 = vmatprep.subr.bf16.mxu0 0
      %588 = vmatpush1.bf16.msra.mxu0 0
      %589 = vmatprep.subr.bf16.mxu0 0
      %590 = vmatpush1.bf16.msra.mxu0 0
      %591 = vmatprep.subr.bf16.mxu0 0
      %592 = vmatpush1.bf16.msra.mxu0 0
      %593 = vmatprep.subr.bf16.mxu0 0
      %594 = vmatpush1.bf16.msra.mxu0 0
      %595 = vmatprep.subr.bf16.mxu0 0
      %596 = vmatpush1.bf16.msra.mxu0 0
      %597 = vmatprep.subr.bf16.mxu0 0
      %598 = vmatpush1.bf16.msra.mxu0 0
      %599 = vmatprep.subr.bf16.mxu0 0
      %600 = vmatpush1.bf16.msra.mxu0 0
      %601 = vmatprep.mubr.bf16.mxu0 0
      %602 = vmatmul.mubr.bf16.gmra.mrb[0].mxu0 %v555
      %v603 = vpop.f32.mrb[0].mxu0
      %v604 = vadd.f32 %v531, %v603
      %v605 = vpop.f32.mrb[0].mxu0
      %v606 = vpop.f32.mrb[0].mxu0
      %v607 = vadd.f32 %v531, %v606
      %v608 = vpop.f32.mrb[0].mxu0
      %609 = vmatprep.mubr.bf16.mxu0 0
      %610 = vmatmul.mubr.bf16.gmra.mrb[0].mxu0 %v558
      %v611 = vpop.f32.mrb[0].mxu0
      %v612 = vadd.f32 %v531, %v611
      %v613 = vpop.f32.mrb[0].mxu0
      %v614 = vpop.f32.mrb[0].mxu0
      %v615 = vadd.f32 %v531, %v614
      %v616 = vpop.f32.mrb[0].mxu0
      %617 = vmatprep.mubr.bf16.mxu0 0
      %618 = vmatmul.mubr.bf16.gmra.mrb[0].mxu0 %v561
      %v619 = vpop.f32.mrb[0].mxu0
      %v620 = vadd.f32 %v531, %v619
      %v621 = vpop.f32.mrb[0].mxu0
      %v622 = vpop.f32.mrb[0].mxu0
      %v623 = vadd.f32 %v531, %v622
      %v624 = vpop.f32.mrb[0].mxu0
      %625 = vmatprep.mubr.bf16.mxu0 0
      %626 = vmatmul.mubr.bf16.gmra.mrb[0].mxu0 %v564
      %v627 = vpop.f32.mrb[0].mxu0
      %v628 = vadd.f32 %v531, %v627
      %v629 = vpop.f32.mrb[0].mxu0
      %v630 = vpop.f32.mrb[0].mxu0
      %v631 = vadd.f32 %v531, %v630
      %v632 = vpop.f32.mrb[0].mxu0
      %633 = vdwg.mxu0
      %v634 = vld [vmem:[%s5] sm:$0x1]
      %v636 = vlaneseq
      %v637 = vshrl.u32 %v636, 7
      %v638 = vsub.s32 0, %v637
      %v639 = vrot.slane %v634, %v638
      %v641 = vadd.f32 %v604, %v639
      %v642 = vadd.f32 %v607, %v639
      %v643 = vadd.f32 %v612, %v639
      %v644 = vadd.f32 %v615, %v639
      %v645 = vadd.f32 %v620, %v639
      %v646 = vadd.f32 %v623, %v639
      %v647 = vadd.f32 %v628, %v639
      %v648 = vadd.f32 %v631, %v639
      %v649 = vld [vmem:[#allocation2] sm:$0xff]
      %v650 = vld [vmem:[#allocation2 + $0x10] sm:$0xff]
      %v651 = vld [vmem:[#allocation2 + $0x20] sm:$0xff]
      %v652 = vld [vmem:[#allocation2 + $0x30] sm:$0xff]
      %v653 = vld [vmem:[#allocation2 + $0x40] sm:$0xff]
      %v654 = vld [vmem:[#allocation2 + $0x50] sm:$0xff]
      %v655 = vld [vmem:[#allocation2 + $0x60] sm:$0xff]
      %v656 = vld [vmem:[#allocation2 + $0x70] sm:$0xff]
      %v657 = vpack.c.bf16 %v650, %v649
      %v658 = vpack.c.bf16 %v652, %v651
      %v659 = vpack.c.bf16 %v654, %v653
      %v660 = vpack.c.bf16 %v656, %v655
      %v661 = vld [vmem:[%s4] sm:$0xf]
      %v662 = vld [vmem:[%s4 + $0x4] sm:$0xf]
      %v663 = vld [vmem:[%s4 + $0x8] sm:$0xf]
      %v664 = vld [vmem:[%s4 + $0xc] sm:$0xf]
      %v665 = vld [vmem:[%s4 + $0x10] sm:$0xf]
      %v666 = vld [vmem:[%s4 + $0x14] sm:$0xf]
      %v667 = vld [vmem:[%s4 + $0x18] sm:$0xf]
      %v668 = vld [vmem:[%s4 + $0x1c] sm:$0xf]
      %v669 = vld [vmem:[%s4 + $0x20] sm:$0xf]
      %v670 = vld [vmem:[%s4 + $0x24] sm:$0xf]
      %v671 = vld [vmem:[%s4 + $0x28] sm:$0xf]
      %v672 = vld [vmem:[%s4 + $0x2c] sm:$0xf]
      %v673 = vld [vmem:[%s4 + $0x30] sm:$0xf]
      %v674 = vld [vmem:[%s4 + $0x34] sm:$0xf]
      %v675 = vld [vmem:[%s4 + $0x38] sm:$0xf]
      %v676 = vld [vmem:[%s4 + $0x3c] sm:$0xf]
      %v693 = vunpack.c.l.b16 %v661
      %v694 = vunpack.c.l.b16 %v662
      %v695 = vunpack.c.l.b16 %v663
      %v696 = vunpack.c.l.b16 %v664
      %v697 = vunpack.c.l.b16 %v665
      %v698 = vunpack.c.l.b16 %v666
      %v699 = vunpack.c.l.b16 %v667
      %v700 = vunpack.c.l.b16 %v668
      %v701 = vunpack.c.l.b16 %v669
      %v702 = vunpack.c.l.b16 %v670
      %v703 = vunpack.c.l.b16 %v671
      %v704 = vunpack.c.l.b16 %v672
      %v705 = vunpack.c.l.b16 %v673
      %v706 = vunpack.c.l.b16 %v674
      %v707 = vunpack.c.l.b16 %v675
      %v708 = vunpack.c.l.b16 %v676
      %v709 = vpack.c.b16 %v694, %v693
      %v710 = vpack.c.b16 %v696, %v695
      %v711 = vpack.c.b16 %v698, %v697
      %v712 = vpack.c.b16 %v700, %v699
      %v713 = vpack.c.b16 %v702, %v701
      %v714 = vpack.c.b16 %v704, %v703
      %v715 = vpack.c.b16 %v706, %v705
      %v716 = vpack.c.b16 %v708, %v707
      %725 = vmatprep.subr.bf16.mxu0 0
      %726 = vmatpush1.bf16.msra.mxu0 %v709
      %727 = vmatprep.subr.bf16.mxu0 0
      %728 = vmatpush1.bf16.msra.mxu0 %v710
      %729 = vmatprep.subr.bf16.mxu0 0
      %730 = vmatpush1.bf16.msra.mxu0 %v711
      %731 = vmatprep.subr.bf16.mxu0 0
      %732 = vmatpush1.bf16.msra.mxu0 %v712
      %733 = vmatprep.subr.bf16.mxu0 0
      %734 = vmatpush1.bf16.msra.mxu0 %v713
      %735 = vmatprep.subr.bf16.mxu0 0
      %736 = vmatpush1.bf16.msra.mxu0 %v714
      %737 = vmatprep.subr.bf16.mxu0 0
      %738 = vmatpush1.bf16.msra.mxu0 %v715
      %739 = vmatprep.subr.bf16.mxu0 0
      %740 = vmatpush1.bf16.msra.mxu0 %v716
      %741 = vmatprep.subr.bf16.mxu0 0
      %742 = vmatpush1.bf16.msra.mxu0 0
      %743 = vmatprep.subr.bf16.mxu0 0
      %744 = vmatpush1.bf16.msra.mxu0 0
      %745 = vmatprep.subr.bf16.mxu0 0
      %746 = vmatpush1.bf16.msra.mxu0 0
      %747 = vmatprep.subr.bf16.mxu0 0
      %748 = vmatpush1.bf16.msra.mxu0 0
      %749 = vmatprep.subr.bf16.mxu0 0
      %750 = vmatpush1.bf16.msra.mxu0 0
      %751 = vmatprep.subr.bf16.mxu0 0
      %752 = vmatpush1.bf16.msra.mxu0 0
      %753 = vmatprep.subr.bf16.mxu0 0
      %754 = vmatpush1.bf16.msra.mxu0 0
      %755 = vmatprep.subr.bf16.mxu0 0
      %756 = vmatpush1.bf16.msra.mxu0 0
      %757 = vmatprep.mubr.bf16.mxu0 0
      %758 = vmatmul.mubr.bf16.gmra.mrb[0].mxu0 %v657
      %v759 = vpop.f32.mrb[0].mxu0
      %v760 = vadd.f32 0.0, %v759
      %v761 = vpop.f32.mrb[0].mxu0
      %v762 = vpop.f32.mrb[0].mxu0
      %v763 = vadd.f32 0.0, %v762
      %v764 = vpop.f32.mrb[0].mxu0
      %765 = vmatprep.mubr.bf16.mxu0 0
      %766 = vmatmul.mubr.bf16.gmra.mrb[0].mxu0 %v658
      %v767 = vpop.f32.mrb[0].mxu0
      %v768 = vadd.f32 0.0, %v767
      %v769 = vpop.f32.mrb[0].mxu0
      %v770 = vpop.f32.mrb[0].mxu0
      %v771 = vadd.f32 0.0, %v770
      %v772 = vpop.f32.mrb[0].mxu0
      %773 = vmatprep.mubr.bf16.mxu0 0
      %774 = vmatmul.mubr.bf16.gmra.mrb[0].mxu0 %v659
      %v775 = vpop.f32.mrb[0].mxu0
      %v776 = vadd.f32 0.0, %v775
      %v777 = vpop.f32.mrb[0].mxu0
      %v778 = vpop.f32.mrb[0].mxu0
      %v779 = vadd.f32 0.0, %v778
      %v780 = vpop.f32.mrb[0].mxu0
      %781 = vmatprep.mubr.bf16.mxu0 0
      %782 = vmatmul.mubr.bf16.gmra.mrb[0].mxu0 %v660
      %v783 = vpop.f32.mrb[0].mxu0
      %v784 = vadd.f32 0.0, %v783
      %v785 = vpop.f32.mrb[0].mxu0
      %v786 = vpop.f32.mrb[0].mxu0
      %v787 = vadd.f32 0.0, %v786
      %v788 = vpop.f32.mrb[0].mxu0
      %789 = vdwg.mxu0
      %v790 = vadd.f32 %v641, %v760
      %v791 = vadd.f32 %v642, %v763
      %v792 = vadd.f32 %v643, %v768
      %v793 = vadd.f32 %v644, %v771
      %v794 = vadd.f32 %v645, %v776
      %v795 = vadd.f32 %v646, %v779
      %v796 = vadd.f32 %v647, %v784
      %v797 = vadd.f32 %v648, %v787
      %v798 = vld [vmem:[#allocation2 + $0x1] sm:$0xff]
      %v799 = vld [vmem:[#allocation2 + $0x11] sm:$0xff]
      %v800 = vld [vmem:[#allocation2 + $0x21] sm:$0xff]
      %v801 = vld [vmem:[#allocation2 + $0x31] sm:$0xff]
      %v802 = vld [vmem:[#allocation2 + $0x41] sm:$0xff]
      %v803 = vld [vmem:[#allocation2 + $0x51] sm:$0xff]
      %v804 = vld [vmem:[#allocation2 + $0x61] sm:$0xff]
      %v805 = vld [vmem:[#allocation2 + $0x71] sm:$0xff]
      %v806 = vpack.c.bf16 %v799, %v798
      %v807 = vpack.c.bf16 %v801, %v800
      %v808 = vpack.c.bf16 %v803, %v802
      %v809 = vpack.c.bf16 %v805, %v804
      %s810 = scalar_lea.vmem %s4, 64
      %v811 = vld [vmem:[%s810] sm:$0xf]
      %v812 = vld [vmem:[%s810 + $0x4] sm:$0xf]
      %v813 = vld [vmem:[%s810 + $0x8] sm:$0xf]
      %v814 = vld [vmem:[%s810 + $0xc] sm:$0xf]
      %v815 = vld [vmem:[%s810 + $0x10] sm:$0xf]
      %v816 = vld [vmem:[%s810 + $0x14] sm:$0xf]
      %v817 = vld [vmem:[%s810 + $0x18] sm:$0xf]
      %v818 = vld [vmem:[%s810 + $0x1c] sm:$0xf]
      %v819 = vld [vmem:[%s810 + $0x20] sm:$0xf]
      %v820 = vld [vmem:[%s810 + $0x24] sm:$0xf]
      %v821 = vld [vmem:[%s810 + $0x28] sm:$0xf]
      %v822 = vld [vmem:[%s810 + $0x2c] sm:$0xf]
      %v823 = vld [vmem:[%s810 + $0x30] sm:$0xf]
      %v824 = vld [vmem:[%s810 + $0x34] sm:$0xf]
      %v825 = vld [vmem:[%s810 + $0x38] sm:$0xf]
      %v826 = vld [vmem:[%s810 + $0x3c] sm:$0xf]
      %v843 = vunpack.c.l.b16 %v811
      %v844 = vunpack.c.l.b16 %v812
      %v845 = vunpack.c.l.b16 %v813
      %v846 = vunpack.c.l.b16 %v814
      %v847 = vunpack.c.l.b16 %v815
      %v848 = vunpack.c.l.b16 %v816
      %v849 = vunpack.c.l.b16 %v817
      %v850 = vunpack.c.l.b16 %v818
      %v851 = vunpack.c.l.b16 %v819
      %v852 = vunpack.c.l.b16 %v820
      %v853 = vunpack.c.l.b16 %v821
      %v854 = vunpack.c.l.b16 %v822
      %v855 = vunpack.c.l.b16 %v823
      %v856 = vunpack.c.l.b16 %v824
      %v857 = vunpack.c.l.b16 %v825
      %v858 = vunpack.c.l.b16 %v826
      %v859 = vpack.c.b16 %v844, %v843
      %v860 = vpack.c.b16 %v846, %v845
      %v861 = vpack.c.b16 %v848, %v847
      %v862 = vpack.c.b16 %v850, %v849
      %v863 = vpack.c.b16 %v852, %v851
      %v864 = vpack.c.b16 %v854, %v853
      %v865 = vpack.c.b16 %v856, %v855
      %v866 = vpack.c.b16 %v858, %v857
      %875 = vmatprep.subr.bf16.mxu0 0
      %876 = vmatpush1.bf16.msra.mxu0 %v859
      %877 = vmatprep.subr.bf16.mxu0 0
      %878 = vmatpush1.bf16.msra.mxu0 %v860
      %879 = vmatprep.subr.bf16.mxu0 0
      %880 = vmatpush1.bf16.msra.mxu0 %v861
      %881 = vmatprep.subr.bf16.mxu0 0
      %882 = vmatpush1.bf16.msra.mxu0 %v862
      %883 = vmatprep.subr.bf16.mxu0 0
      %884 = vmatpush1.bf16.msra.mxu0 %v863
      %885 = vmatprep.subr.bf16.mxu0 0
      %886 = vmatpush1.bf16.msra.mxu0 %v864
      %887 = vmatprep.subr.bf16.mxu0 0
      %888 = vmatpush1.bf16.msra.mxu0 %v865
      %889 = vmatprep.subr.bf16.mxu0 0
      %890 = vmatpush1.bf16.msra.mxu0 %v866
      %891 = vmatprep.subr.bf16.mxu0 0
      %892 = vmatpush1.bf16.msra.mxu0 0
      %893 = vmatprep.subr.bf16.mxu0 0
      %894 = vmatpush1.bf16.msra.mxu0 0
      %895 = vmatprep.subr.bf16.mxu0 0
      %896 = vmatpush1.bf16.msra.mxu0 0
      %897 = vmatprep.subr.bf16.mxu0 0
      %898 = vmatpush1.bf16.msra.mxu0 0
      %899 = vmatprep.subr.bf16.mxu0 0
      %900 = vmatpush1.bf16.msra.mxu0 0
      %901 = vmatprep.subr.bf16.mxu0 0
      %902 = vmatpush1.bf16.msra.mxu0 0
      %903 = vmatprep.subr.bf16.mxu0 0
      %904 = vmatpush1.bf16.msra.mxu0 0
      %905 = vmatprep.subr.bf16.mxu0 0
      %906 = vmatpush1.bf16.msra.mxu0 0
      %907 = vmatprep.mubr.bf16.mxu0 0
      %908 = vmatmul.mubr.bf16.gmra.mrb[0].mxu0 %v806
      %v909 = vpop.f32.mrb[0].mxu0
      %v910 = vadd.f32 0.0, %v909
      %v911 = vpop.f32.mrb[0].mxu0
      %v912 = vpop.f32.mrb[0].mxu0
      %v913 = vadd.f32 0.0, %v912
      %v914 = vpop.f32.mrb[0].mxu0
      %915 = vmatprep.mubr.bf16.mxu0 0
      %916 = vmatmul.mubr.bf16.gmra.mrb[0].mxu0 %v807
      %v917 = vpop.f32.mrb[0].mxu0
      %v918 = vadd.f32 0.0, %v917
      %v919 = vpop.f32.mrb[0].mxu0
      %v920 = vpop.f32.mrb[0].mxu0
      %v921 = vadd.f32 0.0, %v920
      %v922 = vpop.f32.mrb[0].mxu0
      %923 = vmatprep.mubr.bf16.mxu0 0
      %924 = vmatmul.mubr.bf16.gmra.mrb[0].mxu0 %v808
      %v925 = vpop.f32.mrb[0].mxu0
      %v926 = vadd.f32 0.0, %v925
      %v927 = vpop.f32.mrb[0].mxu0
      %v928 = vpop.f32.mrb[0].mxu0
      %v929 = vadd.f32 0.0, %v928
      %v930 = vpop.f32.mrb[0].mxu0
      %931 = vmatprep.mubr.bf16.mxu0 0
      %932 = vmatmul.mubr.bf16.gmra.mrb[0].mxu0 %v809
      %v933 = vpop.f32.mrb[0].mxu0
      %v934 = vadd.f32 0.0, %v933
      %v935 = vpop.f32.mrb[0].mxu0
      %v936 = vpop.f32.mrb[0].mxu0
      %v937 = vadd.f32 0.0, %v936
      %v938 = vpop.f32.mrb[0].mxu0
      %939 = vdwg.mxu0
      %v940 = vadd.f32 %v790, %v910
      %v941 = vadd.f32 %v791, %v913
      %v942 = vadd.f32 %v792, %v918
      %v943 = vadd.f32 %v793, %v921
      %v944 = vadd.f32 %v794, %v926
      %v945 = vadd.f32 %v795, %v929
      %v946 = vadd.f32 %v796, %v934
      %v947 = vadd.f32 %v797, %v937
      %v948 = vld [vmem:[#allocation2 + $0x2] sm:$0xff]
      %v949 = vld [vmem:[#allocation2 + $0x12] sm:$0xff]
      %v950 = vld [vmem:[#allocation2 + $0x22] sm:$0xff]
      %v951 = vld [vmem:[#allocation2 + $0x32] sm:$0xff]
      %v952 = vld [vmem:[#allocation2 + $0x42] sm:$0xff]
      %v953 = vld [vmem:[#allocation2 + $0x52] sm:$0xff]
      %v954 = vld [vmem:[#allocation2 + $0x62] sm:$0xff]
      %v955 = vld [vmem:[#allocation2 + $0x72] sm:$0xff]
      %v956 = vpack.c.bf16 %v949, %v948
      %v957 = vpack.c.bf16 %v951, %v950
      %v958 = vpack.c.bf16 %v953, %v952
      %v959 = vpack.c.bf16 %v955, %v954
      %s960 = scalar_lea.vmem %s4, 128
      %v961 = vld [vmem:[%s960] sm:$0xf]
      %v962 = vld [vmem:[%s960 + $0x4] sm:$0xf]
      %v963 = vld [vmem:[%s960 + $0x8] sm:$0xf]
      %v964 = vld [vmem:[%s960 + $0xc] sm:$0xf]
      %v965 = vld [vmem:[%s960 + $0x10] sm:$0xf]
      %v966 = vld [vmem:[%s960 + $0x14] sm:$0xf]
      %v967 = vld [vmem:[%s960 + $0x18] sm:$0xf]
      %v968 = vld [vmem:[%s960 + $0x1c] sm:$0xf]
      %v969 = vld [vmem:[%s960 + $0x20] sm:$0xf]
      %v970 = vld [vmem:[%s960 + $0x24] sm:$0xf]
      %v971 = vld [vmem:[%s960 + $0x28] sm:$0xf]
      %v972 = vld [vmem:[%s960 + $0x2c] sm:$0xf]
      %v973 = vld [vmem:[%s960 + $0x30] sm:$0xf]
      %v974 = vld [vmem:[%s960 + $0x34] sm:$0xf]
      %v975 = vld [vmem:[%s960 + $0x38] sm:$0xf]
      %v976 = vld [vmem:[%s960 + $0x3c] sm:$0xf]
      %v993 = vunpack.c.l.b16 %v961
      %v994 = vunpack.c.l.b16 %v962
      %v995 = vunpack.c.l.b16 %v963
      %v996 = vunpack.c.l.b16 %v964
      %v997 = vunpack.c.l.b16 %v965
      %v998 = vunpack.c.l.b16 %v966
      %v999 = vunpack.c.l.b16 %v967
      %v1000 = vunpack.c.l.b16 %v968
      %v1001 = vunpack.c.l.b16 %v969
      %v1002 = vunpack.c.l.b16 %v970
      %v1003 = vunpack.c.l.b16 %v971
      %v1004 = vunpack.c.l.b16 %v972
      %v1005 = vunpack.c.l.b16 %v973
      %v1006 = vunpack.c.l.b16 %v974
      %v1007 = vunpack.c.l.b16 %v975
      %v1008 = vunpack.c.l.b16 %v976
      %v1009 = vpack.c.b16 %v994, %v993
      %v1010 = vpack.c.b16 %v996, %v995
      %v1011 = vpack.c.b16 %v998, %v997
      %v1012 = vpack.c.b16 %v1000, %v999
      %v1013 = vpack.c.b16 %v1002, %v1001
      %v1014 = vpack.c.b16 %v1004, %v1003
      %v1015 = vpack.c.b16 %v1006, %v1005
      %v1016 = vpack.c.b16 %v1008, %v1007
      %1025 = vmatprep.subr.bf16.mxu0 0
      %1026 = vmatpush1.bf16.msra.mxu0 %v1009
      %1027 = vmatprep.subr.bf16.mxu0 0
      %1028 = vmatpush1.bf16.msra.mxu0 %v1010
      %1029 = vmatprep.subr.bf16.mxu0 0
      %1030 = vmatpush1.bf16.msra.mxu0 %v1011
      %1031 = vmatprep.subr.bf16.mxu0 0
      %1032 = vmatpush1.bf16.msra.mxu0 %v1012
      %1033 = vmatprep.subr.bf16.mxu0 0
      %1034 = vmatpush1.bf16.msra.mxu0 %v1013
      %1035 = vmatprep.subr.bf16.mxu0 0
      %1036 = vmatpush1.bf16.msra.mxu0 %v1014
      %1037 = vmatprep.subr.bf16.mxu0 0
      %1038 = vmatpush1.bf16.msra.mxu0 %v1015
      %1039 = vmatprep.subr.bf16.mxu0 0
      %1040 = vmatpush1.bf16.msra.mxu0 %v1016
      %1041 = vmatprep.subr.bf16.mxu0 0
      %1042 = vmatpush1.bf16.msra.mxu0 0
      %1043 = vmatprep.subr.bf16.mxu0 0
      %1044 = vmatpush1.bf16.msra.mxu0 0
      %1045 = vmatprep.subr.bf16.mxu0 0
      %1046 = vmatpush1.bf16.msra.mxu0 0
      %1047 = vmatprep.subr.bf16.mxu0 0
      %1048 = vmatpush1.bf16.msra.mxu0 0
      %1049 = vmatprep.subr.bf16.mxu0 0
      %1050 = vmatpush1.bf16.msra.mxu0 0
      %1051 = vmatprep.subr.bf16.mxu0 0
      %1052 = vmatpush1.bf16.msra.mxu0 0
      %1053 = vmatprep.subr.bf16.mxu0 0
      %1054 = vmatpush1.bf16.msra.mxu0 0
      %1055 = vmatprep.subr.bf16.mxu0 0
      %1056 = vmatpush1.bf16.msra.mxu0 0
      %1057 = vmatprep.mubr.bf16.mxu0 0
      %1058 = vmatmul.mubr.bf16.gmra.mrb[0].mxu0 %v956
      %v1059 = vpop.f32.mrb[0].mxu0
      %v1060 = vadd.f32 0.0, %v1059
      %v1061 = vpop.f32.mrb[0].mxu0
      %v1062 = vpop.f32.mrb[0].mxu0
      %v1063 = vadd.f32 0.0, %v1062
      %v1064 = vpop.f32.mrb[0].mxu0
      %1065 = vmatprep.mubr.bf16.mxu0 0
      %1066 = vmatmul.mubr.bf16.gmra.mrb[0].mxu0 %v957
      %v1067 = vpop.f32.mrb[0].mxu0
      %v1068 = vadd.f32 0.0, %v1067
      %v1069 = vpop.f32.mrb[0].mxu0
      %v1070 = vpop.f32.mrb[0].mxu0
      %v1071 = vadd.f32 0.0, %v1070
      %v1072 = vpop.f32.mrb[0].mxu0
      %1073 = vmatprep.mubr.bf16.mxu0 0
      %1074 = vmatmul.mubr.bf16.gmra.mrb[0].mxu0 %v958
      %v1075 = vpop.f32.mrb[0].mxu0
      %v1076 = vadd.f32 0.0, %v1075
      %v1077 = vpop.f32.mrb[0].mxu0
      %v1078 = vpop.f32.mrb[0].mxu0
      %v1079 = vadd.f32 0.0, %v1078
      %v1080 = vpop.f32.mrb[0].mxu0
      %1081 = vmatprep.mubr.bf16.mxu0 0
      %1082 = vmatmul.mubr.bf16.gmra.mrb[0].mxu0 %v959
      %v1083 = vpop.f32.mrb[0].mxu0
      %v1084 = vadd.f32 0.0, %v1083
      %v1085 = vpop.f32.mrb[0].mxu0
      %v1086 = vpop.f32.mrb[0].mxu0
      %v1087 = vadd.f32 0.0, %v1086
      %v1088 = vpop.f32.mrb[0].mxu0
      %1089 = vdwg.mxu0
      %v1090 = vadd.f32 %v940, %v1060
      %v1091 = vadd.f32 %v941, %v1063
      %v1092 = vadd.f32 %v942, %v1068
      %v1093 = vadd.f32 %v943, %v1071
      %v1094 = vadd.f32 %v944, %v1076
      %v1095 = vadd.f32 %v945, %v1079
      %v1096 = vadd.f32 %v946, %v1084
      %v1097 = vadd.f32 %v947, %v1087
      %v1098 = vld [vmem:[%s508] sm:$0xff]
      %v1099 = vld [vmem:[%s508 + $0x10] sm:$0xff]
      %v1100 = vld [vmem:[%s508 + $0x20] sm:$0xff]
      %v1101 = vld [vmem:[%s508 + $0x30] sm:$0xff]
      %v1102 = vld [vmem:[%s508 + $0x40] sm:$0xff]
      %v1103 = vld [vmem:[%s508 + $0x50] sm:$0xff]
      %v1104 = vld [vmem:[%s508 + $0x60] sm:$0xff]
      %v1105 = vld [vmem:[%s508 + $0x70] sm:$0xff]
      %v1106 = vpack.c.bf16 %v1099, %v1098
      %v1107 = vpack.c.bf16 %v1101, %v1100
      %v1108 = vpack.c.bf16 %v1103, %v1102
      %v1109 = vpack.c.bf16 %v1105, %v1104
      %s1110 = scalar_lea.vmem %s4, 192
      %v1111 = vld [vmem:[%s1110] sm:$0xf]
      %v1112 = vld [vmem:[%s1110 + $0x4] sm:$0xf]
      %v1113 = vld [vmem:[%s1110 + $0x8] sm:$0xf]
      %v1114 = vld [vmem:[%s1110 + $0xc] sm:$0xf]
      %v1115 = vld [vmem:[%s1110 + $0x10] sm:$0xf]
      %v1116 = vld [vmem:[%s1110 + $0x14] sm:$0xf]
      %v1117 = vld [vmem:[%s1110 + $0x18] sm:$0xf]
      %v1118 = vld [vmem:[%s1110 + $0x1c] sm:$0xf]
      %v1119 = vld [vmem:[%s1110 + $0x20] sm:$0xf]
      %v1120 = vld [vmem:[%s1110 + $0x24] sm:$0xf]
      %v1121 = vld [vmem:[%s1110 + $0x28] sm:$0xf]
      %v1122 = vld [vmem:[%s1110 + $0x2c] sm:$0xf]
      %v1123 = vld [vmem:[%s1110 + $0x30] sm:$0xf]
      %v1124 = vld [vmem:[%s1110 + $0x34] sm:$0xf]
      %v1125 = vld [vmem:[%s1110 + $0x38] sm:$0xf]
      %v1126 = vld [vmem:[%s1110 + $0x3c] sm:$0xf]
      %v1143 = vunpack.c.l.b16 %v1111
      %v1144 = vunpack.c.l.b16 %v1112
      %v1145 = vunpack.c.l.b16 %v1113
      %v1146 = vunpack.c.l.b16 %v1114
      %v1147 = vunpack.c.l.b16 %v1115
      %v1148 = vunpack.c.l.b16 %v1116
      %v1149 = vunpack.c.l.b16 %v1117
      %v1150 = vunpack.c.l.b16 %v1118
      %v1151 = vunpack.c.l.b16 %v1119
      %v1152 = vunpack.c.l.b16 %v1120
      %v1153 = vunpack.c.l.b16 %v1121
      %v1154 = vunpack.c.l.b16 %v1122
      %v1155 = vunpack.c.l.b16 %v1123
      %v1156 = vunpack.c.l.b16 %v1124
      %v1157 = vunpack.c.l.b16 %v1125
      %v1158 = vunpack.c.l.b16 %v1126
      %v1159 = vpack.c.b16 %v1144, %v1143
      %v1160 = vpack.c.b16 %v1146, %v1145
      %v1161 = vpack.c.b16 %v1148, %v1147
      %v1162 = vpack.c.b16 %v1150, %v1149
      %v1163 = vpack.c.b16 %v1152, %v1151
      %v1164 = vpack.c.b16 %v1154, %v1153
      %v1165 = vpack.c.b16 %v1156, %v1155
      %v1166 = vpack.c.b16 %v1158, %v1157
      %1175 = vmatprep.subr.bf16.mxu0 0
      %1176 = vmatpush1.bf16.msra.mxu0 %v1159
      %1177 = vmatprep.subr.bf16.mxu0 0
      %1178 = vmatpush1.bf16.msra.mxu0 %v1160
      %1179 = vmatprep.subr.bf16.mxu0 0
      %1180 = vmatpush1.bf16.msra.mxu0 %v1161
      %1181 = vmatprep.subr.bf16.mxu0 0
      %1182 = vmatpush1.bf16.msra.mxu0 %v1162
      %1183 = vmatprep.subr.bf16.mxu0 0
      %1184 = vmatpush1.bf16.msra.mxu0 %v1163
      %1185 = vmatprep.subr.bf16.mxu0 0
      %1186 = vmatpush1.bf16.msra.mxu0 %v1164
      %1187 = vmatprep.subr.bf16.mxu0 0
      %1188 = vmatpush1.bf16.msra.mxu0 %v1165
      %1189 = vmatprep.subr.bf16.mxu0 0
      %1190 = vmatpush1.bf16.msra.mxu0 %v1166
      %1191 = vmatprep.subr.bf16.mxu0 0
      %1192 = vmatpush1.bf16.msra.mxu0 0
      %1193 = vmatprep.subr.bf16.mxu0 0
      %1194 = vmatpush1.bf16.msra.mxu0 0
      %1195 = vmatprep.subr.bf16.mxu0 0
      %1196 = vmatpush1.bf16.msra.mxu0 0
      %1197 = vmatprep.subr.bf16.mxu0 0
      %1198 = vmatpush1.bf16.msra.mxu0 0
      %1199 = vmatprep.subr.bf16.mxu0 0
      %1200 = vmatpush1.bf16.msra.mxu0 0
      %1201 = vmatprep.subr.bf16.mxu0 0
      %1202 = vmatpush1.bf16.msra.mxu0 0
      %1203 = vmatprep.subr.bf16.mxu0 0
      %1204 = vmatpush1.bf16.msra.mxu0 0
      %1205 = vmatprep.subr.bf16.mxu0 0
      %1206 = vmatpush1.bf16.msra.mxu0 0
      %1207 = vmatprep.mubr.bf16.mxu0 0
      %1208 = vmatmul.mubr.bf16.gmra.mrb[0].mxu0 %v1106
      %v1209 = vpop.f32.mrb[0].mxu0
      %v1210 = vadd.f32 0.0, %v1209
      %v1211 = vpop.f32.mrb[0].mxu0
      %v1212 = vpop.f32.mrb[0].mxu0
      %v1213 = vadd.f32 0.0, %v1212
      %v1214 = vpop.f32.mrb[0].mxu0
      %1215 = vmatprep.mubr.bf16.mxu0 0
      %1216 = vmatmul.mubr.bf16.gmra.mrb[0].mxu0 %v1107
      %v1217 = vpop.f32.mrb[0].mxu0
      %v1218 = vadd.f32 0.0, %v1217
      %v1219 = vpop.f32.mrb[0].mxu0
      %v1220 = vpop.f32.mrb[0].mxu0
      %v1221 = vadd.f32 0.0, %v1220
      %v1222 = vpop.f32.mrb[0].mxu0
      %1223 = vmatprep.mubr.bf16.mxu0 0
      %1224 = vmatmul.mubr.bf16.gmra.mrb[0].mxu0 %v1108
      %v1225 = vpop.f32.mrb[0].mxu0
      %v1226 = vadd.f32 0.0, %v1225
      %v1227 = vpop.f32.mrb[0].mxu0
      %v1228 = vpop.f32.mrb[0].mxu0
      %v1229 = vadd.f32 0.0, %v1228
      %v1230 = vpop.f32.mrb[0].mxu0
      %1231 = vmatprep.mubr.bf16.mxu0 0
      %1232 = vmatmul.mubr.bf16.gmra.mrb[0].mxu0 %v1109
      %v1233 = vpop.f32.mrb[0].mxu0
      %v1234 = vadd.f32 0.0, %v1233
      %v1235 = vpop.f32.mrb[0].mxu0
      %v1236 = vpop.f32.mrb[0].mxu0
      %v1237 = vadd.f32 0.0, %v1236
      %v1238 = vpop.f32.mrb[0].mxu0
      %1239 = vdwg.mxu0
      %v1240 = vadd.f32 %v1090, %v1210
      %v1241 = vadd.f32 %v1091, %v1213
      %v1242 = vadd.f32 %v1092, %v1218
      %v1243 = vadd.f32 %v1093, %v1221
      %v1244 = vadd.f32 %v1094, %v1226
      %v1245 = vadd.f32 %v1095, %v1229
      %v1246 = vadd.f32 %v1096, %v1234
      %v1247 = vadd.f32 %v1097, %v1237
      %v1248 = vld [vmem:[%s508 + $0x1] sm:$0xff]
      %v1249 = vld [vmem:[%s508 + $0x11] sm:$0xff]
      %v1250 = vld [vmem:[%s508 + $0x21] sm:$0xff]
      %v1251 = vld [vmem:[%s508 + $0x31] sm:$0xff]
      %v1252 = vld [vmem:[%s508 + $0x41] sm:$0xff]
      %v1253 = vld [vmem:[%s508 + $0x51] sm:$0xff]
      %v1254 = vld [vmem:[%s508 + $0x61] sm:$0xff]
      %v1255 = vld [vmem:[%s508 + $0x71] sm:$0xff]
      %v1256 = vpack.c.bf16 %v1249, %v1248
      %v1257 = vpack.c.bf16 %v1251, %v1250
      %v1258 = vpack.c.bf16 %v1253, %v1252
      %v1259 = vpack.c.bf16 %v1255, %v1254
      %s1260 = scalar_lea.vmem %s4, 256
      %v1261 = vld [vmem:[%s1260] sm:$0xf]
      %v1262 = vld [vmem:[%s1260 + $0x4] sm:$0xf]
      %v1263 = vld [vmem:[%s1260 + $0x8] sm:$0xf]
      %v1264 = vld [vmem:[%s1260 + $0xc] sm:$0xf]
      %v1265 = vld [vmem:[%s1260 + $0x10] sm:$0xf]
      %v1266 = vld [vmem:[%s1260 + $0x14] sm:$0xf]
      %v1267 = vld [vmem:[%s1260 + $0x18] sm:$0xf]
      %v1268 = vld [vmem:[%s1260 + $0x1c] sm:$0xf]
      %v1269 = vld [vmem:[%s1260 + $0x20] sm:$0xf]
      %v1270 = vld [vmem:[%s1260 + $0x24] sm:$0xf]
      %v1271 = vld [vmem:[%s1260 + $0x28] sm:$0xf]
      %v1272 = vld [vmem:[%s1260 + $0x2c] sm:$0xf]
      %v1273 = vld [vmem:[%s1260 + $0x30] sm:$0xf]
      %v1274 = vld [vmem:[%s1260 + $0x34] sm:$0xf]
      %v1275 = vld [vmem:[%s1260 + $0x38] sm:$0xf]
      %v1276 = vld [vmem:[%s1260 + $0x3c] sm:$0xf]
      %v1293 = vunpack.c.l.b16 %v1261
      %v1294 = vunpack.c.l.b16 %v1262
      %v1295 = vunpack.c.l.b16 %v1263
      %v1296 = vunpack.c.l.b16 %v1264
      %v1297 = vunpack.c.l.b16 %v1265
      %v1298 = vunpack.c.l.b16 %v1266
      %v1299 = vunpack.c.l.b16 %v1267
      %v1300 = vunpack.c.l.b16 %v1268
      %v1301 = vunpack.c.l.b16 %v1269
      %v1302 = vunpack.c.l.b16 %v1270
      %v1303 = vunpack.c.l.b16 %v1271
      %v1304 = vunpack.c.l.b16 %v1272
      %v1305 = vunpack.c.l.b16 %v1273
      %v1306 = vunpack.c.l.b16 %v1274
      %v1307 = vunpack.c.l.b16 %v1275
      %v1308 = vunpack.c.l.b16 %v1276
      %v1309 = vpack.c.b16 %v1294, %v1293
      %v1310 = vpack.c.b16 %v1296, %v1295
      %v1311 = vpack.c.b16 %v1298, %v1297
      %v1312 = vpack.c.b16 %v1300, %v1299
      %v1313 = vpack.c.b16 %v1302, %v1301
      %v1314 = vpack.c.b16 %v1304, %v1303
      %v1315 = vpack.c.b16 %v1306, %v1305
      %v1316 = vpack.c.b16 %v1308, %v1307
      %1325 = vmatprep.subr.bf16.mxu0 0
      %1326 = vmatpush1.bf16.msra.mxu0 %v1309
      %1327 = vmatprep.subr.bf16.mxu0 0
      %1328 = vmatpush1.bf16.msra.mxu0 %v1310
      %1329 = vmatprep.subr.bf16.mxu0 0
      %1330 = vmatpush1.bf16.msra.mxu0 %v1311
      %1331 = vmatprep.subr.bf16.mxu0 0
      %1332 = vmatpush1.bf16.msra.mxu0 %v1312
      %1333 = vmatprep.subr.bf16.mxu0 0
      %1334 = vmatpush1.bf16.msra.mxu0 %v1313
      %1335 = vmatprep.subr.bf16.mxu0 0
      %1336 = vmatpush1.bf16.msra.mxu0 %v1314
      %1337 = vmatprep.subr.bf16.mxu0 0
      %1338 = vmatpush1.bf16.msra.mxu0 %v1315
      %1339 = vmatprep.subr.bf16.mxu0 0
      %1340 = vmatpush1.bf16.msra.mxu0 %v1316
      %1341 = vmatprep.subr.bf16.mxu0 0
      %1342 = vmatpush1.bf16.msra.mxu0 0
      %1343 = vmatprep.subr.bf16.mxu0 0
      %1344 = vmatpush1.bf16.msra.mxu0 0
      %1345 = vmatprep.subr.bf16.mxu0 0
      %1346 = vmatpush1.bf16.msra.mxu0 0
      %1347 = vmatprep.subr.bf16.mxu0 0
      %1348 = vmatpush1.bf16.msra.mxu0 0
      %1349 = vmatprep.subr.bf16.mxu0 0
      %1350 = vmatpush1.bf16.msra.mxu0 0
      %1351 = vmatprep.subr.bf16.mxu0 0
      %1352 = vmatpush1.bf16.msra.mxu0 0
      %1353 = vmatprep.subr.bf16.mxu0 0
      %1354 = vmatpush1.bf16.msra.mxu0 0
      %1355 = vmatprep.subr.bf16.mxu0 0
      %1356 = vmatpush1.bf16.msra.mxu0 0
      %1357 = vmatprep.mubr.bf16.mxu0 0
      %1358 = vmatmul.mubr.bf16.gmra.mrb[0].mxu0 %v1256
      %v1359 = vpop.f32.mrb[0].mxu0
      %v1360 = vadd.f32 0.0, %v1359
      %v1361 = vpop.f32.mrb[0].mxu0
      %v1362 = vpop.f32.mrb[0].mxu0
      %v1363 = vadd.f32 0.0, %v1362
      %v1364 = vpop.f32.mrb[0].mxu0
      %1365 = vmatprep.mubr.bf16.mxu0 0
      %1366 = vmatmul.mubr.bf16.gmra.mrb[0].mxu0 %v1257
      %v1367 = vpop.f32.mrb[0].mxu0
      %v1368 = vadd.f32 0.0, %v1367
      %v1369 = vpop.f32.mrb[0].mxu0
      %v1370 = vpop.f32.mrb[0].mxu0
      %v1371 = vadd.f32 0.0, %v1370
      %v1372 = vpop.f32.mrb[0].mxu0
      %1373 = vmatprep.mubr.bf16.mxu0 0
      %1374 = vmatmul.mubr.bf16.gmra.mrb[0].mxu0 %v1258
      %v1375 = vpop.f32.mrb[0].mxu0
      %v1376 = vadd.f32 0.0, %v1375
      %v1377 = vpop.f32.mrb[0].mxu0
      %v1378 = vpop.f32.mrb[0].mxu0
      %v1379 = vadd.f32 0.0, %v1378
      %v1380 = vpop.f32.mrb[0].mxu0
      %1381 = vmatprep.mubr.bf16.mxu0 0
      %1382 = vmatmul.mubr.bf16.gmra.mrb[0].mxu0 %v1259
      %v1383 = vpop.f32.mrb[0].mxu0
      %v1384 = vadd.f32 0.0, %v1383
      %v1385 = vpop.f32.mrb[0].mxu0
      %v1386 = vpop.f32.mrb[0].mxu0
      %v1387 = vadd.f32 0.0, %v1386
      %v1388 = vpop.f32.mrb[0].mxu0
      %1389 = vdwg.mxu0
      %v1390 = vadd.f32 %v1240, %v1360
      %v1391 = vadd.f32 %v1241, %v1363
      %v1392 = vadd.f32 %v1242, %v1368
      %v1393 = vadd.f32 %v1243, %v1371
      %v1394 = vadd.f32 %v1244, %v1376
      %v1395 = vadd.f32 %v1245, %v1379
      %v1396 = vadd.f32 %v1246, %v1384
      %v1397 = vadd.f32 %v1247, %v1387
      %v1398 = vld [vmem:[%s508 + $0x2] sm:$0xff]
      %v1399 = vld [vmem:[%s508 + $0x12] sm:$0xff]
      %v1400 = vld [vmem:[%s508 + $0x22] sm:$0xff]
      %v1401 = vld [vmem:[%s508 + $0x32] sm:$0xff]
      %v1402 = vld [vmem:[%s508 + $0x42] sm:$0xff]
      %v1403 = vld [vmem:[%s508 + $0x52] sm:$0xff]
      %v1404 = vld [vmem:[%s508 + $0x62] sm:$0xff]
      %v1405 = vld [vmem:[%s508 + $0x72] sm:$0xff]
      %v1406 = vpack.c.bf16 %v1399, %v1398
      %v1407 = vpack.c.bf16 %v1401, %v1400
      %v1408 = vpack.c.bf16 %v1403, %v1402
      %v1409 = vpack.c.bf16 %v1405, %v1404
      %s1410 = scalar_lea.vmem %s4, 320
      %v1411 = vld [vmem:[%s1410] sm:$0xf]
      %v1412 = vld [vmem:[%s1410 + $0x4] sm:$0xf]
      %v1413 = vld [vmem:[%s1410 + $0x8] sm:$0xf]
      %v1414 = vld [vmem:[%s1410 + $0xc] sm:$0xf]
      %v1415 = vld [vmem:[%s1410 + $0x10] sm:$0xf]
      %v1416 = vld [vmem:[%s1410 + $0x14] sm:$0xf]
      %v1417 = vld [vmem:[%s1410 + $0x18] sm:$0xf]
      %v1418 = vld [vmem:[%s1410 + $0x1c] sm:$0xf]
      %v1419 = vld [vmem:[%s1410 + $0x20] sm:$0xf]
      %v1420 = vld [vmem:[%s1410 + $0x24] sm:$0xf]
      %v1421 = vld [vmem:[%s1410 + $0x28] sm:$0xf]
      %v1422 = vld [vmem:[%s1410 + $0x2c] sm:$0xf]
      %v1423 = vld [vmem:[%s1410 + $0x30] sm:$0xf]
      %v1424 = vld [vmem:[%s1410 + $0x34] sm:$0xf]
      %v1425 = vld [vmem:[%s1410 + $0x38] sm:$0xf]
      %v1426 = vld [vmem:[%s1410 + $0x3c] sm:$0xf]
      %v1443 = vunpack.c.l.b16 %v1411
      %v1444 = vunpack.c.l.b16 %v1412
      %v1445 = vunpack.c.l.b16 %v1413
      %v1446 = vunpack.c.l.b16 %v1414
      %v1447 = vunpack.c.l.b16 %v1415
      %v1448 = vunpack.c.l.b16 %v1416
      %v1449 = vunpack.c.l.b16 %v1417
      %v1450 = vunpack.c.l.b16 %v1418
      %v1451 = vunpack.c.l.b16 %v1419
      %v1452 = vunpack.c.l.b16 %v1420
      %v1453 = vunpack.c.l.b16 %v1421
      %v1454 = vunpack.c.l.b16 %v1422
      %v1455 = vunpack.c.l.b16 %v1423
      %v1456 = vunpack.c.l.b16 %v1424
      %v1457 = vunpack.c.l.b16 %v1425
      %v1458 = vunpack.c.l.b16 %v1426
      %v1459 = vpack.c.b16 %v1444, %v1443
      %v1460 = vpack.c.b16 %v1446, %v1445
      %v1461 = vpack.c.b16 %v1448, %v1447
      %v1462 = vpack.c.b16 %v1450, %v1449
      %v1463 = vpack.c.b16 %v1452, %v1451
      %v1464 = vpack.c.b16 %v1454, %v1453
      %v1465 = vpack.c.b16 %v1456, %v1455
      %v1466 = vpack.c.b16 %v1458, %v1457
      %1475 = vmatprep.subr.bf16.mxu0 0
      %1476 = vmatpush1.bf16.msra.mxu0 %v1459
      %1477 = vmatprep.subr.bf16.mxu0 0
      %1478 = vmatpush1.bf16.msra.mxu0 %v1460
      %1479 = vmatprep.subr.bf16.mxu0 0
      %1480 = vmatpush1.bf16.msra.mxu0 %v1461
      %1481 = vmatprep.subr.bf16.mxu0 0
      %1482 = vmatpush1.bf16.msra.mxu0 %v1462
      %1483 = vmatprep.subr.bf16.mxu0 0
      %1484 = vmatpush1.bf16.msra.mxu0 %v1463
      %1485 = vmatprep.subr.bf16.mxu0 0
      %1486 = vmatpush1.bf16.msra.mxu0 %v1464
      %1487 = vmatprep.subr.bf16.mxu0 0
      %1488 = vmatpush1.bf16.msra.mxu0 %v1465
      %1489 = vmatprep.subr.bf16.mxu0 0
      %1490 = vmatpush1.bf16.msra.mxu0 %v1466
      %1491 = vmatprep.subr.bf16.mxu0 0
      %1492 = vmatpush1.bf16.msra.mxu0 0
      %1493 = vmatprep.subr.bf16.mxu0 0
      %1494 = vmatpush1.bf16.msra.mxu0 0
      %1495 = vmatprep.subr.bf16.mxu0 0
      %1496 = vmatpush1.bf16.msra.mxu0 0
      %1497 = vmatprep.subr.bf16.mxu0 0
      %1498 = vmatpush1.bf16.msra.mxu0 0
      %1499 = vmatprep.subr.bf16.mxu0 0
      %1500 = vmatpush1.bf16.msra.mxu0 0
      %1501 = vmatprep.subr.bf16.mxu0 0
      %1502 = vmatpush1.bf16.msra.mxu0 0
      %1503 = vmatprep.subr.bf16.mxu0 0
      %1504 = vmatpush1.bf16.msra.mxu0 0
      %1505 = vmatprep.subr.bf16.mxu0 0
      %1506 = vmatpush1.bf16.msra.mxu0 0
      %1507 = vmatprep.mubr.bf16.mxu0 0
      %1508 = vmatmul.mubr.bf16.gmra.mrb[0].mxu0 %v1406
      %v1509 = vpop.f32.mrb[0].mxu0
      %v1510 = vadd.f32 0.0, %v1509
      %v1511 = vpop.f32.mrb[0].mxu0
      %v1512 = vpop.f32.mrb[0].mxu0
      %v1513 = vadd.f32 0.0, %v1512
      %v1514 = vpop.f32.mrb[0].mxu0
      %1515 = vmatprep.mubr.bf16.mxu0 0
      %1516 = vmatmul.mubr.bf16.gmra.mrb[0].mxu0 %v1407
      %v1517 = vpop.f32.mrb[0].mxu0
      %v1518 = vadd.f32 0.0, %v1517
      %v1519 = vpop.f32.mrb[0].mxu0
      %v1520 = vpop.f32.mrb[0].mxu0
      %v1521 = vadd.f32 0.0, %v1520
      %v1522 = vpop.f32.mrb[0].mxu0
      %1523 = vmatprep.mubr.bf16.mxu0 0
      %1524 = vmatmul.mubr.bf16.gmra.mrb[0].mxu0 %v1408
      %v1525 = vpop.f32.mrb[0].mxu0
      %v1526 = vadd.f32 0.0, %v1525
      %v1527 = vpop.f32.mrb[0].mxu0
      %v1528 = vpop.f32.mrb[0].mxu0
      %v1529 = vadd.f32 0.0, %v1528
      %v1530 = vpop.f32.mrb[0].mxu0
      %1531 = vmatprep.mubr.bf16.mxu0 0
      %1532 = vmatmul.mubr.bf16.gmra.mrb[0].mxu0 %v1409
      %v1533 = vpop.f32.mrb[0].mxu0
      %v1534 = vadd.f32 0.0, %v1533
      %v1535 = vpop.f32.mrb[0].mxu0
      %v1536 = vpop.f32.mrb[0].mxu0
      %v1537 = vadd.f32 0.0, %v1536
      %v1538 = vpop.f32.mrb[0].mxu0
      %1539 = vdwg.mxu0
      %v1540 = vadd.f32 %v1390, %v1510
      %v1541 = vadd.f32 %v1391, %v1513
      %v1542 = vadd.f32 %v1392, %v1518
      %v1543 = vadd.f32 %v1393, %v1521
      %v1544 = vadd.f32 %v1394, %v1526
      %v1545 = vadd.f32 %v1395, %v1529
      %v1546 = vadd.f32 %v1396, %v1534
      %v1547 = vadd.f32 %v1397, %v1537
      %s1548 = scalar_lea.vmem [#allocation2], 32
      %v1549 = vld [vmem:[%s1548] sm:$0xff]
      %v1550 = vld [vmem:[%s1548 + $0x10] sm:$0xff]
      %v1551 = vld [vmem:[%s1548 + $0x20] sm:$0xff]
      %v1552 = vld [vmem:[%s1548 + $0x30] sm:$0xff]
      %v1553 = vld [vmem:[%s1548 + $0x40] sm:$0xff]
      %v1554 = vld [vmem:[%s1548 + $0x50] sm:$0xff]
      %v1555 = vld [vmem:[%s1548 + $0x60] sm:$0xff]
      %v1556 = vld [vmem:[%s1548 + $0x70] sm:$0xff]
      %v1557 = vpack.c.bf16 %v1550, %v1549
      %v1558 = vpack.c.bf16 %v1552, %v1551
      %v1559 = vpack.c.bf16 %v1554, %v1553
      %v1560 = vpack.c.bf16 %v1556, %v1555
      %s1561 = scalar_lea.vmem %s4, 384
      %v1562 = vld [vmem:[%s1561] sm:$0xf]
      %v1563 = vld [vmem:[%s1561 + $0x4] sm:$0xf]
      %v1564 = vld [vmem:[%s1561 + $0x8] sm:$0xf]
      %v1565 = vld [vmem:[%s1561 + $0xc] sm:$0xf]
      %v1566 = vld [vmem:[%s1561 + $0x10] sm:$0xf]
      %v1567 = vld [vmem:[%s1561 + $0x14] sm:$0xf]
      %v1568 = vld [vmem:[%s1561 + $0x18] sm:$0xf]
      %v1569 = vld [vmem:[%s1561 + $0x1c] sm:$0xf]
      %v1570 = vld [vmem:[%s1561 + $0x20] sm:$0xf]
      %v1571 = vld [vmem:[%s1561 + $0x24] sm:$0xf]
      %v1572 = vld [vmem:[%s1561 + $0x28] sm:$0xf]
      %v1573 = vld [vmem:[%s1561 + $0x2c] sm:$0xf]
      %v1574 = vld [vmem:[%s1561 + $0x30] sm:$0xf]
      %v1575 = vld [vmem:[%s1561 + $0x34] sm:$0xf]
      %v1576 = vld [vmem:[%s1561 + $0x38] sm:$0xf]
      %v1577 = vld [vmem:[%s1561 + $0x3c] sm:$0xf]
      %v1594 = vunpack.c.l.b16 %v1562
      %v1595 = vunpack.c.l.b16 %v1563
      %v1596 = vunpack.c.l.b16 %v1564
      %v1597 = vunpack.c.l.b16 %v1565
      %v1598 = vunpack.c.l.b16 %v1566
      %v1599 = vunpack.c.l.b16 %v1567
      %v1600 = vunpack.c.l.b16 %v1568
      %v1601 = vunpack.c.l.b16 %v1569
      %v1602 = vunpack.c.l.b16 %v1570
      %v1603 = vunpack.c.l.b16 %v1571
      %v1604 = vunpack.c.l.b16 %v1572
      %v1605 = vunpack.c.l.b16 %v1573
      %v1606 = vunpack.c.l.b16 %v1574
      %v1607 = vunpack.c.l.b16 %v1575
      %v1608 = vunpack.c.l.b16 %v1576
      %v1609 = vunpack.c.l.b16 %v1577
      %v1610 = vpack.c.b16 %v1595, %v1594
      %v1611 = vpack.c.b16 %v1597, %v1596
      %v1612 = vpack.c.b16 %v1599, %v1598
      %v1613 = vpack.c.b16 %v1601, %v1600
      %v1614 = vpack.c.b16 %v1603, %v1602
      %v1615 = vpack.c.b16 %v1605, %v1604
      %v1616 = vpack.c.b16 %v1607, %v1606
      %v1617 = vpack.c.b16 %v1609, %v1608
      %1626 = vmatprep.subr.bf16.mxu0 0
      %1627 = vmatpush1.bf16.msra.mxu0 %v1610
      %1628 = vmatprep.subr.bf16.mxu0 0
      %1629 = vmatpush1.bf16.msra.mxu0 %v1611
      %1630 = vmatprep.subr.bf16.mxu0 0
      %1631 = vmatpush1.bf16.msra.mxu0 %v1612
      %1632 = vmatprep.subr.bf16.mxu0 0
      %1633 = vmatpush1.bf16.msra.mxu0 %v1613
      %1634 = vmatprep.subr.bf16.mxu0 0
      %1635 = vmatpush1.bf16.msra.mxu0 %v1614
      %1636 = vmatprep.subr.bf16.mxu0 0
      %1637 = vmatpush1.bf16.msra.mxu0 %v1615
      %1638 = vmatprep.subr.bf16.mxu0 0
      %1639 = vmatpush1.bf16.msra.mxu0 %v1616
      %1640 = vmatprep.subr.bf16.mxu0 0
      %1641 = vmatpush1.bf16.msra.mxu0 %v1617
      %1642 = vmatprep.subr.bf16.mxu0 0
      %1643 = vmatpush1.bf16.msra.mxu0 0
      %1644 = vmatprep.subr.bf16.mxu0 0
      %1645 = vmatpush1.bf16.msra.mxu0 0
      %1646 = vmatprep.subr.bf16.mxu0 0
      %1647 = vmatpush1.bf16.msra.mxu0 0
      %1648 = vmatprep.subr.bf16.mxu0 0
      %1649 = vmatpush1.bf16.msra.mxu0 0
      %1650 = vmatprep.subr.bf16.mxu0 0
      %1651 = vmatpush1.bf16.msra.mxu0 0
      %1652 = vmatprep.subr.bf16.mxu0 0
      %1653 = vmatpush1.bf16.msra.mxu0 0
      %1654 = vmatprep.subr.bf16.mxu0 0
      %1655 = vmatpush1.bf16.msra.mxu0 0
      %1656 = vmatprep.subr.bf16.mxu0 0
      %1657 = vmatpush1.bf16.msra.mxu0 0
      %1658 = vmatprep.mubr.bf16.mxu0 0
      %1659 = vmatmul.mubr.bf16.gmra.mrb[0].mxu0 %v1557
      %v1660 = vpop.f32.mrb[0].mxu0
      %v1661 = vadd.f32 0.0, %v1660
      %v1662 = vpop.f32.mrb[0].mxu0
      %v1663 = vpop.f32.mrb[0].mxu0
      %v1664 = vadd.f32 0.0, %v1663
      %v1665 = vpop.f32.mrb[0].mxu0
      %1666 = vmatprep.mubr.bf16.mxu0 0
      %1667 = vmatmul.mubr.bf16.gmra.mrb[0].mxu0 %v1558
      %v1668 = vpop.f32.mrb[0].mxu0
      %v1669 = vadd.f32 0.0, %v1668
      %v1670 = vpop.f32.mrb[0].mxu0
      %v1671 = vpop.f32.mrb[0].mxu0
      %v1672 = vadd.f32 0.0, %v1671
      %v1673 = vpop.f32.mrb[0].mxu0
      %1674 = vmatprep.mubr.bf16.mxu0 0
      %1675 = vmatmul.mubr.bf16.gmra.mrb[0].mxu0 %v1559
      %v1676 = vpop.f32.mrb[0].mxu0
      %v1677 = vadd.f32 0.0, %v1676
      %v1678 = vpop.f32.mrb[0].mxu0
      %v1679 = vpop.f32.mrb[0].mxu0
      %v1680 = vadd.f32 0.0, %v1679
      %v1681 = vpop.f32.mrb[0].mxu0
      %1682 = vmatprep.mubr.bf16.mxu0 0
      %1683 = vmatmul.mubr.bf16.gmra.mrb[0].mxu0 %v1560
      %v1684 = vpop.f32.mrb[0].mxu0
      %v1685 = vadd.f32 0.0, %v1684
      %v1686 = vpop.f32.mrb[0].mxu0
      %v1687 = vpop.f32.mrb[0].mxu0
      %v1688 = vadd.f32 0.0, %v1687
      %v1689 = vpop.f32.mrb[0].mxu0
      %1690 = vdwg.mxu0
      %v1691 = vadd.f32 %v1540, %v1661
      %v1692 = vadd.f32 %v1541, %v1664
      %v1693 = vadd.f32 %v1542, %v1669
      %v1694 = vadd.f32 %v1543, %v1672
      %v1695 = vadd.f32 %v1544, %v1677
      %v1696 = vadd.f32 %v1545, %v1680
      %v1697 = vadd.f32 %v1546, %v1685
      %v1698 = vadd.f32 %v1547, %v1688
      %v1699 = vld [vmem:[%s1548 + $0x1] sm:$0xff]
      %v1700 = vld [vmem:[%s1548 + $0x11] sm:$0xff]
      %v1701 = vld [vmem:[%s1548 + $0x21] sm:$0xff]
      %v1702 = vld [vmem:[%s1548 + $0x31] sm:$0xff]
      %v1703 = vld [vmem:[%s1548 + $0x41] sm:$0xff]
      %v1704 = vld [vmem:[%s1548 + $0x51] sm:$0xff]
      %v1705 = vld [vmem:[%s1548 + $0x61] sm:$0xff]
      %v1706 = vld [vmem:[%s1548 + $0x71] sm:$0xff]
      %v1707 = vpack.c.bf16 %v1700, %v1699
      %v1708 = vpack.c.bf16 %v1702, %v1701
      %v1709 = vpack.c.bf16 %v1704, %v1703
      %v1710 = vpack.c.bf16 %v1706, %v1705
      %s1711 = scalar_lea.vmem %s4, 448
      %v1712 = vld [vmem:[%s1711] sm:$0xf]
      %v1713 = vld [vmem:[%s1711 + $0x4] sm:$0xf]
      %v1714 = vld [vmem:[%s1711 + $0x8] sm:$0xf]
      %v1715 = vld [vmem:[%s1711 + $0xc] sm:$0xf]
      %v1716 = vld [vmem:[%s1711 + $0x10] sm:$0xf]
      %v1717 = vld [vmem:[%s1711 + $0x14] sm:$0xf]
      %v1718 = vld [vmem:[%s1711 + $0x18] sm:$0xf]
      %v1719 = vld [vmem:[%s1711 + $0x1c] sm:$0xf]
      %v1720 = vld [vmem:[%s1711 + $0x20] sm:$0xf]
      %v1721 = vld [vmem:[%s1711 + $0x24] sm:$0xf]
      %v1722 = vld [vmem:[%s1711 + $0x28] sm:$0xf]
      %v1723 = vld [vmem:[%s1711 + $0x2c] sm:$0xf]
      %v1724 = vld [vmem:[%s1711 + $0x30] sm:$0xf]
      %v1725 = vld [vmem:[%s1711 + $0x34] sm:$0xf]
      %v1726 = vld [vmem:[%s1711 + $0x38] sm:$0xf]
      %v1727 = vld [vmem:[%s1711 + $0x3c] sm:$0xf]
      %v1744 = vunpack.c.l.b16 %v1712
      %v1745 = vunpack.c.l.b16 %v1713
      %v1746 = vunpack.c.l.b16 %v1714
      %v1747 = vunpack.c.l.b16 %v1715
      %v1748 = vunpack.c.l.b16 %v1716
      %v1749 = vunpack.c.l.b16 %v1717
      %v1750 = vunpack.c.l.b16 %v1718
      %v1751 = vunpack.c.l.b16 %v1719
      %v1752 = vunpack.c.l.b16 %v1720
      %v1753 = vunpack.c.l.b16 %v1721
      %v1754 = vunpack.c.l.b16 %v1722
      %v1755 = vunpack.c.l.b16 %v1723
      %v1756 = vunpack.c.l.b16 %v1724
      %v1757 = vunpack.c.l.b16 %v1725
      %v1758 = vunpack.c.l.b16 %v1726
      %v1759 = vunpack.c.l.b16 %v1727
      %v1760 = vpack.c.b16 %v1745, %v1744
      %v1761 = vpack.c.b16 %v1747, %v1746
      %v1762 = vpack.c.b16 %v1749, %v1748
      %v1763 = vpack.c.b16 %v1751, %v1750
      %v1764 = vpack.c.b16 %v1753, %v1752
      %v1765 = vpack.c.b16 %v1755, %v1754
      %v1766 = vpack.c.b16 %v1757, %v1756
      %v1767 = vpack.c.b16 %v1759, %v1758
      %1776 = vmatprep.subr.bf16.mxu0 0
      %1777 = vmatpush1.bf16.msra.mxu0 %v1760
      %1778 = vmatprep.subr.bf16.mxu0 0
      %1779 = vmatpush1.bf16.msra.mxu0 %v1761
      %1780 = vmatprep.subr.bf16.mxu0 0
      %1781 = vmatpush1.bf16.msra.mxu0 %v1762
      %1782 = vmatprep.subr.bf16.mxu0 0
      %1783 = vmatpush1.bf16.msra.mxu0 %v1763
      %1784 = vmatprep.subr.bf16.mxu0 0
      %1785 = vmatpush1.bf16.msra.mxu0 %v1764
      %1786 = vmatprep.subr.bf16.mxu0 0
      %1787 = vmatpush1.bf16.msra.mxu0 %v1765
      %1788 = vmatprep.subr.bf16.mxu0 0
      %1789 = vmatpush1.bf16.msra.mxu0 %v1766
      %1790 = vmatprep.subr.bf16.mxu0 0
      %1791 = vmatpush1.bf16.msra.mxu0 %v1767
      %1792 = vmatprep.subr.bf16.mxu0 0
      %1793 = vmatpush1.bf16.msra.mxu0 0
      %1794 = vmatprep.subr.bf16.mxu0 0
      %1795 = vmatpush1.bf16.msra.mxu0 0
      %1796 = vmatprep.subr.bf16.mxu0 0
      %1797 = vmatpush1.bf16.msra.mxu0 0
      %1798 = vmatprep.subr.bf16.mxu0 0
      %1799 = vmatpush1.bf16.msra.mxu0 0
      %1800 = vmatprep.subr.bf16.mxu0 0
      %1801 = vmatpush1.bf16.msra.mxu0 0
      %1802 = vmatprep.subr.bf16.mxu0 0
      %1803 = vmatpush1.bf16.msra.mxu0 0
      %1804 = vmatprep.subr.bf16.mxu0 0
      %1805 = vmatpush1.bf16.msra.mxu0 0
      %1806 = vmatprep.subr.bf16.mxu0 0
      %1807 = vmatpush1.bf16.msra.mxu0 0
      %1808 = vmatprep.mubr.bf16.mxu0 0
      %1809 = vmatmul.mubr.bf16.gmra.mrb[0].mxu0 %v1707
      %v1810 = vpop.f32.mrb[0].mxu0
      %v1811 = vadd.f32 0.0, %v1810
      %v1812 = vpop.f32.mrb[0].mxu0
      %v1813 = vpop.f32.mrb[0].mxu0
      %v1814 = vadd.f32 0.0, %v1813
      %v1815 = vpop.f32.mrb[0].mxu0
      %1816 = vmatprep.mubr.bf16.mxu0 0
      %1817 = vmatmul.mubr.bf16.gmra.mrb[0].mxu0 %v1708
      %v1818 = vpop.f32.mrb[0].mxu0
      %v1819 = vadd.f32 0.0, %v1818
      %v1820 = vpop.f32.mrb[0].mxu0
      %v1821 = vpop.f32.mrb[0].mxu0
      %v1822 = vadd.f32 0.0, %v1821
      %v1823 = vpop.f32.mrb[0].mxu0
      %1824 = vmatprep.mubr.bf16.mxu0 0
      %1825 = vmatmul.mubr.bf16.gmra.mrb[0].mxu0 %v1709
      %v1826 = vpop.f32.mrb[0].mxu0
      %v1827 = vadd.f32 0.0, %v1826
      %v1828 = vpop.f32.mrb[0].mxu0
      %v1829 = vpop.f32.mrb[0].mxu0
      %v1830 = vadd.f32 0.0, %v1829
      %v1831 = vpop.f32.mrb[0].mxu0
      %1832 = vmatprep.mubr.bf16.mxu0 0
      %1833 = vmatmul.mubr.bf16.gmra.mrb[0].mxu0 %v1710
      %v1834 = vpop.f32.mrb[0].mxu0
      %v1835 = vadd.f32 0.0, %v1834
      %v1836 = vpop.f32.mrb[0].mxu0
      %v1837 = vpop.f32.mrb[0].mxu0
      %v1838 = vadd.f32 0.0, %v1837
      %v1839 = vpop.f32.mrb[0].mxu0
      %1840 = vdwg.mxu0
      %v1841 = vadd.f32 %v1691, %v1811
      %v1842 = vadd.f32 %v1692, %v1814
      %v1843 = vadd.f32 %v1693, %v1819
      %v1844 = vadd.f32 %v1694, %v1822
      %v1845 = vadd.f32 %v1695, %v1827
      %v1846 = vadd.f32 %v1696, %v1830
      %v1847 = vadd.f32 %v1697, %v1835
      %v1848 = vadd.f32 %v1698, %v1838
      %v1849 = vld [vmem:[%s1548 + $0x2] sm:$0xff]
      %v1850 = vld [vmem:[%s1548 + $0x12] sm:$0xff]
      %v1851 = vld [vmem:[%s1548 + $0x22] sm:$0xff]
      %v1852 = vld [vmem:[%s1548 + $0x32] sm:$0xff]
      %v1853 = vld [vmem:[%s1548 + $0x42] sm:$0xff]
      %v1854 = vld [vmem:[%s1548 + $0x52] sm:$0xff]
      %v1855 = vld [vmem:[%s1548 + $0x62] sm:$0xff]
      %v1856 = vld [vmem:[%s1548 + $0x72] sm:$0xff]
      %v1857 = vpack.c.bf16 %v1850, %v1849
      %v1858 = vpack.c.bf16 %v1852, %v1851
      %v1859 = vpack.c.bf16 %v1854, %v1853
      %v1860 = vpack.c.bf16 %v1856, %v1855
      %s1861 = scalar_lea.vmem %s4, 512
      %v1862 = vld [vmem:[%s1861] sm:$0xf]
      %v1863 = vld [vmem:[%s1861 + $0x4] sm:$0xf]
      %v1864 = vld [vmem:[%s1861 + $0x8] sm:$0xf]
      %v1865 = vld [vmem:[%s1861 + $0xc] sm:$0xf]
      %v1866 = vld [vmem:[%s1861 + $0x10] sm:$0xf]
      %v1867 = vld [vmem:[%s1861 + $0x14] sm:$0xf]
      %v1868 = vld [vmem:[%s1861 + $0x18] sm:$0xf]
      %v1869 = vld [vmem:[%s1861 + $0x1c] sm:$0xf]
      %v1870 = vld [vmem:[%s1861 + $0x20] sm:$0xf]
      %v1871 = vld [vmem:[%s1861 + $0x24] sm:$0xf]
      %v1872 = vld [vmem:[%s1861 + $0x28] sm:$0xf]
      %v1873 = vld [vmem:[%s1861 + $0x2c] sm:$0xf]
      %v1874 = vld [vmem:[%s1861 + $0x30] sm:$0xf]
      %v1875 = vld [vmem:[%s1861 + $0x34] sm:$0xf]
      %v1876 = vld [vmem:[%s1861 + $0x38] sm:$0xf]
      %v1877 = vld [vmem:[%s1861 + $0x3c] sm:$0xf]
      %v1894 = vunpack.c.l.b16 %v1862
      %v1895 = vunpack.c.l.b16 %v1863
      %v1896 = vunpack.c.l.b16 %v1864
      %v1897 = vunpack.c.l.b16 %v1865
      %v1898 = vunpack.c.l.b16 %v1866
      %v1899 = vunpack.c.l.b16 %v1867
      %v1900 = vunpack.c.l.b16 %v1868
      %v1901 = vunpack.c.l.b16 %v1869
      %v1902 = vunpack.c.l.b16 %v1870
      %v1903 = vunpack.c.l.b16 %v1871
      %v1904 = vunpack.c.l.b16 %v1872
      %v1905 = vunpack.c.l.b16 %v1873
      %v1906 = vunpack.c.l.b16 %v1874
      %v1907 = vunpack.c.l.b16 %v1875
      %v1908 = vunpack.c.l.b16 %v1876
      %v1909 = vunpack.c.l.b16 %v1877
      %v1910 = vpack.c.b16 %v1895, %v1894
      %v1911 = vpack.c.b16 %v1897, %v1896
      %v1912 = vpack.c.b16 %v1899, %v1898
      %v1913 = vpack.c.b16 %v1901, %v1900
      %v1914 = vpack.c.b16 %v1903, %v1902
      %v1915 = vpack.c.b16 %v1905, %v1904
      %v1916 = vpack.c.b16 %v1907, %v1906
      %v1917 = vpack.c.b16 %v1909, %v1908
      %1926 = vmatprep.subr.bf16.mxu0 0
      %1927 = vmatpush1.bf16.msra.mxu0 %v1910
      %1928 = vmatprep.subr.bf16.mxu0 0
      %1929 = vmatpush1.bf16.msra.mxu0 %v1911
      %1930 = vmatprep.subr.bf16.mxu0 0
      %1931 = vmatpush1.bf16.msra.mxu0 %v1912
      %1932 = vmatprep.subr.bf16.mxu0 0
      %1933 = vmatpush1.bf16.msra.mxu0 %v1913
      %1934 = vmatprep.subr.bf16.mxu0 0
      %1935 = vmatpush1.bf16.msra.mxu0 %v1914
      %1936 = vmatprep.subr.bf16.mxu0 0
      %1937 = vmatpush1.bf16.msra.mxu0 %v1915
      %1938 = vmatprep.subr.bf16.mxu0 0
      %1939 = vmatpush1.bf16.msra.mxu0 %v1916
      %1940 = vmatprep.subr.bf16.mxu0 0
      %1941 = vmatpush1.bf16.msra.mxu0 %v1917
      %1942 = vmatprep.subr.bf16.mxu0 0
      %1943 = vmatpush1.bf16.msra.mxu0 0
      %1944 = vmatprep.subr.bf16.mxu0 0
      %1945 = vmatpush1.bf16.msra.mxu0 0
      %1946 = vmatprep.subr.bf16.mxu0 0
      %1947 = vmatpush1.bf16.msra.mxu0 0
      %1948 = vmatprep.subr.bf16.mxu0 0
      %1949 = vmatpush1.bf16.msra.mxu0 0
      %1950 = vmatprep.subr.bf16.mxu0 0
      %1951 = vmatpush1.bf16.msra.mxu0 0
      %1952 = vmatprep.subr.bf16.mxu0 0
      %1953 = vmatpush1.bf16.msra.mxu0 0
      %1954 = vmatprep.subr.bf16.mxu0 0
      %1955 = vmatpush1.bf16.msra.mxu0 0
      %1956 = vmatprep.subr.bf16.mxu0 0
      %1957 = vmatpush1.bf16.msra.mxu0 0
      %1958 = vmatprep.mubr.bf16.mxu0 0
      %1959 = vmatmul.mubr.bf16.gmra.mrb[0].mxu0 %v1857
      %v1960 = vpop.f32.mrb[0].mxu0
      %v1961 = vadd.f32 0.0, %v1960
      %v1962 = vpop.f32.mrb[0].mxu0
      %v1963 = vpop.f32.mrb[0].mxu0
      %v1964 = vadd.f32 0.0, %v1963
      %v1965 = vpop.f32.mrb[0].mxu0
      %1966 = vmatprep.mubr.bf16.mxu0 0
      %1967 = vmatmul.mubr.bf16.gmra.mrb[0].mxu0 %v1858
      %v1968 = vpop.f32.mrb[0].mxu0
      %v1969 = vadd.f32 0.0, %v1968
      %v1970 = vpop.f32.mrb[0].mxu0
      %v1971 = vpop.f32.mrb[0].mxu0
      %v1972 = vadd.f32 0.0, %v1971
      %v1973 = vpop.f32.mrb[0].mxu0
      %1974 = vmatprep.mubr.bf16.mxu0 0
      %1975 = vmatmul.mubr.bf16.gmra.mrb[0].mxu0 %v1859
      %v1976 = vpop.f32.mrb[0].mxu0
      %v1977 = vadd.f32 0.0, %v1976
      %v1978 = vpop.f32.mrb[0].mxu0
      %v1979 = vpop.f32.mrb[0].mxu0
      %v1980 = vadd.f32 0.0, %v1979
      %v1981 = vpop.f32.mrb[0].mxu0
      %1982 = vmatprep.mubr.bf16.mxu0 0
      %1983 = vmatmul.mubr.bf16.gmra.mrb[0].mxu0 %v1860
      %v1984 = vpop.f32.mrb[0].mxu0
      %v1985 = vadd.f32 0.0, %v1984
      %v1986 = vpop.f32.mrb[0].mxu0
      %v1987 = vpop.f32.mrb[0].mxu0
      %v1988 = vadd.f32 0.0, %v1987
      %v1989 = vpop.f32.mrb[0].mxu0
      %1990 = vdwg.mxu0
      %v1991 = vadd.f32 %v1841, %v1961
      %v1992 = vadd.f32 %v1842, %v1964
      %v1993 = vadd.f32 %v1843, %v1969
      %v1994 = vadd.f32 %v1844, %v1972
      %v1995 = vadd.f32 %v1845, %v1977
      %v1996 = vadd.f32 %v1846, %v1980
      %v1997 = vadd.f32 %v1847, %v1985
      %v1998 = vadd.f32 %v1848, %v1988
      %v1999 = vmax.f32 %v1991, 0.0
      %v2000 = vmax.f32 %v1992, 0.0
      %v2001 = vmax.f32 %v1993, 0.0
      %v2002 = vmax.f32 %v1994, 0.0
      %v2003 = vmax.f32 %v1995, 0.0
      %v2004 = vmax.f32 %v1996, 0.0
      %v2005 = vmax.f32 %v1997, 0.0
      %v2006 = vmax.f32 %v1998, 0.0
      %v2007 = vpack.c.bf16 %v2000, %v1999
      %v2008 = vpack.c.bf16 %v2002, %v2001
      %v2009 = vpack.c.bf16 %v2004, %v2003
      %v2010 = vpack.c.bf16 %v2006, %v2005
      %v2015 = vunpack.c.l.b16 %v2007
      %v2016 = vunpack.c.h.b16 %v2007
      %v2017 = vunpack.c.l.b16 %v2008
      %v2018 = vunpack.c.h.b16 %v2008
      %v2019 = vunpack.c.l.b16 %v2009
      %v2020 = vunpack.c.h.b16 %v2009
      %v2021 = vunpack.c.l.b16 %v2010
      %v2022 = vunpack.c.h.b16 %v2010
      %v2023 = vpack.c.b16 %v2015, %v2015
      %v2024 = vpack.c.b16 %v2016, %v2016
      %v2025 = vpack.c.b16 %v2017, %v2017
      %v2026 = vpack.c.b16 %v2018, %v2018
      %v2027 = vpack.c.b16 %v2019, %v2019
      %v2028 = vpack.c.b16 %v2020, %v2020
      %v2029 = vpack.c.b16 %v2021, %v2021
      %v2030 = vpack.c.b16 %v2022, %v2022
      %2039 = vst [vmem:[%s325] sm:$0xf] %v2023
      %2040 = vst [vmem:[%s325 + $0x4] sm:$0xf] %v2024
      %2041 = vst [vmem:[%s325 + $0x8] sm:$0xf] %v2025
      %2042 = vst [vmem:[%s325 + $0xc] sm:$0xf] %v2026
      %2043 = vst [vmem:[%s325 + $0x10] sm:$0xf] %v2027
      %2044 = vst [vmem:[%s325 + $0x14] sm:$0xf] %v2028
      %2045 = vst [vmem:[%s325 + $0x18] sm:$0xf] %v2029
      %2046 = vst [vmem:[%s325 + $0x1c] sm:$0xf] %v2030
      %p2047 = scmp.lt.s32.totalorder %s19, 1
      %s2048 = scalar_select %p2047, %s19, 1
      %s2049 = smul.addr %s2048, 8
      %s2050 = smul.addr %s2049, 4
      %s2051 = scalar_lea.vmem %s8, %s2050
      // Predicated region
      $region53: #{encoder_forward.3} parent=51 // pred_check
        %p2052 = pneg %p215
      $region54: #{encoder_forward.3} parent=51 // pred_check_branch
        %2054 = sbr.rel (%p2052) target = $region56
      $region55: #{encoder_forward.3} parent=51 // pred_region
        _
      $region56: #{encoder_forward.3} parent=51 // pred_fallthru
        _
    $region52: #{encoder_forward.3} parent=5 // pred_fallthru
      _
    %p2055 = scmp.le.s32.totalorder 2, %s14
    // Predicated region
    $region57: #{encoder_forward.3} parent=5 // pred_check
      %p2056 = pneg %p2055
    $region58: #{encoder_forward.3} parent=5 // pred_check_branch
      %2058 = sbr.rel (%p2056) target = $region60
    $region59: #{encoder_forward.3} parent=5 // pred_region
      %s2059 = ssub.s32 %s14, 2
      // Predicated region
      $region61: #{encoder_forward.3} parent=59 // pred_check
        %p2060 = pneg %p221
      $region62: #{encoder_forward.3} parent=59 // pred_check_branch
        %2062 = sbr.rel (%p2060) target = $region64
      $region63: #{encoder_forward.3} parent=59 // pred_region
        %p2063 = scmp.lt.s32.totalorder %s20, 1
        %s2064 = scalar_select %p2063, %s20, 1
        %s2065 = smul.addr %s2064, 8
        %s2066 = smul.addr %s2065, 4
        %s2067 = scalar_lea.vmem %s8, %s2066
      $region64: #{encoder_forward.3} parent=59 // pred_fallthru
        _
    $region60: #{encoder_forward.3} parent=5 // pred_fallthru
      _
  $region6: #{encoder_forward.3} parent=0 // loop_footer
    %s18 = sadd.s32 1, %s14
  $region7: #{encoder_forward.3} parent=0 // loop_footer_branch
    %13 = sbr.rel target = $region3
  $region8: #{encoder_forward.3} parent=0 // loop_exit
    _

// kernel: encoder_forward.4
$region0: #{encoder_forward.4}
  #allocation0 [shape = 'u32[]', space=smem, size = 0x4, offset = 0x4, fixed_abs, tag = 'smem constant byte address 0x4 - core index']
  #allocation1 [shape = 'u32[144,128]{1,0:T(1,128)}', space=vmem, size = 0x12000, scoped, tag = 'internal scratch']
  #allocation2 [shape = 'f32[6,6,128]{2,1,0:T(8,128)}', space=vmem, size = 0x6000, scoped, tag = 'scratch operand']
  %s0 = inlined_call_operand.vmem [shape: bf16[2,16,1152], index: 0, kind: input, shape index: {}]
  %s1 = inlined_call_operand.vmem [shape: bf16[2,16,128], index: 1, kind: input, shape index: {}]
  %s2 = inlined_call_operand.vmem [shape: bf16[1152,128], index: 2, kind: input, shape index: {}]
  %s3 = inlined_call_operand.vmem [shape: f32[1,128], index: 3, kind: input, shape index: {}]
  %s4 = inlined_call_operand.vmem [shape: bf16[9,128,128], index: 4, kind: input, shape index: {}]
  %s5 = inlined_call_operand.vmem [shape: f32[1,128], index: 5, kind: input, shape index: {}]
  %s6 = inlined_call_operand.vmem [shape: bf16[128,128], index: 6, kind: input, shape index: {}]
  %s7 = inlined_call_operand.vmem [shape: f32[1,128], index: 7, kind: input, shape index: {}]
  %s8 = inlined_call_operand.vmem [shape: bf16[2,16,128], index: 8, kind: output, shape index: {}]
  %s9 = sld [smem:[#allocation0]]
  $region65: #{encoder_forward.4} parent=0
    _
  %s11 = ssub.s32 1, %s9
  %s12 = scalar_select 0, %s11, %s9
  loop: start=0, step=1, limit=4
  $region2: #{encoder_forward.4} parent=0 // loop_pre_header
    _
  $region3: #{encoder_forward.4} parent=0 // loop_header
    %s14 = sphi 0, %s18
    %p15 = scmp.ge.s32.totalorder %s14, 4
    %s24 = sphi 0, %s26
    %s27 = sphi 0, %s24
    %s28 = sphi 0, %s27
    %s44 = sphi 0, %s28
    %s50 = sphi 0, %s52
    %s53 = sphi 0, %s50
    %s54 = sphi 0, %s53
    %s70 = sphi 0, %s54
    %s74 = sphi 0, %s74
    %s76 = sphi 0, %s74
    %s77 = sphi 0, %s76
    %s91 = sphi 0, %s77
    %s95 = sphi 0, %s95
    %s97 = sphi 0, %s95
    %s98 = sphi 0, %s97
    %s112 = sphi 0, %s98
    %s116 = sphi 0, %s116
    %s118 = sphi 0, %s116
    %s119 = sphi 0, %s118
    %s133 = sphi 0, %s119
    %s137 = sphi 0, %s137
    %s139 = sphi 0, %s137
    %s140 = sphi 0, %s139
    %s154 = sphi 0, %s140
    %s158 = sphi 0, %s158
    %s160 = sphi 0, %s158
    %s161 = sphi 0, %s160
    %s175 = sphi 0, %s161
    %s179 = sphi 0, %s179
    %s181 = sphi 0, %s179
    %s182 = sphi 0, %s181
    %s196 = sphi 0, %s182
    %s202 = sphi 0, %s204
    %s205 = sphi 0, %s202
    %s206 = sphi 0, %s205
    %s222 = sphi 0, %s206
  $region4: #{encoder_forward.4} parent=0 // loop_header_branch
    %17 = sbr.rel (%p15) target = $region8
  $region5: #{encoder_forward.4} parent=0 // loop_body
    %s19 = ssub.s32 %s14, 1
    %s20 = ssub.s32 %s14, 2
    %s21 = sadd.s32 %s14, 1
    %s22 = ssub.s32 %s14, %s21
    %p23 = scmp.eq.s32.totalorder %s22, 0
    %s25 = sadd.s32 %s24, 1
    %s26 = scalar_select %p23, %s24, %s25
    %p29 = pneg %p23
    %p30 = scmp.eq.s32.totalorder %s14, 1
    %p31 = por %p29, %p30
    %p32 = scmp.ne.s32.totalorder %s24, %s27
    %p33 = scmp.eq.s32.totalorder %s14, 0
    %p34 = por %p32, %p33
    %p35 = scmp.ne.s32.totalorder %s24, %s27
    %p36 = scmp.eq.s32.totalorder %s19, 1
    %p37 = por %p35, %p36
    %p38 = scmp.ne.s32.totalorder %s27, %s28
    %p39 = scmp.eq.s32.totalorder %s19, 0
    %p40 = por %p38, %p39
    %p41 = scmp.ne.s32.totalorder %s27, %s28
    %p42 = scmp.eq.s32.totalorder %s20, 1
    %p43 = por %p41, %p42
    %p45 = scmp.ne.s32.totalorder %s28, %s44
    %p46 = scmp.eq.s32.totalorder %s20, 0
    %p47 = por %p45, %p46
    %s48 = ssub.s32 %s14, %s21
    %p49 = scmp.eq.s32.totalorder %s48, 0
    %s51 = sadd.s32 %s50, 1
    %s52 = scalar_select %p49, %s50, %s51
    %p55 = pneg %p49
    %p56 = scmp.eq.s32.totalorder %s14, 1
    %p57 = por %p55, %p56
    %p58 = scmp.ne.s32.totalorder %s50, %s53
    %p59 = scmp.eq.s32.totalorder %s14, 0
    %p60 = por %p58, %p59
    %p61 = scmp.ne.s32.totalorder %s50, %s53
    %p62 = scmp.eq.s32.totalorder %s19, 1
    %p63 = por %p61, %p62
    %p64 = scmp.ne.s32.totalorder %s53, %s54
    %p65 = scmp.eq.s32.totalorder %s19, 0
    %p66 = por %p64, %p65
    %p67 = scmp.ne.s32.totalorder %s53, %s54
    %p68 = scmp.eq.s32.totalorder %s20, 1
    %p69 = por %p67, %p68
    %p71 = scmp.ne.s32.totalorder %s54, %s70
    %p72 = scmp.eq.s32.totalorder %s20, 0
    %p73 = por %p71, %p72
    %s75 = sadd.s32 %s74, 1
    %p78 = scmp.eq.s32.totalorder %s14, 1
    %p79 = scmp.ne.s32.totalorder %s74, %s76
    %p80 = scmp.eq.s32.totalorder %s14, 0
    %p81 = por %p79, %p80
    %p82 = scmp.ne.s32.totalorder %s74, %s76
    %p83 = scmp.eq.s32.totalorder %s19, 1
    %p84 = por %p82, %p83
    %p85 = scmp.ne.s32.totalorder %s76, %s77
    %p86 = scmp.eq.s32.totalorder %s19, 0
    %p87 = por %p85, %p86
    %p88 = scmp.ne.s32.totalorder %s76, %s77
    %p89 = scmp.eq.s32.totalorder %s20, 1
    %p90 = por %p88, %p89
    %p92 = scmp.ne.s32.totalorder %s77, %s91
    %p93 = scmp.eq.s32.totalorder %s20, 0
    %p94 = por %p92, %p93
    %s96 = sadd.s32 %s95, 1
    %p99 = scmp.eq.s32.totalorder %s14, 1
    %p100 = scmp.ne.s32.totalorder %s95, %s97
    %p101 = scmp.eq.s32.totalorder %s14, 0
    %p102 = por %p100, %p101
    %p103 = scmp.ne.s32.totalorder %s95, %s97
    %p104 = scmp.eq.s32.totalorder %s19, 1
    %p105 = por %p103, %p104
    %p106 = scmp.ne.s32.totalorder %s97, %s98
    %p107 = scmp.eq.s32.totalorder %s19, 0
    %p108 = por %p106, %p107
    %p109 = scmp.ne.s32.totalorder %s97, %s98
    %p110 = scmp.eq.s32.totalorder %s20, 1
    %p111 = por %p109, %p110
    %p113 = scmp.ne.s32.totalorder %s98, %s112
    %p114 = scmp.eq.s32.totalorder %s20, 0
    %p115 = por %p113, %p114
    %s117 = sadd.s32 %s116, 1
    %p120 = scmp.eq.s32.totalorder %s14, 1
    %p121 = scmp.ne.s32.totalorder %s116, %s118
    %p122 = scmp.eq.s32.totalorder %s14, 0
    %p123 = por %p121, %p122
    %p124 = scmp.ne.s32.totalorder %s116, %s118
    %p125 = scmp.eq.s32.totalorder %s19, 1
    %p126 = por %p124, %p125
    %p127 = scmp.ne.s32.totalorder %s118, %s119
    %p128 = scmp.eq.s32.totalorder %s19, 0
    %p129 = por %p127, %p128
    %p130 = scmp.ne.s32.totalorder %s118, %s119
    %p131 = scmp.eq.s32.totalorder %s20, 1
    %p132 = por %p130, %p131
    %p134 = scmp.ne.s32.totalorder %s119, %s133
    %p135 = scmp.eq.s32.totalorder %s20, 0
    %p136 = por %p134, %p135
    %s138 = sadd.s32 %s137, 1
    %p141 = scmp.eq.s32.totalorder %s14, 1
    %p142 = scmp.ne.s32.totalorder %s137, %s139
    %p143 = scmp.eq.s32.totalorder %s14, 0
    %p144 = por %p142, %p143
    %p145 = scmp.ne.s32.totalorder %s137, %s139
    %p146 = scmp.eq.s32.totalorder %s19, 1
    %p147 = por %p145, %p146
    %p148 = scmp.ne.s32.totalorder %s139, %s140
    %p149 = scmp.eq.s32.totalorder %s19, 0
    %p150 = por %p148, %p149
    %p151 = scmp.ne.s32.totalorder %s139, %s140
    %p152 = scmp.eq.s32.totalorder %s20, 1
    %p153 = por %p151, %p152
    %p155 = scmp.ne.s32.totalorder %s140, %s154
    %p156 = scmp.eq.s32.totalorder %s20, 0
    %p157 = por %p155, %p156
    %s159 = sadd.s32 %s158, 1
    %p162 = scmp.eq.s32.totalorder %s14, 1
    %p163 = scmp.ne.s32.totalorder %s158, %s160
    %p164 = scmp.eq.s32.totalorder %s14, 0
    %p165 = por %p163, %p164
    %p166 = scmp.ne.s32.totalorder %s158, %s160
    %p167 = scmp.eq.s32.totalorder %s19, 1
    %p168 = por %p166, %p167
    %p169 = scmp.ne.s32.totalorder %s160, %s161
    %p170 = scmp.eq.s32.totalorder %s19, 0
    %p171 = por %p169, %p170
    %p172 = scmp.ne.s32.totalorder %s160, %s161
    %p173 = scmp.eq.s32.totalorder %s20, 1
    %p174 = por %p172, %p173
    %p176 = scmp.ne.s32.totalorder %s161, %s175
    %p177 = scmp.eq.s32.totalorder %s20, 0
    %p178 = por %p176, %p177
    %s180 = sadd.s32 %s179, 1
    %p183 = scmp.eq.s32.totalorder %s14, 1
    %p184 = scmp.ne.s32.totalorder %s179, %s181
    %p185 = scmp.eq.s32.totalorder %s14, 0
    %p186 = por %p184, %p185
    %p187 = scmp.ne.s32.totalorder %s179, %s181
    %p188 = scmp.eq.s32.totalorder %s19, 1
    %p189 = por %p187, %p188
    %p190 = scmp.ne.s32.totalorder %s181, %s182
    %p191 = scmp.eq.s32.totalorder %s19, 0
    %p192 = por %p190, %p191
    %p193 = scmp.ne.s32.totalorder %s181, %s182
    %p194 = scmp.eq.s32.totalorder %s20, 1
    %p195 = por %p193, %p194
    %p197 = scmp.ne.s32.totalorder %s182, %s196
    %p198 = scmp.eq.s32.totalorder %s20, 0
    %p199 = por %p197, %p198
    %s200 = ssub.s32 %s14, %s21
    %p201 = scmp.eq.s32.totalorder %s200, 0
    %s203 = sadd.s32 %s202, 1
    %s204 = scalar_select %p201, %s202, %s203
    %p207 = pneg %p201
    %p208 = scmp.eq.s32.totalorder %s14, 1
    %p209 = por %p207, %p208
    %p210 = scmp.ne.s32.totalorder %s202, %s205
    %p211 = scmp.eq.s32.totalorder %s14, 0
    %p212 = por %p210, %p211
    %p213 = scmp.ne.s32.totalorder %s202, %s205
    %p214 = scmp.eq.s32.totalorder %s19, 1
    %p215 = por %p213, %p214
    %p216 = scmp.ne.s32.totalorder %s205, %s206
    %p217 = scmp.eq.s32.totalorder %s19, 0
    %p218 = por %p216, %p217
    %p219 = scmp.ne.s32.totalorder %s205, %s206
    %p220 = scmp.eq.s32.totalorder %s20, 1
    %p221 = por %p219, %p220
    %p223 = scmp.ne.s32.totalorder %s206, %s222
    %p224 = scmp.eq.s32.totalorder %s20, 0
    %p225 = por %p223, %p224
    %p226 = scmp.le.s32.totalorder 1, %s14
    %p227 = scmp.lt.s32.totalorder %s14, 3
    %p228 = pnand %p226, %p227
    %p229 = pneg %p228
    // Predicated region
    $region9: #{encoder_forward.4} parent=5 // pred_check
      _
    $region10: #{encoder_forward.4} parent=5 // pred_check_branch
      %231 = sbr.rel (%p228) target = $region12
    $region11: #{encoder_forward.4} parent=5 // pred_region
      %s232 = ssub.s32 %s14, 1
      // Predicated region
      $region13: #{encoder_forward.4} parent=11 // pred_check
        %p233 = pneg %p87
      $region14: #{encoder_forward.4} parent=11 // pred_check_branch
        %235 = sbr.rel (%p233) target = $region16
      $region15: #{encoder_forward.4} parent=11 // pred_region
        _
      $region16: #{encoder_forward.4} parent=11 // pred_fallthru
        _
      // Predicated region
      $region17: #{encoder_forward.4} parent=11 // pred_check
        %p236 = pneg %p108
      $region18: #{encoder_forward.4} parent=11 // pred_check_branch
        %238 = sbr.rel (%p236) target = $region20
      $region19: #{encoder_forward.4} parent=11 // pred_region
        _
      $region20: #{encoder_forward.4} parent=11 // pred_fallthru
        _
      // Predicated region
      $region21: #{encoder_forward.4} parent=11 // pred_check
        %p239 = pneg %p129
      $region22: #{encoder_forward.4} parent=11 // pred_check_branch
        %241 = sbr.rel (%p239) target = $region24
      $region23: #{encoder_forward.4} parent=11 // pred_region
        _
      $region24: #{encoder_forward.4} parent=11 // pred_fallthru
        _
      // Predicated region
      $region25: #{encoder_forward.4} parent=11 // pred_check
        %p242 = pneg %p150
      $region26: #{encoder_forward.4} parent=11 // pred_check_branch
        %244 = sbr.rel (%p242) target = $region28
      $region27: #{encoder_forward.4} parent=11 // pred_region
        _
      $region28: #{encoder_forward.4} parent=11 // pred_fallthru
        _
      // Predicated region
      $region29: #{encoder_forward.4} parent=11 // pred_check
        %p245 = pneg %p171
      $region30: #{encoder_forward.4} parent=11 // pred_check_branch
        %247 = sbr.rel (%p245) target = $region32
      $region31: #{encoder_forward.4} parent=11 // pred_region
        _
      $region32: #{encoder_forward.4} parent=11 // pred_fallthru
        _
      // Predicated region
      $region33: #{encoder_forward.4} parent=11 // pred_check
        %p248 = pneg %p192
      $region34: #{encoder_forward.4} parent=11 // pred_check_branch
        %250 = sbr.rel (%p248) target = $region36
      $region35: #{encoder_forward.4} parent=11 // pred_region
        _
      $region36: #{encoder_forward.4} parent=11 // pred_fallthru
        _
    $region12: #{encoder_forward.4} parent=5 // pred_fallthru
      _
    %p251 = scmp.lt.s32.totalorder %s14, 2
    // Predicated region
    $region37: #{encoder_forward.4} parent=5 // pred_check
      %p252 = pneg %p251
    $region38: #{encoder_forward.4} parent=5 // pred_check_branch
      %254 = sbr.rel (%p252) target = $region40
    $region39: #{encoder_forward.4} parent=5 // pred_region
      // Predicated region
      $region41: #{encoder_forward.4} parent=39 // pred_check
        %p255 = pneg %p34
      $region42: #{encoder_forward.4} parent=39 // pred_check_branch
        %257 = sbr.rel (%p255) target = $region44
      $region43: #{encoder_forward.4} parent=39 // pred_region
        %p258 = scmp.lt.s32.totalorder %s14, 1
        %s259 = scalar_select %p258, %s14, 1
        %s260 = smul.addr %s259, 18
        %s261 = smul.addr %s260, 4
        %s262 = scalar_lea.vmem %s0, %s261
      $region44: #{encoder_forward.4} parent=39 // pred_fallthru
        _
      // Predicated region
      $region45: #{encoder_forward.4} parent=39 // pred_check
        %p263 = pneg %p60
      $region46: #{encoder_forward.4} parent=39 // pred_check_branch
        %265 = sbr.rel (%p263) target = $region48
      $region47: #{encoder_forward.4} parent=39 // pred_region
        %p266 = scmp.lt.s32.totalorder %s14, 1
        %s267 = scalar_select %p266, %s14, 1
        %s268 = smul.addr %s267, 2
        %s269 = smul.addr %s268, 4
        %s270 = scalar_lea.vmem %s1, %s269
      $region48: #{encoder_forward.4} parent=39 // pred_fallthru
        _
    $region40: #{encoder_forward.4} parent=5 // pred_fallthru
      _
    %p271 = scmp.le.s32.totalorder 1, %s14
    %p272 = scmp.lt.s32.totalorder %s14, 3
    %p273 = pnand %p271, %p272
    %p274 = pneg %p273
    // Predicated region
    $region49: #{encoder_forward.4} parent=5 // pred_check
      _
    $region50: #{encoder_forward.4} parent=5 // pred_check_branch
      %276 = sbr.rel (%p273) target = $region52
    $region51: #{encoder_forward.4} parent=5 // pred_region
      %s277 = ssub.s32 %s14, 1
      %p278 = scmp.lt.s32.totalorder %s19, 1
      %s279 = scalar_select %p278, %s19, 1
      %s280 = smul.addr %s279, 18
      %s281 = smul.addr %s280, 4
      %s282 = scalar_lea.vmem %s0, %s281
      %p283 = pneg %p40
      %p284 = pneg %p37
      %p285 = scmp.lt.s32.totalorder %s19, 1
      %s286 = scalar_select %p285, %s19, 1
      %s287 = smul.addr %s286, 2
      %s288 = smul.addr %s287, 4
      %s289 = scalar_lea.vmem %s1, %s288
      %p290 = pneg %p66
      %p291 = pneg %p63
      %p292 = pneg %p87
      %p293 = pneg %p84
      %p294 = pneg %p108
      %p295 = pneg %p105
      %p296 = pneg %p129
      %p297 = pneg %p126
      %p298 = pneg %p150
      %p299 = pneg %p147
      %p300 = pneg %p171
      %p301 = pneg %p168
      %p302 = pneg %p192
      %p303 = pneg %p189
      %p304 = pneg %p218
      %p305 = pneg %p215
      %p306 = scmp.lt.s32.totalorder %s19, 1
      %s307 = scalar_select %p306, %s19, 1
      %s308 = smul.addr %s307, 2
      %s309 = smul.addr %s308, 4
      %s310 = scalar_lea.vmem %s8, %s309
      %p311 = scmp.lt.s32.totalorder %s19, 1
      %s312 = scalar_select %p311, %s19, 1
      %s313 = smul.addr %s312, 18
      %s314 = smul.addr %s313, 4
      %s315 = scalar_lea.vmem %s0, %s314
      %p316 = scmp.lt.s32.totalorder %s19, 1
      %s317 = scalar_select %p316, %s19, 1
      %s318 = smul.addr %s317, 2
      %s319 = smul.addr %s318, 4
      %s320 = scalar_lea.vmem %s1, %s319
      %p321 = scmp.lt.s32.totalorder %s19, 1
      %s322 = scalar_select %p321, %s19, 1
      %s323 = smul.addr %s322, 2
      %s324 = smul.addr %s323, 4
      %s325 = scalar_lea.vmem %s8, %s324
      %v327 = vld [vmem:[%s315] sm:$0xff]
      %v328 = vld [vmem:[%s315 + $0x8] sm:$0xff]
      %v329 = vld [vmem:[%s315 + $0x10] sm:$0xff]
      %v330 = vld [vmem:[%s315 + $0x18] sm:$0xff]
      %v331 = vld [vmem:[%s315 + $0x20] sm:$0xf]
      %v332 = vld [vmem:[%s315 + $0x24] sm:$0xff]
      %v333 = vld [vmem:[%s315 + $0x2c] sm:$0xff]
      %v334 = vld [vmem:[%s315 + $0x34] sm:$0xff]
      %v335 = vld [vmem:[%s315 + $0x3c] sm:$0xff]
      %v336 = vld [vmem:[%s315 + $0x44] sm:$0xf]
      %v337 = vld [vmem:[%s2] sm:$0xf]
      %v338 = vld [vmem:[%s2 + $0x4] sm:$0xf]
      %v339 = vld [vmem:[%s2 + $0x8] sm:$0xf]
      %v340 = vld [vmem:[%s2 + $0xc] sm:$0xf]
      %v341 = vld [vmem:[%s2 + $0x10] sm:$0xf]
      %v342 = vld [vmem:[%s2 + $0x14] sm:$0xf]
      %v343 = vld [vmem:[%s2 + $0x18] sm:$0xf]
      %v344 = vld [vmem:[%s2 + $0x1c] sm:$0xf]
      %v345 = vld [vmem:[%s2 + $0x20] sm:$0xf]
      %v346 = vld [vmem:[%s2 + $0x24] sm:$0xf]
      %v347 = vld [vmem:[%s2 + $0x28] sm:$0xf]
      %v348 = vld [vmem:[%s2 + $0x2c] sm:$0xf]
      %v349 = vld [vmem:[%s2 + $0x30] sm:$0xf]
      %v350 = vld [vmem:[%s2 + $0x34] sm:$0xf]
      %v351 = vld [vmem:[%s2 + $0x38] sm:$0xf]
      %v352 = vld [vmem:[%s2 + $0x3c] sm:$0xf]
      %v353 = vld [vmem:[%s2 + $0x40] sm:$0xf]
      %v354 = vld [vmem:[%s2 + $0x44] sm:$0xf]
      %v355 = vld [vmem:[%s2 + $0x48] sm:$0xf]
      %v356 = vld [vmem:[%s2 + $0x4c] sm:$0xf]
      %v357 = vld [vmem:[%s2 + $0x50] sm:$0xf]
      %v358 = vld [vmem:[%s2 + $0x54] sm:$0xf]
      %v359 = vld [vmem:[%s2 + $0x58] sm:$0xf]
      %v360 = vld [vmem:[%s2 + $0x5c] sm:$0xf]
      %v361 = vld [vmem:[%s2 + $0x60] sm:$0xf]
      %v362 = vld [vmem:[%s2 + $0x64] sm:$0xf]
      %v363 = vld [vmem:[%s2 + $0x68] sm:$0xf]
      %v364 = vld [vmem:[%s2 + $0x6c] sm:$0xf]
      %v365 = vld [vmem:[%s2 + $0x70] sm:$0xf]
      %v366 = vld [vmem:[%s2 + $0x74] sm:$0xf]
      %v367 = vld [vmem:[%s2 + $0x78] sm:$0xf]
      %v368 = vld [vmem:[%s2 + $0x7c] sm:$0xf]
      %v369 = vld [vmem:[%s2 + $0x80] sm:$0xf]
      %v370 = vld [vmem:[%s2 + $0x84] sm:$0xf]
      %v371 = vld [vmem:[%s2 + $0x88] sm:$0xf]
      %v372 = vld [vmem:[%s2 + $0x8c] sm:$0xf]
      %v373 = vld [vmem:[%s2 + $0x90] sm:$0xf]
      %v374 = vld [vmem:[%s2 + $0x94] sm:$0xf]
      %v375 = vld [vmem:[%s2 + $0x98] sm:$0xf]
      %v376 = vld [vmem:[%s2 + $0x9c] sm:$0xf]
      %v377 = vld [vmem:[%s2 + $0xa0] sm:$0xf]
      %v378 = vld [vmem:[%s2 + $0xa4] sm:$0xf]
      %v379 = vld [vmem:[%s2 + $0xa8] sm:$0xf]
      %v380 = vld [vmem:[%s2 + $0xac] sm:$0xf]
      %v381 = vld [vmem:[%s2 + $0xb0] sm:$0xf]
      %v382 = vld [vmem:[%s2 + $0xb4] sm:$0xf]
      %v383 = vld [vmem:[%s2 + $0xb8] sm:$0xf]
      %v384 = vld [vmem:[%s2 + $0xbc] sm:$0xf]
      %v385 = vld [vmem:[%s2 + $0xc0] sm:$0xf]
      %v386 = vld [vmem:[%s2 + $0xc4] sm:$0xf]
      %v387 = vld [vmem:[%s2 + $0xc8] sm:$0xf]
      %v388 = vld [vmem:[%s2 + $0xcc] sm:$0xf]
      %v389 = vld [vmem:[%s2 + $0xd0] sm:$0xf]
      %v390 = vld [vmem:[%s2 + $0xd4] sm:$0xf]
      %v391 = vld [vmem:[%s2 + $0xd8] sm:$0xf]
      %v392 = vld [vmem:[%s2 + $0xdc] sm:$0xf]
      %v393 = vld [vmem:[%s2 + $0xe0] sm:$0xf]
      %v394 = vld [vmem:[%s2 + $0xe4] sm:$0xf]
      %v395 = vld [vmem:[%s2 + $0xe8] sm:$0xf]
      %v396 = vld [vmem:[%s2 + $0xec] sm:$0xf]
      %v397 = vld [vmem:[%s2 + $0xf0] sm:$0xf]
      %v398 = vld [vmem:[%s2 + $0xf4] sm:$0xf]
      %v399 = vld [vmem:[%s2 + $0xf8] sm:$0xf]
      %v400 = vld [vmem:[%s2 + $0xfc] sm:$0xf]
      %v401 = vld [vmem:[%s2 + $0x100] sm:$0xf]
      %v402 = vld [vmem:[%s2 + $0x104] sm:$0xf]
      %v403 = vld [vmem:[%s2 + $0x108] sm:$0xf]
      %v404 = vld [vmem:[%s2 + $0x10c] sm:$0xf]
      %v405 = vld [vmem:[%s2 + $0x110] sm:$0xf]
      %v406 = vld [vmem:[%s2 + $0x114] sm:$0xf]
      %v407 = vld [vmem:[%s2 + $0x118] sm:$0xf]
      %v408 = vld [vmem:[%s2 + $0x11c] sm:$0xf]
      %v409 = vld [vmem:[%s2 + $0x120] sm:$0xf]
      %v410 = vld [vmem:[%s2 + $0x124] sm:$0xf]
      %v411 = vld [vmem:[%s2 + $0x128] sm:$0xf]
      %v412 = vld [vmem:[%s2 + $0x12c] sm:$0xf]
      %v413 = vld [vmem:[%s2 + $0x130] sm:$0xf]
      %v414 = vld [vmem:[%s2 + $0x134] sm:$0xf]
      %v415 = vld [vmem:[%s2 + $0x138] sm:$0xf]
      %v416 = vld [vmem:[%s2 + $0x13c] sm:$0xf]
      %v417 = vld [vmem:[%s2 + $0x140] sm:$0xf]
      %v418 = vld [vmem:[%s2 + $0x144] sm:$0xf]
      %v419 = vld [vmem:[%s2 + $0x148] sm:$0xf]
      %v420 = vld [vmem:[%s2 + $0x14c] sm:$0xf]
      %v421 = vld [vmem:[%s2 + $0x150] sm:$0xf]
      %v422 = vld [vmem:[%s2 + $0x154] sm:$0xf]
      %v423 = vld [vmem:[%s2 + $0x158] sm:$0xf]
      %v424 = vld [vmem:[%s2 + $0x15c] sm:$0xf]
      %v425 = vld [vmem:[%s2 + $0x160] sm:$0xf]
      %v426 = vld [vmem:[%s2 + $0x164] sm:$0xf]
      %v427 = vld [vmem:[%s2 + $0x168] sm:$0xf]
      %v428 = vld [vmem:[%s2 + $0x16c] sm:$0xf]
      %v429 = vld [vmem:[%s2 + $0x170] sm:$0xf]
      %v430 = vld [vmem:[%s2 + $0x174] sm:$0xf]
      %v431 = vld [vmem:[%s2 + $0x178] sm:$0xf]
      %v432 = vld [vmem:[%s2 + $0x17c] sm:$0xf]
      %v433 = vld [vmem:[%s2 + $0x180] sm:$0xf]
      %v434 = vld [vmem:[%s2 + $0x184] sm:$0xf]
      %v435 = vld [vmem:[%s2 + $0x188] sm:$0xf]
      %v436 = vld [vmem:[%s2 + $0x18c] sm:$0xf]
      %v437 = vld [vmem:[%s2 + $0x190] sm:$0xf]
      %v438 = vld [vmem:[%s2 + $0x194] sm:$0xf]
      %v439 = vld [vmem:[%s2 + $0x198] sm:$0xf]
      %v440 = vld [vmem:[%s2 + $0x19c] sm:$0xf]
      %v441 = vld [vmem:[%s2 + $0x1a0] sm:$0xf]
      %v442 = vld [vmem:[%s2 + $0x1a4] sm:$0xf]
      %v443 = vld [vmem:[%s2 + $0x1a8] sm:$0xf]
      %v444 = vld [vmem:[%s2 + $0x1ac] sm:$0xf]
      %v445 = vld [vmem:[%s2 + $0x1b0] sm:$0xf]
      %v446 = vld [vmem:[%s2 + $0x1b4] sm:$0xf]
      %v447 = vld [vmem:[%s2 + $0x1b8] sm:$0xf]
      %v448 = vld [vmem:[%s2 + $0x1bc] sm:$0xf]
      %v449 = vld [vmem:[%s2 + $0x1c0] sm:$0xf]
      %v450 = vld [vmem:[%s2 + $0x1c4] sm:$0xf]
      %v451 = vld [vmem:[%s2 + $0x1c8] sm:$0xf]
      %v452 = vld [vmem:[%s2 + $0x1cc] sm:$0xf]
      %v453 = vld [vmem:[%s2 + $0x1d0] sm:$0xf]
      %v454 = vld [vmem:[%s2 + $0x1d4] sm:$0xf]
      %v455 = vld [vmem:[%s2 + $0x1d8] sm:$0xf]
      %v456 = vld [vmem:[%s2 + $0x1dc] sm:$0xf]
      %v457 = vld [vmem:[%s2 + $0x1e0] sm:$0xf]
      %v458 = vld [vmem:[%s2 + $0x1e4] sm:$0xf]
      %v459 = vld [vmem:[%s2 + $0x1e8] sm:$0xf]
      %v460 = vld [vmem:[%s2 + $0x1ec] sm:$0xf]
      %v461 = vld [vmem:[%s2 + $0x1f0] sm:$0xf]
      %v462 = vld [vmem:[%s2 + $0x1f4] sm:$0xf]
      %v463 = vld [vmem:[%s2 + $0x1f8] sm:$0xf]
      %v464 = vld [vmem:[%s2 + $0x1fc] sm:$0xf]
      %v465 = vld [vmem:[%s2 + $0x200] sm:$0xf]
      %v466 = vld [vmem:[%s2 + $0x204] sm:$0xf]
      %v467 = vld [vmem:[%s2 + $0x208] sm:$0xf]
      %v468 = vld [vmem:[%s2 + $0x20c] sm:$0xf]
      %v469 = vld [vmem:[%s2 + $0x210] sm:$0xf]
      %v470 = vld [vmem:[%s2 + $0x214] sm:$0xf]
      %v471 = vld [vmem:[%s2 + $0x218] sm:$0xf]
      %v472 = vld [vmem:[%s2 + $0x21c] sm:$0xf]
      %v473 = vld [vmem:[%s2 + $0x220] sm:$0xf]
      %v474 = vld [vmem:[%s2 + $0x224] sm:$0xf]
      %v475 = vld [vmem:[%s2 + $0x228] sm:$0xf]
      %v476 = vld [vmem:[%s2 + $0x22c] sm:$0xf]
      %v477 = vld [vmem:[%s2 + $0x230] sm:$0xf]
      %v478 = vld [vmem:[%s2 + $0x234] sm:$0xf]
      %v479 = vld [vmem:[%s2 + $0x238] sm:$0xf]
      %v480 = vld [vmem:[%s2 + $0x23c] sm:$0xf]
      %v481 = vld [vmem:[%s3] sm:$0x1]
      %v483 = vlaneseq
      %v484 = vshrl.u32 %v483, 7
      %v485 = vsub.s32 0, %v484
      %v486 = vrot.slane %v481, %v485
      %v498 = vunpack.c.l.b16 %v327
      %v499 = vunpack.c.h.b16 %v327
      %v500 = vunpack.c.l.b16 %v328
      %v501 = vunpack.c.h.b16 %v328
      %v502 = vunpack.c.l.b16 %v329
      %v503 = vunpack.c.h.b16 %v329
      %v504 = vunpack.c.l.b16 %v330
      %v505 = vunpack.c.h.b16 %v330
      %v506 = vunpack.c.l.b16 %v331
      %v507 = vunpack.c.l.b16 %v332
      %v508 = vunpack.c.h.b16 %v332
      %v509 = vunpack.c.l.b16 %v333
      %v510 = vunpack.c.h.b16 %v333
      %v511 = vunpack.c.l.b16 %v334
      %v512 = vunpack.c.h.b16 %v334
      %v513 = vunpack.c.l.b16 %v335
      %v514 = vunpack.c.h.b16 %v335
      %v515 = vunpack.c.l.b16 %v336
      %v516 = vpack.c.b16 %v507, %v498
      %v517 = vpack.c.b16 %v508, %v499
      %v518 = vpack.c.b16 %v509, %v500
      %v519 = vpack.c.b16 %v510, %v501
      %v520 = vpack.c.b16 %v511, %v502
      %v521 = vpack.c.b16 %v512, %v503
      %v522 = vpack.c.b16 %v513, %v504
      %v523 = vpack.c.b16 %v514, %v505
      %v524 = vpack.c.b16 %v515, %v506
      %v678 = vunpack.c.l.b16 %v337
      %v679 = vunpack.c.l.b16 %v338
      %v680 = vunpack.c.l.b16 %v339
      %v681 = vunpack.c.l.b16 %v340
      %v682 = vunpack.c.l.b16 %v341
      %v683 = vunpack.c.l.b16 %v342
      %v684 = vunpack.c.l.b16 %v343
      %v685 = vunpack.c.l.b16 %v344
      %v686 = vunpack.c.l.b16 %v345
      %v687 = vunpack.c.l.b16 %v346
      %v688 = vunpack.c.l.b16 %v347
      %v689 = vunpack.c.l.b16 %v348
      %v690 = vunpack.c.l.b16 %v349
      %v691 = vunpack.c.l.b16 %v350
      %v692 = vunpack.c.l.b16 %v351
      %v693 = vunpack.c.l.b16 %v352
      %v694 = vunpack.c.l.b16 %v353
      %v695 = vunpack.c.l.b16 %v354
      %v696 = vunpack.c.l.b16 %v355
      %v697 = vunpack.c.l.b16 %v356
      %v698 = vunpack.c.l.b16 %v357
      %v699 = vunpack.c.l.b16 %v358
      %v700 = vunpack.c.l.b16 %v359
      %v701 = vunpack.c.l.b16 %v360
      %v702 = vunpack.c.l.b16 %v361
      %v703 = vunpack.c.l.b16 %v362
      %v704 = vunpack.c.l.b16 %v363
      %v705 = vunpack.c.l.b16 %v364
      %v706 = vunpack.c.l.b16 %v365
      %v707 = vunpack.c.l.b16 %v366
      %v708 = vunpack.c.l.b16 %v367
      %v709 = vunpack.c.l.b16 %v368
      %v710 = vunpack.c.l.b16 %v369
      %v711 = vunpack.c.l.b16 %v370
      %v712 = vunpack.c.l.b16 %v371
      %v713 = vunpack.c.l.b16 %v372
      %v714 = vunpack.c.l.b16 %v373
      %v715 = vunpack.c.l.b16 %v374
      %v716 = vunpack.c.l.b16 %v375
      %v717 = vunpack.c.l.b16 %v376
      %v718 = vunpack.c.l.b16 %v377
      %v719 = vunpack.c.l.b16 %v378
      %v720 = vunpack.c.l.b16 %v379
      %v721 = vunpack.c.l.b16 %v380
      %v722 = vunpack.c.l.b16 %v381
      %v723 = vunpack.c.l.b16 %v382
      %v724 = vunpack.c.l.b16 %v383
      %v725 = vunpack.c.l.b16 %v384
      %v726 = vunpack.c.l.b16 %v385
      %v727 = vunpack.c.l.b16 %v386
      %v728 = vunpack.c.l.b16 %v387
      %v729 = vunpack.c.l.b16 %v388
      %v730 = vunpack.c.l.b16 %v389
      %v731 = vunpack.c.l.b16 %v390
      %v732 = vunpack.c.l.b16 %v391
      %v733 = vunpack.c.l.b16 %v392
      %v734 = vunpack.c.l.b16 %v393
      %v735 = vunpack.c.l.b16 %v394
      %v736 = vunpack.c.l.b16 %v395
      %v737 = vunpack.c.l.b16 %v396
      %v738 = vunpack.c.l.b16 %v397
      %v739 = vunpack.c.l.b16 %v398
      %v740 = vunpack.c.l.b16 %v399
      %v741 = vunpack.c.l.b16 %v400
      %v742 = vunpack.c.l.b16 %v401
      %v743 = vunpack.c.l.b16 %v402
      %v744 = vunpack.c.l.b16 %v403
      %v745 = vunpack.c.l.b16 %v404
      %v746 = vunpack.c.l.b16 %v405
      %v747 = vunpack.c.l.b16 %v406
      %v748 = vunpack.c.l.b16 %v407
      %v749 = vunpack.c.l.b16 %v408
      %v750 = vunpack.c.l.b16 %v409
      %v751 = vunpack.c.l.b16 %v410
      %v752 = vunpack.c.l.b16 %v411
      %v753 = vunpack.c.l.b16 %v412
      %v754 = vunpack.c.l.b16 %v413
      %v755 = vunpack.c.l.b16 %v414
      %v756 = vunpack.c.l.b16 %v415
      %v757 = vunpack.c.l.b16 %v416
      %v758 = vunpack.c.l.b16 %v417
      %v759 = vunpack.c.l.b16 %v418
      %v760 = vunpack.c.l.b16 %v419
      %v761 = vunpack.c.l.b16 %v420
      %v762 = vunpack.c.l.b16 %v421
      %v763 = vunpack.c.l.b16 %v422
      %v764 = vunpack.c.l.b16 %v423
      %v765 = vunpack.c.l.b16 %v424
      %v766 = vunpack.c.l.b16 %v425
      %v767 = vunpack.c.l.b16 %v426
      %v768 = vunpack.c.l.b16 %v427
      %v769 = vunpack.c.l.b16 %v428
      %v770 = vunpack.c.l.b16 %v429
      %v771 = vunpack.c.l.b16 %v430
      %v772 = vunpack.c.l.b16 %v431
      %v773 = vunpack.c.l.b16 %v432
      %v774 = vunpack.c.l.b16 %v433
      %v775 = vunpack.c.l.b16 %v434
      %v776 = vunpack.c.l.b16 %v435
      %v777 = vunpack.c.l.b16 %v436
      %v778 = vunpack.c.l.b16 %v437
      %v779 = vunpack.c.l.b16 %v438
      %v780 = vunpack.c.l.b16 %v439
      %v781 = vunpack.c.l.b16 %v440
      %v782 = vunpack.c.l.b16 %v441
      %v783 = vunpack.c.l.b16 %v442
      %v784 = vunpack.c.l.b16 %v443
      %v785 = vunpack.c.l.b16 %v444
      %v786 = vunpack.c.l.b16 %v445
      %v787 = vunpack.c.l.b16 %v446
      %v788 = vunpack.c.l.b16 %v447
      %v789 = vunpack.c.l.b16 %v448
      %v790 = vunpack.c.l.b16 %v449
      %v791 = vunpack.c.l.b16 %v450
      %v792 = vunpack.c.l.b16 %v451
      %v793 = vunpack.c.l.b16 %v452
      %v794 = vunpack.c.l.b16 %v453
      %v795 = vunpack.c.l.b16 %v454
      %v796 = vunpack.c.l.b16 %v455
      %v797 = vunpack.c.l.b16 %v456
      %v798 = vunpack.c.l.b16 %v457
      %v799 = vunpack.c.l.b16 %v458
      %v800 = vunpack.c.l.b16 %v459
      %v801 = vunpack.c.l.b16 %v460
      %v802 = vunpack.c.l.b16 %v461
      %v803 = vunpack.c.l.b16 %v462
      %v804 = vunpack.c.l.b16 %v463
      %v805 = vunpack.c.l.b16 %v464
      %v806 = vunpack.c.l.b16 %v465
      %v807 = vunpack.c.l.b16 %v466
      %v808 = vunpack.c.l.b16 %v467
      %v809 = vunpack.c.l.b16 %v468
      %v810 = vunpack.c.l.b16 %v469
      %v811 = vunpack.c.l.b16 %v470
      %v812 = vunpack.c.l.b16 %v471
      %v813 = vunpack.c.l.b16 %v472
      %v814 = vunpack.c.l.b16 %v473
      %v815 = vunpack.c.l.b16 %v474
      %v816 = vunpack.c.l.b16 %v475
      %v817 = vunpack.c.l.b16 %v476
      %v818 = vunpack.c.l.b16 %v477
      %v819 = vunpack.c.l.b16 %v478
      %v820 = vunpack.c.l.b16 %v479
      %v821 = vunpack.c.l.b16 %v480
      %v822 = vpack.c.b16 %v679, %v678
      %v823 = vpack.c.b16 %v681, %v680
      %v824 = vpack.c.b16 %v683, %v682
      %v825 = vpack.c.b16 %v685, %v684
      %v826 = vpack.c.b16 %v687, %v686
      %v827 = vpack.c.b16 %v689, %v688
      %v828 = vpack.c.b16 %v691, %v690
      %v829 = vpack.c.b16 %v693, %v692
      %v830 = vpack.c.b16 %v695, %v694
      %v831 = vpack.c.b16 %v697, %v696
      %v832 = vpack.c.b16 %v699, %v698
      %v833 = vpack.c.b16 %v701, %v700
      %v834 = vpack.c.b16 %v703, %v702
      %v835 = vpack.c.b16 %v705, %v704
      %v836 = vpack.c.b16 %v707, %v706
      %v837 = vpack.c.b16 %v709, %v708
      %v838 = vpack.c.b16 %v711, %v710
      %v839 = vpack.c.b16 %v713, %v712
      %v840 = vpack.c.b16 %v715, %v714
      %v841 = vpack.c.b16 %v717, %v716
      %v842 = vpack.c.b16 %v719, %v718
      %v843 = vpack.c.b16 %v721, %v720
      %v844 = vpack.c.b16 %v723, %v722
      %v845 = vpack.c.b16 %v725, %v724
      %v846 = vpack.c.b16 %v727, %v726
      %v847 = vpack.c.b16 %v729, %v728
      %v848 = vpack.c.b16 %v731, %v730
      %v849 = vpack.c.b16 %v733, %v732
      %v850 = vpack.c.b16 %v735, %v734
      %v851 = vpack.c.b16 %v737, %v736
      %v852 = vpack.c.b16 %v739, %v738
      %v853 = vpack.c.b16 %v741, %v740
      %v854 = vpack.c.b16 %v743, %v742
      %v855 = vpack.c.b16 %v745, %v744
      %v856 = vpack.c.b16 %v747, %v746
      %v857 = vpack.c.b16 %v749, %v748
      %v858 = vpack.c.b16 %v751, %v750
      %v859 = vpack.c.b16 %v753, %v752
      %v860 = vpack.c.b16 %v755, %v754
      %v861 = vpack.c.b16 %v757, %v756
      %v862 = vpack.c.b16 %v759, %v758
      %v863 = vpack.c.b16 %v761, %v760
      %v864 = vpack.c.b16 %v763, %v762
      %v865 = vpack.c.b16 %v765, %v764
      %v866 = vpack.c.b16 %v767, %v766
      %v867 = vpack.c.b16 %v769, %v768
      %v868 = vpack.c.b16 %v771, %v770
      %v869 = vpack.c.b16 %v773, %v772
      %v870 = vpack.c.b16 %v775, %v774
      %v871 = vpack.c.b16 %v777, %v776
      %v872 = vpack.c.b16 %v779, %v778
      %v873 = vpack.c.b16 %v781, %v780
      %v874 = vpack.c.b16 %v783, %v782
      %v875 = vpack.c.b16 %v785, %v784
      %v876 = vpack.c.b16 %v787, %v786
      %v877 = vpack.c.b16 %v789, %v788
      %v878 = vpack.c.b16 %v791, %v790
      %v879 = vpack.c.b16 %v793, %v792
      %v880 = vpack.c.b16 %v795, %v794
      %v881 = vpack.c.b16 %v797, %v796
      %v882 = vpack.c.b16 %v799, %v798
      %v883 = vpack.c.b16 %v801, %v800
      %v884 = vpack.c.b16 %v803, %v802
      %v885 = vpack.c.b16 %v805, %v804
      %v886 = vpack.c.b16 %v807, %v806
      %v887 = vpack.c.b16 %v809, %v808
      %v888 = vpack.c.b16 %v811, %v810
      %v889 = vpack.c.b16 %v813, %v812
      %v890 = vpack.c.b16 %v815, %v814
      %v891 = vpack.c.b16 %v817, %v816
      %v892 = vpack.c.b16 %v819, %v818
      %v893 = vpack.c.b16 %v821, %v820
      %966 = vmatprep.subr.bf16.mxu0 0
      %967 = vmatpush1.bf16.msra.mxu0 %v822
      %968 = vmatprep.subr.bf16.mxu0 0
      %969 = vmatpush1.bf16.msra.mxu0 %v823
      %970 = vmatprep.subr.bf16.mxu0 0
      %971 = vmatpush1.bf16.msra.mxu0 %v824
      %972 = vmatprep.subr.bf16.mxu0 0
      %973 = vmatpush1.bf16.msra.mxu0 %v825
      %974 = vmatprep.subr.bf16.mxu0 0
      %975 = vmatpush1.bf16.msra.mxu0 %v826
      %976 = vmatprep.subr.bf16.mxu0 0
      %977 = vmatpush1.bf16.msra.mxu0 %v827
      %978 = vmatprep.subr.bf16.mxu0 0
      %979 = vmatpush1.bf16.msra.mxu0 %v828
      %980 = vmatprep.subr.bf16.mxu0 0
      %981 = vmatpush1.bf16.msra.mxu0 %v829
      %982 = vmatprep.subr.bf16.mxu0 0
      %983 = vmatpush1.bf16.msra.mxu0 %v830
      %984 = vmatprep.subr.bf16.mxu0 0
      %985 = vmatpush1.bf16.msra.mxu0 %v831
      %986 = vmatprep.subr.bf16.mxu0 0
      %987 = vmatpush1.bf16.msra.mxu0 %v832
      %988 = vmatprep.subr.bf16.mxu0 0
      %989 = vmatpush1.bf16.msra.mxu0 %v833
      %990 = vmatprep.subr.bf16.mxu0 0
      %991 = vmatpush1.bf16.msra.mxu0 %v834
      %992 = vmatprep.subr.bf16.mxu0 0
      %993 = vmatpush1.bf16.msra.mxu0 %v835
      %994 = vmatprep.subr.bf16.mxu0 0
      %995 = vmatpush1.bf16.msra.mxu0 %v836
      %996 = vmatprep.subr.bf16.mxu0 0
      %997 = vmatpush1.bf16.msra.mxu0 %v837
      %998 = vmatprep.mubr.bf16.mxu0 %v517
      %999 = vmatmul.mubr.bf16.gmra.mrb[0].mxu0 %v516
      %v1000 = vpop.f32.mrb[0].mxu0
      %v1001 = vadd.f32 %v486, %v1000
      %v1002 = vpop.f32.mrb[0].mxu0
      %v1003 = vpop.f32.mrb[0].mxu0
      %v1004 = vadd.f32 %v486, %v1003
      %v1005 = vpop.f32.mrb[0].mxu0
      %1006 = vdwg.mxu0
      %1007 = vmatprep.subr.bf16.mxu0 0
      %1008 = vmatpush1.bf16.msra.mxu0 %v838
      %1009 = vmatprep.subr.bf16.mxu0 0
      %1010 = vmatpush1.bf16.msra.mxu0 %v839
      %1011 = vmatprep.subr.bf16.mxu0 0
      %1012 = vmatpush1.bf16.msra.mxu0 %v840
      %1013 = vmatprep.subr.bf16.mxu0 0
      %1014 = vmatpush1.bf16.msra.mxu0 %v841
      %1015 = vmatprep.subr.bf16.mxu0 0
      %1016 = vmatpush1.bf16.msra.mxu0 %v842
      %1017 = vmatprep.subr.bf16.mxu0 0
      %1018 = vmatpush1.bf16.msra.mxu0 %v843
      %1019 = vmatprep.subr.bf16.mxu0 0
      %1020 = vmatpush1.bf16.msra.mxu0 %v844
      %1021 = vmatprep.subr.bf16.mxu0 0
      %1022 = vmatpush1.bf16.msra.mxu0 %v845
      %1023 = vmatprep.subr.bf16.mxu0 0
      %1024 = vmatpush1.bf16.msra.mxu0 %v846
      %1025 = vmatprep.subr.bf16.mxu0 0
      %1026 = vmatpush1.bf16.msra.mxu0 %v847
      %1027 = vmatprep.subr.bf16.mxu0 0
      %1028 = vmatpush1.bf16.msra.mxu0 %v848
      %1029 = vmatprep.subr.bf16.mxu0 0
      %1030 = vmatpush1.bf16.msra.mxu0 %v849
      %1031 = vmatprep.subr.bf16.mxu0 0
      %1032 = vmatpush1.bf16.msra.mxu0 %v850
      %1033 = vmatprep.subr.bf16.mxu0 0
      %1034 = vmatpush1.bf16.msra.mxu0 %v851
      %1035 = vmatprep.subr.bf16.mxu0 0
      %1036 = vmatpush1.bf16.msra.mxu0 %v852
      %1037 = vmatprep.subr.bf16.mxu0 0
      %1038 = vmatpush1.bf16.msra.mxu0 %v853
      %1039 = vmatprep.mubr.bf16.mxu0 %v519
      %1040 = vmatmul.mubr.bf16.gmra.mrb[0].mxu0 %v518
      %v1041 = vpop.f32.mrb[0].mxu0
      %v1042 = vadd.f32 %v1001, %v1041
      %v1043 = vpop.f32.mrb[0].mxu0
      %v1044 = vpop.f32.mrb[0].mxu0
      %v1045 = vadd.f32 %v1004, %v1044
      %v1046 = vpop.f32.mrb[0].mxu0
      %1047 = vdwg.mxu0
      %1048 = vmatprep.subr.bf16.mxu0 0
      %1049 = vmatpush1.bf16.msra.mxu0 %v854
      %1050 = vmatprep.subr.bf16.mxu0 0
      %1051 = vmatpush1.bf16.msra.mxu0 %v855
      %1052 = vmatprep.subr.bf16.mxu0 0
      %1053 = vmatpush1.bf16.msra.mxu0 %v856
      %1054 = vmatprep.subr.bf16.mxu0 0
      %1055 = vmatpush1.bf16.msra.mxu0 %v857
      %1056 = vmatprep.subr.bf16.mxu0 0
      %1057 = vmatpush1.bf16.msra.mxu0 %v858
      %1058 = vmatprep.subr.bf16.mxu0 0
      %1059 = vmatpush1.bf16.msra.mxu0 %v859
      %1060 = vmatprep.subr.bf16.mxu0 0
      %1061 = vmatpush1.bf16.msra.mxu0 %v860
      %1062 = vmatprep.subr.bf16.mxu0 0
      %1063 = vmatpush1.bf16.msra.mxu0 %v861
      %1064 = vmatprep.subr.bf16.mxu0 0
      %1065 = vmatpush1.bf16.msra.mxu0 %v862
      %1066 = vmatprep.subr.bf16.mxu0 0
      %1067 = vmatpush1.bf16.msra.mxu0 %v863
      %1068 = vmatprep.subr.bf16.mxu0 0
      %1069 = vmatpush1.bf16.msra.mxu0 %v864
      %1070 = vmatprep.subr.bf16.mxu0 0
      %1071 = vmatpush1.bf16.msra.mxu0 %v865
      %1072 = vmatprep.subr.bf16.mxu0 0
      %1073 = vmatpush1.bf16.msra.mxu0 %v866
      %1074 = vmatprep.subr.bf16.mxu0 0
      %1075 = vmatpush1.bf16.msra.mxu0 %v867
      %1076 = vmatprep.subr.bf16.mxu0 0
      %1077 = vmatpush1.bf16.msra.mxu0 %v868
      %1078 = vmatprep.subr.bf16.mxu0 0
      %1079 = vmatpush1.bf16.msra.mxu0 %v869
      %1080 = vmatprep.mubr.bf16.mxu0 %v521
      %1081 = vmatmul.mubr.bf16.gmra.mrb[0].mxu0 %v520
      %v1082 = vpop.f32.mrb[0].mxu0
      %v1083 = vadd.f32 %v1042, %v1082
      %v1084 = vpop.f32.mrb[0].mxu0
      %v1085 = vpop.f32.mrb[0].mxu0
      %v1086 = vadd.f32 %v1045, %v1085
      %v1087 = vpop.f32.mrb[0].mxu0
      %1088 = vdwg.mxu0
      %1089 = vmatprep.subr.bf16.mxu0 0
      %1090 = vmatpush1.bf16.msra.mxu0 %v870
      %1091 = vmatprep.subr.bf16.mxu0 0
      %1092 = vmatpush1.bf16.msra.mxu0 %v871
      %1093 = vmatprep.subr.bf16.mxu0 0
      %1094 = vmatpush1.bf16.msra.mxu0 %v872
      %1095 = vmatprep.subr.bf16.mxu0 0
      %1096 = vmatpush1.bf16.msra.mxu0 %v873
      %1097 = vmatprep.subr.bf16.mxu0 0
      %1098 = vmatpush1.bf16.msra.mxu0 %v874
      %1099 = vmatprep.subr.bf16.mxu0 0
      %1100 = vmatpush1.bf16.msra.mxu0 %v875
      %1101 = vmatprep.subr.bf16.mxu0 0
      %1102 = vmatpush1.bf16.msra.mxu0 %v876
      %1103 = vmatprep.subr.bf16.mxu0 0
      %1104 = vmatpush1.bf16.msra.mxu0 %v877
      %1105 = vmatprep.subr.bf16.mxu0 0
      %1106 = vmatpush1.bf16.msra.mxu0 %v878
      %1107 = vmatprep.subr.bf16.mxu0 0
      %1108 = vmatpush1.bf16.msra.mxu0 %v879
      %1109 = vmatprep.subr.bf16.mxu0 0
      %1110 = vmatpush1.bf16.msra.mxu0 %v880
      %1111 = vmatprep.subr.bf16.mxu0 0
      %1112 = vmatpush1.bf16.msra.mxu0 %v881
      %1113 = vmatprep.subr.bf16.mxu0 0
      %1114 = vmatpush1.bf16.msra.mxu0 %v882
      %1115 = vmatprep.subr.bf16.mxu0 0
      %1116 = vmatpush1.bf16.msra.mxu0 %v883
      %1117 = vmatprep.subr.bf16.mxu0 0
      %1118 = vmatpush1.bf16.msra.mxu0 %v884
      %1119 = vmatprep.subr.bf16.mxu0 0
      %1120 = vmatpush1.bf16.msra.mxu0 %v885
      %1121 = vmatprep.mubr.bf16.mxu0 %v523
      %1122 = vmatmul.mubr.bf16.gmra.mrb[0].mxu0 %v522
      %v1123 = vpop.f32.mrb[0].mxu0
      %v1124 = vadd.f32 %v1083, %v1123
      %v1125 = vpop.f32.mrb[0].mxu0
      %v1126 = vpop.f32.mrb[0].mxu0
      %v1127 = vadd.f32 %v1086, %v1126
      %v1128 = vpop.f32.mrb[0].mxu0
      %1129 = vdwg.mxu0
      %1130 = vmatprep.subr.bf16.mxu0 0
      %1131 = vmatpush1.bf16.msra.mxu0 %v886
      %1132 = vmatprep.subr.bf16.mxu0 0
      %1133 = vmatpush1.bf16.msra.mxu0 %v887
      %1134 = vmatprep.subr.bf16.mxu0 0
      %1135 = vmatpush1.bf16.msra.mxu0 %v888
      %1136 = vmatprep.subr.bf16.mxu0 0
      %1137 = vmatpush1.bf16.msra.mxu0 %v889
      %1138 = vmatprep.subr.bf16.mxu0 0
      %1139 = vmatpush1.bf16.msra.mxu0 %v890
      %1140 = vmatprep.subr.bf16.mxu0 0
      %1141 = vmatpush1.bf16.msra.mxu0 %v891
      %1142 = vmatprep.subr.bf16.mxu0 0
      %1143 = vmatpush1.bf16.msra.mxu0 %v892
      %1144 = vmatprep.subr.bf16.mxu0 0
      %1145 = vmatpush1.bf16.msra.mxu0 %v893
      %1146 = vmatprep.subr.bf16.mxu0 0
      %1147 = vmatpush1.bf16.msra.mxu0 0
      %1148 = vmatprep.subr.bf16.mxu0 0
      %1149 = vmatpush1.bf16.msra.mxu0 0
      %1150 = vmatprep.subr.bf16.mxu0 0
      %1151 = vmatpush1.bf16.msra.mxu0 0
      %1152 = vmatprep.subr.bf16.mxu0 0
      %1153 = vmatpush1.bf16.msra.mxu0 0
      %1154 = vmatprep.subr.bf16.mxu0 0
      %1155 = vmatpush1.bf16.msra.mxu0 0
      %1156 = vmatprep.subr.bf16.mxu0 0
      %1157 = vmatpush1.bf16.msra.mxu0 0
      %1158 = vmatprep.subr.bf16.mxu0 0
      %1159 = vmatpush1.bf16.msra.mxu0 0
      %1160 = vmatprep.subr.bf16.mxu0 0
      %1161 = vmatpush1.bf16.msra.mxu0 0
      %1162 = vmatprep.mubr.bf16.mxu0 0
      %1163 = vmatmul.mubr.bf16.gmra.mrb[0].mxu0 %v524
      %v1164 = vpop.f32.mrb[0].mxu0
      %v1165 = vadd.f32 %v1124, %v1164
      %v1166 = vpop.f32.mrb[0].mxu0
      %v1167 = vpop.f32.mrb[0].mxu0
      %v1168 = vadd.f32 %v1127, %v1167
      %v1169 = vpop.f32.mrb[0].mxu0
      %1170 = vdwg.mxu0
      %v1171 = vmax.f32 %v1165, 0.0
      %v1172 = vmax.f32 %v1168, 0.0
      %1173 = vst [vmem:[#allocation2] sm:$0x3f] 0.0
      %1174 = vst [vmem:[#allocation2 + $0x8] sm:$0x3f] 0.0
      %1175 = vst [vmem:[#allocation2 + $0x10] sm:$0x3f] 0.0
      %1176 = vst [vmem:[#allocation2 + $0x18] sm:$0x3f] 0.0
      %1177 = vst [vmem:[#allocation2 + $0x20] sm:$0x3f] 0.0
      %1178 = vst [vmem:[#allocation2 + $0x28] sm:$0x3f] 0.0
      %v1181 = vcombine.high %v1171, %v1171
      %v1182 = vcombine.high %v1172, %v1172
      %s1185 = scalar_lea.vmem [#allocation2], 8
      %1186 = vst [vmem:[%s1185 + $0x1] sm:$0xf] %v1171
      %1187 = vst [vmem:[%s1185 + $0x9] sm:$0xf] %v1181
      %1188 = vst [vmem:[%s1185 + $0x11] sm:$0xf] %v1172
      %1189 = vst [vmem:[%s1185 + $0x19] sm:$0xf] %v1182
      %v1190 = vld [vmem:[%s320] sm:$0xf]
      %v1191 = vld [vmem:[%s320 + $0x4] sm:$0xf]
      %v1192 = vld [vmem:[%s6] sm:$0xf]
      %v1193 = vld [vmem:[%s6 + $0x4] sm:$0xf]
      %v1194 = vld [vmem:[%s6 + $0x8] sm:$0xf]
      %v1195 = vld [vmem:[%s6 + $0xc] sm:$0xf]
      %v1196 = vld [vmem:[%s6 + $0x10] sm:$0xf]
      %v1197 = vld [vmem:[%s6 + $0x14] sm:$0xf]
      %v1198 = vld [vmem:[%s6 + $0x18] sm:$0xf]
      %v1199 = vld [vmem:[%s6 + $0x1c] sm:$0xf]
      %v1200 = vld [vmem:[%s6 + $0x20] sm:$0xf]
      %v1201 = vld [vmem:[%s6 + $0x24] sm:$0xf]
      %v1202 = vld [vmem:[%s6 + $0x28] sm:$0xf]
      %v1203 = vld [vmem:[%s6 + $0x2c] sm:$0xf]
      %v1204 = vld [vmem:[%s6 + $0x30] sm:$0xf]
      %v1205 = vld [vmem:[%s6 + $0x34] sm:$0xf]
      %v1206 = vld [vmem:[%s6 + $0x38] sm:$0xf]
      %v1207 = vld [vmem:[%s6 + $0x3c] sm:$0xf]
      %v1208 = vld [vmem:[%s7] sm:$0x1]
      %v1210 = vlaneseq
      %v1211 = vshrl.u32 %v1210, 7
      %v1212 = vsub.s32 0, %v1211
      %v1213 = vrot.slane %v1208, %v1212
      %v1217 = vunpack.c.l.b16 %v1190
      %v1218 = vunpack.c.l.b16 %v1191
      %v1219 = vpack.c.b16 %v1218, %v1217
      %v1237 = vunpack.c.l.b16 %v1192
      %v1238 = vunpack.c.l.b16 %v1193
      %v1239 = vunpack.c.l.b16 %v1194
      %v1240 = vunpack.c.l.b16 %v1195
      %v1241 = vunpack.c.l.b16 %v1196
      %v1242 = vunpack.c.l.b16 %v1197
      %v1243 = vunpack.c.l.b16 %v1198
      %v1244 = vunpack.c.l.b16 %v1199
      %v1245 = vunpack.c.l.b16 %v1200
      %v1246 = vunpack.c.l.b16 %v1201
      %v1247 = vunpack.c.l.b16 %v1202
      %v1248 = vunpack.c.l.b16 %v1203
      %v1249 = vunpack.c.l.b16 %v1204
      %v1250 = vunpack.c.l.b16 %v1205
      %v1251 = vunpack.c.l.b16 %v1206
      %v1252 = vunpack.c.l.b16 %v1207
      %v1253 = vpack.c.b16 %v1238, %v1237
      %v1254 = vpack.c.b16 %v1240, %v1239
      %v1255 = vpack.c.b16 %v1242, %v1241
      %v1256 = vpack.c.b16 %v1244, %v1243
      %v1257 = vpack.c.b16 %v1246, %v1245
      %v1258 = vpack.c.b16 %v1248, %v1247
      %v1259 = vpack.c.b16 %v1250, %v1249
      %v1260 = vpack.c.b16 %v1252, %v1251
      %1269 = vmatprep.subr.bf16.mxu0 0
      %1270 = vmatpush1.bf16.msra.mxu0 %v1253
      %1271 = vmatprep.subr.bf16.mxu0 0
      %1272 = vmatpush1.bf16.msra.mxu0 %v1254
      %1273 = vmatprep.subr.bf16.mxu0 0
      %1274 = vmatpush1.bf16.msra.mxu0 %v1255
      %1275 = vmatprep.subr.bf16.mxu0 0
      %1276 = vmatpush1.bf16.msra.mxu0 %v1256
      %1277 = vmatprep.subr.bf16.mxu0 0
      %1278 = vmatpush1.bf16.msra.mxu0 %v1257
      %1279 = vmatprep.subr.bf16.mxu0 0
      %1280 = vmatpush1.bf16.msra.mxu0 %v1258
      %1281 = vmatprep.subr.bf16.mxu0 0
      %1282 = vmatpush1.bf16.msra.mxu0 %v1259
      %1283 = vmatprep.subr.bf16.mxu0 0
      %1284 = vmatpush1.bf16.msra.mxu0 %v1260
      %1285 = vmatprep.subr.bf16.mxu0 0
      %1286 = vmatpush1.bf16.msra.mxu0 0
      %1287 = vmatprep.subr.bf16.mxu0 0
      %1288 = vmatpush1.bf16.msra.mxu0 0
      %1289 = vmatprep.subr.bf16.mxu0 0
      %1290 = vmatpush1.bf16.msra.mxu0 0
      %1291 = vmatprep.subr.bf16.mxu0 0
      %1292 = vmatpush1.bf16.msra.mxu0 0
      %1293 = vmatprep.subr.bf16.mxu0 0
      %1294 = vmatpush1.bf16.msra.mxu0 0
      %1295 = vmatprep.subr.bf16.mxu0 0
      %1296 = vmatpush1.bf16.msra.mxu0 0
      %1297 = vmatprep.subr.bf16.mxu0 0
      %1298 = vmatpush1.bf16.msra.mxu0 0
      %1299 = vmatprep.subr.bf16.mxu0 0
      %1300 = vmatpush1.bf16.msra.mxu0 0
      %1301 = vmatprep.mubr.bf16.mxu0 0
      %1302 = vmatmul.mubr.bf16.gmra.mrb[0].mxu0 %v1219
      %v1303 = vpop.f32.mrb[0].mxu0
      %v1304 = vadd.f32 %v1213, %v1303
      %v1305 = vpop.f32.mrb[0].mxu0
      %v1306 = vpop.f32.mrb[0].mxu0
      %v1307 = vadd.f32 %v1213, %v1306
      %v1308 = vpop.f32.mrb[0].mxu0
      %1309 = vdwg.mxu0
      %v1310 = vld [vmem:[%s5] sm:$0x1]
      %v1312 = vlaneseq
      %v1313 = vshrl.u32 %v1312, 7
      %v1314 = vsub.s32 0, %v1313
      %v1315 = vrot.slane %v1310, %v1314
      %v1317 = vadd.f32 %v1304, %v1315
      %v1318 = vadd.f32 %v1307, %v1315
      %v1319 = vld [vmem:[#allocation2] sm:$0xf]
      %v1320 = vld [vmem:[#allocation2 + $0x8] sm:$0xf]
      %v1321 = vld [vmem:[#allocation2 + $0x10] sm:$0xf]
      %v1322 = vld [vmem:[#allocation2 + $0x18] sm:$0xf]
      %v1327 = vcombine.low %v1319, %v1320
      %v1328 = vcombine.low %v1321, %v1322
      %v1331 = vpack.c.bf16 %v1328, %v1327
      %v1332 = vld [vmem:[%s4] sm:$0xf]
      %v1333 = vld [vmem:[%s4 + $0x4] sm:$0xf]
      %v1334 = vld [vmem:[%s4 + $0x8] sm:$0xf]
      %v1335 = vld [vmem:[%s4 + $0xc] sm:$0xf]
      %v1336 = vld [vmem:[%s4 + $0x10] sm:$0xf]
      %v1337 = vld [vmem:[%s4 + $0x14] sm:$0xf]
      %v1338 = vld [vmem:[%s4 + $0x18] sm:$0xf]
      %v1339 = vld [vmem:[%s4 + $0x1c] sm:$0xf]
      %v1340 = vld [vmem:[%s4 + $0x20] sm:$0xf]
      %v1341 = vld [vmem:[%s4 + $0x24] sm:$0xf]
      %v1342 = vld [vmem:[%s4 + $0x28] sm:$0xf]
      %v1343 = vld [vmem:[%s4 + $0x2c] sm:$0xf]
      %v1344 = vld [vmem:[%s4 + $0x30] sm:$0xf]
      %v1345 = vld [vmem:[%s4 + $0x34] sm:$0xf]
      %v1346 = vld [vmem:[%s4 + $0x38] sm:$0xf]
      %v1347 = vld [vmem:[%s4 + $0x3c] sm:$0xf]
      %v1364 = vunpack.c.l.b16 %v1332
      %v1365 = vunpack.c.l.b16 %v1333
      %v1366 = vunpack.c.l.b16 %v1334
      %v1367 = vunpack.c.l.b16 %v1335
      %v1368 = vunpack.c.l.b16 %v1336
      %v1369 = vunpack.c.l.b16 %v1337
      %v1370 = vunpack.c.l.b16 %v1338
      %v1371 = vunpack.c.l.b16 %v1339
      %v1372 = vunpack.c.l.b16 %v1340
      %v1373 = vunpack.c.l.b16 %v1341
      %v1374 = vunpack.c.l.b16 %v1342
      %v1375 = vunpack.c.l.b16 %v1343
      %v1376 = vunpack.c.l.b16 %v1344
      %v1377 = vunpack.c.l.b16 %v1345
      %v1378 = vunpack.c.l.b16 %v1346
      %v1379 = vunpack.c.l.b16 %v1347
      %v1380 = vpack.c.b16 %v1365, %v1364
      %v1381 = vpack.c.b16 %v1367, %v1366
      %v1382 = vpack.c.b16 %v1369, %v1368
      %v1383 = vpack.c.b16 %v1371, %v1370
      %v1384 = vpack.c.b16 %v1373, %v1372
      %v1385 = vpack.c.b16 %v1375, %v1374
      %v1386 = vpack.c.b16 %v1377, %v1376
      %v1387 = vpack.c.b16 %v1379, %v1378
      %1396 = vmatprep.subr.bf16.mxu0 0
      %1397 = vmatpush1.bf16.msra.mxu0 %v1380
      %1398 = vmatprep.subr.bf16.mxu0 0
      %1399 = vmatpush1.bf16.msra.mxu0 %v1381
      %1400 = vmatprep.subr.bf16.mxu0 0
      %1401 = vmatpush1.bf16.msra.mxu0 %v1382
      %1402 = vmatprep.subr.bf16.mxu0 0
      %1403 = vmatpush1.bf16.msra.mxu0 %v1383
      %1404 = vmatprep.subr.bf16.mxu0 0
      %1405 = vmatpush1.bf16.msra.mxu0 %v1384
      %1406 = vmatprep.subr.bf16.mxu0 0
      %1407 = vmatpush1.bf16.msra.mxu0 %v1385
      %1408 = vmatprep.subr.bf16.mxu0 0
      %1409 = vmatpush1.bf16.msra.mxu0 %v1386
      %1410 = vmatprep.subr.bf16.mxu0 0
      %1411 = vmatpush1.bf16.msra.mxu0 %v1387
      %1412 = vmatprep.subr.bf16.mxu0 0
      %1413 = vmatpush1.bf16.msra.mxu0 0
      %1414 = vmatprep.subr.bf16.mxu0 0
      %1415 = vmatpush1.bf16.msra.mxu0 0
      %1416 = vmatprep.subr.bf16.mxu0 0
      %1417 = vmatpush1.bf16.msra.mxu0 0
      %1418 = vmatprep.subr.bf16.mxu0 0
      %1419 = vmatpush1.bf16.msra.mxu0 0
      %1420 = vmatprep.subr.bf16.mxu0 0
      %1421 = vmatpush1.bf16.msra.mxu0 0
      %1422 = vmatprep.subr.bf16.mxu0 0
      %1423 = vmatpush1.bf16.msra.mxu0 0
      %1424 = vmatprep.subr.bf16.mxu0 0
      %1425 = vmatpush1.bf16.msra.mxu0 0
      %1426 = vmatprep.subr.bf16.mxu0 0
      %1427 = vmatpush1.bf16.msra.mxu0 0
      %1428 = vmatprep.mubr.bf16.mxu0 0
      %1429 = vmatmul.mubr.bf16.gmra.mrb[0].mxu0 %v1331
      %v1430 = vpop.f32.mrb[0].mxu0
      %v1431 = vadd.f32 0.0, %v1430
      %v1432 = vpop.f32.mrb[0].mxu0
      %v1433 = vpop.f32.mrb[0].mxu0
      %v1434 = vadd.f32 0.0, %v1433
      %v1435 = vpop.f32.mrb[0].mxu0
      %1436 = vdwg.mxu0
      %v1437 = vadd.f32 %v1317, %v1431
      %v1438 = vadd.f32 %v1318, %v1434
      %v1439 = vld [vmem:[#allocation2 + $0x1] sm:$0xf]
      %v1440 = vld [vmem:[#allocation2 + $0x9] sm:$0xf]
      %v1441 = vld [vmem:[#allocation2 + $0x11] sm:$0xf]
      %v1442 = vld [vmem:[#allocation2 + $0x19] sm:$0xf]
      %v1447 = vcombine.low %v1439, %v1440
      %v1448 = vcombine.low %v1441, %v1442
      %v1451 = vpack.c.bf16 %v1448, %v1447
      %s1452 = scalar_lea.vmem %s4, 64
      %v1453 = vld [vmem:[%s1452] sm:$0xf]
      %v1454 = vld [vmem:[%s1452 + $0x4] sm:$0xf]
      %v1455 = vld [vmem:[%s1452 + $0x8] sm:$0xf]
      %v1456 = vld [vmem:[%s1452 + $0xc] sm:$0xf]
      %v1457 = vld [vmem:[%s1452 + $0x10] sm:$0xf]
      %v1458 = vld [vmem:[%s1452 + $0x14] sm:$0xf]
      %v1459 = vld [vmem:[%s1452 + $0x18] sm:$0xf]
      %v1460 = vld [vmem:[%s1452 + $0x1c] sm:$0xf]
      %v1461 = vld [vmem:[%s1452 + $0x20] sm:$0xf]
      %v1462 = vld [vmem:[%s1452 + $0x24] sm:$0xf]
      %v1463 = vld [vmem:[%s1452 + $0x28] sm:$0xf]
      %v1464 = vld [vmem:[%s1452 + $0x2c] sm:$0xf]
      %v1465 = vld [vmem:[%s1452 + $0x30] sm:$0xf]
      %v1466 = vld [vmem:[%s1452 + $0x34] sm:$0xf]
      %v1467 = vld [vmem:[%s1452 + $0x38] sm:$0xf]
      %v1468 = vld [vmem:[%s1452 + $0x3c] sm:$0xf]
      %v1485 = vunpack.c.l.b16 %v1453
      %v1486 = vunpack.c.l.b16 %v1454
      %v1487 = vunpack.c.l.b16 %v1455
      %v1488 = vunpack.c.l.b16 %v1456
      %v1489 = vunpack.c.l.b16 %v1457
      %v1490 = vunpack.c.l.b16 %v1458
      %v1491 = vunpack.c.l.b16 %v1459
      %v1492 = vunpack.c.l.b16 %v1460
      %v1493 = vunpack.c.l.b16 %v1461
      %v1494 = vunpack.c.l.b16 %v1462
      %v1495 = vunpack.c.l.b16 %v1463
      %v1496 = vunpack.c.l.b16 %v1464
      %v1497 = vunpack.c.l.b16 %v1465
      %v1498 = vunpack.c.l.b16 %v1466
      %v1499 = vunpack.c.l.b16 %v1467
      %v1500 = vunpack.c.l.b16 %v1468
      %v1501 = vpack.c.b16 %v1486, %v1485
      %v1502 = vpack.c.b16 %v1488, %v1487
      %v1503 = vpack.c.b16 %v1490, %v1489
      %v1504 = vpack.c.b16 %v1492, %v1491
      %v1505 = vpack.c.b16 %v1494, %v1493
      %v1506 = vpack.c.b16 %v1496, %v1495
      %v1507 = vpack.c.b16 %v1498, %v1497
      %v1508 = vpack.c.b16 %v1500, %v1499
      %1517 = vmatprep.subr.bf16.mxu0 0
      %1518 = vmatpush1.bf16.msra.mxu0 %v1501
      %1519 = vmatprep.subr.bf16.mxu0 0
      %1520 = vmatpush1.bf16.msra.mxu0 %v1502
      %1521 = vmatprep.subr.bf16.mxu0 0
      %1522 = vmatpush1.bf16.msra.mxu0 %v1503
      %1523 = vmatprep.subr.bf16.mxu0 0
      %1524 = vmatpush1.bf16.msra.mxu0 %v1504
      %1525 = vmatprep.subr.bf16.mxu0 0
      %1526 = vmatpush1.bf16.msra.mxu0 %v1505
      %1527 = vmatprep.subr.bf16.mxu0 0
      %1528 = vmatpush1.bf16.msra.mxu0 %v1506
      %1529 = vmatprep.subr.bf16.mxu0 0
      %1530 = vmatpush1.bf16.msra.mxu0 %v1507
      %1531 = vmatprep.subr.bf16.mxu0 0
      %1532 = vmatpush1.bf16.msra.mxu0 %v1508
      %1533 = vmatprep.subr.bf16.mxu0 0
      %1534 = vmatpush1.bf16.msra.mxu0 0
      %1535 = vmatprep.subr.bf16.mxu0 0
      %1536 = vmatpush1.bf16.msra.mxu0 0
      %1537 = vmatprep.subr.bf16.mxu0 0
      %1538 = vmatpush1.bf16.msra.mxu0 0
      %1539 = vmatprep.subr.bf16.mxu0 0
      %1540 = vmatpush1.bf16.msra.mxu0 0
      %1541 = vmatprep.subr.bf16.mxu0 0
      %1542 = vmatpush1.bf16.msra.mxu0 0
      %1543 = vmatprep.subr.bf16.mxu0 0
      %1544 = vmatpush1.bf16.msra.mxu0 0
      %1545 = vmatprep.subr.bf16.mxu0 0
      %1546 = vmatpush1.bf16.msra.mxu0 0
      %1547 = vmatprep.subr.bf16.mxu0 0
      %1548 = vmatpush1.bf16.msra.mxu0 0
      %1549 = vmatprep.mubr.bf16.mxu0 0
      %1550 = vmatmul.mubr.bf16.gmra.mrb[0].mxu0 %v1451
      %v1551 = vpop.f32.mrb[0].mxu0
      %v1552 = vadd.f32 0.0, %v1551
      %v1553 = vpop.f32.mrb[0].mxu0
      %v1554 = vpop.f32.mrb[0].mxu0
      %v1555 = vadd.f32 0.0, %v1554
      %v1556 = vpop.f32.mrb[0].mxu0
      %1557 = vdwg.mxu0
      %v1558 = vadd.f32 %v1437, %v1552
      %v1559 = vadd.f32 %v1438, %v1555
      %v1560 = vld [vmem:[#allocation2 + $0x2] sm:$0xf]
      %v1561 = vld [vmem:[#allocation2 + $0xa] sm:$0xf]
      %v1562 = vld [vmem:[#allocation2 + $0x12] sm:$0xf]
      %v1563 = vld [vmem:[#allocation2 + $0x1a] sm:$0xf]
      %v1568 = vcombine.low %v1560, %v1561
      %v1569 = vcombine.low %v1562, %v1563
      %v1572 = vpack.c.bf16 %v1569, %v1568
      %s1573 = scalar_lea.vmem %s4, 128
      %v1574 = vld [vmem:[%s1573] sm:$0xf]
      %v1575 = vld [vmem:[%s1573 + $0x4] sm:$0xf]
      %v1576 = vld [vmem:[%s1573 + $0x8] sm:$0xf]
      %v1577 = vld [vmem:[%s1573 + $0xc] sm:$0xf]
      %v1578 = vld [vmem:[%s1573 + $0x10] sm:$0xf]
      %v1579 = vld [vmem:[%s1573 + $0x14] sm:$0xf]
      %v1580 = vld [vmem:[%s1573 + $0x18] sm:$0xf]
      %v1581 = vld [vmem:[%s1573 + $0x1c] sm:$0xf]
      %v1582 = vld [vmem:[%s1573 + $0x20] sm:$0xf]
      %v1583 = vld [vmem:[%s1573 + $0x24] sm:$0xf]
      %v1584 = vld [vmem:[%s1573 + $0x28] sm:$0xf]
      %v1585 = vld [vmem:[%s1573 + $0x2c] sm:$0xf]
      %v1586 = vld [vmem:[%s1573 + $0x30] sm:$0xf]
      %v1587 = vld [vmem:[%s1573 + $0x34] sm:$0xf]
      %v1588 = vld [vmem:[%s1573 + $0x38] sm:$0xf]
      %v1589 = vld [vmem:[%s1573 + $0x3c] sm:$0xf]
      %v1606 = vunpack.c.l.b16 %v1574
      %v1607 = vunpack.c.l.b16 %v1575
      %v1608 = vunpack.c.l.b16 %v1576
      %v1609 = vunpack.c.l.b16 %v1577
      %v1610 = vunpack.c.l.b16 %v1578
      %v1611 = vunpack.c.l.b16 %v1579
      %v1612 = vunpack.c.l.b16 %v1580
      %v1613 = vunpack.c.l.b16 %v1581
      %v1614 = vunpack.c.l.b16 %v1582
      %v1615 = vunpack.c.l.b16 %v1583
      %v1616 = vunpack.c.l.b16 %v1584
      %v1617 = vunpack.c.l.b16 %v1585
      %v1618 = vunpack.c.l.b16 %v1586
      %v1619 = vunpack.c.l.b16 %v1587
      %v1620 = vunpack.c.l.b16 %v1588
      %v1621 = vunpack.c.l.b16 %v1589
      %v1622 = vpack.c.b16 %v1607, %v1606
      %v1623 = vpack.c.b16 %v1609, %v1608
      %v1624 = vpack.c.b16 %v1611, %v1610
      %v1625 = vpack.c.b16 %v1613, %v1612
      %v1626 = vpack.c.b16 %v1615, %v1614
      %v1627 = vpack.c.b16 %v1617, %v1616
      %v1628 = vpack.c.b16 %v1619, %v1618
      %v1629 = vpack.c.b16 %v1621, %v1620
      %1638 = vmatprep.subr.bf16.mxu0 0
      %1639 = vmatpush1.bf16.msra.mxu0 %v1622
      %1640 = vmatprep.subr.bf16.mxu0 0
      %1641 = vmatpush1.bf16.msra.mxu0 %v1623
      %1642 = vmatprep.subr.bf16.mxu0 0
      %1643 = vmatpush1.bf16.msra.mxu0 %v1624
      %1644 = vmatprep.subr.bf16.mxu0 0
      %1645 = vmatpush1.bf16.msra.mxu0 %v1625
      %1646 = vmatprep.subr.bf16.mxu0 0
      %1647 = vmatpush1.bf16.msra.mxu0 %v1626
      %1648 = vmatprep.subr.bf16.mxu0 0
      %1649 = vmatpush1.bf16.msra.mxu0 %v1627
      %1650 = vmatprep.subr.bf16.mxu0 0
      %1651 = vmatpush1.bf16.msra.mxu0 %v1628
      %1652 = vmatprep.subr.bf16.mxu0 0
      %1653 = vmatpush1.bf16.msra.mxu0 %v1629
      %1654 = vmatprep.subr.bf16.mxu0 0
      %1655 = vmatpush1.bf16.msra.mxu0 0
      %1656 = vmatprep.subr.bf16.mxu0 0
      %1657 = vmatpush1.bf16.msra.mxu0 0
      %1658 = vmatprep.subr.bf16.mxu0 0
      %1659 = vmatpush1.bf16.msra.mxu0 0
      %1660 = vmatprep.subr.bf16.mxu0 0
      %1661 = vmatpush1.bf16.msra.mxu0 0
      %1662 = vmatprep.subr.bf16.mxu0 0
      %1663 = vmatpush1.bf16.msra.mxu0 0
      %1664 = vmatprep.subr.bf16.mxu0 0
      %1665 = vmatpush1.bf16.msra.mxu0 0
      %1666 = vmatprep.subr.bf16.mxu0 0
      %1667 = vmatpush1.bf16.msra.mxu0 0
      %1668 = vmatprep.subr.bf16.mxu0 0
      %1669 = vmatpush1.bf16.msra.mxu0 0
      %1670 = vmatprep.mubr.bf16.mxu0 0
      %1671 = vmatmul.mubr.bf16.gmra.mrb[0].mxu0 %v1572
      %v1672 = vpop.f32.mrb[0].mxu0
      %v1673 = vadd.f32 0.0, %v1672
      %v1674 = vpop.f32.mrb[0].mxu0
      %v1675 = vpop.f32.mrb[0].mxu0
      %v1676 = vadd.f32 0.0, %v1675
      %v1677 = vpop.f32.mrb[0].mxu0
      %1678 = vdwg.mxu0
      %v1679 = vadd.f32 %v1558, %v1673
      %v1680 = vadd.f32 %v1559, %v1676
      %v1681 = vld [vmem:[%s1185] sm:$0xf]
      %v1682 = vld [vmem:[%s1185 + $0x8] sm:$0xf]
      %v1683 = vld [vmem:[%s1185 + $0x10] sm:$0xf]
      %v1684 = vld [vmem:[%s1185 + $0x18] sm:$0xf]
      %v1689 = vcombine.low %v1681, %v1682
      %v1690 = vcombine.low %v1683, %v1684
      %v1693 = vpack.c.bf16 %v1690, %v1689
      %s1694 = scalar_lea.vmem %s4, 192
      %v1695 = vld [vmem:[%s1694] sm:$0xf]
      %v1696 = vld [vmem:[%s1694 + $0x4] sm:$0xf]
      %v1697 = vld [vmem:[%s1694 + $0x8] sm:$0xf]
      %v1698 = vld [vmem:[%s1694 + $0xc] sm:$0xf]
      %v1699 = vld [vmem:[%s1694 + $0x10] sm:$0xf]
      %v1700 = vld [vmem:[%s1694 + $0x14] sm:$0xf]
      %v1701 = vld [vmem:[%s1694 + $0x18] sm:$0xf]
      %v1702 = vld [vmem:[%s1694 + $0x1c] sm:$0xf]
      %v1703 = vld [vmem:[%s1694 + $0x20] sm:$0xf]
      %v1704 = vld [vmem:[%s1694 + $0x24] sm:$0xf]
      %v1705 = vld [vmem:[%s1694 + $0x28] sm:$0xf]
      %v1706 = vld [vmem:[%s1694 + $0x2c] sm:$0xf]
      %v1707 = vld [vmem:[%s1694 + $0x30] sm:$0xf]
      %v1708 = vld [vmem:[%s1694 + $0x34] sm:$0xf]
      %v1709 = vld [vmem:[%s1694 + $0x38] sm:$0xf]
      %v1710 = vld [vmem:[%s1694 + $0x3c] sm:$0xf]
      %v1727 = vunpack.c.l.b16 %v1695
      %v1728 = vunpack.c.l.b16 %v1696
      %v1729 = vunpack.c.l.b16 %v1697
      %v1730 = vunpack.c.l.b16 %v1698
      %v1731 = vunpack.c.l.b16 %v1699
      %v1732 = vunpack.c.l.b16 %v1700
      %v1733 = vunpack.c.l.b16 %v1701
      %v1734 = vunpack.c.l.b16 %v1702
      %v1735 = vunpack.c.l.b16 %v1703
      %v1736 = vunpack.c.l.b16 %v1704
      %v1737 = vunpack.c.l.b16 %v1705
      %v1738 = vunpack.c.l.b16 %v1706
      %v1739 = vunpack.c.l.b16 %v1707
      %v1740 = vunpack.c.l.b16 %v1708
      %v1741 = vunpack.c.l.b16 %v1709
      %v1742 = vunpack.c.l.b16 %v1710
      %v1743 = vpack.c.b16 %v1728, %v1727
      %v1744 = vpack.c.b16 %v1730, %v1729
      %v1745 = vpack.c.b16 %v1732, %v1731
      %v1746 = vpack.c.b16 %v1734, %v1733
      %v1747 = vpack.c.b16 %v1736, %v1735
      %v1748 = vpack.c.b16 %v1738, %v1737
      %v1749 = vpack.c.b16 %v1740, %v1739
      %v1750 = vpack.c.b16 %v1742, %v1741
      %1759 = vmatprep.subr.bf16.mxu0 0
      %1760 = vmatpush1.bf16.msra.mxu0 %v1743
      %1761 = vmatprep.subr.bf16.mxu0 0
      %1762 = vmatpush1.bf16.msra.mxu0 %v1744
      %1763 = vmatprep.subr.bf16.mxu0 0
      %1764 = vmatpush1.bf16.msra.mxu0 %v1745
      %1765 = vmatprep.subr.bf16.mxu0 0
      %1766 = vmatpush1.bf16.msra.mxu0 %v1746
      %1767 = vmatprep.subr.bf16.mxu0 0
      %1768 = vmatpush1.bf16.msra.mxu0 %v1747
      %1769 = vmatprep.subr.bf16.mxu0 0
      %1770 = vmatpush1.bf16.msra.mxu0 %v1748
      %1771 = vmatprep.subr.bf16.mxu0 0
      %1772 = vmatpush1.bf16.msra.mxu0 %v1749
      %1773 = vmatprep.subr.bf16.mxu0 0
      %1774 = vmatpush1.bf16.msra.mxu0 %v1750
      %1775 = vmatprep.subr.bf16.mxu0 0
      %1776 = vmatpush1.bf16.msra.mxu0 0
      %1777 = vmatprep.subr.bf16.mxu0 0
      %1778 = vmatpush1.bf16.msra.mxu0 0
      %1779 = vmatprep.subr.bf16.mxu0 0
      %1780 = vmatpush1.bf16.msra.mxu0 0
      %1781 = vmatprep.subr.bf16.mxu0 0
      %1782 = vmatpush1.bf16.msra.mxu0 0
      %1783 = vmatprep.subr.bf16.mxu0 0
      %1784 = vmatpush1.bf16.msra.mxu0 0
      %1785 = vmatprep.subr.bf16.mxu0 0
      %1786 = vmatpush1.bf16.msra.mxu0 0
      %1787 = vmatprep.subr.bf16.mxu0 0
      %1788 = vmatpush1.bf16.msra.mxu0 0
      %1789 = vmatprep.subr.bf16.mxu0 0
      %1790 = vmatpush1.bf16.msra.mxu0 0
      %1791 = vmatprep.mubr.bf16.mxu0 0
      %1792 = vmatmul.mubr.bf16.gmra.mrb[0].mxu0 %v1693
      %v1793 = vpop.f32.mrb[0].mxu0
      %v1794 = vadd.f32 0.0, %v1793
      %v1795 = vpop.f32.mrb[0].mxu0
      %v1796 = vpop.f32.mrb[0].mxu0
      %v1797 = vadd.f32 0.0, %v1796
      %v1798 = vpop.f32.mrb[0].mxu0
      %1799 = vdwg.mxu0
      %v1800 = vadd.f32 %v1679, %v1794
      %v1801 = vadd.f32 %v1680, %v1797
      %v1802 = vld [vmem:[%s1185 + $0x1] sm:$0xf]
      %v1803 = vld [vmem:[%s1185 + $0x9] sm:$0xf]
      %v1804 = vld [vmem:[%s1185 + $0x11] sm:$0xf]
      %v1805 = vld [vmem:[%s1185 + $0x19] sm:$0xf]
      %v1810 = vcombine.low %v1802, %v1803
      %v1811 = vcombine.low %v1804, %v1805
      %v1814 = vpack.c.bf16 %v1811, %v1810
      %s1815 = scalar_lea.vmem %s4, 256
      %v1816 = vld [vmem:[%s1815] sm:$0xf]
      %v1817 = vld [vmem:[%s1815 + $0x4] sm:$0xf]
      %v1818 = vld [vmem:[%s1815 + $0x8] sm:$0xf]
      %v1819 = vld [vmem:[%s1815 + $0xc] sm:$0xf]
      %v1820 = vld [vmem:[%s1815 + $0x10] sm:$0xf]
      %v1821 = vld [vmem:[%s1815 + $0x14] sm:$0xf]
      %v1822 = vld [vmem:[%s1815 + $0x18] sm:$0xf]
      %v1823 = vld [vmem:[%s1815 + $0x1c] sm:$0xf]
      %v1824 = vld [vmem:[%s1815 + $0x20] sm:$0xf]
      %v1825 = vld [vmem:[%s1815 + $0x24] sm:$0xf]
      %v1826 = vld [vmem:[%s1815 + $0x28] sm:$0xf]
      %v1827 = vld [vmem:[%s1815 + $0x2c] sm:$0xf]
      %v1828 = vld [vmem:[%s1815 + $0x30] sm:$0xf]
      %v1829 = vld [vmem:[%s1815 + $0x34] sm:$0xf]
      %v1830 = vld [vmem:[%s1815 + $0x38] sm:$0xf]
      %v1831 = vld [vmem:[%s1815 + $0x3c] sm:$0xf]
      %v1848 = vunpack.c.l.b16 %v1816
      %v1849 = vunpack.c.l.b16 %v1817
      %v1850 = vunpack.c.l.b16 %v1818
      %v1851 = vunpack.c.l.b16 %v1819
      %v1852 = vunpack.c.l.b16 %v1820
      %v1853 = vunpack.c.l.b16 %v1821
      %v1854 = vunpack.c.l.b16 %v1822
      %v1855 = vunpack.c.l.b16 %v1823
      %v1856 = vunpack.c.l.b16 %v1824
      %v1857 = vunpack.c.l.b16 %v1825
      %v1858 = vunpack.c.l.b16 %v1826
      %v1859 = vunpack.c.l.b16 %v1827
      %v1860 = vunpack.c.l.b16 %v1828
      %v1861 = vunpack.c.l.b16 %v1829
      %v1862 = vunpack.c.l.b16 %v1830
      %v1863 = vunpack.c.l.b16 %v1831
      %v1864 = vpack.c.b16 %v1849, %v1848
      %v1865 = vpack.c.b16 %v1851, %v1850
      %v1866 = vpack.c.b16 %v1853, %v1852
      %v1867 = vpack.c.b16 %v1855, %v1854
      %v1868 = vpack.c.b16 %v1857, %v1856
      %v1869 = vpack.c.b16 %v1859, %v1858
      %v1870 = vpack.c.b16 %v1861, %v1860
      %v1871 = vpack.c.b16 %v1863, %v1862
      %1880 = vmatprep.subr.bf16.mxu0 0
      %1881 = vmatpush1.bf16.msra.mxu0 %v1864
      %1882 = vmatprep.subr.bf16.mxu0 0
      %1883 = vmatpush1.bf16.msra.mxu0 %v1865
      %1884 = vmatprep.subr.bf16.mxu0 0
      %1885 = vmatpush1.bf16.msra.mxu0 %v1866
      %1886 = vmatprep.subr.bf16.mxu0 0
      %1887 = vmatpush1.bf16.msra.mxu0 %v1867
      %1888 = vmatprep.subr.bf16.mxu0 0
      %1889 = vmatpush1.bf16.msra.mxu0 %v1868
      %1890 = vmatprep.subr.bf16.mxu0 0
      %1891 = vmatpush1.bf16.msra.mxu0 %v1869
      %1892 = vmatprep.subr.bf16.mxu0 0
      %1893 = vmatpush1.bf16.msra.mxu0 %v1870
      %1894 = vmatprep.subr.bf16.mxu0 0
      %1895 = vmatpush1.bf16.msra.mxu0 %v1871
      %1896 = vmatprep.subr.bf16.mxu0 0
      %1897 = vmatpush1.bf16.msra.mxu0 0
      %1898 = vmatprep.subr.bf16.mxu0 0
      %1899 = vmatpush1.bf16.msra.mxu0 0
      %1900 = vmatprep.subr.bf16.mxu0 0
      %1901 = vmatpush1.bf16.msra.mxu0 0
      %1902 = vmatprep.subr.bf16.mxu0 0
      %1903 = vmatpush1.bf16.msra.mxu0 0
      %1904 = vmatprep.subr.bf16.mxu0 0
      %1905 = vmatpush1.bf16.msra.mxu0 0
      %1906 = vmatprep.subr.bf16.mxu0 0
      %1907 = vmatpush1.bf16.msra.mxu0 0
      %1908 = vmatprep.subr.bf16.mxu0 0
      %1909 = vmatpush1.bf16.msra.mxu0 0
      %1910 = vmatprep.subr.bf16.mxu0 0
      %1911 = vmatpush1.bf16.msra.mxu0 0
      %1912 = vmatprep.mubr.bf16.mxu0 0
      %1913 = vmatmul.mubr.bf16.gmra.mrb[0].mxu0 %v1814
      %v1914 = vpop.f32.mrb[0].mxu0
      %v1915 = vadd.f32 0.0, %v1914
      %v1916 = vpop.f32.mrb[0].mxu0
      %v1917 = vpop.f32.mrb[0].mxu0
      %v1918 = vadd.f32 0.0, %v1917
      %v1919 = vpop.f32.mrb[0].mxu0
      %1920 = vdwg.mxu0
      %v1921 = vadd.f32 %v1800, %v1915
      %v1922 = vadd.f32 %v1801, %v1918
      %v1923 = vld [vmem:[%s1185 + $0x2] sm:$0xf]
      %v1924 = vld [vmem:[%s1185 + $0xa] sm:$0xf]
      %v1925 = vld [vmem:[%s1185 + $0x12] sm:$0xf]
      %v1926 = vld [vmem:[%s1185 + $0x1a] sm:$0xf]
      %v1931 = vcombine.low %v1923, %v1924
      %v1932 = vcombine.low %v1925, %v1926
      %v1935 = vpack.c.bf16 %v1932, %v1931
      %s1936 = scalar_lea.vmem %s4, 320
      %v1937 = vld [vmem:[%s1936] sm:$0xf]
      %v1938 = vld [vmem:[%s1936 + $0x4] sm:$0xf]
      %v1939 = vld [vmem:[%s1936 + $0x8] sm:$0xf]
      %v1940 = vld [vmem:[%s1936 + $0xc] sm:$0xf]
      %v1941 = vld [vmem:[%s1936 + $0x10] sm:$0xf]
      %v1942 = vld [vmem:[%s1936 + $0x14] sm:$0xf]
      %v1943 = vld [vmem:[%s1936 + $0x18] sm:$0xf]
      %v1944 = vld [vmem:[%s1936 + $0x1c] sm:$0xf]
      %v1945 = vld [vmem:[%s1936 + $0x20] sm:$0xf]
      %v1946 = vld [vmem:[%s1936 + $0x24] sm:$0xf]
      %v1947 = vld [vmem:[%s1936 + $0x28] sm:$0xf]
      %v1948 = vld [vmem:[%s1936 + $0x2c] sm:$0xf]
      %v1949 = vld [vmem:[%s1936 + $0x30] sm:$0xf]
      %v1950 = vld [vmem:[%s1936 + $0x34] sm:$0xf]
      %v1951 = vld [vmem:[%s1936 + $0x38] sm:$0xf]
      %v1952 = vld [vmem:[%s1936 + $0x3c] sm:$0xf]
      %v1969 = vunpack.c.l.b16 %v1937
      %v1970 = vunpack.c.l.b16 %v1938
      %v1971 = vunpack.c.l.b16 %v1939
      %v1972 = vunpack.c.l.b16 %v1940
      %v1973 = vunpack.c.l.b16 %v1941
      %v1974 = vunpack.c.l.b16 %v1942
      %v1975 = vunpack.c.l.b16 %v1943
      %v1976 = vunpack.c.l.b16 %v1944
      %v1977 = vunpack.c.l.b16 %v1945
      %v1978 = vunpack.c.l.b16 %v1946
      %v1979 = vunpack.c.l.b16 %v1947
      %v1980 = vunpack.c.l.b16 %v1948
      %v1981 = vunpack.c.l.b16 %v1949
      %v1982 = vunpack.c.l.b16 %v1950
      %v1983 = vunpack.c.l.b16 %v1951
      %v1984 = vunpack.c.l.b16 %v1952
      %v1985 = vpack.c.b16 %v1970, %v1969
      %v1986 = vpack.c.b16 %v1972, %v1971
      %v1987 = vpack.c.b16 %v1974, %v1973
      %v1988 = vpack.c.b16 %v1976, %v1975
      %v1989 = vpack.c.b16 %v1978, %v1977
      %v1990 = vpack.c.b16 %v1980, %v1979
      %v1991 = vpack.c.b16 %v1982, %v1981
      %v1992 = vpack.c.b16 %v1984, %v1983
      %2001 = vmatprep.subr.bf16.mxu0 0
      %2002 = vmatpush1.bf16.msra.mxu0 %v1985
      %2003 = vmatprep.subr.bf16.mxu0 0
      %2004 = vmatpush1.bf16.msra.mxu0 %v1986
      %2005 = vmatprep.subr.bf16.mxu0 0
      %2006 = vmatpush1.bf16.msra.mxu0 %v1987
      %2007 = vmatprep.subr.bf16.mxu0 0
      %2008 = vmatpush1.bf16.msra.mxu0 %v1988
      %2009 = vmatprep.subr.bf16.mxu0 0
      %2010 = vmatpush1.bf16.msra.mxu0 %v1989
      %2011 = vmatprep.subr.bf16.mxu0 0
      %2012 = vmatpush1.bf16.msra.mxu0 %v1990
      %2013 = vmatprep.subr.bf16.mxu0 0
      %2014 = vmatpush1.bf16.msra.mxu0 %v1991
      %2015 = vmatprep.subr.bf16.mxu0 0
      %2016 = vmatpush1.bf16.msra.mxu0 %v1992
      %2017 = vmatprep.subr.bf16.mxu0 0
      %2018 = vmatpush1.bf16.msra.mxu0 0
      %2019 = vmatprep.subr.bf16.mxu0 0
      %2020 = vmatpush1.bf16.msra.mxu0 0
      %2021 = vmatprep.subr.bf16.mxu0 0
      %2022 = vmatpush1.bf16.msra.mxu0 0
      %2023 = vmatprep.subr.bf16.mxu0 0
      %2024 = vmatpush1.bf16.msra.mxu0 0
      %2025 = vmatprep.subr.bf16.mxu0 0
      %2026 = vmatpush1.bf16.msra.mxu0 0
      %2027 = vmatprep.subr.bf16.mxu0 0
      %2028 = vmatpush1.bf16.msra.mxu0 0
      %2029 = vmatprep.subr.bf16.mxu0 0
      %2030 = vmatpush1.bf16.msra.mxu0 0
      %2031 = vmatprep.subr.bf16.mxu0 0
      %2032 = vmatpush1.bf16.msra.mxu0 0
      %2033 = vmatprep.mubr.bf16.mxu0 0
      %2034 = vmatmul.mubr.bf16.gmra.mrb[0].mxu0 %v1935
      %v2035 = vpop.f32.mrb[0].mxu0
      %v2036 = vadd.f32 0.0, %v2035
      %v2037 = vpop.f32.mrb[0].mxu0
      %v2038 = vpop.f32.mrb[0].mxu0
      %v2039 = vadd.f32 0.0, %v2038
      %v2040 = vpop.f32.mrb[0].mxu0
      %2041 = vdwg.mxu0
      %v2042 = vadd.f32 %v1921, %v2036
      %v2043 = vadd.f32 %v1922, %v2039
      %s2044 = scalar_lea.vmem [#allocation2], 16
      %v2045 = vld [vmem:[%s2044] sm:$0xf]
      %v2046 = vld [vmem:[%s2044 + $0x8] sm:$0xf]
      %v2047 = vld [vmem:[%s2044 + $0x10] sm:$0xf]
      %v2048 = vld [vmem:[%s2044 + $0x18] sm:$0xf]
      %v2053 = vcombine.low %v2045, %v2046
      %v2054 = vcombine.low %v2047, %v2048
      %v2057 = vpack.c.bf16 %v2054, %v2053
      %s2058 = scalar_lea.vmem %s4, 384
      %v2059 = vld [vmem:[%s2058] sm:$0xf]
      %v2060 = vld [vmem:[%s2058 + $0x4] sm:$0xf]
      %v2061 = vld [vmem:[%s2058 + $0x8] sm:$0xf]
      %v2062 = vld [vmem:[%s2058 + $0xc] sm:$0xf]
      %v2063 = vld [vmem:[%s2058 + $0x10] sm:$0xf]
      %v2064 = vld [vmem:[%s2058 + $0x14] sm:$0xf]
      %v2065 = vld [vmem:[%s2058 + $0x18] sm:$0xf]
      %v2066 = vld [vmem:[%s2058 + $0x1c] sm:$0xf]
      %v2067 = vld [vmem:[%s2058 + $0x20] sm:$0xf]
      %v2068 = vld [vmem:[%s2058 + $0x24] sm:$0xf]
      %v2069 = vld [vmem:[%s2058 + $0x28] sm:$0xf]
      %v2070 = vld [vmem:[%s2058 + $0x2c] sm:$0xf]
      %v2071 = vld [vmem:[%s2058 + $0x30] sm:$0xf]
      %v2072 = vld [vmem:[%s2058 + $0x34] sm:$0xf]
      %v2073 = vld [vmem:[%s2058 + $0x38] sm:$0xf]
      %v2074 = vld [vmem:[%s2058 + $0x3c] sm:$0xf]
      %v2091 = vunpack.c.l.b16 %v2059
      %v2092 = vunpack.c.l.b16 %v2060
      %v2093 = vunpack.c.l.b16 %v2061
      %v2094 = vunpack.c.l.b16 %v2062
      %v2095 = vunpack.c.l.b16 %v2063
      %v2096 = vunpack.c.l.b16 %v2064
      %v2097 = vunpack.c.l.b16 %v2065
      %v2098 = vunpack.c.l.b16 %v2066
      %v2099 = vunpack.c.l.b16 %v2067
      %v2100 = vunpack.c.l.b16 %v2068
      %v2101 = vunpack.c.l.b16 %v2069
      %v2102 = vunpack.c.l.b16 %v2070
      %v2103 = vunpack.c.l.b16 %v2071
      %v2104 = vunpack.c.l.b16 %v2072
      %v2105 = vunpack.c.l.b16 %v2073
      %v2106 = vunpack.c.l.b16 %v2074
      %v2107 = vpack.c.b16 %v2092, %v2091
      %v2108 = vpack.c.b16 %v2094, %v2093
      %v2109 = vpack.c.b16 %v2096, %v2095
      %v2110 = vpack.c.b16 %v2098, %v2097
      %v2111 = vpack.c.b16 %v2100, %v2099
      %v2112 = vpack.c.b16 %v2102, %v2101
      %v2113 = vpack.c.b16 %v2104, %v2103
      %v2114 = vpack.c.b16 %v2106, %v2105
      %2123 = vmatprep.subr.bf16.mxu0 0
      %2124 = vmatpush1.bf16.msra.mxu0 %v2107
      %2125 = vmatprep.subr.bf16.mxu0 0
      %2126 = vmatpush1.bf16.msra.mxu0 %v2108
      %2127 = vmatprep.subr.bf16.mxu0 0
      %2128 = vmatpush1.bf16.msra.mxu0 %v2109
      %2129 = vmatprep.subr.bf16.mxu0 0
      %2130 = vmatpush1.bf16.msra.mxu0 %v2110
      %2131 = vmatprep.subr.bf16.mxu0 0
      %2132 = vmatpush1.bf16.msra.mxu0 %v2111
      %2133 = vmatprep.subr.bf16.mxu0 0
      %2134 = vmatpush1.bf16.msra.mxu0 %v2112
      %2135 = vmatprep.subr.bf16.mxu0 0
      %2136 = vmatpush1.bf16.msra.mxu0 %v2113
      %2137 = vmatprep.subr.bf16.mxu0 0
      %2138 = vmatpush1.bf16.msra.mxu0 %v2114
      %2139 = vmatprep.subr.bf16.mxu0 0
      %2140 = vmatpush1.bf16.msra.mxu0 0
      %2141 = vmatprep.subr.bf16.mxu0 0
      %2142 = vmatpush1.bf16.msra.mxu0 0
      %2143 = vmatprep.subr.bf16.mxu0 0
      %2144 = vmatpush1.bf16.msra.mxu0 0
      %2145 = vmatprep.subr.bf16.mxu0 0
      %2146 = vmatpush1.bf16.msra.mxu0 0
      %2147 = vmatprep.subr.bf16.mxu0 0
      %2148 = vmatpush1.bf16.msra.mxu0 0
      %2149 = vmatprep.subr.bf16.mxu0 0
      %2150 = vmatpush1.bf16.msra.mxu0 0
      %2151 = vmatprep.subr.bf16.mxu0 0
      %2152 = vmatpush1.bf16.msra.mxu0 0
      %2153 = vmatprep.subr.bf16.mxu0 0
      %2154 = vmatpush1.bf16.msra.mxu0 0
      %2155 = vmatprep.mubr.bf16.mxu0 0
      %2156 = vmatmul.mubr.bf16.gmra.mrb[0].mxu0 %v2057
      %v2157 = vpop.f32.mrb[0].mxu0
      %v2158 = vadd.f32 0.0, %v2157
      %v2159 = vpop.f32.mrb[0].mxu0
      %v2160 = vpop.f32.mrb[0].mxu0
      %v2161 = vadd.f32 0.0, %v2160
      %v2162 = vpop.f32.mrb[0].mxu0
      %2163 = vdwg.mxu0
      %v2164 = vadd.f32 %v2042, %v2158
      %v2165 = vadd.f32 %v2043, %v2161
      %v2166 = vld [vmem:[%s2044 + $0x1] sm:$0xf]
      %v2167 = vld [vmem:[%s2044 + $0x9] sm:$0xf]
      %v2168 = vld [vmem:[%s2044 + $0x11] sm:$0xf]
      %v2169 = vld [vmem:[%s2044 + $0x19] sm:$0xf]
      %v2174 = vcombine.low %v2166, %v2167
      %v2175 = vcombine.low %v2168, %v2169
      %v2178 = vpack.c.bf16 %v2175, %v2174
      %s2179 = scalar_lea.vmem %s4, 448
      %v2180 = vld [vmem:[%s2179] sm:$0xf]
      %v2181 = vld [vmem:[%s2179 + $0x4] sm:$0xf]
      %v2182 = vld [vmem:[%s2179 + $0x8] sm:$0xf]
      %v2183 = vld [vmem:[%s2179 + $0xc] sm:$0xf]
      %v2184 = vld [vmem:[%s2179 + $0x10] sm:$0xf]
      %v2185 = vld [vmem:[%s2179 + $0x14] sm:$0xf]
      %v2186 = vld [vmem:[%s2179 + $0x18] sm:$0xf]
      %v2187 = vld [vmem:[%s2179 + $0x1c] sm:$0xf]
      %v2188 = vld [vmem:[%s2179 + $0x20] sm:$0xf]
      %v2189 = vld [vmem:[%s2179 + $0x24] sm:$0xf]
      %v2190 = vld [vmem:[%s2179 + $0x28] sm:$0xf]
      %v2191 = vld [vmem:[%s2179 + $0x2c] sm:$0xf]
      %v2192 = vld [vmem:[%s2179 + $0x30] sm:$0xf]
      %v2193 = vld [vmem:[%s2179 + $0x34] sm:$0xf]
      %v2194 = vld [vmem:[%s2179 + $0x38] sm:$0xf]
      %v2195 = vld [vmem:[%s2179 + $0x3c] sm:$0xf]
      %v2212 = vunpack.c.l.b16 %v2180
      %v2213 = vunpack.c.l.b16 %v2181
      %v2214 = vunpack.c.l.b16 %v2182
      %v2215 = vunpack.c.l.b16 %v2183
      %v2216 = vunpack.c.l.b16 %v2184
      %v2217 = vunpack.c.l.b16 %v2185
      %v2218 = vunpack.c.l.b16 %v2186
      %v2219 = vunpack.c.l.b16 %v2187
      %v2220 = vunpack.c.l.b16 %v2188
      %v2221 = vunpack.c.l.b16 %v2189
      %v2222 = vunpack.c.l.b16 %v2190
      %v2223 = vunpack.c.l.b16 %v2191
      %v2224 = vunpack.c.l.b16 %v2192
      %v2225 = vunpack.c.l.b16 %v2193
      %v2226 = vunpack.c.l.b16 %v2194
      %v2227 = vunpack.c.l.b16 %v2195
      %v2228 = vpack.c.b16 %v2213, %v2212
      %v2229 = vpack.c.b16 %v2215, %v2214
      %v2230 = vpack.c.b16 %v2217, %v2216
      %v2231 = vpack.c.b16 %v2219, %v2218
      %v2232 = vpack.c.b16 %v2221, %v2220
      %v2233 = vpack.c.b16 %v2223, %v2222
      %v2234 = vpack.c.b16 %v2225, %v2224
      %v2235 = vpack.c.b16 %v2227, %v2226
      %2244 = vmatprep.subr.bf16.mxu0 0
      %2245 = vmatpush1.bf16.msra.mxu0 %v2228
      %2246 = vmatprep.subr.bf16.mxu0 0
      %2247 = vmatpush1.bf16.msra.mxu0 %v2229
      %2248 = vmatprep.subr.bf16.mxu0 0
      %2249 = vmatpush1.bf16.msra.mxu0 %v2230
      %2250 = vmatprep.subr.bf16.mxu0 0
      %2251 = vmatpush1.bf16.msra.mxu0 %v2231
      %2252 = vmatprep.subr.bf16.mxu0 0
      %2253 = vmatpush1.bf16.msra.mxu0 %v2232
      %2254 = vmatprep.subr.bf16.mxu0 0
      %2255 = vmatpush1.bf16.msra.mxu0 %v2233
      %2256 = vmatprep.subr.bf16.mxu0 0
      %2257 = vmatpush1.bf16.msra.mxu0 %v2234
      %2258 = vmatprep.subr.bf16.mxu0 0
      %2259 = vmatpush1.bf16.msra.mxu0 %v2235
      %2260 = vmatprep.subr.bf16.mxu0 0
      %2261 = vmatpush1.bf16.msra.mxu0 0
      %2262 = vmatprep.subr.bf16.mxu0 0
      %2263 = vmatpush1.bf16.msra.mxu0 0
      %2264 = vmatprep.subr.bf16.mxu0 0
      %2265 = vmatpush1.bf16.msra.mxu0 0
      %2266 = vmatprep.subr.bf16.mxu0 0
      %2267 = vmatpush1.bf16.msra.mxu0 0
      %2268 = vmatprep.subr.bf16.mxu0 0
      %2269 = vmatpush1.bf16.msra.mxu0 0
      %2270 = vmatprep.subr.bf16.mxu0 0
      %2271 = vmatpush1.bf16.msra.mxu0 0
      %2272 = vmatprep.subr.bf16.mxu0 0
      %2273 = vmatpush1.bf16.msra.mxu0 0
      %2274 = vmatprep.subr.bf16.mxu0 0
      %2275 = vmatpush1.bf16.msra.mxu0 0
      %2276 = vmatprep.mubr.bf16.mxu0 0
      %2277 = vmatmul.mubr.bf16.gmra.mrb[0].mxu0 %v2178
      %v2278 = vpop.f32.mrb[0].mxu0
      %v2279 = vadd.f32 0.0, %v2278
      %v2280 = vpop.f32.mrb[0].mxu0
      %v2281 = vpop.f32.mrb[0].mxu0
      %v2282 = vadd.f32 0.0, %v2281
      %v2283 = vpop.f32.mrb[0].mxu0
      %2284 = vdwg.mxu0
      %v2285 = vadd.f32 %v2164, %v2279
      %v2286 = vadd.f32 %v2165, %v2282
      %v2287 = vld [vmem:[%s2044 + $0x2] sm:$0xf]
      %v2288 = vld [vmem:[%s2044 + $0xa] sm:$0xf]
      %v2289 = vld [vmem:[%s2044 + $0x12] sm:$0xf]
      %v2290 = vld [vmem:[%s2044 + $0x1a] sm:$0xf]
      %v2295 = vcombine.low %v2287, %v2288
      %v2296 = vcombine.low %v2289, %v2290
      %v2299 = vpack.c.bf16 %v2296, %v2295
      %s2300 = scalar_lea.vmem %s4, 512
      %v2301 = vld [vmem:[%s2300] sm:$0xf]
      %v2302 = vld [vmem:[%s2300 + $0x4] sm:$0xf]
      %v2303 = vld [vmem:[%s2300 + $0x8] sm:$0xf]
      %v2304 = vld [vmem:[%s2300 + $0xc] sm:$0xf]
      %v2305 = vld [vmem:[%s2300 + $0x10] sm:$0xf]
      %v2306 = vld [vmem:[%s2300 + $0x14] sm:$0xf]
      %v2307 = vld [vmem:[%s2300 + $0x18] sm:$0xf]
      %v2308 = vld [vmem:[%s2300 + $0x1c] sm:$0xf]
      %v2309 = vld [vmem:[%s2300 + $0x20] sm:$0xf]
      %v2310 = vld [vmem:[%s2300 + $0x24] sm:$0xf]
      %v2311 = vld [vmem:[%s2300 + $0x28] sm:$0xf]
      %v2312 = vld [vmem:[%s2300 + $0x2c] sm:$0xf]
      %v2313 = vld [vmem:[%s2300 + $0x30] sm:$0xf]
      %v2314 = vld [vmem:[%s2300 + $0x34] sm:$0xf]
      %v2315 = vld [vmem:[%s2300 + $0x38] sm:$0xf]
      %v2316 = vld [vmem:[%s2300 + $0x3c] sm:$0xf]
      %v2333 = vunpack.c.l.b16 %v2301
      %v2334 = vunpack.c.l.b16 %v2302
      %v2335 = vunpack.c.l.b16 %v2303
      %v2336 = vunpack.c.l.b16 %v2304
      %v2337 = vunpack.c.l.b16 %v2305
      %v2338 = vunpack.c.l.b16 %v2306
      %v2339 = vunpack.c.l.b16 %v2307
      %v2340 = vunpack.c.l.b16 %v2308
      %v2341 = vunpack.c.l.b16 %v2309
      %v2342 = vunpack.c.l.b16 %v2310
      %v2343 = vunpack.c.l.b16 %v2311
      %v2344 = vunpack.c.l.b16 %v2312
      %v2345 = vunpack.c.l.b16 %v2313
      %v2346 = vunpack.c.l.b16 %v2314
      %v2347 = vunpack.c.l.b16 %v2315
      %v2348 = vunpack.c.l.b16 %v2316
      %v2349 = vpack.c.b16 %v2334, %v2333
      %v2350 = vpack.c.b16 %v2336, %v2335
      %v2351 = vpack.c.b16 %v2338, %v2337
      %v2352 = vpack.c.b16 %v2340, %v2339
      %v2353 = vpack.c.b16 %v2342, %v2341
      %v2354 = vpack.c.b16 %v2344, %v2343
      %v2355 = vpack.c.b16 %v2346, %v2345
      %v2356 = vpack.c.b16 %v2348, %v2347
      %2365 = vmatprep.subr.bf16.mxu0 0
      %2366 = vmatpush1.bf16.msra.mxu0 %v2349
      %2367 = vmatprep.subr.bf16.mxu0 0
      %2368 = vmatpush1.bf16.msra.mxu0 %v2350
      %2369 = vmatprep.subr.bf16.mxu0 0
      %2370 = vmatpush1.bf16.msra.mxu0 %v2351
      %2371 = vmatprep.subr.bf16.mxu0 0
      %2372 = vmatpush1.bf16.msra.mxu0 %v2352
      %2373 = vmatprep.subr.bf16.mxu0 0
      %2374 = vmatpush1.bf16.msra.mxu0 %v2353
      %2375 = vmatprep.subr.bf16.mxu0 0
      %2376 = vmatpush1.bf16.msra.mxu0 %v2354
      %2377 = vmatprep.subr.bf16.mxu0 0
      %2378 = vmatpush1.bf16.msra.mxu0 %v2355
      %2379 = vmatprep.subr.bf16.mxu0 0
      %2380 = vmatpush1.bf16.msra.mxu0 %v2356
      %2381 = vmatprep.subr.bf16.mxu0 0
      %2382 = vmatpush1.bf16.msra.mxu0 0
      %2383 = vmatprep.subr.bf16.mxu0 0
      %2384 = vmatpush1.bf16.msra.mxu0 0
      %2385 = vmatprep.subr.bf16.mxu0 0
      %2386 = vmatpush1.bf16.msra.mxu0 0
      %2387 = vmatprep.subr.bf16.mxu0 0
      %2388 = vmatpush1.bf16.msra.mxu0 0
      %2389 = vmatprep.subr.bf16.mxu0 0
      %2390 = vmatpush1.bf16.msra.mxu0 0
      %2391 = vmatprep.subr.bf16.mxu0 0
      %2392 = vmatpush1.bf16.msra.mxu0 0
      %2393 = vmatprep.subr.bf16.mxu0 0
      %2394 = vmatpush1.bf16.msra.mxu0 0
      %2395 = vmatprep.subr.bf16.mxu0 0
      %2396 = vmatpush1.bf16.msra.mxu0 0
      %2397 = vmatprep.mubr.bf16.mxu0 0
      %2398 = vmatmul.mubr.bf16.gmra.mrb[0].mxu0 %v2299
      %v2399 = vpop.f32.mrb[0].mxu0
      %v2400 = vadd.f32 0.0, %v2399
      %v2401 = vpop.f32.mrb[0].mxu0
      %v2402 = vpop.f32.mrb[0].mxu0
      %v2403 = vadd.f32 0.0, %v2402
      %v2404 = vpop.f32.mrb[0].mxu0
      %2405 = vdwg.mxu0
      %v2406 = vadd.f32 %v2285, %v2400
      %v2407 = vadd.f32 %v2286, %v2403
      %v2408 = vmax.f32 %v2406, 0.0
      %v2409 = vmax.f32 %v2407, 0.0
      %v2410 = vpack.c.bf16 %v2409, %v2408
      %v2412 = vunpack.c.l.b16 %v2410
      %v2413 = vunpack.c.h.b16 %v2410
      %v2414 = vpack.c.b16 %v2412, %v2412
      %v2415 = vpack.c.b16 %v2413, %v2413
      %2418 = vst [vmem:[%s325] sm:$0xf] %v2414
      %2419 = vst [vmem:[%s325 + $0x4] sm:$0xf] %v2415
      %p2420 = scmp.lt.s32.totalorder %s19, 1
      %s2421 = scalar_select %p2420, %s19, 1
      %s2422 = smul.addr %s2421, 2
      %s2423 = smul.addr %s2422, 4
      %s2424 = scalar_lea.vmem %s8, %s2423
      // Predicated region
      $region53: #{encoder_forward.4} parent=51 // pred_check
        %p2425 = pneg %p215
      $region54: #{encoder_forward.4} parent=51 // pred_check_branch
        %2427 = sbr.rel (%p2425) target = $region56
      $region55: #{encoder_forward.4} parent=51 // pred_region
        _
      $region56: #{encoder_forward.4} parent=51 // pred_fallthru
        _
    $region52: #{encoder_forward.4} parent=5 // pred_fallthru
      _
    %p2428 = scmp.le.s32.totalorder 2, %s14
    // Predicated region
    $region57: #{encoder_forward.4} parent=5 // pred_check
      %p2429 = pneg %p2428
    $region58: #{encoder_forward.4} parent=5 // pred_check_branch
      %2431 = sbr.rel (%p2429) target = $region60
    $region59: #{encoder_forward.4} parent=5 // pred_region
      %s2432 = ssub.s32 %s14, 2
      // Predicated region
      $region61: #{encoder_forward.4} parent=59 // pred_check
        %p2433 = pneg %p221
      $region62: #{encoder_forward.4} parent=59 // pred_check_branch
        %2435 = sbr.rel (%p2433) target = $region64
      $region63: #{encoder_forward.4} parent=59 // pred_region
        %p2436 = scmp.lt.s32.totalorder %s20, 1
        %s2437 = scalar_select %p2436, %s20, 1
        %s2438 = smul.addr %s2437, 2
        %s2439 = smul.addr %s2438, 4
        %s2440 = scalar_lea.vmem %s8, %s2439
      $region64: #{encoder_forward.4} parent=59 // pred_fallthru
        _
    $region60: #{encoder_forward.4} parent=5 // pred_fallthru
      _
  $region6: #{encoder_forward.4} parent=0 // loop_footer
    %s18 = sadd.s32 1, %s14
  $region7: #{encoder_forward.4} parent=0 // loop_footer_branch
    %13 = sbr.rel target = $region3
  $region8: #{encoder_forward.4} parent=0 // loop_exit
    _

// kernel: encoder_forward.5
$region0: #{encoder_forward.5}
  #allocation0 [shape = 'u32[]', space=smem, size = 0x4, offset = 0x4, fixed_abs, tag = 'smem constant byte address 0x4 - core index']
  #allocation1 [shape = 'u32[144,128]{1,0:T(1,128)}', space=vmem, size = 0x12000, scoped, tag = 'internal scratch']
  #allocation2 [shape = 'f32[4,4,256]{2,1,0:T(4,128)}', space=vmem, size = 0x4000, scoped, tag = 'scratch operand']
  %s0 = inlined_call_operand.vmem [shape: bf16[2,4,1152], index: 0, kind: input, shape index: {}]
  %s1 = inlined_call_operand.vmem [shape: bf16[2,4,128], index: 1, kind: input, shape index: {}]
  %s2 = inlined_call_operand.vmem [shape: bf16[1152,256], index: 2, kind: input, shape index: {}]
  %s3 = inlined_call_operand.vmem [shape: f32[1,256], index: 3, kind: input, shape index: {}]
  %s4 = inlined_call_operand.vmem [shape: bf16[9,256,256], index: 4, kind: input, shape index: {}]
  %s5 = inlined_call_operand.vmem [shape: f32[1,256], index: 5, kind: input, shape index: {}]
  %s6 = inlined_call_operand.vmem [shape: bf16[128,256], index: 6, kind: input, shape index: {}]
  %s7 = inlined_call_operand.vmem [shape: f32[1,256], index: 7, kind: input, shape index: {}]
  %s8 = inlined_call_operand.vmem [shape: bf16[256,128], index: 8, kind: input, shape index: {}]
  %s9 = inlined_call_operand.vmem [shape: f32[1,128], index: 9, kind: input, shape index: {}]
  %s10 = inlined_call_operand.hbm [shape: f32[2,1,128], index: 10, kind: output, shape index: {}]
  %s11 = sld [smem:[#allocation0]]
  $region73: #{encoder_forward.5} parent=0
    _
  %s13 = ssub.s32 1, %s11
  %s14 = scalar_select 0, %s13, %s11
  $region1: #{encoder_forward.5} parent=0
    #allocation3 [shape = 'u8[1024]{0}', space=vmem, size = 0x400, scoped, tag = 'output window, operand 0']
    #allocation4 [shape = 's32[2]{0}', space=sflag, size = 0x8, scoped, tag = 'scoped memory for encoder_forward.5']
    %15 = vsyncpa [#allocation4], 0
    %s16 = scalar_lea.sflag [#allocation4], 1
    %17 = vsyncpa %s16, 0
    loop: start=0, step=1, limit=4
    $region2: #{encoder_forward.5} parent=1 // loop_pre_header
      _
    $region3: #{encoder_forward.5} parent=1 // loop_header
      %s19 = sphi 0, %s23
      %p20 = scmp.ge.s32.totalorder %s19, 4
      %s29 = sphi 0, %s31
      %s32 = sphi 0, %s29
      %s33 = sphi 0, %s32
      %s49 = sphi 0, %s33
      %s55 = sphi 0, %s57
      %s58 = sphi 0, %s55
      %s59 = sphi 0, %s58
      %s75 = sphi 0, %s59
      %s79 = sphi 0, %s79
      %s81 = sphi 0, %s79
      %s82 = sphi 0, %s81
      %s96 = sphi 0, %s82
      %s100 = sphi 0, %s100
      %s102 = sphi 0, %s100
      %s103 = sphi 0, %s102
      %s117 = sphi 0, %s103
      %s121 = sphi 0, %s121
      %s123 = sphi 0, %s121
      %s124 = sphi 0, %s123
      %s138 = sphi 0, %s124
      %s142 = sphi 0, %s142
      %s144 = sphi 0, %s142
      %s145 = sphi 0, %s144
      %s159 = sphi 0, %s145
      %s163 = sphi 0, %s163
      %s165 = sphi 0, %s163
      %s166 = sphi 0, %s165
      %s180 = sphi 0, %s166
      %s184 = sphi 0, %s184
      %s186 = sphi 0, %s184
      %s187 = sphi 0, %s186
      %s201 = sphi 0, %s187
      %s205 = sphi 0, %s205
      %s207 = sphi 0, %s205
      %s208 = sphi 0, %s207
      %s222 = sphi 0, %s208
      %s226 = sphi 0, %s226
      %s228 = sphi 0, %s226
      %s229 = sphi 0, %s228
      %s243 = sphi 0, %s229
      %s249 = sphi 0, %s251
      %s252 = sphi 0, %s249
      %s253 = sphi 0, %s252
      %s269 = sphi 0, %s253
    $region4: #{encoder_forward.5} parent=1 // loop_header_branch
      %22 = sbr.rel (%p20) target = $region8
    $region5: #{encoder_forward.5} parent=1 // loop_body
      %s24 = ssub.s32 %s19, 1
      %s25 = ssub.s32 %s19, 2
      %s26 = sadd.s32 %s19, 1
      %s27 = ssub.s32 %s19, %s26
      %p28 = scmp.eq.s32.totalorder %s27, 0
      %s30 = sadd.s32 %s29, 1
      %s31 = scalar_select %p28, %s29, %s30
      %p34 = pneg %p28
      %p35 = scmp.eq.s32.totalorder %s19, 1
      %p36 = por %p34, %p35
      %p37 = scmp.ne.s32.totalorder %s29, %s32
      %p38 = scmp.eq.s32.totalorder %s19, 0
      %p39 = por %p37, %p38
      %p40 = scmp.ne.s32.totalorder %s29, %s32
      %p41 = scmp.eq.s32.totalorder %s24, 1
      %p42 = por %p40, %p41
      %p43 = scmp.ne.s32.totalorder %s32, %s33
      %p44 = scmp.eq.s32.totalorder %s24, 0
      %p45 = por %p43, %p44
      %p46 = scmp.ne.s32.totalorder %s32, %s33
      %p47 = scmp.eq.s32.totalorder %s25, 1
      %p48 = por %p46, %p47
      %p50 = scmp.ne.s32.totalorder %s33, %s49
      %p51 = scmp.eq.s32.totalorder %s25, 0
      %p52 = por %p50, %p51
      %s53 = ssub.s32 %s19, %s26
      %p54 = scmp.eq.s32.totalorder %s53, 0
      %s56 = sadd.s32 %s55, 1
      %s57 = scalar_select %p54, %s55, %s56
      %p60 = pneg %p54
      %p61 = scmp.eq.s32.totalorder %s19, 1
      %p62 = por %p60, %p61
      %p63 = scmp.ne.s32.totalorder %s55, %s58
      %p64 = scmp.eq.s32.totalorder %s19, 0
      %p65 = por %p63, %p64
      %p66 = scmp.ne.s32.totalorder %s55, %s58
      %p67 = scmp.eq.s32.totalorder %s24, 1
      %p68 = por %p66, %p67
      %p69 = scmp.ne.s32.totalorder %s58, %s59
      %p70 = scmp.eq.s32.totalorder %s24, 0
      %p71 = por %p69, %p70
      %p72 = scmp.ne.s32.totalorder %s58, %s59
      %p73 = scmp.eq.s32.totalorder %s25, 1
      %p74 = por %p72, %p73
      %p76 = scmp.ne.s32.totalorder %s59, %s75
      %p77 = scmp.eq.s32.totalorder %s25, 0
      %p78 = por %p76, %p77
      %s80 = sadd.s32 %s79, 1
      %p83 = scmp.eq.s32.totalorder %s19, 1
      %p84 = scmp.ne.s32.totalorder %s79, %s81
      %p85 = scmp.eq.s32.totalorder %s19, 0
      %p86 = por %p84, %p85
      %p87 = scmp.ne.s32.totalorder %s79, %s81
      %p88 = scmp.eq.s32.totalorder %s24, 1
      %p89 = por %p87, %p88
      %p90 = scmp.ne.s32.totalorder %s81, %s82
      %p91 = scmp.eq.s32.totalorder %s24, 0
      %p92 = por %p90, %p91
      %p93 = scmp.ne.s32.totalorder %s81, %s82
      %p94 = scmp.eq.s32.totalorder %s25, 1
      %p95 = por %p93, %p94
      %p97 = scmp.ne.s32.totalorder %s82, %s96
      %p98 = scmp.eq.s32.totalorder %s25, 0
      %p99 = por %p97, %p98
      %s101 = sadd.s32 %s100, 1
      %p104 = scmp.eq.s32.totalorder %s19, 1
      %p105 = scmp.ne.s32.totalorder %s100, %s102
      %p106 = scmp.eq.s32.totalorder %s19, 0
      %p107 = por %p105, %p106
      %p108 = scmp.ne.s32.totalorder %s100, %s102
      %p109 = scmp.eq.s32.totalorder %s24, 1
      %p110 = por %p108, %p109
      %p111 = scmp.ne.s32.totalorder %s102, %s103
      %p112 = scmp.eq.s32.totalorder %s24, 0
      %p113 = por %p111, %p112
      %p114 = scmp.ne.s32.totalorder %s102, %s103
      %p115 = scmp.eq.s32.totalorder %s25, 1
      %p116 = por %p114, %p115
      %p118 = scmp.ne.s32.totalorder %s103, %s117
      %p119 = scmp.eq.s32.totalorder %s25, 0
      %p120 = por %p118, %p119
      %s122 = sadd.s32 %s121, 1
      %p125 = scmp.eq.s32.totalorder %s19, 1
      %p126 = scmp.ne.s32.totalorder %s121, %s123
      %p127 = scmp.eq.s32.totalorder %s19, 0
      %p128 = por %p126, %p127
      %p129 = scmp.ne.s32.totalorder %s121, %s123
      %p130 = scmp.eq.s32.totalorder %s24, 1
      %p131 = por %p129, %p130
      %p132 = scmp.ne.s32.totalorder %s123, %s124
      %p133 = scmp.eq.s32.totalorder %s24, 0
      %p134 = por %p132, %p133
      %p135 = scmp.ne.s32.totalorder %s123, %s124
      %p136 = scmp.eq.s32.totalorder %s25, 1
      %p137 = por %p135, %p136
      %p139 = scmp.ne.s32.totalorder %s124, %s138
      %p140 = scmp.eq.s32.totalorder %s25, 0
      %p141 = por %p139, %p140
      %s143 = sadd.s32 %s142, 1
      %p146 = scmp.eq.s32.totalorder %s19, 1
      %p147 = scmp.ne.s32.totalorder %s142, %s144
      %p148 = scmp.eq.s32.totalorder %s19, 0
      %p149 = por %p147, %p148
      %p150 = scmp.ne.s32.totalorder %s142, %s144
      %p151 = scmp.eq.s32.totalorder %s24, 1
      %p152 = por %p150, %p151
      %p153 = scmp.ne.s32.totalorder %s144, %s145
      %p154 = scmp.eq.s32.totalorder %s24, 0
      %p155 = por %p153, %p154
      %p156 = scmp.ne.s32.totalorder %s144, %s145
      %p157 = scmp.eq.s32.totalorder %s25, 1
      %p158 = por %p156, %p157
      %p160 = scmp.ne.s32.totalorder %s145, %s159
      %p161 = scmp.eq.s32.totalorder %s25, 0
      %p162 = por %p160, %p161
      %s164 = sadd.s32 %s163, 1
      %p167 = scmp.eq.s32.totalorder %s19, 1
      %p168 = scmp.ne.s32.totalorder %s163, %s165
      %p169 = scmp.eq.s32.totalorder %s19, 0
      %p170 = por %p168, %p169
      %p171 = scmp.ne.s32.totalorder %s163, %s165
      %p172 = scmp.eq.s32.totalorder %s24, 1
      %p173 = por %p171, %p172
      %p174 = scmp.ne.s32.totalorder %s165, %s166
      %p175 = scmp.eq.s32.totalorder %s24, 0
      %p176 = por %p174, %p175
      %p177 = scmp.ne.s32.totalorder %s165, %s166
      %p178 = scmp.eq.s32.totalorder %s25, 1
      %p179 = por %p177, %p178
      %p181 = scmp.ne.s32.totalorder %s166, %s180
      %p182 = scmp.eq.s32.totalorder %s25, 0
      %p183 = por %p181, %p182
      %s185 = sadd.s32 %s184, 1
      %p188 = scmp.eq.s32.totalorder %s19, 1
      %p189 = scmp.ne.s32.totalorder %s184, %s186
      %p190 = scmp.eq.s32.totalorder %s19, 0
      %p191 = por %p189, %p190
      %p192 = scmp.ne.s32.totalorder %s184, %s186
      %p193 = scmp.eq.s32.totalorder %s24, 1
      %p194 = por %p192, %p193
      %p195 = scmp.ne.s32.totalorder %s186, %s187
      %p196 = scmp.eq.s32.totalorder %s24, 0
      %p197 = por %p195, %p196
      %p198 = scmp.ne.s32.totalorder %s186, %s187
      %p199 = scmp.eq.s32.totalorder %s25, 1
      %p200 = por %p198, %p199
      %p202 = scmp.ne.s32.totalorder %s187, %s201
      %p203 = scmp.eq.s32.totalorder %s25, 0
      %p204 = por %p202, %p203
      %s206 = sadd.s32 %s205, 1
      %p209 = scmp.eq.s32.totalorder %s19, 1
      %p210 = scmp.ne.s32.totalorder %s205, %s207
      %p211 = scmp.eq.s32.totalorder %s19, 0
      %p212 = por %p210, %p211
      %p213 = scmp.ne.s32.totalorder %s205, %s207
      %p214 = scmp.eq.s32.totalorder %s24, 1
      %p215 = por %p213, %p214
      %p216 = scmp.ne.s32.totalorder %s207, %s208
      %p217 = scmp.eq.s32.totalorder %s24, 0
      %p218 = por %p216, %p217
      %p219 = scmp.ne.s32.totalorder %s207, %s208
      %p220 = scmp.eq.s32.totalorder %s25, 1
      %p221 = por %p219, %p220
      %p223 = scmp.ne.s32.totalorder %s208, %s222
      %p224 = scmp.eq.s32.totalorder %s25, 0
      %p225 = por %p223, %p224
      %s227 = sadd.s32 %s226, 1
      %p230 = scmp.eq.s32.totalorder %s19, 1
      %p231 = scmp.ne.s32.totalorder %s226, %s228
      %p232 = scmp.eq.s32.totalorder %s19, 0
      %p233 = por %p231, %p232
      %p234 = scmp.ne.s32.totalorder %s226, %s228
      %p235 = scmp.eq.s32.totalorder %s24, 1
      %p236 = por %p234, %p235
      %p237 = scmp.ne.s32.totalorder %s228, %s229
      %p238 = scmp.eq.s32.totalorder %s24, 0
      %p239 = por %p237, %p238
      %p240 = scmp.ne.s32.totalorder %s228, %s229
      %p241 = scmp.eq.s32.totalorder %s25, 1
      %p242 = por %p240, %p241
      %p244 = scmp.ne.s32.totalorder %s229, %s243
      %p245 = scmp.eq.s32.totalorder %s25, 0
      %p246 = por %p244, %p245
      %s247 = ssub.s32 %s19, %s26
      %p248 = scmp.eq.s32.totalorder %s247, 0
      %s250 = sadd.s32 %s249, 1
      %s251 = scalar_select %p248, %s249, %s250
      %p254 = pneg %p248
      %p255 = scmp.eq.s32.totalorder %s19, 1
      %p256 = por %p254, %p255
      %p257 = scmp.ne.s32.totalorder %s249, %s252
      %p258 = scmp.eq.s32.totalorder %s19, 0
      %p259 = por %p257, %p258
      %p260 = scmp.ne.s32.totalorder %s249, %s252
      %p261 = scmp.eq.s32.totalorder %s24, 1
      %p262 = por %p260, %p261
      %p263 = scmp.ne.s32.totalorder %s252, %s253
      %p264 = scmp.eq.s32.totalorder %s24, 0
      %p265 = por %p263, %p264
      %p266 = scmp.ne.s32.totalorder %s252, %s253
      %p267 = scmp.eq.s32.totalorder %s25, 1
      %p268 = por %p266, %p267
      %p270 = scmp.ne.s32.totalorder %s253, %s269
      %p271 = scmp.eq.s32.totalorder %s25, 0
      %p272 = por %p270, %p271
      %p273 = scmp.le.s32.totalorder 1, %s19
      %p274 = scmp.lt.s32.totalorder %s19, 3
      %p275 = pnand %p273, %p274
      %p276 = pneg %p275
      // Predicated region
      $region9: #{encoder_forward.5} parent=5 // pred_check
        _
      $region10: #{encoder_forward.5} parent=5 // pred_check_branch
        %278 = sbr.rel (%p275) target = $region12
      $region11: #{encoder_forward.5} parent=5 // pred_region
        %s279 = ssub.s32 %s19, 1
        // Predicated region
        $region13: #{encoder_forward.5} parent=11 // pred_check
          %p280 = pneg %p92
        $region14: #{encoder_forward.5} parent=11 // pred_check_branch
          %282 = sbr.rel (%p280) target = $region16
        $region15: #{encoder_forward.5} parent=11 // pred_region
          _
        $region16: #{encoder_forward.5} parent=11 // pred_fallthru
          _
        // Predicated region
        $region17: #{encoder_forward.5} parent=11 // pred_check
          %p283 = pneg %p113
        $region18: #{encoder_forward.5} parent=11 // pred_check_branch
          %285 = sbr.rel (%p283) target = $region20
        $region19: #{encoder_forward.5} parent=11 // pred_region
          _
        $region20: #{encoder_forward.5} parent=11 // pred_fallthru
          _
        // Predicated region
        $region21: #{encoder_forward.5} parent=11 // pred_check
          %p286 = pneg %p134
        $region22: #{encoder_forward.5} parent=11 // pred_check_branch
          %288 = sbr.rel (%p286) target = $region24
        $region23: #{encoder_forward.5} parent=11 // pred_region
          _
        $region24: #{encoder_forward.5} parent=11 // pred_fallthru
          _
        // Predicated region
        $region25: #{encoder_forward.5} parent=11 // pred_check
          %p289 = pneg %p155
        $region26: #{encoder_forward.5} parent=11 // pred_check_branch
          %291 = sbr.rel (%p289) target = $region28
        $region27: #{encoder_forward.5} parent=11 // pred_region
          _
        $region28: #{encoder_forward.5} parent=11 // pred_fallthru
          _
        // Predicated region
        $region29: #{encoder_forward.5} parent=11 // pred_check
          %p292 = pneg %p176
        $region30: #{encoder_forward.5} parent=11 // pred_check_branch
          %294 = sbr.rel (%p292) target = $region32
        $region31: #{encoder_forward.5} parent=11 // pred_region
          _
        $region32: #{encoder_forward.5} parent=11 // pred_fallthru
          _
        // Predicated region
        $region33: #{encoder_forward.5} parent=11 // pred_check
          %p295 = pneg %p197
        $region34: #{encoder_forward.5} parent=11 // pred_check_branch
          %297 = sbr.rel (%p295) target = $region36
        $region35: #{encoder_forward.5} parent=11 // pred_region
          _
        $region36: #{encoder_forward.5} parent=11 // pred_fallthru
          _
        // Predicated region
        $region37: #{encoder_forward.5} parent=11 // pred_check
          %p298 = pneg %p218
        $region38: #{encoder_forward.5} parent=11 // pred_check_branch
          %300 = sbr.rel (%p298) target = $region40
        $region39: #{encoder_forward.5} parent=11 // pred_region
          _
        $region40: #{encoder_forward.5} parent=11 // pred_fallthru
          _
        // Predicated region
        $region41: #{encoder_forward.5} parent=11 // pred_check
          %p301 = pneg %p239
        $region42: #{encoder_forward.5} parent=11 // pred_check_branch
          %303 = sbr.rel (%p301) target = $region44
        $region43: #{encoder_forward.5} parent=11 // pred_region
          _
        $region44: #{encoder_forward.5} parent=11 // pred_fallthru
          _
      $region12: #{encoder_forward.5} parent=5 // pred_fallthru
        _
      %p304 = scmp.lt.s32.totalorder %s19, 2
      // Predicated region
      $region45: #{encoder_forward.5} parent=5 // pred_check
        %p305 = pneg %p304
      $region46: #{encoder_forward.5} parent=5 // pred_check_branch
        %307 = sbr.rel (%p305) target = $region48
      $region47: #{encoder_forward.5} parent=5 // pred_region
        // Predicated region
        $region49: #{encoder_forward.5} parent=47 // pred_check
          %p308 = pneg %p39
        $region50: #{encoder_forward.5} parent=47 // pred_check_branch
          %310 = sbr.rel (%p308) target = $region52
        $region51: #{encoder_forward.5} parent=47 // pred_region
          %p311 = scmp.lt.s32.totalorder %s19, 1
          %s312 = scalar_select %p311, %s19, 1
          %s313 = smul.addr %s312, 9
          %s314 = smul.addr %s313, 2
          %s315 = scalar_lea.vmem %s0, %s314
        $region52: #{encoder_forward.5} parent=47 // pred_fallthru
          _
        // Predicated region
        $region53: #{encoder_forward.5} parent=47 // pred_check
          %p316 = pneg %p65
        $region54: #{encoder_forward.5} parent=47 // pred_check_branch
          %318 = sbr.rel (%p316) target = $region56
        $region55: #{encoder_forward.5} parent=47 // pred_region
          %p319 = scmp.lt.s32.totalorder %s19, 1
          %s320 = scalar_select %p319, %s19, 1
          %s321 = smul.addr %s320, 2
          %s322 = scalar_lea.vmem %s1, %s321
        $region56: #{encoder_forward.5} parent=47 // pred_fallthru
          _
      $region48: #{encoder_forward.5} parent=5 // pred_fallthru
        _
      %p323 = scmp.le.s32.totalorder 1, %s19
      %p324 = scmp.lt.s32.totalorder %s19, 3
      %p325 = pnand %p323, %p324
      %p326 = pneg %p325
      // Predicated region
      $region57: #{encoder_forward.5} parent=5 // pred_check
        _
      $region58: #{encoder_forward.5} parent=5 // pred_check_branch
        %328 = sbr.rel (%p325) target = $region60
      $region59: #{encoder_forward.5} parent=5 // pred_region
        %s329 = ssub.s32 %s19, 1
        %p330 = scmp.lt.s32.totalorder %s24, 1
        %s331 = scalar_select %p330, %s24, 1
        %s332 = smul.addr %s331, 9
        %s333 = smul.addr %s332, 2
        %s334 = scalar_lea.vmem %s0, %s333
        %p335 = pneg %p45
        %p336 = pneg %p42
        %p337 = scmp.lt.s32.totalorder %s24, 1
        %s338 = scalar_select %p337, %s24, 1
        %s339 = smul.addr %s338, 2
        %s340 = scalar_lea.vmem %s1, %s339
        %p341 = pneg %p71
        %p342 = pneg %p68
        %p343 = pneg %p92
        %p344 = pneg %p89
        %p345 = pneg %p113
        %p346 = pneg %p110
        %p347 = pneg %p134
        %p348 = pneg %p131
        %p349 = pneg %p155
        %p350 = pneg %p152
        %p351 = pneg %p176
        %p352 = pneg %p173
        %p353 = pneg %p197
        %p354 = pneg %p194
        %p355 = pneg %p218
        %p356 = pneg %p215
        %p357 = pneg %p239
        %p358 = pneg %p236
        %p359 = pneg %p265
        %p360 = pneg %p262
        %s361 = sand.u32 %s252, 1
        %s362 = scalar_lea.sflag [#allocation4], %s361
        %s363 = sand.u32 %s252, 1
        %s364 = scalar_lea.vmem [#allocation3], %s363
        %p365 = scmp.lt.s32.totalorder %s24, 1
        %s366 = scalar_select %p365, %s24, 1
        %s367 = smul.addr %s366, 9
        %s368 = smul.addr %s367, 2
        %s369 = scalar_lea.vmem %s0, %s368
        %p370 = scmp.lt.s32.totalorder %s24, 1
        %s371 = scalar_select %p370, %s24, 1
        %s372 = smul.addr %s371, 2
        %s373 = scalar_lea.vmem %s1, %s372
        %v375 = vld [vmem:[%s369] sm:$0xff]
        %v376 = vld [vmem:[%s369 + $0x8] sm:$0xff]
        %v377 = vld [vmem:[%s369 + $0x10] sm:$0x3]
        %v378 = vld [vmem:[%s2] sm:$0xff]
        %v379 = vld [vmem:[%s2 + $0x8] sm:$0xff]
        %v380 = vld [vmem:[%s2 + $0x10] sm:$0xff]
        %v381 = vld [vmem:[%s2 + $0x18] sm:$0xff]
        %v382 = vld [vmem:[%s2 + $0x20] sm:$0xff]
        %v383 = vld [vmem:[%s2 + $0x28] sm:$0xff]
        %v384 = vld [vmem:[%s2 + $0x30] sm:$0xff]
        %v385 = vld [vmem:[%s2 + $0x38] sm:$0xff]
        %v386 = vld [vmem:[%s2 + $0x40] sm:$0xff]
        %v387 = vld [vmem:[%s2 + $0x48] sm:$0xff]
        %v388 = vld [vmem:[%s2 + $0x50] sm:$0xff]
        %v389 = vld [vmem:[%s2 + $0x58] sm:$0xff]
        %v390 = vld [vmem:[%s2 + $0x60] sm:$0xff]
        %v391 = vld [vmem:[%s2 + $0x68] sm:$0xff]
        %v392 = vld [vmem:[%s2 + $0x70] sm:$0xff]
        %v393 = vld [vmem:[%s2 + $0x78] sm:$0xff]
        %v394 = vld [vmem:[%s2 + $0x80] sm:$0xff]
        %v395 = vld [vmem:[%s2 + $0x88] sm:$0xff]
        %v396 = vld [vmem:[%s2 + $0x90] sm:$0xff]
        %v397 = vld [vmem:[%s2 + $0x98] sm:$0xff]
        %v398 = vld [vmem:[%s2 + $0xa0] sm:$0xff]
        %v399 = vld [vmem:[%s2 + $0xa8] sm:$0xff]
        %v400 = vld [vmem:[%s2 + $0xb0] sm:$0xff]
        %v401 = vld [vmem:[%s2 + $0xb8] sm:$0xff]
        %v402 = vld [vmem:[%s2 + $0xc0] sm:$0xff]
        %v403 = vld [vmem:[%s2 + $0xc8] sm:$0xff]
        %v404 = vld [vmem:[%s2 + $0xd0] sm:$0xff]
        %v405 = vld [vmem:[%s2 + $0xd8] sm:$0xff]
        %v406 = vld [vmem:[%s2 + $0xe0] sm:$0xff]
        %v407 = vld [vmem:[%s2 + $0xe8] sm:$0xff]
        %v408 = vld [vmem:[%s2 + $0xf0] sm:$0xff]
        %v409 = vld [vmem:[%s2 + $0xf8] sm:$0xff]
        %v410 = vld [vmem:[%s2 + $0x100] sm:$0xff]
        %v411 = vld [vmem:[%s2 + $0x108] sm:$0xff]
        %v412 = vld [vmem:[%s2 + $0x110] sm:$0xff]
        %v413 = vld [vmem:[%s2 + $0x118] sm:$0xff]
        %v414 = vld [vmem:[%s2 + $0x120] sm:$0xff]
        %v415 = vld [vmem:[%s2 + $0x128] sm:$0xff]
        %v416 = vld [vmem:[%s2 + $0x130] sm:$0xff]
        %v417 = vld [vmem:[%s2 + $0x138] sm:$0xff]
        %v418 = vld [vmem:[%s2 + $0x140] sm:$0xff]
        %v419 = vld [vmem:[%s2 + $0x148] sm:$0xff]
        %v420 = vld [vmem:[%s2 + $0x150] sm:$0xff]
        %v421 = vld [vmem:[%s2 + $0x158] sm:$0xff]
        %v422 = vld [vmem:[%s2 + $0x160] sm:$0xff]
        %v423 = vld [vmem:[%s2 + $0x168] sm:$0xff]
        %v424 = vld [vmem:[%s2 + $0x170] sm:$0xff]
        %v425 = vld [vmem:[%s2 + $0x178] sm:$0xff]
        %v426 = vld [vmem:[%s2 + $0x180] sm:$0xff]
        %v427 = vld [vmem:[%s2 + $0x188] sm:$0xff]
        %v428 = vld [vmem:[%s2 + $0x190] sm:$0xff]
        %v429 = vld [vmem:[%s2 + $0x198] sm:$0xff]
        %v430 = vld [vmem:[%s2 + $0x1a0] sm:$0xff]
        %v431 = vld [vmem:[%s2 + $0x1a8] sm:$0xff]
        %v432 = vld [vmem:[%s2 + $0x1b0] sm:$0xff]
        %v433 = vld [vmem:[%s2 + $0x1b8] sm:$0xff]
        %v434 = vld [vmem:[%s2 + $0x1c0] sm:$0xff]
        %v435 = vld [vmem:[%s2 + $0x1c8] sm:$0xff]
        %v436 = vld [vmem:[%s2 + $0x1d0] sm:$0xff]
        %v437 = vld [vmem:[%s2 + $0x1d8] sm:$0xff]
        %v438 = vld [vmem:[%s2 + $0x1e0] sm:$0xff]
        %v439 = vld [vmem:[%s2 + $0x1e8] sm:$0xff]
        %v440 = vld [vmem:[%s2 + $0x1f0] sm:$0xff]
        %v441 = vld [vmem:[%s2 + $0x1f8] sm:$0xff]
        %v442 = vld [vmem:[%s2 + $0x200] sm:$0xff]
        %v443 = vld [vmem:[%s2 + $0x208] sm:$0xff]
        %v444 = vld [vmem:[%s2 + $0x210] sm:$0xff]
        %v445 = vld [vmem:[%s2 + $0x218] sm:$0xff]
        %v446 = vld [vmem:[%s2 + $0x220] sm:$0xff]
        %v447 = vld [vmem:[%s2 + $0x228] sm:$0xff]
        %v448 = vld [vmem:[%s2 + $0x230] sm:$0xff]
        %v449 = vld [vmem:[%s2 + $0x238] sm:$0xff]
        %v450 = vld [vmem:[%s2 + $0x240] sm:$0xff]
        %v451 = vld [vmem:[%s2 + $0x248] sm:$0xff]
        %v452 = vld [vmem:[%s2 + $0x250] sm:$0xff]
        %v453 = vld [vmem:[%s2 + $0x258] sm:$0xff]
        %v454 = vld [vmem:[%s2 + $0x260] sm:$0xff]
        %v455 = vld [vmem:[%s2 + $0x268] sm:$0xff]
        %v456 = vld [vmem:[%s2 + $0x270] sm:$0xff]
        %v457 = vld [vmem:[%s2 + $0x278] sm:$0xff]
        %v458 = vld [vmem:[%s2 + $0x280] sm:$0xff]
        %v459 = vld [vmem:[%s2 + $0x288] sm:$0xff]
        %v460 = vld [vmem:[%s2 + $0x290] sm:$0xff]
        %v461 = vld [vmem:[%s2 + $0x298] sm:$0xff]
        %v462 = vld [vmem:[%s2 + $0x2a0] sm:$0xff]
        %v463 = vld [vmem:[%s2 + $0x2a8] sm:$0xff]
        %v464 = vld [vmem:[%s2 + $0x2b0] sm:$0xff]
        %v465 = vld [vmem:[%s2 + $0x2b8] sm:$0xff]
        %v466 = vld [vmem:[%s2 + $0x2c0] sm:$0xff]
        %v467 = vld [vmem:[%s2 + $0x2c8] sm:$0xff]
        %v468 = vld [vmem:[%s2 + $0x2d0] sm:$0xff]
        %v469 = vld [vmem:[%s2 + $0x2d8] sm:$0xff]
        %v470 = vld [vmem:[%s2 + $0x2e0] sm:$0xff]
        %v471 = vld [vmem:[%s2 + $0x2e8] sm:$0xff]
        %v472 = vld [vmem:[%s2 + $0x2f0] sm:$0xff]
        %v473 = vld [vmem:[%s2 + $0x2f8] sm:$0xff]
        %v474 = vld [vmem:[%s2 + $0x300] sm:$0xff]
        %v475 = vld [vmem:[%s2 + $0x308] sm:$0xff]
        %v476 = vld [vmem:[%s2 + $0x310] sm:$0xff]
        %v477 = vld [vmem:[%s2 + $0x318] sm:$0xff]
        %v478 = vld [vmem:[%s2 + $0x320] sm:$0xff]
        %v479 = vld [vmem:[%s2 + $0x328] sm:$0xff]
        %v480 = vld [vmem:[%s2 + $0x330] sm:$0xff]
        %v481 = vld [vmem:[%s2 + $0x338] sm:$0xff]
        %v482 = vld [vmem:[%s2 + $0x340] sm:$0xff]
        %v483 = vld [vmem:[%s2 + $0x348] sm:$0xff]
        %v484 = vld [vmem:[%s2 + $0x350] sm:$0xff]
        %v485 = vld [vmem:[%s2 + $0x358] sm:$0xff]
        %v486 = vld [vmem:[%s2 + $0x360] sm:$0xff]
        %v487 = vld [vmem:[%s2 + $0x368] sm:$0xff]
        %v488 = vld [vmem:[%s2 + $0x370] sm:$0xff]
        %v489 = vld [vmem:[%s2 + $0x378] sm:$0xff]
        %v490 = vld [vmem:[%s2 + $0x380] sm:$0xff]
        %v491 = vld [vmem:[%s2 + $0x388] sm:$0xff]
        %v492 = vld [vmem:[%s2 + $0x390] sm:$0xff]
        %v493 = vld [vmem:[%s2 + $0x398] sm:$0xff]
        %v494 = vld [vmem:[%s2 + $0x3a0] sm:$0xff]
        %v495 = vld [vmem:[%s2 + $0x3a8] sm:$0xff]
        %v496 = vld [vmem:[%s2 + $0x3b0] sm:$0xff]
        %v497 = vld [vmem:[%s2 + $0x3b8] sm:$0xff]
        %v498 = vld [vmem:[%s2 + $0x3c0] sm:$0xff]
        %v499 = vld [vmem:[%s2 + $0x3c8] sm:$0xff]
        %v500 = vld [vmem:[%s2 + $0x3d0] sm:$0xff]
        %v501 = vld [vmem:[%s2 + $0x3d8] sm:$0xff]
        %v502 = vld [vmem:[%s2 + $0x3e0] sm:$0xff]
        %v503 = vld [vmem:[%s2 + $0x3e8] sm:$0xff]
        %v504 = vld [vmem:[%s2 + $0x3f0] sm:$0xff]
        %v505 = vld [vmem:[%s2 + $0x3f8] sm:$0xff]
        %v506 = vld [vmem:[%s2 + $0x400] sm:$0xff]
        %v507 = vld [vmem:[%s2 + $0x408] sm:$0xff]
        %v508 = vld [vmem:[%s2 + $0x410] sm:$0xff]
        %v509 = vld [vmem:[%s2 + $0x418] sm:$0xff]
        %v510 = vld [vmem:[%s2 + $0x420] sm:$0xff]
        %v511 = vld [vmem:[%s2 + $0x428] sm:$0xff]
        %v512 = vld [vmem:[%s2 + $0x430] sm:$0xff]
        %v513 = vld [vmem:[%s2 + $0x438] sm:$0xff]
        %v514 = vld [vmem:[%s2 + $0x440] sm:$0xff]
        %v515 = vld [vmem:[%s2 + $0x448] sm:$0xff]
        %v516 = vld [vmem:[%s2 + $0x450] sm:$0xff]
        %v517 = vld [vmem:[%s2 + $0x458] sm:$0xff]
        %v518 = vld [vmem:[%s2 + $0x460] sm:$0xff]
        %v519 = vld [vmem:[%s2 + $0x468] sm:$0xff]
        %v520 = vld [vmem:[%s2 + $0x470] sm:$0xff]
        %v521 = vld [vmem:[%s2 + $0x478] sm:$0xff]
        %v522 = vld [vmem:[%s3] sm:$0x3]
        %v524 = vlaneseq
        %v525 = vshrl.u32 %v524, 7
        %v526 = vsub.s32 0, %v525
        %v527 = vrot.slane %v522, %v526
        %v528 = vlaneseq
        %v529 = vshrl.u32 %v528, 7
        %v530 = vsub.s32 1, %v529
        %v531 = vrot.slane %v522, %v530
        %v537 = vcombine.high %v375, %v375
        %v539 = vunpack.c.l.s4 1983009808
        %v540 = vunpack.c.0.s8 %v539
        %v541 = vlaneseq
        %v542 = vshrl.u32 %v541, 7
        %v543 = vsub.s32 %v540, %v542
        %v544 = vrot.slane %v375, %v543
        %v546 = vunpack.c.l.s4 1983009808
        %v547 = vunpack.c.0.s8 %v546
        %v548 = vlaneseq
        %v549 = vshrl.u32 %v548, 7
        %v550 = vsub.s32 %v547, %v549
        %v551 = vrot.slane %v537, %v550
        %v552 = vcombine.high %v544, %v544
        %v553 = vcombine.high %v551, %v551
        %v554 = vcombine.high %v376, %v376
        %v556 = vunpack.c.l.s4 1983009808
        %v557 = vunpack.c.0.s8 %v556
        %v558 = vlaneseq
        %v559 = vshrl.u32 %v558, 7
        %v560 = vsub.s32 %v557, %v559
        %v561 = vrot.slane %v376, %v560
        %v563 = vunpack.c.l.s4 1983009808
        %v564 = vunpack.c.0.s8 %v563
        %v565 = vlaneseq
        %v566 = vshrl.u32 %v565, 7
        %v567 = vsub.s32 %v564, %v566
        %v568 = vrot.slane %v554, %v567
        %v569 = vcombine.high %v561, %v561
        %v570 = vcombine.high %v568, %v568
        %v572 = vunpack.c.l.s4 1983009808
        %v573 = vunpack.c.0.s8 %v572
        %v574 = vlaneseq
        %v575 = vshrl.u32 %v574, 7
        %v576 = vsub.s32 %v573, %v575
        %v577 = vrot.slane %v377, %v576
        %v731 = vunpack.c.l.b16 %v378
        %v732 = vunpack.c.h.b16 %v378
        %v733 = vunpack.c.l.b16 %v379
        %v734 = vunpack.c.h.b16 %v379
        %v735 = vunpack.c.l.b16 %v380
        %v736 = vunpack.c.h.b16 %v380
        %v737 = vunpack.c.l.b16 %v381
        %v738 = vunpack.c.h.b16 %v381
        %v739 = vunpack.c.l.b16 %v382
        %v740 = vunpack.c.h.b16 %v382
        %v741 = vunpack.c.l.b16 %v383
        %v742 = vunpack.c.h.b16 %v383
        %v743 = vunpack.c.l.b16 %v384
        %v744 = vunpack.c.h.b16 %v384
        %v745 = vunpack.c.l.b16 %v385
        %v746 = vunpack.c.h.b16 %v385
        %v747 = vunpack.c.l.b16 %v386
        %v748 = vunpack.c.h.b16 %v386
        %v749 = vunpack.c.l.b16 %v387
        %v750 = vunpack.c.h.b16 %v387
        %v751 = vunpack.c.l.b16 %v388
        %v752 = vunpack.c.h.b16 %v388
        %v753 = vunpack.c.l.b16 %v389
        %v754 = vunpack.c.h.b16 %v389
        %v755 = vunpack.c.l.b16 %v390
        %v756 = vunpack.c.h.b16 %v390
        %v757 = vunpack.c.l.b16 %v391
        %v758 = vunpack.c.h.b16 %v391
        %v759 = vunpack.c.l.b16 %v392
        %v760 = vunpack.c.h.b16 %v392
        %v761 = vunpack.c.l.b16 %v393
        %v762 = vunpack.c.h.b16 %v393
        %v763 = vunpack.c.l.b16 %v394
        %v764 = vunpack.c.h.b16 %v394
        %v765 = vunpack.c.l.b16 %v395
        %v766 = vunpack.c.h.b16 %v395
        %v767 = vunpack.c.l.b16 %v396
        %v768 = vunpack.c.h.b16 %v396
        %v769 = vunpack.c.l.b16 %v397
        %v770 = vunpack.c.h.b16 %v397
        %v771 = vunpack.c.l.b16 %v398
        %v772 = vunpack.c.h.b16 %v398
        %v773 = vunpack.c.l.b16 %v399
        %v774 = vunpack.c.h.b16 %v399
        %v775 = vunpack.c.l.b16 %v400
        %v776 = vunpack.c.h.b16 %v400
        %v777 = vunpack.c.l.b16 %v401
        %v778 = vunpack.c.h.b16 %v401
        %v779 = vunpack.c.l.b16 %v402
        %v780 = vunpack.c.h.b16 %v402
        %v781 = vunpack.c.l.b16 %v403
        %v782 = vunpack.c.h.b16 %v403
        %v783 = vunpack.c.l.b16 %v404
        %v784 = vunpack.c.h.b16 %v404
        %v785 = vunpack.c.l.b16 %v405
        %v786 = vunpack.c.h.b16 %v405
        %v787 = vunpack.c.l.b16 %v406
        %v788 = vunpack.c.h.b16 %v406
        %v789 = vunpack.c.l.b16 %v407
        %v790 = vunpack.c.h.b16 %v407
        %v791 = vunpack.c.l.b16 %v408
        %v792 = vunpack.c.h.b16 %v408
        %v793 = vunpack.c.l.b16 %v409
        %v794 = vunpack.c.h.b16 %v409
        %v795 = vunpack.c.l.b16 %v410
        %v796 = vunpack.c.h.b16 %v410
        %v797 = vunpack.c.l.b16 %v411
        %v798 = vunpack.c.h.b16 %v411
        %v799 = vunpack.c.l.b16 %v412
        %v800 = vunpack.c.h.b16 %v412
        %v801 = vunpack.c.l.b16 %v413
        %v802 = vunpack.c.h.b16 %v413
        %v803 = vunpack.c.l.b16 %v414
        %v804 = vunpack.c.h.b16 %v414
        %v805 = vunpack.c.l.b16 %v415
        %v806 = vunpack.c.h.b16 %v415
        %v807 = vunpack.c.l.b16 %v416
        %v808 = vunpack.c.h.b16 %v416
        %v809 = vunpack.c.l.b16 %v417
        %v810 = vunpack.c.h.b16 %v417
        %v811 = vunpack.c.l.b16 %v418
        %v812 = vunpack.c.h.b16 %v418
        %v813 = vunpack.c.l.b16 %v419
        %v814 = vunpack.c.h.b16 %v419
        %v815 = vunpack.c.l.b16 %v420
        %v816 = vunpack.c.h.b16 %v420
        %v817 = vunpack.c.l.b16 %v421
        %v818 = vunpack.c.h.b16 %v421
        %v819 = vunpack.c.l.b16 %v422
        %v820 = vunpack.c.h.b16 %v422
        %v821 = vunpack.c.l.b16 %v423
        %v822 = vunpack.c.h.b16 %v423
        %v823 = vunpack.c.l.b16 %v424
        %v824 = vunpack.c.h.b16 %v424
        %v825 = vunpack.c.l.b16 %v425
        %v826 = vunpack.c.h.b16 %v425
        %v827 = vunpack.c.l.b16 %v426
        %v828 = vunpack.c.h.b16 %v426
        %v829 = vunpack.c.l.b16 %v427
        %v830 = vunpack.c.h.b16 %v427
        %v831 = vunpack.c.l.b16 %v428
        %v832 = vunpack.c.h.b16 %v428
        %v833 = vunpack.c.l.b16 %v429
        %v834 = vunpack.c.h.b16 %v429
        %v835 = vunpack.c.l.b16 %v430
        %v836 = vunpack.c.h.b16 %v430
        %v837 = vunpack.c.l.b16 %v431
        %v838 = vunpack.c.h.b16 %v431
        %v839 = vunpack.c.l.b16 %v432
        %v840 = vunpack.c.h.b16 %v432
        %v841 = vunpack.c.l.b16 %v433
        %v842 = vunpack.c.h.b16 %v433
        %v843 = vunpack.c.l.b16 %v434
        %v844 = vunpack.c.h.b16 %v434
        %v845 = vunpack.c.l.b16 %v435
        %v846 = vunpack.c.h.b16 %v435
        %v847 = vunpack.c.l.b16 %v436
        %v848 = vunpack.c.h.b16 %v436
        %v849 = vunpack.c.l.b16 %v437
        %v850 = vunpack.c.h.b16 %v437
        %v851 = vunpack.c.l.b16 %v438
        %v852 = vunpack.c.h.b16 %v438
        %v853 = vunpack.c.l.b16 %v439
        %v854 = vunpack.c.h.b16 %v439
        %v855 = vunpack.c.l.b16 %v440
        %v856 = vunpack.c.h.b16 %v440
        %v857 = vunpack.c.l.b16 %v441
        %v858 = vunpack.c.h.b16 %v441
        %v859 = vunpack.c.l.b16 %v442
        %v860 = vunpack.c.h.b16 %v442
        %v861 = vunpack.c.l.b16 %v443
        %v862 = vunpack.c.h.b16 %v443
        %v863 = vunpack.c.l.b16 %v444
        %v864 = vunpack.c.h.b16 %v444
        %v865 = vunpack.c.l.b16 %v445
        %v866 = vunpack.c.h.b16 %v445
        %v867 = vunpack.c.l.b16 %v446
        %v868 = vunpack.c.h.b16 %v446
        %v869 = vunpack.c.l.b16 %v447
        %v870 = vunpack.c.h.b16 %v447
        %v871 = vunpack.c.l.b16 %v448
        %v872 = vunpack.c.h.b16 %v448
        %v873 = vunpack.c.l.b16 %v449
        %v874 = vunpack.c.h.b16 %v449
        %v875 = vunpack.c.l.b16 %v450
        %v876 = vunpack.c.h.b16 %v450
        %v877 = vunpack.c.l.b16 %v451
        %v878 = vunpack.c.h.b16 %v451
        %v879 = vunpack.c.l.b16 %v452
        %v880 = vunpack.c.h.b16 %v452
        %v881 = vunpack.c.l.b16 %v453
        %v882 = vunpack.c.h.b16 %v453
        %v883 = vunpack.c.l.b16 %v454
        %v884 = vunpack.c.h.b16 %v454
        %v885 = vunpack.c.l.b16 %v455
        %v886 = vunpack.c.h.b16 %v455
        %v887 = vunpack.c.l.b16 %v456
        %v888 = vunpack.c.h.b16 %v456
        %v889 = vunpack.c.l.b16 %v457
        %v890 = vunpack.c.h.b16 %v457
        %v891 = vunpack.c.l.b16 %v458
        %v892 = vunpack.c.h.b16 %v458
        %v893 = vunpack.c.l.b16 %v459
        %v894 = vunpack.c.h.b16 %v459
        %v895 = vunpack.c.l.b16 %v460
        %v896 = vunpack.c.h.b16 %v460
        %v897 = vunpack.c.l.b16 %v461
        %v898 = vunpack.c.h.b16 %v461
        %v899 = vunpack.c.l.b16 %v462
        %v900 = vunpack.c.h.b16 %v462
        %v901 = vunpack.c.l.b16 %v463
        %v902 = vunpack.c.h.b16 %v463
        %v903 = vunpack.c.l.b16 %v464
        %v904 = vunpack.c.h.b16 %v464
        %v905 = vunpack.c.l.b16 %v465
        %v906 = vunpack.c.h.b16 %v465
        %v907 = vunpack.c.l.b16 %v466
        %v908 = vunpack.c.h.b16 %v466
        %v909 = vunpack.c.l.b16 %v467
        %v910 = vunpack.c.h.b16 %v467
        %v911 = vunpack.c.l.b16 %v468
        %v912 = vunpack.c.h.b16 %v468
        %v913 = vunpack.c.l.b16 %v469
        %v914 = vunpack.c.h.b16 %v469
        %v915 = vunpack.c.l.b16 %v470
        %v916 = vunpack.c.h.b16 %v470
        %v917 = vunpack.c.l.b16 %v471
        %v918 = vunpack.c.h.b16 %v471
        %v919 = vunpack.c.l.b16 %v472
        %v920 = vunpack.c.h.b16 %v472
        %v921 = vunpack.c.l.b16 %v473
        %v922 = vunpack.c.h.b16 %v473
        %v923 = vunpack.c.l.b16 %v474
        %v924 = vunpack.c.h.b16 %v474
        %v925 = vunpack.c.l.b16 %v475
        %v926 = vunpack.c.h.b16 %v475
        %v927 = vunpack.c.l.b16 %v476
        %v928 = vunpack.c.h.b16 %v476
        %v929 = vunpack.c.l.b16 %v477
        %v930 = vunpack.c.h.b16 %v477
        %v931 = vunpack.c.l.b16 %v478
        %v932 = vunpack.c.h.b16 %v478
        %v933 = vunpack.c.l.b16 %v479
        %v934 = vunpack.c.h.b16 %v479
        %v935 = vunpack.c.l.b16 %v480
        %v936 = vunpack.c.h.b16 %v480
        %v937 = vunpack.c.l.b16 %v481
        %v938 = vunpack.c.h.b16 %v481
        %v939 = vunpack.c.l.b16 %v482
        %v940 = vunpack.c.h.b16 %v482
        %v941 = vunpack.c.l.b16 %v483
        %v942 = vunpack.c.h.b16 %v483
        %v943 = vunpack.c.l.b16 %v484
        %v944 = vunpack.c.h.b16 %v484
        %v945 = vunpack.c.l.b16 %v485
        %v946 = vunpack.c.h.b16 %v485
        %v947 = vunpack.c.l.b16 %v486
        %v948 = vunpack.c.h.b16 %v486
        %v949 = vunpack.c.l.b16 %v487
        %v950 = vunpack.c.h.b16 %v487
        %v951 = vunpack.c.l.b16 %v488
        %v952 = vunpack.c.h.b16 %v488
        %v953 = vunpack.c.l.b16 %v489
        %v954 = vunpack.c.h.b16 %v489
        %v955 = vunpack.c.l.b16 %v490
        %v956 = vunpack.c.h.b16 %v490
        %v957 = vunpack.c.l.b16 %v491
        %v958 = vunpack.c.h.b16 %v491
        %v959 = vunpack.c.l.b16 %v492
        %v960 = vunpack.c.h.b16 %v492
        %v961 = vunpack.c.l.b16 %v493
        %v962 = vunpack.c.h.b16 %v493
        %v963 = vunpack.c.l.b16 %v494
        %v964 = vunpack.c.h.b16 %v494
        %v965 = vunpack.c.l.b16 %v495
        %v966 = vunpack.c.h.b16 %v495
        %v967 = vunpack.c.l.b16 %v496
        %v968 = vunpack.c.h.b16 %v496
        %v969 = vunpack.c.l.b16 %v497
        %v970 = vunpack.c.h.b16 %v497
        %v971 = vunpack.c.l.b16 %v498
        %v972 = vunpack.c.h.b16 %v498
        %v973 = vunpack.c.l.b16 %v499
        %v974 = vunpack.c.h.b16 %v499
        %v975 = vunpack.c.l.b16 %v500
        %v976 = vunpack.c.h.b16 %v500
        %v977 = vunpack.c.l.b16 %v501
        %v978 = vunpack.c.h.b16 %v501
        %v979 = vunpack.c.l.b16 %v502
        %v980 = vunpack.c.h.b16 %v502
        %v981 = vunpack.c.l.b16 %v503
        %v982 = vunpack.c.h.b16 %v503
        %v983 = vunpack.c.l.b16 %v504
        %v984 = vunpack.c.h.b16 %v504
        %v985 = vunpack.c.l.b16 %v505
        %v986 = vunpack.c.h.b16 %v505
        %v987 = vunpack.c.l.b16 %v506
        %v988 = vunpack.c.h.b16 %v506
        %v989 = vunpack.c.l.b16 %v507
        %v990 = vunpack.c.h.b16 %v507
        %v991 = vunpack.c.l.b16 %v508
        %v992 = vunpack.c.h.b16 %v508
        %v993 = vunpack.c.l.b16 %v509
        %v994 = vunpack.c.h.b16 %v509
        %v995 = vunpack.c.l.b16 %v510
        %v996 = vunpack.c.h.b16 %v510
        %v997 = vunpack.c.l.b16 %v511
        %v998 = vunpack.c.h.b16 %v511
        %v999 = vunpack.c.l.b16 %v512
        %v1000 = vunpack.c.h.b16 %v512
        %v1001 = vunpack.c.l.b16 %v513
        %v1002 = vunpack.c.h.b16 %v513
        %v1003 = vunpack.c.l.b16 %v514
        %v1004 = vunpack.c.h.b16 %v514
        %v1005 = vunpack.c.l.b16 %v515
        %v1006 = vunpack.c.h.b16 %v515
        %v1007 = vunpack.c.l.b16 %v516
        %v1008 = vunpack.c.h.b16 %v516
        %v1009 = vunpack.c.l.b16 %v517
        %v1010 = vunpack.c.h.b16 %v517
        %v1011 = vunpack.c.l.b16 %v518
        %v1012 = vunpack.c.h.b16 %v518
        %v1013 = vunpack.c.l.b16 %v519
        %v1014 = vunpack.c.h.b16 %v519
        %v1015 = vunpack.c.l.b16 %v520
        %v1016 = vunpack.c.h.b16 %v520
        %v1017 = vunpack.c.l.b16 %v521
        %v1018 = vunpack.c.h.b16 %v521
        %v1019 = vpack.c.b16 %v733, %v731
        %v1020 = vpack.c.b16 %v734, %v732
        %v1021 = vpack.c.b16 %v737, %v735
        %v1022 = vpack.c.b16 %v738, %v736
        %v1023 = vpack.c.b16 %v741, %v739
        %v1024 = vpack.c.b16 %v742, %v740
        %v1025 = vpack.c.b16 %v745, %v743
        %v1026 = vpack.c.b16 %v746, %v744
        %v1027 = vpack.c.b16 %v749, %v747
        %v1028 = vpack.c.b16 %v750, %v748
        %v1029 = vpack.c.b16 %v753, %v751
        %v1030 = vpack.c.b16 %v754, %v752
        %v1031 = vpack.c.b16 %v757, %v755
        %v1032 = vpack.c.b16 %v758, %v756
        %v1033 = vpack.c.b16 %v761, %v759
        %v1034 = vpack.c.b16 %v762, %v760
        %v1035 = vpack.c.b16 %v765, %v763
        %v1036 = vpack.c.b16 %v766, %v764
        %v1037 = vpack.c.b16 %v769, %v767
        %v1038 = vpack.c.b16 %v770, %v768
        %v1039 = vpack.c.b16 %v773, %v771
        %v1040 = vpack.c.b16 %v774, %v772
        %v1041 = vpack.c.b16 %v777, %v775
        %v1042 = vpack.c.b16 %v778, %v776
        %v1043 = vpack.c.b16 %v781, %v779
        %v1044 = vpack.c.b16 %v782, %v780
        %v1045 = vpack.c.b16 %v785, %v783
        %v1046 = vpack.c.b16 %v786, %v784
        %v1047 = vpack.c.b16 %v789, %v787
        %v1048 = vpack.c.b16 %v790, %v788
        %v1049 = vpack.c.b16 %v793, %v791
        %v1050 = vpack.c.b16 %v794, %v792
        %v1051 = vpack.c.b16 %v797, %v795
        %v1052 = vpack.c.b16 %v798, %v796
        %v1053 = vpack.c.b16 %v801, %v799
        %v1054 = vpack.c.b16 %v802, %v800
        %v1055 = vpack.c.b16 %v805, %v803
        %v1056 = vpack.c.b16 %v806, %v804
        %v1057 = vpack.c.b16 %v809, %v807
        %v1058 = vpack.c.b16 %v810, %v808
        %v1059 = vpack.c.b16 %v813, %v811
        %v1060 = vpack.c.b16 %v814, %v812
        %v1061 = vpack.c.b16 %v817, %v815
        %v1062 = vpack.c.b16 %v818, %v816
        %v1063 = vpack.c.b16 %v821, %v819
        %v1064 = vpack.c.b16 %v822, %v820
        %v1065 = vpack.c.b16 %v825, %v823
        %v1066 = vpack.c.b16 %v826, %v824
        %v1067 = vpack.c.b16 %v829, %v827
        %v1068 = vpack.c.b16 %v830, %v828
        %v1069 = vpack.c.b16 %v833, %v831
        %v1070 = vpack.c.b16 %v834, %v832
        %v1071 = vpack.c.b16 %v837, %v835
        %v1072 = vpack.c.b16 %v838, %v836
        %v1073 = vpack.c.b16 %v841, %v839
        %v1074 = vpack.c.b16 %v842, %v840
        %v1075 = vpack.c.b16 %v845, %v843
        %v1076 = vpack.c.b16 %v846, %v844
        %v1077 = vpack.c.b16 %v849, %v847
        %v1078 = vpack.c.b16 %v850, %v848
        %v1079 = vpack.c.b16 %v853, %v851
        %v1080 = vpack.c.b16 %v854, %v852
        %v1081 = vpack.c.b16 %v857, %v855
        %v1082 = vpack.c.b16 %v858, %v856
        %v1083 = vpack.c.b16 %v861, %v859
        %v1084 = vpack.c.b16 %v862, %v860
        %v1085 = vpack.c.b16 %v865, %v863
        %v1086 = vpack.c.b16 %v866, %v864
        %v1087 = vpack.c.b16 %v869, %v867
        %v1088 = vpack.c.b16 %v870, %v868
        %v1089 = vpack.c.b16 %v873, %v871
        %v1090 = vpack.c.b16 %v874, %v872
        %v1091 = vpack.c.b16 %v877, %v875
        %v1092 = vpack.c.b16 %v878, %v876
        %v1093 = vpack.c.b16 %v881, %v879
        %v1094 = vpack.c.b16 %v882, %v880
        %v1095 = vpack.c.b16 %v885, %v883
        %v1096 = vpack.c.b16 %v886, %v884
        %v1097 = vpack.c.b16 %v889, %v887
        %v1098 = vpack.c.b16 %v890, %v888
        %v1099 = vpack.c.b16 %v893, %v891
        %v1100 = vpack.c.b16 %v894, %v892
        %v1101 = vpack.c.b16 %v897, %v895
        %v1102 = vpack.c.b16 %v898, %v896
        %v1103 = vpack.c.b16 %v901, %v899
        %v1104 = vpack.c.b16 %v902, %v900
        %v1105 = vpack.c.b16 %v905, %v903
        %v1106 = vpack.c.b16 %v906, %v904
        %v1107 = vpack.c.b16 %v909, %v907
        %v1108 = vpack.c.b16 %v910, %v908
        %v1109 = vpack.c.b16 %v913, %v911
        %v1110 = vpack.c.b16 %v914, %v912
        %v1111 = vpack.c.b16 %v917, %v915
        %v1112 = vpack.c.b16 %v918, %v916
        %v1113 = vpack.c.b16 %v921, %v919
        %v1114 = vpack.c.b16 %v922, %v920
        %v1115 = vpack.c.b16 %v925, %v923
        %v1116 = vpack.c.b16 %v926, %v924
        %v1117 = vpack.c.b16 %v929, %v927
        %v1118 = vpack.c.b16 %v930, %v928
        %v1119 = vpack.c.b16 %v933, %v931
        %v1120 = vpack.c.b16 %v934, %v932
        %v1121 = vpack.c.b16 %v937, %v935
        %v1122 = vpack.c.b16 %v938, %v936
        %v1123 = vpack.c.b16 %v941, %v939
        %v1124 = vpack.c.b16 %v942, %v940
        %v1125 = vpack.c.b16 %v945, %v943
        %v1126 = vpack.c.b16 %v946, %v944
        %v1127 = vpack.c.b16 %v949, %v947
        %v1128 = vpack.c.b16 %v950, %v948
        %v1129 = vpack.c.b16 %v953, %v951
        %v1130 = vpack.c.b16 %v954, %v952
        %v1131 = vpack.c.b16 %v957, %v955
        %v1132 = vpack.c.b16 %v958, %v956
        %v1133 = vpack.c.b16 %v961, %v959
        %v1134 = vpack.c.b16 %v962, %v960
        %v1135 = vpack.c.b16 %v965, %v963
        %v1136 = vpack.c.b16 %v966, %v964
        %v1137 = vpack.c.b16 %v969, %v967
        %v1138 = vpack.c.b16 %v970, %v968
        %v1139 = vpack.c.b16 %v973, %v971
        %v1140 = vpack.c.b16 %v974, %v972
        %v1141 = vpack.c.b16 %v977, %v975
        %v1142 = vpack.c.b16 %v978, %v976
        %v1143 = vpack.c.b16 %v981, %v979
        %v1144 = vpack.c.b16 %v982, %v980
        %v1145 = vpack.c.b16 %v985, %v983
        %v1146 = vpack.c.b16 %v986, %v984
        %v1147 = vpack.c.b16 %v989, %v987
        %v1148 = vpack.c.b16 %v990, %v988
        %v1149 = vpack.c.b16 %v993, %v991
        %v1150 = vpack.c.b16 %v994, %v992
        %v1151 = vpack.c.b16 %v997, %v995
        %v1152 = vpack.c.b16 %v998, %v996
        %v1153 = vpack.c.b16 %v1001, %v999
        %v1154 = vpack.c.b16 %v1002, %v1000
        %v1155 = vpack.c.b16 %v1005, %v1003
        %v1156 = vpack.c.b16 %v1006, %v1004
        %v1157 = vpack.c.b16 %v1009, %v1007
        %v1158 = vpack.c.b16 %v1010, %v1008
        %v1159 = vpack.c.b16 %v1013, %v1011
        %v1160 = vpack.c.b16 %v1014, %v1012
        %v1161 = vpack.c.b16 %v1017, %v1015
        %v1162 = vpack.c.b16 %v1018, %v1016
        %1307 = vmatprep.subr.bf16.mxu0 %v1020
        %1308 = vmatpush1.bf16.msra.mxu0 %v1019
        %1309 = vmatprep.subr.bf16.mxu0 %v1022
        %1310 = vmatpush1.bf16.msra.mxu0 %v1021
        %1311 = vmatprep.subr.bf16.mxu0 %v1024
        %1312 = vmatpush1.bf16.msra.mxu0 %v1023
        %1313 = vmatprep.subr.bf16.mxu0 %v1026
        %1314 = vmatpush1.bf16.msra.mxu0 %v1025
        %1315 = vmatprep.subr.bf16.mxu0 %v1028
        %1316 = vmatpush1.bf16.msra.mxu0 %v1027
        %1317 = vmatprep.subr.bf16.mxu0 %v1030
        %1318 = vmatpush1.bf16.msra.mxu0 %v1029
        %1319 = vmatprep.subr.bf16.mxu0 %v1032
        %1320 = vmatpush1.bf16.msra.mxu0 %v1031
        %1321 = vmatprep.subr.bf16.mxu0 %v1034
        %1322 = vmatpush1.bf16.msra.mxu0 %v1033
        %1323 = vmatprep.subr.bf16.mxu0 %v1036
        %1324 = vmatpush1.bf16.msra.mxu0 %v1035
        %1325 = vmatprep.subr.bf16.mxu0 %v1038
        %1326 = vmatpush1.bf16.msra.mxu0 %v1037
        %1327 = vmatprep.subr.bf16.mxu0 %v1040
        %1328 = vmatpush1.bf16.msra.mxu0 %v1039
        %1329 = vmatprep.subr.bf16.mxu0 %v1042
        %1330 = vmatpush1.bf16.msra.mxu0 %v1041
        %1331 = vmatprep.subr.bf16.mxu0 %v1044
        %1332 = vmatpush1.bf16.msra.mxu0 %v1043
        %1333 = vmatprep.subr.bf16.mxu0 %v1046
        %1334 = vmatpush1.bf16.msra.mxu0 %v1045
        %1335 = vmatprep.subr.bf16.mxu0 %v1048
        %1336 = vmatpush1.bf16.msra.mxu0 %v1047
        %1337 = vmatprep.subr.bf16.mxu0 %v1050
        %1338 = vmatpush1.bf16.msra.mxu0 %v1049
        %1339 = vmatprep.mubr.bf16.mxu0 %v552
        %1340 = vmatmul.mubr.bf16.gmra.mrb[0].mxu0 %v544
        %v1341 = vpop.f32.mrb[0].mxu0
        %v1342 = vadd.f32 %v527, %v1341
        %v1343 = vpop.f32.mrb[0].mxu0
        %v1344 = vadd.f32 %v531, %v1343
        %v1345 = vpop.f32.mrb[0].mxu0
        %v1346 = vpop.f32.mrb[0].mxu0
        %1347 = vdwg.mxu0
        %1348 = vmatprep.subr.bf16.mxu0 %v1052
        %1349 = vmatpush1.bf16.msra.mxu0 %v1051
        %1350 = vmatprep.subr.bf16.mxu0 %v1054
        %1351 = vmatpush1.bf16.msra.mxu0 %v1053
        %1352 = vmatprep.subr.bf16.mxu0 %v1056
        %1353 = vmatpush1.bf16.msra.mxu0 %v1055
        %1354 = vmatprep.subr.bf16.mxu0 %v1058
        %1355 = vmatpush1.bf16.msra.mxu0 %v1057
        %1356 = vmatprep.subr.bf16.mxu0 %v1060
        %1357 = vmatpush1.bf16.msra.mxu0 %v1059
        %1358 = vmatprep.subr.bf16.mxu0 %v1062
        %1359 = vmatpush1.bf16.msra.mxu0 %v1061
        %1360 = vmatprep.subr.bf16.mxu0 %v1064
        %1361 = vmatpush1.bf16.msra.mxu0 %v1063
        %1362 = vmatprep.subr.bf16.mxu0 %v1066
        %1363 = vmatpush1.bf16.msra.mxu0 %v1065
        %1364 = vmatprep.subr.bf16.mxu0 %v1068
        %1365 = vmatpush1.bf16.msra.mxu0 %v1067
        %1366 = vmatprep.subr.bf16.mxu0 %v1070
        %1367 = vmatpush1.bf16.msra.mxu0 %v1069
        %1368 = vmatprep.subr.bf16.mxu0 %v1072
        %1369 = vmatpush1.bf16.msra.mxu0 %v1071
        %1370 = vmatprep.subr.bf16.mxu0 %v1074
        %1371 = vmatpush1.bf16.msra.mxu0 %v1073
        %1372 = vmatprep.subr.bf16.mxu0 %v1076
        %1373 = vmatpush1.bf16.msra.mxu0 %v1075
        %1374 = vmatprep.subr.bf16.mxu0 %v1078
        %1375 = vmatpush1.bf16.msra.mxu0 %v1077
        %1376 = vmatprep.subr.bf16.mxu0 %v1080
        %1377 = vmatpush1.bf16.msra.mxu0 %v1079
        %1378 = vmatprep.subr.bf16.mxu0 %v1082
        %1379 = vmatpush1.bf16.msra.mxu0 %v1081
        %1380 = vmatprep.mubr.bf16.mxu0 %v553
        %1381 = vmatmul.mubr.bf16.gmra.mrb[0].mxu0 %v551
        %v1382 = vpop.f32.mrb[0].mxu0
        %v1383 = vadd.f32 %v1342, %v1382
        %v1384 = vpop.f32.mrb[0].mxu0
        %v1385 = vadd.f32 %v1344, %v1384
        %v1386 = vpop.f32.mrb[0].mxu0
        %v1387 = vpop.f32.mrb[0].mxu0
        %1388 = vdwg.mxu0
        %1389 = vmatprep.subr.bf16.mxu0 %v1084
        %1390 = vmatpush1.bf16.msra.mxu0 %v1083
        %1391 = vmatprep.subr.bf16.mxu0 %v1086
        %1392 = vmatpush1.bf16.msra.mxu0 %v1085
        %1393 = vmatprep.subr.bf16.mxu0 %v1088
        %1394 = vmatpush1.bf16.msra.mxu0 %v1087
        %1395 = vmatprep.subr.bf16.mxu0 %v1090
        %1396 = vmatpush1.bf16.msra.mxu0 %v1089
        %1397 = vmatprep.subr.bf16.mxu0 %v1092
        %1398 = vmatpush1.bf16.msra.mxu0 %v1091
        %1399 = vmatprep.subr.bf16.mxu0 %v1094
        %1400 = vmatpush1.bf16.msra.mxu0 %v1093
        %1401 = vmatprep.subr.bf16.mxu0 %v1096
        %1402 = vmatpush1.bf16.msra.mxu0 %v1095
        %1403 = vmatprep.subr.bf16.mxu0 %v1098
        %1404 = vmatpush1.bf16.msra.mxu0 %v1097
        %1405 = vmatprep.subr.bf16.mxu0 %v1100
        %1406 = vmatpush1.bf16.msra.mxu0 %v1099
        %1407 = vmatprep.subr.bf16.mxu0 %v1102
        %1408 = vmatpush1.bf16.msra.mxu0 %v1101
        %1409 = vmatprep.subr.bf16.mxu0 %v1104
        %1410 = vmatpush1.bf16.msra.mxu0 %v1103
        %1411 = vmatprep.subr.bf16.mxu0 %v1106
        %1412 = vmatpush1.bf16.msra.mxu0 %v1105
        %1413 = vmatprep.subr.bf16.mxu0 %v1108
        %1414 = vmatpush1.bf16.msra.mxu0 %v1107
        %1415 = vmatprep.subr.bf16.mxu0 %v1110
        %1416 = vmatpush1.bf16.msra.mxu0 %v1109
        %1417 = vmatprep.subr.bf16.mxu0 %v1112
        %1418 = vmatpush1.bf16.msra.mxu0 %v1111
        %1419 = vmatprep.subr.bf16.mxu0 %v1114
        %1420 = vmatpush1.bf16.msra.mxu0 %v1113
        %1421 = vmatprep.mubr.bf16.mxu0 %v569
        %1422 = vmatmul.mubr.bf16.gmra.mrb[0].mxu0 %v561
        %v1423 = vpop.f32.mrb[0].mxu0
        %v1424 = vadd.f32 %v1383, %v1423
        %v1425 = vpop.f32.mrb[0].mxu0
        %v1426 = vadd.f32 %v1385, %v1425
        %v1427 = vpop.f32.mrb[0].mxu0
        %v1428 = vpop.f32.mrb[0].mxu0
        %1429 = vdwg.mxu0
        %1430 = vmatprep.subr.bf16.mxu0 %v1116
        %1431 = vmatpush1.bf16.msra.mxu0 %v1115
        %1432 = vmatprep.subr.bf16.mxu0 %v1118
        %1433 = vmatpush1.bf16.msra.mxu0 %v1117
        %1434 = vmatprep.subr.bf16.mxu0 %v1120
        %1435 = vmatpush1.bf16.msra.mxu0 %v1119
        %1436 = vmatprep.subr.bf16.mxu0 %v1122
        %1437 = vmatpush1.bf16.msra.mxu0 %v1121
        %1438 = vmatprep.subr.bf16.mxu0 %v1124
        %1439 = vmatpush1.bf16.msra.mxu0 %v1123
        %1440 = vmatprep.subr.bf16.mxu0 %v1126
        %1441 = vmatpush1.bf16.msra.mxu0 %v1125
        %1442 = vmatprep.subr.bf16.mxu0 %v1128
        %1443 = vmatpush1.bf16.msra.mxu0 %v1127
        %1444 = vmatprep.subr.bf16.mxu0 %v1130
        %1445 = vmatpush1.bf16.msra.mxu0 %v1129
        %1446 = vmatprep.subr.bf16.mxu0 %v1132
        %1447 = vmatpush1.bf16.msra.mxu0 %v1131
        %1448 = vmatprep.subr.bf16.mxu0 %v1134
        %1449 = vmatpush1.bf16.msra.mxu0 %v1133
        %1450 = vmatprep.subr.bf16.mxu0 %v1136
        %1451 = vmatpush1.bf16.msra.mxu0 %v1135
        %1452 = vmatprep.subr.bf16.mxu0 %v1138
        %1453 = vmatpush1.bf16.msra.mxu0 %v1137
        %1454 = vmatprep.subr.bf16.mxu0 %v1140
        %1455 = vmatpush1.bf16.msra.mxu0 %v1139
        %1456 = vmatprep.subr.bf16.mxu0 %v1142
        %1457 = vmatpush1.bf16.msra.mxu0 %v1141
        %1458 = vmatprep.subr.bf16.mxu0 %v1144
        %1459 = vmatpush1.bf16.msra.mxu0 %v1143
        %1460 = vmatprep.subr.bf16.mxu0 %v1146
        %1461 = vmatpush1.bf16.msra.mxu0 %v1145
        %1462 = vmatprep.mubr.bf16.mxu0 %v570
        %1463 = vmatmul.mubr.bf16.gmra.mrb[0].mxu0 %v568
        %v1464 = vpop.f32.mrb[0].mxu0
        %v1465 = vadd.f32 %v1424, %v1464
        %v1466 = vpop.f32.mrb[0].mxu0
        %v1467 = vadd.f32 %v1426, %v1466
        %v1468 = vpop.f32.mrb[0].mxu0
        %v1469 = vpop.f32.mrb[0].mxu0
        %1470 = vdwg.mxu0
        %1471 = vmatprep.subr.bf16.mxu0 %v1148
        %1472 = vmatpush1.bf16.msra.mxu0 %v1147
        %1473 = vmatprep.subr.bf16.mxu0 %v1150
        %1474 = vmatpush1.bf16.msra.mxu0 %v1149
        %1475 = vmatprep.subr.bf16.mxu0 %v1152
        %1476 = vmatpush1.bf16.msra.mxu0 %v1151
        %1477 = vmatprep.subr.bf16.mxu0 %v1154
        %1478 = vmatpush1.bf16.msra.mxu0 %v1153
        %1479 = vmatprep.subr.bf16.mxu0 %v1156
        %1480 = vmatpush1.bf16.msra.mxu0 %v1155
        %1481 = vmatprep.subr.bf16.mxu0 %v1158
        %1482 = vmatpush1.bf16.msra.mxu0 %v1157
        %1483 = vmatprep.subr.bf16.mxu0 %v1160
        %1484 = vmatpush1.bf16.msra.mxu0 %v1159
        %1485 = vmatprep.subr.bf16.mxu0 %v1162
        %1486 = vmatpush1.bf16.msra.mxu0 %v1161
        %1487 = vmatprep.subr.bf16.mxu0 0
        %1488 = vmatpush1.bf16.msra.mxu0 0
        %1489 = vmatprep.subr.bf16.mxu0 0
        %1490 = vmatpush1.bf16.msra.mxu0 0
        %1491 = vmatprep.subr.bf16.mxu0 0
        %1492 = vmatpush1.bf16.msra.mxu0 0
        %1493 = vmatprep.subr.bf16.mxu0 0
        %1494 = vmatpush1.bf16.msra.mxu0 0
        %1495 = vmatprep.subr.bf16.mxu0 0
        %1496 = vmatpush1.bf16.msra.mxu0 0
        %1497 = vmatprep.subr.bf16.mxu0 0
        %1498 = vmatpush1.bf16.msra.mxu0 0
        %1499 = vmatprep.subr.bf16.mxu0 0
        %1500 = vmatpush1.bf16.msra.mxu0 0
        %1501 = vmatprep.subr.bf16.mxu0 0
        %1502 = vmatpush1.bf16.msra.mxu0 0
        %1503 = vmatprep.mubr.bf16.mxu0 0
        %1504 = vmatmul.mubr.bf16.gmra.mrb[0].mxu0 %v577
        %v1505 = vpop.f32.mrb[0].mxu0
        %v1506 = vadd.f32 %v1465, %v1505
        %v1507 = vpop.f32.mrb[0].mxu0
        %v1508 = vadd.f32 %v1467, %v1507
        %v1509 = vpop.f32.mrb[0].mxu0
        %v1510 = vpop.f32.mrb[0].mxu0
        %1511 = vdwg.mxu0
        %v1512 = vmax.f32 %v1506, 0.0
        %v1513 = vmax.f32 %v1508, 0.0
        %1514 = vst [vmem:[#allocation2] sm:$0xff] 0.0
        %1515 = vst [vmem:[#allocation2 + $0x8] sm:$0xff] 0.0
        %1516 = vst [vmem:[#allocation2 + $0x10] sm:$0xff] 0.0
        %1517 = vst [vmem:[#allocation2 + $0x18] sm:$0xff] 0.0
        %v1520 = vcombine.low %v1512, %v1513
        %v1522 = vunpack.c.l.s4 1983009808
        %v1523 = vunpack.c.0.s8 %v1522
        %v1524 = vlaneseq
        %v1525 = vshrl.u32 %v1524, 7
        %v1526 = vsub.s32 %v1523, %v1525
        %v1527 = vrot.slane %v1520, %v1526
        %v1528 = vcombine.high %v1527, %v1527
        %v1530 = vunpack.c.l.s4 1983009808
        %v1531 = vunpack.c.0.s8 %v1530
        %v1532 = vlaneseq
        %v1533 = vshrl.u32 %v1532, 7
        %v1534 = vsub.s32 %v1531, %v1533
        %v1535 = vrot.slane %v1527, %v1534
        %v1537 = vunpack.c.l.s4 1983009808
        %v1538 = vunpack.c.0.s8 %v1537
        %v1539 = vlaneseq
        %v1540 = vshrl.u32 %v1539, 7
        %v1541 = vsub.s32 %v1538, %v1540
        %v1542 = vrot.slane %v1528, %v1541
        %v1543 = vrot.slane %v1535, 7
        %v1544 = vrot.slane %v1542, 7
        %s1547 = scalar_lea.vmem [#allocation2], 8
        %1548 = vst [vmem:[%s1547] sm:$0x66] %v1543
        %1549 = vst [vmem:[%s1547 + $0x8] sm:$0x66] %v1544
        %v1550 = vld [vmem:[%s373] sm:$0x3]
        %v1551 = vld [vmem:[%s6] sm:$0xff]
        %v1552 = vld [vmem:[%s6 + $0x8] sm:$0xff]
        %v1553 = vld [vmem:[%s6 + $0x10] sm:$0xff]
        %v1554 = vld [vmem:[%s6 + $0x18] sm:$0xff]
        %v1555 = vld [vmem:[%s6 + $0x20] sm:$0xff]
        %v1556 = vld [vmem:[%s6 + $0x28] sm:$0xff]
        %v1557 = vld [vmem:[%s6 + $0x30] sm:$0xff]
        %v1558 = vld [vmem:[%s6 + $0x38] sm:$0xff]
        %v1559 = vld [vmem:[%s6 + $0x40] sm:$0xff]
        %v1560 = vld [vmem:[%s6 + $0x48] sm:$0xff]
        %v1561 = vld [vmem:[%s6 + $0x50] sm:$0xff]
        %v1562 = vld [vmem:[%s6 + $0x58] sm:$0xff]
        %v1563 = vld [vmem:[%s6 + $0x60] sm:$0xff]
        %v1564 = vld [vmem:[%s6 + $0x68] sm:$0xff]
        %v1565 = vld [vmem:[%s6 + $0x70] sm:$0xff]
        %v1566 = vld [vmem:[%s6 + $0x78] sm:$0xff]
        %v1567 = vld [vmem:[%s7] sm:$0x3]
        %v1569 = vlaneseq
        %v1570 = vshrl.u32 %v1569, 7
        %v1571 = vsub.s32 0, %v1570
        %v1572 = vrot.slane %v1567, %v1571
        %v1573 = vlaneseq
        %v1574 = vshrl.u32 %v1573, 7
        %v1575 = vsub.s32 1, %v1574
        %v1576 = vrot.slane %v1567, %v1575
        %v1595 = vunpack.c.l.b16 %v1551
        %v1596 = vunpack.c.h.b16 %v1551
        %v1597 = vunpack.c.l.b16 %v1552
        %v1598 = vunpack.c.h.b16 %v1552
        %v1599 = vunpack.c.l.b16 %v1553
        %v1600 = vunpack.c.h.b16 %v1553
        %v1601 = vunpack.c.l.b16 %v1554
        %v1602 = vunpack.c.h.b16 %v1554
        %v1603 = vunpack.c.l.b16 %v1555
        %v1604 = vunpack.c.h.b16 %v1555
        %v1605 = vunpack.c.l.b16 %v1556
        %v1606 = vunpack.c.h.b16 %v1556
        %v1607 = vunpack.c.l.b16 %v1557
        %v1608 = vunpack.c.h.b16 %v1557
        %v1609 = vunpack.c.l.b16 %v1558
        %v1610 = vunpack.c.h.b16 %v1558
        %v1611 = vunpack.c.l.b16 %v1559
        %v1612 = vunpack.c.h.b16 %v1559
        %v1613 = vunpack.c.l.b16 %v1560
        %v1614 = vunpack.c.h.b16 %v1560
        %v1615 = vunpack.c.l.b16 %v1561
        %v1616 = vunpack.c.h.b16 %v1561
        %v1617 = vunpack.c.l.b16 %v1562
        %v1618 = vunpack.c.h.b16 %v1562
        %v1619 = vunpack.c.l.b16 %v1563
        %v1620 = vunpack.c.h.b16 %v1563
        %v1621 = vunpack.c.l.b16 %v1564
        %v1622 = vunpack.c.h.b16 %v1564
        %v1623 = vunpack.c.l.b16 %v1565
        %v1624 = vunpack.c.h.b16 %v1565
        %v1625 = vunpack.c.l.b16 %v1566
        %v1626 = vunpack.c.h.b16 %v1566
        %v1627 = vpack.c.b16 %v1597, %v1595
        %v1628 = vpack.c.b16 %v1598, %v1596
        %v1629 = vpack.c.b16 %v1601, %v1599
        %v1630 = vpack.c.b16 %v1602, %v1600
        %v1631 = vpack.c.b16 %v1605, %v1603
        %v1632 = vpack.c.b16 %v1606, %v1604
        %v1633 = vpack.c.b16 %v1609, %v1607
        %v1634 = vpack.c.b16 %v1610, %v1608
        %v1635 = vpack.c.b16 %v1613, %v1611
        %v1636 = vpack.c.b16 %v1614, %v1612
        %v1637 = vpack.c.b16 %v1617, %v1615
        %v1638 = vpack.c.b16 %v1618, %v1616
        %v1639 = vpack.c.b16 %v1621, %v1619
        %v1640 = vpack.c.b16 %v1622, %v1620
        %v1641 = vpack.c.b16 %v1625, %v1623
        %v1642 = vpack.c.b16 %v1626, %v1624
        %1659 = vmatprep.subr.bf16.mxu0 %v1628
        %1660 = vmatpush1.bf16.msra.mxu0 %v1627
        %1661 = vmatprep.subr.bf16.mxu0 %v1630
        %1662 = vmatpush1.bf16.msra.mxu0 %v1629
        %1663 = vmatprep.subr.bf16.mxu0 %v1632
        %1664 = vmatpush1.bf16.msra.mxu0 %v1631
        %1665 = vmatprep.subr.bf16.mxu0 %v1634
        %1666 = vmatpush1.bf16.msra.mxu0 %v1633
        %1667 = vmatprep.subr.bf16.mxu0 %v1636
        %1668 = vmatpush1.bf16.msra.mxu0 %v1635
        %1669 = vmatprep.subr.bf16.mxu0 %v1638
        %1670 = vmatpush1.bf16.msra.mxu0 %v1637
        %1671 = vmatprep.subr.bf16.mxu0 %v1640
        %1672 = vmatpush1.bf16.msra.mxu0 %v1639
        %1673 = vmatprep.subr.bf16.mxu0 %v1642
        %1674 = vmatpush1.bf16.msra.mxu0 %v1641
        %1675 = vmatprep.subr.bf16.mxu0 0
        %1676 = vmatpush1.bf16.msra.mxu0 0
        %1677 = vmatprep.subr.bf16.mxu0 0
        %1678 = vmatpush1.bf16.msra.mxu0 0
        %1679 = vmatprep.subr.bf16.mxu0 0
        %1680 = vmatpush1.bf16.msra.mxu0 0
        %1681 = vmatprep.subr.bf16.mxu0 0
        %1682 = vmatpush1.bf16.msra.mxu0 0
        %1683 = vmatprep.subr.bf16.mxu0 0
        %1684 = vmatpush1.bf16.msra.mxu0 0
        %1685 = vmatprep.subr.bf16.mxu0 0
        %1686 = vmatpush1.bf16.msra.mxu0 0
        %1687 = vmatprep.subr.bf16.mxu0 0
        %1688 = vmatpush1.bf16.msra.mxu0 0
        %1689 = vmatprep.subr.bf16.mxu0 0
        %1690 = vmatpush1.bf16.msra.mxu0 0
        %1691 = vmatprep.mubr.bf16.mxu0 0
        %1692 = vmatmul.mubr.bf16.gmra.mrb[0].mxu0 %v1550
        %v1693 = vpop.f32.mrb[0].mxu0
        %v1694 = vadd.f32 %v1572, %v1693
        %v1695 = vpop.f32.mrb[0].mxu0
        %v1696 = vadd.f32 %v1576, %v1695
        %v1697 = vpop.f32.mrb[0].mxu0
        %v1698 = vpop.f32.mrb[0].mxu0
        %1699 = vdwg.mxu0
        %v1700 = vld [vmem:[%s5] sm:$0x3]
        %v1702 = vlaneseq
        %v1703 = vshrl.u32 %v1702, 7
        %v1704 = vsub.s32 0, %v1703
        %v1705 = vrot.slane %v1700, %v1704
        %v1706 = vlaneseq
        %v1707 = vshrl.u32 %v1706, 7
        %v1708 = vsub.s32 1, %v1707
        %v1709 = vrot.slane %v1700, %v1708
        %v1712 = vadd.f32 %v1694, %v1705
        %v1713 = vadd.f32 %v1696, %v1709
        %v1714 = vld [vmem:[#allocation2] sm:$0x33]
        %v1715 = vld [vmem:[#allocation2 + $0x8] sm:$0x33]
        %v1719 = vunpack.c.l.s4 1983009808
        %v1720 = vunpack.c.0.s8 %v1719
        %v1721 = vlaneseq
        %v1722 = vshrl.u32 %v1721, 7
        %v1723 = vsub.s32 %v1720, %v1722
        %v1724 = vrot.slane %v1714, %v1723
        %v1726 = vunpack.c.l.s4 1983009808
        %v1727 = vunpack.c.0.s8 %v1726
        %v1728 = vlaneseq
        %v1729 = vshrl.u32 %v1728, 7
        %v1730 = vsub.s32 %v1727, %v1729
        %v1731 = vrot.slane %v1715, %v1730
        %v1732 = vcombine.low %v1724, %v1731
        %v1734 = vunpack.c.l.s4 1983009808
        %v1735 = vunpack.c.0.s8 %v1734
        %v1736 = vlaneseq
        %v1737 = vshrl.u32 %v1736, 7
        %v1738 = vsub.s32 %v1735, %v1737
        %v1739 = vrot.slane %v1732, %v1738
        %v1740 = vcombine.high %v1739, %v1739
        %v1743 = vpack.c.bf16 %v1739, %v1739
        %v1744 = vpack.c.bf16 %v1740, %v1740
        %v1745 = vld [vmem:[%s4] sm:$0xff]
        %v1746 = vld [vmem:[%s4 + $0x8] sm:$0xff]
        %v1747 = vld [vmem:[%s4 + $0x10] sm:$0xff]
        %v1748 = vld [vmem:[%s4 + $0x18] sm:$0xff]
        %v1749 = vld [vmem:[%s4 + $0x20] sm:$0xff]
        %v1750 = vld [vmem:[%s4 + $0x28] sm:$0xff]
        %v1751 = vld [vmem:[%s4 + $0x30] sm:$0xff]
        %v1752 = vld [vmem:[%s4 + $0x38] sm:$0xff]
        %v1753 = vld [vmem:[%s4 + $0x40] sm:$0xff]
        %v1754 = vld [vmem:[%s4 + $0x48] sm:$0xff]
        %v1755 = vld [vmem:[%s4 + $0x50] sm:$0xff]
        %v1756 = vld [vmem:[%s4 + $0x58] sm:$0xff]
        %v1757 = vld [vmem:[%s4 + $0x60] sm:$0xff]
        %v1758 = vld [vmem:[%s4 + $0x68] sm:$0xff]
        %v1759 = vld [vmem:[%s4 + $0x70] sm:$0xff]
        %v1760 = vld [vmem:[%s4 + $0x78] sm:$0xff]
        %v1761 = vld [vmem:[%s4 + $0x80] sm:$0xff]
        %v1762 = vld [vmem:[%s4 + $0x88] sm:$0xff]
        %v1763 = vld [vmem:[%s4 + $0x90] sm:$0xff]
        %v1764 = vld [vmem:[%s4 + $0x98] sm:$0xff]
        %v1765 = vld [vmem:[%s4 + $0xa0] sm:$0xff]
        %v1766 = vld [vmem:[%s4 + $0xa8] sm:$0xff]
        %v1767 = vld [vmem:[%s4 + $0xb0] sm:$0xff]
        %v1768 = vld [vmem:[%s4 + $0xb8] sm:$0xff]
        %v1769 = vld [vmem:[%s4 + $0xc0] sm:$0xff]
        %v1770 = vld [vmem:[%s4 + $0xc8] sm:$0xff]
        %v1771 = vld [vmem:[%s4 + $0xd0] sm:$0xff]
        %v1772 = vld [vmem:[%s4 + $0xd8] sm:$0xff]
        %v1773 = vld [vmem:[%s4 + $0xe0] sm:$0xff]
        %v1774 = vld [vmem:[%s4 + $0xe8] sm:$0xff]
        %v1775 = vld [vmem:[%s4 + $0xf0] sm:$0xff]
        %v1776 = vld [vmem:[%s4 + $0xf8] sm:$0xff]
        %v1809 = vunpack.c.l.b16 %v1745
        %v1810 = vunpack.c.h.b16 %v1745
        %v1811 = vunpack.c.l.b16 %v1746
        %v1812 = vunpack.c.h.b16 %v1746
        %v1813 = vunpack.c.l.b16 %v1747
        %v1814 = vunpack.c.h.b16 %v1747
        %v1815 = vunpack.c.l.b16 %v1748
        %v1816 = vunpack.c.h.b16 %v1748
        %v1817 = vunpack.c.l.b16 %v1749
        %v1818 = vunpack.c.h.b16 %v1749
        %v1819 = vunpack.c.l.b16 %v1750
        %v1820 = vunpack.c.h.b16 %v1750
        %v1821 = vunpack.c.l.b16 %v1751
        %v1822 = vunpack.c.h.b16 %v1751
        %v1823 = vunpack.c.l.b16 %v1752
        %v1824 = vunpack.c.h.b16 %v1752
        %v1825 = vunpack.c.l.b16 %v1753
        %v1826 = vunpack.c.h.b16 %v1753
        %v1827 = vunpack.c.l.b16 %v1754
        %v1828 = vunpack.c.h.b16 %v1754
        %v1829 = vunpack.c.l.b16 %v1755
        %v1830 = vunpack.c.h.b16 %v1755
        %v1831 = vunpack.c.l.b16 %v1756
        %v1832 = vunpack.c.h.b16 %v1756
        %v1833 = vunpack.c.l.b16 %v1757
        %v1834 = vunpack.c.h.b16 %v1757
        %v1835 = vunpack.c.l.b16 %v1758
        %v1836 = vunpack.c.h.b16 %v1758
        %v1837 = vunpack.c.l.b16 %v1759
        %v1838 = vunpack.c.h.b16 %v1759
        %v1839 = vunpack.c.l.b16 %v1760
        %v1840 = vunpack.c.h.b16 %v1760
        %v1841 = vunpack.c.l.b16 %v1761
        %v1842 = vunpack.c.h.b16 %v1761
        %v1843 = vunpack.c.l.b16 %v1762
        %v1844 = vunpack.c.h.b16 %v1762
        %v1845 = vunpack.c.l.b16 %v1763
        %v1846 = vunpack.c.h.b16 %v1763
        %v1847 = vunpack.c.l.b16 %v1764
        %v1848 = vunpack.c.h.b16 %v1764
        %v1849 = vunpack.c.l.b16 %v1765
        %v1850 = vunpack.c.h.b16 %v1765
        %v1851 = vunpack.c.l.b16 %v1766
        %v1852 = vunpack.c.h.b16 %v1766
        %v1853 = vunpack.c.l.b16 %v1767
        %v1854 = vunpack.c.h.b16 %v1767
        %v1855 = vunpack.c.l.b16 %v1768
        %v1856 = vunpack.c.h.b16 %v1768
        %v1857 = vunpack.c.l.b16 %v1769
        %v1858 = vunpack.c.h.b16 %v1769
        %v1859 = vunpack.c.l.b16 %v1770
        %v1860 = vunpack.c.h.b16 %v1770
        %v1861 = vunpack.c.l.b16 %v1771
        %v1862 = vunpack.c.h.b16 %v1771
        %v1863 = vunpack.c.l.b16 %v1772
        %v1864 = vunpack.c.h.b16 %v1772
        %v1865 = vunpack.c.l.b16 %v1773
        %v1866 = vunpack.c.h.b16 %v1773
        %v1867 = vunpack.c.l.b16 %v1774
        %v1868 = vunpack.c.h.b16 %v1774
        %v1869 = vunpack.c.l.b16 %v1775
        %v1870 = vunpack.c.h.b16 %v1775
        %v1871 = vunpack.c.l.b16 %v1776
        %v1872 = vunpack.c.h.b16 %v1776
        %v1873 = vpack.c.b16 %v1811, %v1809
        %v1874 = vpack.c.b16 %v1812, %v1810
        %v1875 = vpack.c.b16 %v1815, %v1813
        %v1876 = vpack.c.b16 %v1816, %v1814
        %v1877 = vpack.c.b16 %v1819, %v1817
        %v1878 = vpack.c.b16 %v1820, %v1818
        %v1879 = vpack.c.b16 %v1823, %v1821
        %v1880 = vpack.c.b16 %v1824, %v1822
        %v1881 = vpack.c.b16 %v1827, %v1825
        %v1882 = vpack.c.b16 %v1828, %v1826
        %v1883 = vpack.c.b16 %v1831, %v1829
        %v1884 = vpack.c.b16 %v1832, %v1830
        %v1885 = vpack.c.b16 %v1835, %v1833
        %v1886 = vpack.c.b16 %v1836, %v1834
        %v1887 = vpack.c.b16 %v1839, %v1837
        %v1888 = vpack.c.b16 %v1840, %v1838
        %v1889 = vpack.c.b16 %v1843, %v1841
        %v1890 = vpack.c.b16 %v1844, %v1842
        %v1891 = vpack.c.b16 %v1847, %v1845
        %v1892 = vpack.c.b16 %v1848, %v1846
        %v1893 = vpack.c.b16 %v1851, %v1849
        %v1894 = vpack.c.b16 %v1852, %v1850
        %v1895 = vpack.c.b16 %v1855, %v1853
        %v1896 = vpack.c.b16 %v1856, %v1854
        %v1897 = vpack.c.b16 %v1859, %v1857
        %v1898 = vpack.c.b16 %v1860, %v1858
        %v1899 = vpack.c.b16 %v1863, %v1861
        %v1900 = vpack.c.b16 %v1864, %v1862
        %v1901 = vpack.c.b16 %v1867, %v1865
        %v1902 = vpack.c.b16 %v1868, %v1866
        %v1903 = vpack.c.b16 %v1871, %v1869
        %v1904 = vpack.c.b16 %v1872, %v1870
        %1937 = vmatprep.subr.bf16.mxu0 %v1874
        %1938 = vmatpush1.bf16.msra.mxu0 %v1873
        %1939 = vmatprep.subr.bf16.mxu0 %v1876
        %1940 = vmatpush1.bf16.msra.mxu0 %v1875
        %1941 = vmatprep.subr.bf16.mxu0 %v1878
        %1942 = vmatpush1.bf16.msra.mxu0 %v1877
        %1943 = vmatprep.subr.bf16.mxu0 %v1880
        %1944 = vmatpush1.bf16.msra.mxu0 %v1879
        %1945 = vmatprep.subr.bf16.mxu0 %v1882
        %1946 = vmatpush1.bf16.msra.mxu0 %v1881
        %1947 = vmatprep.subr.bf16.mxu0 %v1884
        %1948 = vmatpush1.bf16.msra.mxu0 %v1883
        %1949 = vmatprep.subr.bf16.mxu0 %v1886
        %1950 = vmatpush1.bf16.msra.mxu0 %v1885
        %1951 = vmatprep.subr.bf16.mxu0 %v1888
        %1952 = vmatpush1.bf16.msra.mxu0 %v1887
        %1953 = vmatprep.subr.bf16.mxu0 %v1890
        %1954 = vmatpush1.bf16.msra.mxu0 %v1889
        %1955 = vmatprep.subr.bf16.mxu0 %v1892
        %1956 = vmatpush1.bf16.msra.mxu0 %v1891
        %1957 = vmatprep.subr.bf16.mxu0 %v1894
        %1958 = vmatpush1.bf16.msra.mxu0 %v1893
        %1959 = vmatprep.subr.bf16.mxu0 %v1896
        %1960 = vmatpush1.bf16.msra.mxu0 %v1895
        %1961 = vmatprep.subr.bf16.mxu0 %v1898
        %1962 = vmatpush1.bf16.msra.mxu0 %v1897
        %1963 = vmatprep.subr.bf16.mxu0 %v1900
        %1964 = vmatpush1.bf16.msra.mxu0 %v1899
        %1965 = vmatprep.subr.bf16.mxu0 %v1902
        %1966 = vmatpush1.bf16.msra.mxu0 %v1901
        %1967 = vmatprep.subr.bf16.mxu0 %v1904
        %1968 = vmatpush1.bf16.msra.mxu0 %v1903
        %1969 = vmatprep.mubr.bf16.mxu0 %v1744
        %1970 = vmatmul.mubr.bf16.gmra.mrb[0].mxu0 %v1743
        %v1971 = vpop.f32.mrb[0].mxu0
        %v1972 = vadd.f32 0.0, %v1971
        %v1973 = vpop.f32.mrb[0].mxu0
        %v1974 = vadd.f32 0.0, %v1973
        %v1975 = vpop.f32.mrb[0].mxu0
        %v1976 = vpop.f32.mrb[0].mxu0
        %1977 = vdwg.mxu0
        %v1978 = vadd.f32 %v1712, %v1972
        %v1979 = vadd.f32 %v1713, %v1974
        %v1980 = vld [vmem:[#allocation2] sm:$0x66]
        %v1981 = vld [vmem:[#allocation2 + $0x8] sm:$0x66]
        %v1985 = vunpack.c.l.s4 1983009808
        %v1986 = vunpack.c.0.s8 %v1985
        %v1987 = vlaneseq
        %v1988 = vshrl.u32 %v1987, 7
        %v1989 = vsub.s32 %v1986, %v1988
        %v1990 = vrot.slane %v1980, %v1989
        %v1991 = vcombine.high %v1990, %v1990
        %v1993 = vunpack.c.l.s4 1983009808
        %v1994 = vunpack.c.0.s8 %v1993
        %v1995 = vlaneseq
        %v1996 = vshrl.u32 %v1995, 7
        %v1997 = vsub.s32 %v1994, %v1996
        %v1998 = vrot.slane %v1981, %v1997
        %v1999 = vcombine.high %v1998, %v1998
        %vm2000 = vcmask 1040384
        %vm2001 = vcmask 1042434
        %vm2002 = vmor %vm2000, %vm2001
        %vm2003 = vcmask 1044484
        %vm2004 = vmor %vm2002, %vm2003
        %vm2005 = vcmask 1046534
        %vm2006 = vmor %vm2004, %vm2005
        %v2007 = vrot.slane %v1990, 7
        %v2008 = vrot.slane %v2007, 2
        %v2009 = vrot.slane %v1991, 7
        %v2010 = vsel %vm2006, %v2008, %v2009
        %v2011 = vrot.slane %v1998, 7
        %v2012 = vrot.slane %v2011, 2
        %v2013 = vrot.slane %v1999, 7
        %v2014 = vsel %vm2006, %v2012, %v2013
        %v2015 = vcombine.low %v2010, %v2014
        %v2017 = vunpack.c.l.s4 1983009808
        %v2018 = vunpack.c.0.s8 %v2017
        %v2019 = vlaneseq
        %v2020 = vshrl.u32 %v2019, 7
        %v2021 = vsub.s32 %v2018, %v2020
        %v2022 = vrot.slane %v2015, %v2021
        %v2023 = vcombine.high %v2022, %v2022
        %v2026 = vpack.c.bf16 %v2022, %v2022
        %v2027 = vpack.c.bf16 %v2023, %v2023
        %s2028 = scalar_lea.vmem %s4, 256
        %v2029 = vld [vmem:[%s2028] sm:$0xff]
        %v2030 = vld [vmem:[%s2028 + $0x8] sm:$0xff]
        %v2031 = vld [vmem:[%s2028 + $0x10] sm:$0xff]
        %v2032 = vld [vmem:[%s2028 + $0x18] sm:$0xff]
        %v2033 = vld [vmem:[%s2028 + $0x20] sm:$0xff]
        %v2034 = vld [vmem:[%s2028 + $0x28] sm:$0xff]
        %v2035 = vld [vmem:[%s2028 + $0x30] sm:$0xff]
        %v2036 = vld [vmem:[%s2028 + $0x38] sm:$0xff]
        %v2037 = vld [vmem:[%s2028 + $0x40] sm:$0xff]
        %v2038 = vld [vmem:[%s2028 + $0x48] sm:$0xff]
        %v2039 = vld [vmem:[%s2028 + $0x50] sm:$0xff]
        %v2040 = vld [vmem:[%s2028 + $0x58] sm:$0xff]
        %v2041 = vld [vmem:[%s2028 + $0x60] sm:$0xff]
        %v2042 = vld [vmem:[%s2028 + $0x68] sm:$0xff]
        %v2043 = vld [vmem:[%s2028 + $0x70] sm:$0xff]
        %v2044 = vld [vmem:[%s2028 + $0x78] sm:$0xff]
        %v2045 = vld [vmem:[%s2028 + $0x80] sm:$0xff]
        %v2046 = vld [vmem:[%s2028 + $0x88] sm:$0xff]
        %v2047 = vld [vmem:[%s2028 + $0x90] sm:$0xff]
        %v2048 = vld [vmem:[%s2028 + $0x98] sm:$0xff]
        %v2049 = vld [vmem:[%s2028 + $0xa0] sm:$0xff]
        %v2050 = vld [vmem:[%s2028 + $0xa8] sm:$0xff]
        %v2051 = vld [vmem:[%s2028 + $0xb0] sm:$0xff]
        %v2052 = vld [vmem:[%s2028 + $0xb8] sm:$0xff]
        %v2053 = vld [vmem:[%s2028 + $0xc0] sm:$0xff]
        %v2054 = vld [vmem:[%s2028 + $0xc8] sm:$0xff]
        %v2055 = vld [vmem:[%s2028 + $0xd0] sm:$0xff]
        %v2056 = vld [vmem:[%s2028 + $0xd8] sm:$0xff]
        %v2057 = vld [vmem:[%s2028 + $0xe0] sm:$0xff]
        %v2058 = vld [vmem:[%s2028 + $0xe8] sm:$0xff]
        %v2059 = vld [vmem:[%s2028 + $0xf0] sm:$0xff]
        %v2060 = vld [vmem:[%s2028 + $0xf8] sm:$0xff]
        %v2093 = vunpack.c.l.b16 %v2029
        %v2094 = vunpack.c.h.b16 %v2029
        %v2095 = vunpack.c.l.b16 %v2030
        %v2096 = vunpack.c.h.b16 %v2030
        %v2097 = vunpack.c.l.b16 %v2031
        %v2098 = vunpack.c.h.b16 %v2031
        %v2099 = vunpack.c.l.b16 %v2032
        %v2100 = vunpack.c.h.b16 %v2032
        %v2101 = vunpack.c.l.b16 %v2033
        %v2102 = vunpack.c.h.b16 %v2033
        %v2103 = vunpack.c.l.b16 %v2034
        %v2104 = vunpack.c.h.b16 %v2034
        %v2105 = vunpack.c.l.b16 %v2035
        %v2106 = vunpack.c.h.b16 %v2035
        %v2107 = vunpack.c.l.b16 %v2036
        %v2108 = vunpack.c.h.b16 %v2036
        %v2109 = vunpack.c.l.b16 %v2037
        %v2110 = vunpack.c.h.b16 %v2037
        %v2111 = vunpack.c.l.b16 %v2038
        %v2112 = vunpack.c.h.b16 %v2038
        %v2113 = vunpack.c.l.b16 %v2039
        %v2114 = vunpack.c.h.b16 %v2039
        %v2115 = vunpack.c.l.b16 %v2040
        %v2116 = vunpack.c.h.b16 %v2040
        %v2117 = vunpack.c.l.b16 %v2041
        %v2118 = vunpack.c.h.b16 %v2041
        %v2119 = vunpack.c.l.b16 %v2042
        %v2120 = vunpack.c.h.b16 %v2042
        %v2121 = vunpack.c.l.b16 %v2043
        %v2122 = vunpack.c.h.b16 %v2043
        %v2123 = vunpack.c.l.b16 %v2044
        %v2124 = vunpack.c.h.b16 %v2044
        %v2125 = vunpack.c.l.b16 %v2045
        %v2126 = vunpack.c.h.b16 %v2045
        %v2127 = vunpack.c.l.b16 %v2046
        %v2128 = vunpack.c.h.b16 %v2046
        %v2129 = vunpack.c.l.b16 %v2047
        %v2130 = vunpack.c.h.b16 %v2047
        %v2131 = vunpack.c.l.b16 %v2048
        %v2132 = vunpack.c.h.b16 %v2048
        %v2133 = vunpack.c.l.b16 %v2049
        %v2134 = vunpack.c.h.b16 %v2049
        %v2135 = vunpack.c.l.b16 %v2050
        %v2136 = vunpack.c.h.b16 %v2050
        %v2137 = vunpack.c.l.b16 %v2051
        %v2138 = vunpack.c.h.b16 %v2051
        %v2139 = vunpack.c.l.b16 %v2052
        %v2140 = vunpack.c.h.b16 %v2052
        %v2141 = vunpack.c.l.b16 %v2053
        %v2142 = vunpack.c.h.b16 %v2053
        %v2143 = vunpack.c.l.b16 %v2054
        %v2144 = vunpack.c.h.b16 %v2054
        %v2145 = vunpack.c.l.b16 %v2055
        %v2146 = vunpack.c.h.b16 %v2055
        %v2147 = vunpack.c.l.b16 %v2056
        %v2148 = vunpack.c.h.b16 %v2056
        %v2149 = vunpack.c.l.b16 %v2057
        %v2150 = vunpack.c.h.b16 %v2057
        %v2151 = vunpack.c.l.b16 %v2058
        %v2152 = vunpack.c.h.b16 %v2058
        %v2153 = vunpack.c.l.b16 %v2059
        %v2154 = vunpack.c.h.b16 %v2059
        %v2155 = vunpack.c.l.b16 %v2060
        %v2156 = vunpack.c.h.b16 %v2060
        %v2157 = vpack.c.b16 %v2095, %v2093
        %v2158 = vpack.c.b16 %v2096, %v2094
        %v2159 = vpack.c.b16 %v2099, %v2097
        %v2160 = vpack.c.b16 %v2100, %v2098
        %v2161 = vpack.c.b16 %v2103, %v2101
        %v2162 = vpack.c.b16 %v2104, %v2102
        %v2163 = vpack.c.b16 %v2107, %v2105
        %v2164 = vpack.c.b16 %v2108, %v2106
        %v2165 = vpack.c.b16 %v2111, %v2109
        %v2166 = vpack.c.b16 %v2112, %v2110
        %v2167 = vpack.c.b16 %v2115, %v2113
        %v2168 = vpack.c.b16 %v2116, %v2114
        %v2169 = vpack.c.b16 %v2119, %v2117
        %v2170 = vpack.c.b16 %v2120, %v2118
        %v2171 = vpack.c.b16 %v2123, %v2121
        %v2172 = vpack.c.b16 %v2124, %v2122
        %v2173 = vpack.c.b16 %v2127, %v2125
        %v2174 = vpack.c.b16 %v2128, %v2126
        %v2175 = vpack.c.b16 %v2131, %v2129
        %v2176 = vpack.c.b16 %v2132, %v2130
        %v2177 = vpack.c.b16 %v2135, %v2133
        %v2178 = vpack.c.b16 %v2136, %v2134
        %v2179 = vpack.c.b16 %v2139, %v2137
        %v2180 = vpack.c.b16 %v2140, %v2138
        %v2181 = vpack.c.b16 %v2143, %v2141
        %v2182 = vpack.c.b16 %v2144, %v2142
        %v2183 = vpack.c.b16 %v2147, %v2145
        %v2184 = vpack.c.b16 %v2148, %v2146
        %v2185 = vpack.c.b16 %v2151, %v2149
        %v2186 = vpack.c.b16 %v2152, %v2150
        %v2187 = vpack.c.b16 %v2155, %v2153
        %v2188 = vpack.c.b16 %v2156, %v2154
        %2221 = vmatprep.subr.bf16.mxu0 %v2158
        %2222 = vmatpush1.bf16.msra.mxu0 %v2157
        %2223 = vmatprep.subr.bf16.mxu0 %v2160
        %2224 = vmatpush1.bf16.msra.mxu0 %v2159
        %2225 = vmatprep.subr.bf16.mxu0 %v2162
        %2226 = vmatpush1.bf16.msra.mxu0 %v2161
        %2227 = vmatprep.subr.bf16.mxu0 %v2164
        %2228 = vmatpush1.bf16.msra.mxu0 %v2163
        %2229 = vmatprep.subr.bf16.mxu0 %v2166
        %2230 = vmatpush1.bf16.msra.mxu0 %v2165
        %2231 = vmatprep.subr.bf16.mxu0 %v2168
        %2232 = vmatpush1.bf16.msra.mxu0 %v2167
        %2233 = vmatprep.subr.bf16.mxu0 %v2170
        %2234 = vmatpush1.bf16.msra.mxu0 %v2169
        %2235 = vmatprep.subr.bf16.mxu0 %v2172
        %2236 = vmatpush1.bf16.msra.mxu0 %v2171
        %2237 = vmatprep.subr.bf16.mxu0 %v2174
        %2238 = vmatpush1.bf16.msra.mxu0 %v2173
        %2239 = vmatprep.subr.bf16.mxu0 %v2176
        %2240 = vmatpush1.bf16.msra.mxu0 %v2175
        %2241 = vmatprep.subr.bf16.mxu0 %v2178
        %2242 = vmatpush1.bf16.msra.mxu0 %v2177
        %2243 = vmatprep.subr.bf16.mxu0 %v2180
        %2244 = vmatpush1.bf16.msra.mxu0 %v2179
        %2245 = vmatprep.subr.bf16.mxu0 %v2182
        %2246 = vmatpush1.bf16.msra.mxu0 %v2181
        %2247 = vmatprep.subr.bf16.mxu0 %v2184
        %2248 = vmatpush1.bf16.msra.mxu0 %v2183
        %2249 = vmatprep.subr.bf16.mxu0 %v2186
        %2250 = vmatpush1.bf16.msra.mxu0 %v2185
        %2251 = vmatprep.subr.bf16.mxu0 %v2188
        %2252 = vmatpush1.bf16.msra.mxu0 %v2187
        %2253 = vmatprep.mubr.bf16.mxu0 %v2027
        %2254 = vmatmul.mubr.bf16.gmra.mrb[0].mxu0 %v2026
        %v2255 = vpop.f32.mrb[0].mxu0
        %v2256 = vadd.f32 0.0, %v2255
        %v2257 = vpop.f32.mrb[0].mxu0
        %v2258 = vadd.f32 0.0, %v2257
        %v2259 = vpop.f32.mrb[0].mxu0
        %v2260 = vpop.f32.mrb[0].mxu0
        %2261 = vdwg.mxu0
        %v2262 = vadd.f32 %v1978, %v2256
        %v2263 = vadd.f32 %v1979, %v2258
        %v2264 = vld [vmem:[#allocation2] sm:$0xcc]
        %v2265 = vld [vmem:[#allocation2 + $0x8] sm:$0xcc]
        %v2269 = vunpack.c.l.s4 1983009808
        %v2270 = vunpack.c.0.s8 %v2269
        %v2271 = vlaneseq
        %v2272 = vshrl.u32 %v2271, 7
        %v2273 = vsub.s32 %v2270, %v2272
        %v2274 = vrot.slane %v2264, %v2273
        %v2275 = vcombine.high %v2274, %v2274
        %v2277 = vunpack.c.l.s4 1983009808
        %v2278 = vunpack.c.0.s8 %v2277
        %v2279 = vlaneseq
        %v2280 = vshrl.u32 %v2279, 7
        %v2281 = vsub.s32 %v2278, %v2280
        %v2282 = vrot.slane %v2265, %v2281
        %v2283 = vcombine.high %v2282, %v2282
        %v2284 = vcombine.low %v2275, %v2283
        %v2286 = vunpack.c.l.s4 1983009808
        %v2287 = vunpack.c.0.s8 %v2286
        %v2288 = vlaneseq
        %v2289 = vshrl.u32 %v2288, 7
        %v2290 = vsub.s32 %v2287, %v2289
        %v2291 = vrot.slane %v2284, %v2290
        %v2292 = vcombine.high %v2291, %v2291
        %v2295 = vpack.c.bf16 %v2291, %v2291
        %v2296 = vpack.c.bf16 %v2292, %v2292
        %s2297 = scalar_lea.vmem %s4, 512
        %v2298 = vld [vmem:[%s2297] sm:$0xff]
        %v2299 = vld [vmem:[%s2297 + $0x8] sm:$0xff]
        %v2300 = vld [vmem:[%s2297 + $0x10] sm:$0xff]
        %v2301 = vld [vmem:[%s2297 + $0x18] sm:$0xff]
        %v2302 = vld [vmem:[%s2297 + $0x20] sm:$0xff]
        %v2303 = vld [vmem:[%s2297 + $0x28] sm:$0xff]
        %v2304 = vld [vmem:[%s2297 + $0x30] sm:$0xff]
        %v2305 = vld [vmem:[%s2297 + $0x38] sm:$0xff]
        %v2306 = vld [vmem:[%s2297 + $0x40] sm:$0xff]
        %v2307 = vld [vmem:[%s2297 + $0x48] sm:$0xff]
        %v2308 = vld [vmem:[%s2297 + $0x50] sm:$0xff]
        %v2309 = vld [vmem:[%s2297 + $0x58] sm:$0xff]
        %v2310 = vld [vmem:[%s2297 + $0x60] sm:$0xff]
        %v2311 = vld [vmem:[%s2297 + $0x68] sm:$0xff]
        %v2312 = vld [vmem:[%s2297 + $0x70] sm:$0xff]
        %v2313 = vld [vmem:[%s2297 + $0x78] sm:$0xff]
        %v2314 = vld [vmem:[%s2297 + $0x80] sm:$0xff]
        %v2315 = vld [vmem:[%s2297 + $0x88] sm:$0xff]
        %v2316 = vld [vmem:[%s2297 + $0x90] sm:$0xff]
        %v2317 = vld [vmem:[%s2297 + $0x98] sm:$0xff]
        %v2318 = vld [vmem:[%s2297 + $0xa0] sm:$0xff]
        %v2319 = vld [vmem:[%s2297 + $0xa8] sm:$0xff]
        %v2320 = vld [vmem:[%s2297 + $0xb0] sm:$0xff]
        %v2321 = vld [vmem:[%s2297 + $0xb8] sm:$0xff]
        %v2322 = vld [vmem:[%s2297 + $0xc0] sm:$0xff]
        %v2323 = vld [vmem:[%s2297 + $0xc8] sm:$0xff]
        %v2324 = vld [vmem:[%s2297 + $0xd0] sm:$0xff]
        %v2325 = vld [vmem:[%s2297 + $0xd8] sm:$0xff]
        %v2326 = vld [vmem:[%s2297 + $0xe0] sm:$0xff]
        %v2327 = vld [vmem:[%s2297 + $0xe8] sm:$0xff]
        %v2328 = vld [vmem:[%s2297 + $0xf0] sm:$0xff]
        %v2329 = vld [vmem:[%s2297 + $0xf8] sm:$0xff]
        %v2362 = vunpack.c.l.b16 %v2298
        %v2363 = vunpack.c.h.b16 %v2298
        %v2364 = vunpack.c.l.b16 %v2299
        %v2365 = vunpack.c.h.b16 %v2299
        %v2366 = vunpack.c.l.b16 %v2300
        %v2367 = vunpack.c.h.b16 %v2300
        %v2368 = vunpack.c.l.b16 %v2301
        %v2369 = vunpack.c.h.b16 %v2301
        %v2370 = vunpack.c.l.b16 %v2302
        %v2371 = vunpack.c.h.b16 %v2302
        %v2372 = vunpack.c.l.b16 %v2303
        %v2373 = vunpack.c.h.b16 %v2303
        %v2374 = vunpack.c.l.b16 %v2304
        %v2375 = vunpack.c.h.b16 %v2304
        %v2376 = vunpack.c.l.b16 %v2305
        %v2377 = vunpack.c.h.b16 %v2305
        %v2378 = vunpack.c.l.b16 %v2306
        %v2379 = vunpack.c.h.b16 %v2306
        %v2380 = vunpack.c.l.b16 %v2307
        %v2381 = vunpack.c.h.b16 %v2307
        %v2382 = vunpack.c.l.b16 %v2308
        %v2383 = vunpack.c.h.b16 %v2308
        %v2384 = vunpack.c.l.b16 %v2309
        %v2385 = vunpack.c.h.b16 %v2309
        %v2386 = vunpack.c.l.b16 %v2310
        %v2387 = vunpack.c.h.b16 %v2310
        %v2388 = vunpack.c.l.b16 %v2311
        %v2389 = vunpack.c.h.b16 %v2311
        %v2390 = vunpack.c.l.b16 %v2312
        %v2391 = vunpack.c.h.b16 %v2312
        %v2392 = vunpack.c.l.b16 %v2313
        %v2393 = vunpack.c.h.b16 %v2313
        %v2394 = vunpack.c.l.b16 %v2314
        %v2395 = vunpack.c.h.b16 %v2314
        %v2396 = vunpack.c.l.b16 %v2315
        %v2397 = vunpack.c.h.b16 %v2315
        %v2398 = vunpack.c.l.b16 %v2316
        %v2399 = vunpack.c.h.b16 %v2316
        %v2400 = vunpack.c.l.b16 %v2317
        %v2401 = vunpack.c.h.b16 %v2317
        %v2402 = vunpack.c.l.b16 %v2318
        %v2403 = vunpack.c.h.b16 %v2318
        %v2404 = vunpack.c.l.b16 %v2319
        %v2405 = vunpack.c.h.b16 %v2319
        %v2406 = vunpack.c.l.b16 %v2320
        %v2407 = vunpack.c.h.b16 %v2320
        %v2408 = vunpack.c.l.b16 %v2321
        %v2409 = vunpack.c.h.b16 %v2321
        %v2410 = vunpack.c.l.b16 %v2322
        %v2411 = vunpack.c.h.b16 %v2322
        %v2412 = vunpack.c.l.b16 %v2323
        %v2413 = vunpack.c.h.b16 %v2323
        %v2414 = vunpack.c.l.b16 %v2324
        %v2415 = vunpack.c.h.b16 %v2324
        %v2416 = vunpack.c.l.b16 %v2325
        %v2417 = vunpack.c.h.b16 %v2325
        %v2418 = vunpack.c.l.b16 %v2326
        %v2419 = vunpack.c.h.b16 %v2326
        %v2420 = vunpack.c.l.b16 %v2327
        %v2421 = vunpack.c.h.b16 %v2327
        %v2422 = vunpack.c.l.b16 %v2328
        %v2423 = vunpack.c.h.b16 %v2328
        %v2424 = vunpack.c.l.b16 %v2329
        %v2425 = vunpack.c.h.b16 %v2329
        %v2426 = vpack.c.b16 %v2364, %v2362
        %v2427 = vpack.c.b16 %v2365, %v2363
        %v2428 = vpack.c.b16 %v2368, %v2366
        %v2429 = vpack.c.b16 %v2369, %v2367
        %v2430 = vpack.c.b16 %v2372, %v2370
        %v2431 = vpack.c.b16 %v2373, %v2371
        %v2432 = vpack.c.b16 %v2376, %v2374
        %v2433 = vpack.c.b16 %v2377, %v2375
        %v2434 = vpack.c.b16 %v2380, %v2378
        %v2435 = vpack.c.b16 %v2381, %v2379
        %v2436 = vpack.c.b16 %v2384, %v2382
        %v2437 = vpack.c.b16 %v2385, %v2383
        %v2438 = vpack.c.b16 %v2388, %v2386
        %v2439 = vpack.c.b16 %v2389, %v2387
        %v2440 = vpack.c.b16 %v2392, %v2390
        %v2441 = vpack.c.b16 %v2393, %v2391
        %v2442 = vpack.c.b16 %v2396, %v2394
        %v2443 = vpack.c.b16 %v2397, %v2395
        %v2444 = vpack.c.b16 %v2400, %v2398
        %v2445 = vpack.c.b16 %v2401, %v2399
        %v2446 = vpack.c.b16 %v2404, %v2402
        %v2447 = vpack.c.b16 %v2405, %v2403
        %v2448 = vpack.c.b16 %v2408, %v2406
        %v2449 = vpack.c.b16 %v2409, %v2407
        %v2450 = vpack.c.b16 %v2412, %v2410
        %v2451 = vpack.c.b16 %v2413, %v2411
        %v2452 = vpack.c.b16 %v2416, %v2414
        %v2453 = vpack.c.b16 %v2417, %v2415
        %v2454 = vpack.c.b16 %v2420, %v2418
        %v2455 = vpack.c.b16 %v2421, %v2419
        %v2456 = vpack.c.b16 %v2424, %v2422
        %v2457 = vpack.c.b16 %v2425, %v2423
        %2490 = vmatprep.subr.bf16.mxu0 %v2427
        %2491 = vmatpush1.bf16.msra.mxu0 %v2426
        %2492 = vmatprep.subr.bf16.mxu0 %v2429
        %2493 = vmatpush1.bf16.msra.mxu0 %v2428
        %2494 = vmatprep.subr.bf16.mxu0 %v2431
        %2495 = vmatpush1.bf16.msra.mxu0 %v2430
        %2496 = vmatprep.subr.bf16.mxu0 %v2433
        %2497 = vmatpush1.bf16.msra.mxu0 %v2432
        %2498 = vmatprep.subr.bf16.mxu0 %v2435
        %2499 = vmatpush1.bf16.msra.mxu0 %v2434
        %2500 = vmatprep.subr.bf16.mxu0 %v2437
        %2501 = vmatpush1.bf16.msra.mxu0 %v2436
        %2502 = vmatprep.subr.bf16.mxu0 %v2439
        %2503 = vmatpush1.bf16.msra.mxu0 %v2438
        %2504 = vmatprep.subr.bf16.mxu0 %v2441
        %2505 = vmatpush1.bf16.msra.mxu0 %v2440
        %2506 = vmatprep.subr.bf16.mxu0 %v2443
        %2507 = vmatpush1.bf16.msra.mxu0 %v2442
        %2508 = vmatprep.subr.bf16.mxu0 %v2445
        %2509 = vmatpush1.bf16.msra.mxu0 %v2444
        %2510 = vmatprep.subr.bf16.mxu0 %v2447
        %2511 = vmatpush1.bf16.msra.mxu0 %v2446
        %2512 = vmatprep.subr.bf16.mxu0 %v2449
        %2513 = vmatpush1.bf16.msra.mxu0 %v2448
        %2514 = vmatprep.subr.bf16.mxu0 %v2451
        %2515 = vmatpush1.bf16.msra.mxu0 %v2450
        %2516 = vmatprep.subr.bf16.mxu0 %v2453
        %2517 = vmatpush1.bf16.msra.mxu0 %v2452
        %2518 = vmatprep.subr.bf16.mxu0 %v2455
        %2519 = vmatpush1.bf16.msra.mxu0 %v2454
        %2520 = vmatprep.subr.bf16.mxu0 %v2457
        %2521 = vmatpush1.bf16.msra.mxu0 %v2456
        %2522 = vmatprep.mubr.bf16.mxu0 %v2296
        %2523 = vmatmul.mubr.bf16.gmra.mrb[0].mxu0 %v2295
        %v2524 = vpop.f32.mrb[0].mxu0
        %v2525 = vadd.f32 0.0, %v2524
        %v2526 = vpop.f32.mrb[0].mxu0
        %v2527 = vadd.f32 0.0, %v2526
        %v2528 = vpop.f32.mrb[0].mxu0
        %v2529 = vpop.f32.mrb[0].mxu0
        %2530 = vdwg.mxu0
        %v2531 = vadd.f32 %v2262, %v2525
        %v2532 = vadd.f32 %v2263, %v2527
        %v2533 = vld [vmem:[%s1547] sm:$0x33]
        %v2534 = vld [vmem:[%s1547 + $0x8] sm:$0x33]
        %v2538 = vunpack.c.l.s4 1983009808
        %v2539 = vunpack.c.0.s8 %v2538
        %v2540 = vlaneseq
        %v2541 = vshrl.u32 %v2540, 7
        %v2542 = vsub.s32 %v2539, %v2541
        %v2543 = vrot.slane %v2533, %v2542
        %v2545 = vunpack.c.l.s4 1983009808
        %v2546 = vunpack.c.0.s8 %v2545
        %v2547 = vlaneseq
        %v2548 = vshrl.u32 %v2547, 7
        %v2549 = vsub.s32 %v2546, %v2548
        %v2550 = vrot.slane %v2534, %v2549
        %v2551 = vcombine.low %v2543, %v2550
        %v2553 = vunpack.c.l.s4 1983009808
        %v2554 = vunpack.c.0.s8 %v2553
        %v2555 = vlaneseq
        %v2556 = vshrl.u32 %v2555, 7
        %v2557 = vsub.s32 %v2554, %v2556
        %v2558 = vrot.slane %v2551, %v2557
        %v2559 = vcombine.high %v2558, %v2558
        %v2562 = vpack.c.bf16 %v2558, %v2558
        %v2563 = vpack.c.bf16 %v2559, %v2559
        %s2564 = scalar_lea.vmem %s4, 768
        %v2565 = vld [vmem:[%s2564] sm:$0xff]
        %v2566 = vld [vmem:[%s2564 + $0x8] sm:$0xff]
        %v2567 = vld [vmem:[%s2564 + $0x10] sm:$0xff]
        %v2568 = vld [vmem:[%s2564 + $0x18] sm:$0xff]
        %v2569 = vld [vmem:[%s2564 + $0x20] sm:$0xff]
        %v2570 = vld [vmem:[%s2564 + $0x28] sm:$0xff]
        %v2571 = vld [vmem:[%s2564 + $0x30] sm:$0xff]
        %v2572 = vld [vmem:[%s2564 + $0x38] sm:$0xff]
        %v2573 = vld [vmem:[%s2564 + $0x40] sm:$0xff]
        %v2574 = vld [vmem:[%s2564 + $0x48] sm:$0xff]
        %v2575 = vld [vmem:[%s2564 + $0x50] sm:$0xff]
        %v2576 = vld [vmem:[%s2564 + $0x58] sm:$0xff]
        %v2577 = vld [vmem:[%s2564 + $0x60] sm:$0xff]
        %v2578 = vld [vmem:[%s2564 + $0x68] sm:$0xff]
        %v2579 = vld [vmem:[%s2564 + $0x70] sm:$0xff]
        %v2580 = vld [vmem:[%s2564 + $0x78] sm:$0xff]
        %v2581 = vld [vmem:[%s2564 + $0x80] sm:$0xff]
        %v2582 = vld [vmem:[%s2564 + $0x88] sm:$0xff]
        %v2583 = vld [vmem:[%s2564 + $0x90] sm:$0xff]
        %v2584 = vld [vmem:[%s2564 + $0x98] sm:$0xff]
        %v2585 = vld [vmem:[%s2564 + $0xa0] sm:$0xff]
        %v2586 = vld [vmem:[%s2564 + $0xa8] sm:$0xff]
        %v2587 = vld [vmem:[%s2564 + $0xb0] sm:$0xff]
        %v2588 = vld [vmem:[%s2564 + $0xb8] sm:$0xff]
        %v2589 = vld [vmem:[%s2564 + $0xc0] sm:$0xff]
        %v2590 = vld [vmem:[%s2564 + $0xc8] sm:$0xff]
        %v2591 = vld [vmem:[%s2564 + $0xd0] sm:$0xff]
        %v2592 = vld [vmem:[%s2564 + $0xd8] sm:$0xff]
        %v2593 = vld [vmem:[%s2564 + $0xe0] sm:$0xff]
        %v2594 = vld [vmem:[%s2564 + $0xe8] sm:$0xff]
        %v2595 = vld [vmem:[%s2564 + $0xf0] sm:$0xff]
        %v2596 = vld [vmem:[%s2564 + $0xf8] sm:$0xff]
        %v2629 = vunpack.c.l.b16 %v2565
        %v2630 = vunpack.c.h.b16 %v2565
        %v2631 = vunpack.c.l.b16 %v2566
        %v2632 = vunpack.c.h.b16 %v2566
        %v2633 = vunpack.c.l.b16 %v2567
        %v2634 = vunpack.c.h.b16 %v2567
        %v2635 = vunpack.c.l.b16 %v2568
        %v2636 = vunpack.c.h.b16 %v2568
        %v2637 = vunpack.c.l.b16 %v2569
        %v2638 = vunpack.c.h.b16 %v2569
        %v2639 = vunpack.c.l.b16 %v2570
        %v2640 = vunpack.c.h.b16 %v2570
        %v2641 = vunpack.c.l.b16 %v2571
        %v2642 = vunpack.c.h.b16 %v2571
        %v2643 = vunpack.c.l.b16 %v2572
        %v2644 = vunpack.c.h.b16 %v2572
        %v2645 = vunpack.c.l.b16 %v2573
        %v2646 = vunpack.c.h.b16 %v2573
        %v2647 = vunpack.c.l.b16 %v2574
        %v2648 = vunpack.c.h.b16 %v2574
        %v2649 = vunpack.c.l.b16 %v2575
        %v2650 = vunpack.c.h.b16 %v2575
        %v2651 = vunpack.c.l.b16 %v2576
        %v2652 = vunpack.c.h.b16 %v2576
        %v2653 = vunpack.c.l.b16 %v2577
        %v2654 = vunpack.c.h.b16 %v2577
        %v2655 = vunpack.c.l.b16 %v2578
        %v2656 = vunpack.c.h.b16 %v2578
        %v2657 = vunpack.c.l.b16 %v2579
        %v2658 = vunpack.c.h.b16 %v2579
        %v2659 = vunpack.c.l.b16 %v2580
        %v2660 = vunpack.c.h.b16 %v2580
        %v2661 = vunpack.c.l.b16 %v2581
        %v2662 = vunpack.c.h.b16 %v2581
        %v2663 = vunpack.c.l.b16 %v2582
        %v2664 = vunpack.c.h.b16 %v2582
        %v2665 = vunpack.c.l.b16 %v2583
        %v2666 = vunpack.c.h.b16 %v2583
        %v2667 = vunpack.c.l.b16 %v2584
        %v2668 = vunpack.c.h.b16 %v2584
        %v2669 = vunpack.c.l.b16 %v2585
        %v2670 = vunpack.c.h.b16 %v2585
        %v2671 = vunpack.c.l.b16 %v2586
        %v2672 = vunpack.c.h.b16 %v2586
        %v2673 = vunpack.c.l.b16 %v2587
        %v2674 = vunpack.c.h.b16 %v2587
        %v2675 = vunpack.c.l.b16 %v2588
        %v2676 = vunpack.c.h.b16 %v2588
        %v2677 = vunpack.c.l.b16 %v2589
        %v2678 = vunpack.c.h.b16 %v2589
        %v2679 = vunpack.c.l.b16 %v2590
        %v2680 = vunpack.c.h.b16 %v2590
        %v2681 = vunpack.c.l.b16 %v2591
        %v2682 = vunpack.c.h.b16 %v2591
        %v2683 = vunpack.c.l.b16 %v2592
        %v2684 = vunpack.c.h.b16 %v2592
        %v2685 = vunpack.c.l.b16 %v2593
        %v2686 = vunpack.c.h.b16 %v2593
        %v2687 = vunpack.c.l.b16 %v2594
        %v2688 = vunpack.c.h.b16 %v2594
        %v2689 = vunpack.c.l.b16 %v2595
        %v2690 = vunpack.c.h.b16 %v2595
        %v2691 = vunpack.c.l.b16 %v2596
        %v2692 = vunpack.c.h.b16 %v2596
        %v2693 = vpack.c.b16 %v2631, %v2629
        %v2694 = vpack.c.b16 %v2632, %v2630
        %v2695 = vpack.c.b16 %v2635, %v2633
        %v2696 = vpack.c.b16 %v2636, %v2634
        %v2697 = vpack.c.b16 %v2639, %v2637
        %v2698 = vpack.c.b16 %v2640, %v2638
        %v2699 = vpack.c.b16 %v2643, %v2641
        %v2700 = vpack.c.b16 %v2644, %v2642
        %v2701 = vpack.c.b16 %v2647, %v2645
        %v2702 = vpack.c.b16 %v2648, %v2646
        %v2703 = vpack.c.b16 %v2651, %v2649
        %v2704 = vpack.c.b16 %v2652, %v2650
        %v2705 = vpack.c.b16 %v2655, %v2653
        %v2706 = vpack.c.b16 %v2656, %v2654
        %v2707 = vpack.c.b16 %v2659, %v2657
        %v2708 = vpack.c.b16 %v2660, %v2658
        %v2709 = vpack.c.b16 %v2663, %v2661
        %v2710 = vpack.c.b16 %v2664, %v2662
        %v2711 = vpack.c.b16 %v2667, %v2665
        %v2712 = vpack.c.b16 %v2668, %v2666
        %v2713 = vpack.c.b16 %v2671, %v2669
        %v2714 = vpack.c.b16 %v2672, %v2670
        %v2715 = vpack.c.b16 %v2675, %v2673
        %v2716 = vpack.c.b16 %v2676, %v2674
        %v2717 = vpack.c.b16 %v2679, %v2677
        %v2718 = vpack.c.b16 %v2680, %v2678
        %v2719 = vpack.c.b16 %v2683, %v2681
        %v2720 = vpack.c.b16 %v2684, %v2682
        %v2721 = vpack.c.b16 %v2687, %v2685
        %v2722 = vpack.c.b16 %v2688, %v2686
        %v2723 = vpack.c.b16 %v2691, %v2689
        %v2724 = vpack.c.b16 %v2692, %v2690
        %2757 = vmatprep.subr.bf16.mxu0 %v2694
        %2758 = vmatpush1.bf16.msra.mxu0 %v2693
        %2759 = vmatprep.subr.bf16.mxu0 %v2696
        %2760 = vmatpush1.bf16.msra.mxu0 %v2695
        %2761 = vmatprep.subr.bf16.mxu0 %v2698
        %2762 = vmatpush1.bf16.msra.mxu0 %v2697
        %2763 = vmatprep.subr.bf16.mxu0 %v2700
        %2764 = vmatpush1.bf16.msra.mxu0 %v2699
        %2765 = vmatprep.subr.bf16.mxu0 %v2702
        %2766 = vmatpush1.bf16.msra.mxu0 %v2701
        %2767 = vmatprep.subr.bf16.mxu0 %v2704
        %2768 = vmatpush1.bf16.msra.mxu0 %v2703
        %2769 = vmatprep.subr.bf16.mxu0 %v2706
        %2770 = vmatpush1.bf16.msra.mxu0 %v2705
        %2771 = vmatprep.subr.bf16.mxu0 %v2708
        %2772 = vmatpush1.bf16.msra.mxu0 %v2707
        %2773 = vmatprep.subr.bf16.mxu0 %v2710
        %2774 = vmatpush1.bf16.msra.mxu0 %v2709
        %2775 = vmatprep.subr.bf16.mxu0 %v2712
        %2776 = vmatpush1.bf16.msra.mxu0 %v2711
        %2777 = vmatprep.subr.bf16.mxu0 %v2714
        %2778 = vmatpush1.bf16.msra.mxu0 %v2713
        %2779 = vmatprep.subr.bf16.mxu0 %v2716
        %2780 = vmatpush1.bf16.msra.mxu0 %v2715
        %2781 = vmatprep.subr.bf16.mxu0 %v2718
        %2782 = vmatpush1.bf16.msra.mxu0 %v2717
        %2783 = vmatprep.subr.bf16.mxu0 %v2720
        %2784 = vmatpush1.bf16.msra.mxu0 %v2719
        %2785 = vmatprep.subr.bf16.mxu0 %v2722
        %2786 = vmatpush1.bf16.msra.mxu0 %v2721
        %2787 = vmatprep.subr.bf16.mxu0 %v2724
        %2788 = vmatpush1.bf16.msra.mxu0 %v2723
        %2789 = vmatprep.mubr.bf16.mxu0 %v2563
        %2790 = vmatmul.mubr.bf16.gmra.mrb[0].mxu0 %v2562
        %v2791 = vpop.f32.mrb[0].mxu0
        %v2792 = vadd.f32 0.0, %v2791
        %v2793 = vpop.f32.mrb[0].mxu0
        %v2794 = vadd.f32 0.0, %v2793
        %v2795 = vpop.f32.mrb[0].mxu0
        %v2796 = vpop.f32.mrb[0].mxu0
        %2797 = vdwg.mxu0
        %v2798 = vadd.f32 %v2531, %v2792
        %v2799 = vadd.f32 %v2532, %v2794
        %v2800 = vld [vmem:[%s1547] sm:$0x66]
        %v2801 = vld [vmem:[%s1547 + $0x8] sm:$0x66]
        %v2805 = vunpack.c.l.s4 1983009808
        %v2806 = vunpack.c.0.s8 %v2805
        %v2807 = vlaneseq
        %v2808 = vshrl.u32 %v2807, 7
        %v2809 = vsub.s32 %v2806, %v2808
        %v2810 = vrot.slane %v2800, %v2809
        %v2811 = vcombine.high %v2810, %v2810
        %v2813 = vunpack.c.l.s4 1983009808
        %v2814 = vunpack.c.0.s8 %v2813
        %v2815 = vlaneseq
        %v2816 = vshrl.u32 %v2815, 7
        %v2817 = vsub.s32 %v2814, %v2816
        %v2818 = vrot.slane %v2801, %v2817
        %v2819 = vcombine.high %v2818, %v2818
        %v2820 = vrot.slane %v2810, 7
        %v2821 = vrot.slane %v2820, 2
        %v2822 = vrot.slane %v2811, 7
        %v2823 = vsel %vm2006, %v2821, %v2822
        %v2824 = vrot.slane %v2818, 7
        %v2825 = vrot.slane %v2824, 2
        %v2826 = vrot.slane %v2819, 7
        %v2827 = vsel %vm2006, %v2825, %v2826
        %v2828 = vcombine.low %v2823, %v2827
        %v2830 = vunpack.c.l.s4 1983009808
        %v2831 = vunpack.c.0.s8 %v2830
        %v2832 = vlaneseq
        %v2833 = vshrl.u32 %v2832, 7
        %v2834 = vsub.s32 %v2831, %v2833
        %v2835 = vrot.slane %v2828, %v2834
        %v2836 = vcombine.high %v2835, %v2835
        %v2839 = vpack.c.bf16 %v2835, %v2835
        %v2840 = vpack.c.bf16 %v2836, %v2836
        %s2841 = scalar_lea.vmem %s4, 1024
        %v2842 = vld [vmem:[%s2841] sm:$0xff]
        %v2843 = vld [vmem:[%s2841 + $0x8] sm:$0xff]
        %v2844 = vld [vmem:[%s2841 + $0x10] sm:$0xff]
        %v2845 = vld [vmem:[%s2841 + $0x18] sm:$0xff]
        %v2846 = vld [vmem:[%s2841 + $0x20] sm:$0xff]
        %v2847 = vld [vmem:[%s2841 + $0x28] sm:$0xff]
        %v2848 = vld [vmem:[%s2841 + $0x30] sm:$0xff]
        %v2849 = vld [vmem:[%s2841 + $0x38] sm:$0xff]
        %v2850 = vld [vmem:[%s2841 + $0x40] sm:$0xff]
        %v2851 = vld [vmem:[%s2841 + $0x48] sm:$0xff]
        %v2852 = vld [vmem:[%s2841 + $0x50] sm:$0xff]
        %v2853 = vld [vmem:[%s2841 + $0x58] sm:$0xff]
        %v2854 = vld [vmem:[%s2841 + $0x60] sm:$0xff]
        %v2855 = vld [vmem:[%s2841 + $0x68] sm:$0xff]
        %v2856 = vld [vmem:[%s2841 + $0x70] sm:$0xff]
        %v2857 = vld [vmem:[%s2841 + $0x78] sm:$0xff]
        %v2858 = vld [vmem:[%s2841 + $0x80] sm:$0xff]
        %v2859 = vld [vmem:[%s2841 + $0x88] sm:$0xff]
        %v2860 = vld [vmem:[%s2841 + $0x90] sm:$0xff]
        %v2861 = vld [vmem:[%s2841 + $0x98] sm:$0xff]
        %v2862 = vld [vmem:[%s2841 + $0xa0] sm:$0xff]
        %v2863 = vld [vmem:[%s2841 + $0xa8] sm:$0xff]
        %v2864 = vld [vmem:[%s2841 + $0xb0] sm:$0xff]
        %v2865 = vld [vmem:[%s2841 + $0xb8] sm:$0xff]
        %v2866 = vld [vmem:[%s2841 + $0xc0] sm:$0xff]
        %v2867 = vld [vmem:[%s2841 + $0xc8] sm:$0xff]
        %v2868 = vld [vmem:[%s2841 + $0xd0] sm:$0xff]
        %v2869 = vld [vmem:[%s2841 + $0xd8] sm:$0xff]
        %v2870 = vld [vmem:[%s2841 + $0xe0] sm:$0xff]
        %v2871 = vld [vmem:[%s2841 + $0xe8] sm:$0xff]
        %v2872 = vld [vmem:[%s2841 + $0xf0] sm:$0xff]
        %v2873 = vld [vmem:[%s2841 + $0xf8] sm:$0xff]
        %v2906 = vunpack.c.l.b16 %v2842
        %v2907 = vunpack.c.h.b16 %v2842
        %v2908 = vunpack.c.l.b16 %v2843
        %v2909 = vunpack.c.h.b16 %v2843
        %v2910 = vunpack.c.l.b16 %v2844
        %v2911 = vunpack.c.h.b16 %v2844
        %v2912 = vunpack.c.l.b16 %v2845
        %v2913 = vunpack.c.h.b16 %v2845
        %v2914 = vunpack.c.l.b16 %v2846
        %v2915 = vunpack.c.h.b16 %v2846
        %v2916 = vunpack.c.l.b16 %v2847
        %v2917 = vunpack.c.h.b16 %v2847
        %v2918 = vunpack.c.l.b16 %v2848
        %v2919 = vunpack.c.h.b16 %v2848
        %v2920 = vunpack.c.l.b16 %v2849
        %v2921 = vunpack.c.h.b16 %v2849
        %v2922 = vunpack.c.l.b16 %v2850
        %v2923 = vunpack.c.h.b16 %v2850
        %v2924 = vunpack.c.l.b16 %v2851
        %v2925 = vunpack.c.h.b16 %v2851
        %v2926 = vunpack.c.l.b16 %v2852
        %v2927 = vunpack.c.h.b16 %v2852
        %v2928 = vunpack.c.l.b16 %v2853
        %v2929 = vunpack.c.h.b16 %v2853
        %v2930 = vunpack.c.l.b16 %v2854
        %v2931 = vunpack.c.h.b16 %v2854
        %v2932 = vunpack.c.l.b16 %v2855
        %v2933 = vunpack.c.h.b16 %v2855
        %v2934 = vunpack.c.l.b16 %v2856
        %v2935 = vunpack.c.h.b16 %v2856
        %v2936 = vunpack.c.l.b16 %v2857
        %v2937 = vunpack.c.h.b16 %v2857
        %v2938 = vunpack.c.l.b16 %v2858
        %v2939 = vunpack.c.h.b16 %v2858
        %v2940 = vunpack.c.l.b16 %v2859
        %v2941 = vunpack.c.h.b16 %v2859
        %v2942 = vunpack.c.l.b16 %v2860
        %v2943 = vunpack.c.h.b16 %v2860
        %v2944 = vunpack.c.l.b16 %v2861
        %v2945 = vunpack.c.h.b16 %v2861
        %v2946 = vunpack.c.l.b16 %v2862
        %v2947 = vunpack.c.h.b16 %v2862
        %v2948 = vunpack.c.l.b16 %v2863
        %v2949 = vunpack.c.h.b16 %v2863
        %v2950 = vunpack.c.l.b16 %v2864
        %v2951 = vunpack.c.h.b16 %v2864
        %v2952 = vunpack.c.l.b16 %v2865
        %v2953 = vunpack.c.h.b16 %v2865
        %v2954 = vunpack.c.l.b16 %v2866
        %v2955 = vunpack.c.h.b16 %v2866
        %v2956 = vunpack.c.l.b16 %v2867
        %v2957 = vunpack.c.h.b16 %v2867
        %v2958 = vunpack.c.l.b16 %v2868
        %v2959 = vunpack.c.h.b16 %v2868
        %v2960 = vunpack.c.l.b16 %v2869
        %v2961 = vunpack.c.h.b16 %v2869
        %v2962 = vunpack.c.l.b16 %v2870
        %v2963 = vunpack.c.h.b16 %v2870
        %v2964 = vunpack.c.l.b16 %v2871
        %v2965 = vunpack.c.h.b16 %v2871
        %v2966 = vunpack.c.l.b16 %v2872
        %v2967 = vunpack.c.h.b16 %v2872
        %v2968 = vunpack.c.l.b16 %v2873
        %v2969 = vunpack.c.h.b16 %v2873
        %v2970 = vpack.c.b16 %v2908, %v2906
        %v2971 = vpack.c.b16 %v2909, %v2907
        %v2972 = vpack.c.b16 %v2912, %v2910
        %v2973 = vpack.c.b16 %v2913, %v2911
        %v2974 = vpack.c.b16 %v2916, %v2914
        %v2975 = vpack.c.b16 %v2917, %v2915
        %v2976 = vpack.c.b16 %v2920, %v2918
        %v2977 = vpack.c.b16 %v2921, %v2919
        %v2978 = vpack.c.b16 %v2924, %v2922
        %v2979 = vpack.c.b16 %v2925, %v2923
        %v2980 = vpack.c.b16 %v2928, %v2926
        %v2981 = vpack.c.b16 %v2929, %v2927
        %v2982 = vpack.c.b16 %v2932, %v2930
        %v2983 = vpack.c.b16 %v2933, %v2931
        %v2984 = vpack.c.b16 %v2936, %v2934
        %v2985 = vpack.c.b16 %v2937, %v2935
        %v2986 = vpack.c.b16 %v2940, %v2938
        %v2987 = vpack.c.b16 %v2941, %v2939
        %v2988 = vpack.c.b16 %v2944, %v2942
        %v2989 = vpack.c.b16 %v2945, %v2943
        %v2990 = vpack.c.b16 %v2948, %v2946
        %v2991 = vpack.c.b16 %v2949, %v2947
        %v2992 = vpack.c.b16 %v2952, %v2950
        %v2993 = vpack.c.b16 %v2953, %v2951
        %v2994 = vpack.c.b16 %v2956, %v2954
        %v2995 = vpack.c.b16 %v2957, %v2955
        %v2996 = vpack.c.b16 %v2960, %v2958
        %v2997 = vpack.c.b16 %v2961, %v2959
        %v2998 = vpack.c.b16 %v2964, %v2962
        %v2999 = vpack.c.b16 %v2965, %v2963
        %v3000 = vpack.c.b16 %v2968, %v2966
        %v3001 = vpack.c.b16 %v2969, %v2967
        %3034 = vmatprep.subr.bf16.mxu0 %v2971
        %3035 = vmatpush1.bf16.msra.mxu0 %v2970
        %3036 = vmatprep.subr.bf16.mxu0 %v2973
        %3037 = vmatpush1.bf16.msra.mxu0 %v2972
        %3038 = vmatprep.subr.bf16.mxu0 %v2975
        %3039 = vmatpush1.bf16.msra.mxu0 %v2974
        %3040 = vmatprep.subr.bf16.mxu0 %v2977
        %3041 = vmatpush1.bf16.msra.mxu0 %v2976
        %3042 = vmatprep.subr.bf16.mxu0 %v2979
        %3043 = vmatpush1.bf16.msra.mxu0 %v2978
        %3044 = vmatprep.subr.bf16.mxu0 %v2981
        %3045 = vmatpush1.bf16.msra.mxu0 %v2980
        %3046 = vmatprep.subr.bf16.mxu0 %v2983
        %3047 = vmatpush1.bf16.msra.mxu0 %v2982
        %3048 = vmatprep.subr.bf16.mxu0 %v2985
        %3049 = vmatpush1.bf16.msra.mxu0 %v2984
        %3050 = vmatprep.subr.bf16.mxu0 %v2987
        %3051 = vmatpush1.bf16.msra.mxu0 %v2986
        %3052 = vmatprep.subr.bf16.mxu0 %v2989
        %3053 = vmatpush1.bf16.msra.mxu0 %v2988
        %3054 = vmatprep.subr.bf16.mxu0 %v2991
        %3055 = vmatpush1.bf16.msra.mxu0 %v2990
        %3056 = vmatprep.subr.bf16.mxu0 %v2993
        %3057 = vmatpush1.bf16.msra.mxu0 %v2992
        %3058 = vmatprep.subr.bf16.mxu0 %v2995
        %3059 = vmatpush1.bf16.msra.mxu0 %v2994
        %3060 = vmatprep.subr.bf16.mxu0 %v2997
        %3061 = vmatpush1.bf16.msra.mxu0 %v2996
        %3062 = vmatprep.subr.bf16.mxu0 %v2999
        %3063 = vmatpush1.bf16.msra.mxu0 %v2998
        %3064 = vmatprep.subr.bf16.mxu0 %v3001
        %3065 = vmatpush1.bf16.msra.mxu0 %v3000
        %3066 = vmatprep.mubr.bf16.mxu0 %v2840
        %3067 = vmatmul.mubr.bf16.gmra.mrb[0].mxu0 %v2839
        %v3068 = vpop.f32.mrb[0].mxu0
        %v3069 = vadd.f32 0.0, %v3068
        %v3070 = vpop.f32.mrb[0].mxu0
        %v3071 = vadd.f32 0.0, %v3070
        %v3072 = vpop.f32.mrb[0].mxu0
        %v3073 = vpop.f32.mrb[0].mxu0
        %3074 = vdwg.mxu0
        %v3075 = vadd.f32 %v2798, %v3069
        %v3076 = vadd.f32 %v2799, %v3071
        %v3077 = vld [vmem:[%s1547] sm:$0xcc]
        %v3078 = vld [vmem:[%s1547 + $0x8] sm:$0xcc]
        %v3082 = vunpack.c.l.s4 1983009808
        %v3083 = vunpack.c.0.s8 %v3082
        %v3084 = vlaneseq
        %v3085 = vshrl.u32 %v3084, 7
        %v3086 = vsub.s32 %v3083, %v3085
        %v3087 = vrot.slane %v3077, %v3086
        %v3088 = vcombine.high %v3087, %v3087
        %v3090 = vunpack.c.l.s4 1983009808
        %v3091 = vunpack.c.0.s8 %v3090
        %v3092 = vlaneseq
        %v3093 = vshrl.u32 %v3092, 7
        %v3094 = vsub.s32 %v3091, %v3093
        %v3095 = vrot.slane %v3078, %v3094
        %v3096 = vcombine.high %v3095, %v3095
        %v3097 = vcombine.low %v3088, %v3096
        %v3099 = vunpack.c.l.s4 1983009808
        %v3100 = vunpack.c.0.s8 %v3099
        %v3101 = vlaneseq
        %v3102 = vshrl.u32 %v3101, 7
        %v3103 = vsub.s32 %v3100, %v3102
        %v3104 = vrot.slane %v3097, %v3103
        %v3105 = vcombine.high %v3104, %v3104
        %v3108 = vpack.c.bf16 %v3104, %v3104
        %v3109 = vpack.c.bf16 %v3105, %v3105
        %s3110 = scalar_lea.vmem %s4, 1280
        %v3111 = vld [vmem:[%s3110] sm:$0xff]
        %v3112 = vld [vmem:[%s3110 + $0x8] sm:$0xff]
        %v3113 = vld [vmem:[%s3110 + $0x10] sm:$0xff]
        %v3114 = vld [vmem:[%s3110 + $0x18] sm:$0xff]
        %v3115 = vld [vmem:[%s3110 + $0x20] sm:$0xff]
        %v3116 = vld [vmem:[%s3110 + $0x28] sm:$0xff]
        %v3117 = vld [vmem:[%s3110 + $0x30] sm:$0xff]
        %v3118 = vld [vmem:[%s3110 + $0x38] sm:$0xff]
        %v3119 = vld [vmem:[%s3110 + $0x40] sm:$0xff]
        %v3120 = vld [vmem:[%s3110 + $0x48] sm:$0xff]
        %v3121 = vld [vmem:[%s3110 + $0x50] sm:$0xff]
        %v3122 = vld [vmem:[%s3110 + $0x58] sm:$0xff]
        %v3123 = vld [vmem:[%s3110 + $0x60] sm:$0xff]
        %v3124 = vld [vmem:[%s3110 + $0x68] sm:$0xff]
        %v3125 = vld [vmem:[%s3110 + $0x70] sm:$0xff]
        %v3126 = vld [vmem:[%s3110 + $0x78] sm:$0xff]
        %v3127 = vld [vmem:[%s3110 + $0x80] sm:$0xff]
        %v3128 = vld [vmem:[%s3110 + $0x88] sm:$0xff]
        %v3129 = vld [vmem:[%s3110 + $0x90] sm:$0xff]
        %v3130 = vld [vmem:[%s3110 + $0x98] sm:$0xff]
        %v3131 = vld [vmem:[%s3110 + $0xa0] sm:$0xff]
        %v3132 = vld [vmem:[%s3110 + $0xa8] sm:$0xff]
        %v3133 = vld [vmem:[%s3110 + $0xb0] sm:$0xff]
        %v3134 = vld [vmem:[%s3110 + $0xb8] sm:$0xff]
        %v3135 = vld [vmem:[%s3110 + $0xc0] sm:$0xff]
        %v3136 = vld [vmem:[%s3110 + $0xc8] sm:$0xff]
        %v3137 = vld [vmem:[%s3110 + $0xd0] sm:$0xff]
        %v3138 = vld [vmem:[%s3110 + $0xd8] sm:$0xff]
        %v3139 = vld [vmem:[%s3110 + $0xe0] sm:$0xff]
        %v3140 = vld [vmem:[%s3110 + $0xe8] sm:$0xff]
        %v3141 = vld [vmem:[%s3110 + $0xf0] sm:$0xff]
        %v3142 = vld [vmem:[%s3110 + $0xf8] sm:$0xff]
        %v3175 = vunpack.c.l.b16 %v3111
        %v3176 = vunpack.c.h.b16 %v3111
        %v3177 = vunpack.c.l.b16 %v3112
        %v3178 = vunpack.c.h.b16 %v3112
        %v3179 = vunpack.c.l.b16 %v3113
        %v3180 = vunpack.c.h.b16 %v3113
        %v3181 = vunpack.c.l.b16 %v3114
        %v3182 = vunpack.c.h.b16 %v3114
        %v3183 = vunpack.c.l.b16 %v3115
        %v3184 = vunpack.c.h.b16 %v3115
        %v3185 = vunpack.c.l.b16 %v3116
        %v3186 = vunpack.c.h.b16 %v3116
        %v3187 = vunpack.c.l.b16 %v3117
        %v3188 = vunpack.c.h.b16 %v3117
        %v3189 = vunpack.c.l.b16 %v3118
        %v3190 = vunpack.c.h.b16 %v3118
        %v3191 = vunpack.c.l.b16 %v3119
        %v3192 = vunpack.c.h.b16 %v3119
        %v3193 = vunpack.c.l.b16 %v3120
        %v3194 = vunpack.c.h.b16 %v3120
        %v3195 = vunpack.c.l.b16 %v3121
        %v3196 = vunpack.c.h.b16 %v3121
        %v3197 = vunpack.c.l.b16 %v3122
        %v3198 = vunpack.c.h.b16 %v3122
        %v3199 = vunpack.c.l.b16 %v3123
        %v3200 = vunpack.c.h.b16 %v3123
        %v3201 = vunpack.c.l.b16 %v3124
        %v3202 = vunpack.c.h.b16 %v3124
        %v3203 = vunpack.c.l.b16 %v3125
        %v3204 = vunpack.c.h.b16 %v3125
        %v3205 = vunpack.c.l.b16 %v3126
        %v3206 = vunpack.c.h.b16 %v3126
        %v3207 = vunpack.c.l.b16 %v3127
        %v3208 = vunpack.c.h.b16 %v3127
        %v3209 = vunpack.c.l.b16 %v3128
        %v3210 = vunpack.c.h.b16 %v3128
        %v3211 = vunpack.c.l.b16 %v3129
        %v3212 = vunpack.c.h.b16 %v3129
        %v3213 = vunpack.c.l.b16 %v3130
        %v3214 = vunpack.c.h.b16 %v3130
        %v3215 = vunpack.c.l.b16 %v3131
        %v3216 = vunpack.c.h.b16 %v3131
        %v3217 = vunpack.c.l.b16 %v3132
        %v3218 = vunpack.c.h.b16 %v3132
        %v3219 = vunpack.c.l.b16 %v3133
        %v3220 = vunpack.c.h.b16 %v3133
        %v3221 = vunpack.c.l.b16 %v3134
        %v3222 = vunpack.c.h.b16 %v3134
        %v3223 = vunpack.c.l.b16 %v3135
        %v3224 = vunpack.c.h.b16 %v3135
        %v3225 = vunpack.c.l.b16 %v3136
        %v3226 = vunpack.c.h.b16 %v3136
        %v3227 = vunpack.c.l.b16 %v3137
        %v3228 = vunpack.c.h.b16 %v3137
        %v3229 = vunpack.c.l.b16 %v3138
        %v3230 = vunpack.c.h.b16 %v3138
        %v3231 = vunpack.c.l.b16 %v3139
        %v3232 = vunpack.c.h.b16 %v3139
        %v3233 = vunpack.c.l.b16 %v3140
        %v3234 = vunpack.c.h.b16 %v3140
        %v3235 = vunpack.c.l.b16 %v3141
        %v3236 = vunpack.c.h.b16 %v3141
        %v3237 = vunpack.c.l.b16 %v3142
        %v3238 = vunpack.c.h.b16 %v3142
        %v3239 = vpack.c.b16 %v3177, %v3175
        %v3240 = vpack.c.b16 %v3178, %v3176
        %v3241 = vpack.c.b16 %v3181, %v3179
        %v3242 = vpack.c.b16 %v3182, %v3180
        %v3243 = vpack.c.b16 %v3185, %v3183
        %v3244 = vpack.c.b16 %v3186, %v3184
        %v3245 = vpack.c.b16 %v3189, %v3187
        %v3246 = vpack.c.b16 %v3190, %v3188
        %v3247 = vpack.c.b16 %v3193, %v3191
        %v3248 = vpack.c.b16 %v3194, %v3192
        %v3249 = vpack.c.b16 %v3197, %v3195
        %v3250 = vpack.c.b16 %v3198, %v3196
        %v3251 = vpack.c.b16 %v3201, %v3199
        %v3252 = vpack.c.b16 %v3202, %v3200
        %v3253 = vpack.c.b16 %v3205, %v3203
        %v3254 = vpack.c.b16 %v3206, %v3204
        %v3255 = vpack.c.b16 %v3209, %v3207
        %v3256 = vpack.c.b16 %v3210, %v3208
        %v3257 = vpack.c.b16 %v3213, %v3211
        %v3258 = vpack.c.b16 %v3214, %v3212
        %v3259 = vpack.c.b16 %v3217, %v3215
        %v3260 = vpack.c.b16 %v3218, %v3216
        %v3261 = vpack.c.b16 %v3221, %v3219
        %v3262 = vpack.c.b16 %v3222, %v3220
        %v3263 = vpack.c.b16 %v3225, %v3223
        %v3264 = vpack.c.b16 %v3226, %v3224
        %v3265 = vpack.c.b16 %v3229, %v3227
        %v3266 = vpack.c.b16 %v3230, %v3228
        %v3267 = vpack.c.b16 %v3233, %v3231
        %v3268 = vpack.c.b16 %v3234, %v3232
        %v3269 = vpack.c.b16 %v3237, %v3235
        %v3270 = vpack.c.b16 %v3238, %v3236
        %3303 = vmatprep.subr.bf16.mxu0 %v3240
        %3304 = vmatpush1.bf16.msra.mxu0 %v3239
        %3305 = vmatprep.subr.bf16.mxu0 %v3242
        %3306 = vmatpush1.bf16.msra.mxu0 %v3241
        %3307 = vmatprep.subr.bf16.mxu0 %v3244
        %3308 = vmatpush1.bf16.msra.mxu0 %v3243
        %3309 = vmatprep.subr.bf16.mxu0 %v3246
        %3310 = vmatpush1.bf16.msra.mxu0 %v3245
        %3311 = vmatprep.subr.bf16.mxu0 %v3248
        %3312 = vmatpush1.bf16.msra.mxu0 %v3247
        %3313 = vmatprep.subr.bf16.mxu0 %v3250
        %3314 = vmatpush1.bf16.msra.mxu0 %v3249
        %3315 = vmatprep.subr.bf16.mxu0 %v3252
        %3316 = vmatpush1.bf16.msra.mxu0 %v3251
        %3317 = vmatprep.subr.bf16.mxu0 %v3254
        %3318 = vmatpush1.bf16.msra.mxu0 %v3253
        %3319 = vmatprep.subr.bf16.mxu0 %v3256
        %3320 = vmatpush1.bf16.msra.mxu0 %v3255
        %3321 = vmatprep.subr.bf16.mxu0 %v3258
        %3322 = vmatpush1.bf16.msra.mxu0 %v3257
        %3323 = vmatprep.subr.bf16.mxu0 %v3260
        %3324 = vmatpush1.bf16.msra.mxu0 %v3259
        %3325 = vmatprep.subr.bf16.mxu0 %v3262
        %3326 = vmatpush1.bf16.msra.mxu0 %v3261
        %3327 = vmatprep.subr.bf16.mxu0 %v3264
        %3328 = vmatpush1.bf16.msra.mxu0 %v3263
        %3329 = vmatprep.subr.bf16.mxu0 %v3266
        %3330 = vmatpush1.bf16.msra.mxu0 %v3265
        %3331 = vmatprep.subr.bf16.mxu0 %v3268
        %3332 = vmatpush1.bf16.msra.mxu0 %v3267
        %3333 = vmatprep.subr.bf16.mxu0 %v3270
        %3334 = vmatpush1.bf16.msra.mxu0 %v3269
        %3335 = vmatprep.mubr.bf16.mxu0 %v3109
        %3336 = vmatmul.mubr.bf16.gmra.mrb[0].mxu0 %v3108
        %v3337 = vpop.f32.mrb[0].mxu0
        %v3338 = vadd.f32 0.0, %v3337
        %v3339 = vpop.f32.mrb[0].mxu0
        %v3340 = vadd.f32 0.0, %v3339
        %v3341 = vpop.f32.mrb[0].mxu0
        %v3342 = vpop.f32.mrb[0].mxu0
        %3343 = vdwg.mxu0
        %v3344 = vadd.f32 %v3075, %v3338
        %v3345 = vadd.f32 %v3076, %v3340
        %s3346 = scalar_lea.vmem [#allocation2], 16
        %v3347 = vld [vmem:[%s3346] sm:$0x33]
        %v3348 = vld [vmem:[%s3346 + $0x8] sm:$0x33]
        %v3352 = vunpack.c.l.s4 1983009808
        %v3353 = vunpack.c.0.s8 %v3352
        %v3354 = vlaneseq
        %v3355 = vshrl.u32 %v3354, 7
        %v3356 = vsub.s32 %v3353, %v3355
        %v3357 = vrot.slane %v3347, %v3356
        %v3359 = vunpack.c.l.s4 1983009808
        %v3360 = vunpack.c.0.s8 %v3359
        %v3361 = vlaneseq
        %v3362 = vshrl.u32 %v3361, 7
        %v3363 = vsub.s32 %v3360, %v3362
        %v3364 = vrot.slane %v3348, %v3363
        %v3365 = vcombine.low %v3357, %v3364
        %v3367 = vunpack.c.l.s4 1983009808
        %v3368 = vunpack.c.0.s8 %v3367
        %v3369 = vlaneseq
        %v3370 = vshrl.u32 %v3369, 7
        %v3371 = vsub.s32 %v3368, %v3370
        %v3372 = vrot.slane %v3365, %v3371
        %v3373 = vcombine.high %v3372, %v3372
        %v3376 = vpack.c.bf16 %v3372, %v3372
        %v3377 = vpack.c.bf16 %v3373, %v3373
        %s3378 = scalar_lea.vmem %s4, 1536
        %v3379 = vld [vmem:[%s3378] sm:$0xff]
        %v3380 = vld [vmem:[%s3378 + $0x8] sm:$0xff]
        %v3381 = vld [vmem:[%s3378 + $0x10] sm:$0xff]
        %v3382 = vld [vmem:[%s3378 + $0x18] sm:$0xff]
        %v3383 = vld [vmem:[%s3378 + $0x20] sm:$0xff]
        %v3384 = vld [vmem:[%s3378 + $0x28] sm:$0xff]
        %v3385 = vld [vmem:[%s3378 + $0x30] sm:$0xff]
        %v3386 = vld [vmem:[%s3378 + $0x38] sm:$0xff]
        %v3387 = vld [vmem:[%s3378 + $0x40] sm:$0xff]
        %v3388 = vld [vmem:[%s3378 + $0x48] sm:$0xff]
        %v3389 = vld [vmem:[%s3378 + $0x50] sm:$0xff]
        %v3390 = vld [vmem:[%s3378 + $0x58] sm:$0xff]
        %v3391 = vld [vmem:[%s3378 + $0x60] sm:$0xff]
        %v3392 = vld [vmem:[%s3378 + $0x68] sm:$0xff]
        %v3393 = vld [vmem:[%s3378 + $0x70] sm:$0xff]
        %v3394 = vld [vmem:[%s3378 + $0x78] sm:$0xff]
        %v3395 = vld [vmem:[%s3378 + $0x80] sm:$0xff]
        %v3396 = vld [vmem:[%s3378 + $0x88] sm:$0xff]
        %v3397 = vld [vmem:[%s3378 + $0x90] sm:$0xff]
        %v3398 = vld [vmem:[%s3378 + $0x98] sm:$0xff]
        %v3399 = vld [vmem:[%s3378 + $0xa0] sm:$0xff]
        %v3400 = vld [vmem:[%s3378 + $0xa8] sm:$0xff]
        %v3401 = vld [vmem:[%s3378 + $0xb0] sm:$0xff]
        %v3402 = vld [vmem:[%s3378 + $0xb8] sm:$0xff]
        %v3403 = vld [vmem:[%s3378 + $0xc0] sm:$0xff]
        %v3404 = vld [vmem:[%s3378 + $0xc8] sm:$0xff]
        %v3405 = vld [vmem:[%s3378 + $0xd0] sm:$0xff]
        %v3406 = vld [vmem:[%s3378 + $0xd8] sm:$0xff]
        %v3407 = vld [vmem:[%s3378 + $0xe0] sm:$0xff]
        %v3408 = vld [vmem:[%s3378 + $0xe8] sm:$0xff]
        %v3409 = vld [vmem:[%s3378 + $0xf0] sm:$0xff]
        %v3410 = vld [vmem:[%s3378 + $0xf8] sm:$0xff]
        %v3443 = vunpack.c.l.b16 %v3379
        %v3444 = vunpack.c.h.b16 %v3379
        %v3445 = vunpack.c.l.b16 %v3380
        %v3446 = vunpack.c.h.b16 %v3380
        %v3447 = vunpack.c.l.b16 %v3381
        %v3448 = vunpack.c.h.b16 %v3381
        %v3449 = vunpack.c.l.b16 %v3382
        %v3450 = vunpack.c.h.b16 %v3382
        %v3451 = vunpack.c.l.b16 %v3383
        %v3452 = vunpack.c.h.b16 %v3383
        %v3453 = vunpack.c.l.b16 %v3384
        %v3454 = vunpack.c.h.b16 %v3384
        %v3455 = vunpack.c.l.b16 %v3385
        %v3456 = vunpack.c.h.b16 %v3385
        %v3457 = vunpack.c.l.b16 %v3386
        %v3458 = vunpack.c.h.b16 %v3386
        %v3459 = vunpack.c.l.b16 %v3387
        %v3460 = vunpack.c.h.b16 %v3387
        %v3461 = vunpack.c.l.b16 %v3388
        %v3462 = vunpack.c.h.b16 %v3388
        %v3463 = vunpack.c.l.b16 %v3389
        %v3464 = vunpack.c.h.b16 %v3389
        %v3465 = vunpack.c.l.b16 %v3390
        %v3466 = vunpack.c.h.b16 %v3390
        %v3467 = vunpack.c.l.b16 %v3391
        %v3468 = vunpack.c.h.b16 %v3391
        %v3469 = vunpack.c.l.b16 %v3392
        %v3470 = vunpack.c.h.b16 %v3392
        %v3471 = vunpack.c.l.b16 %v3393
        %v3472 = vunpack.c.h.b16 %v3393
        %v3473 = vunpack.c.l.b16 %v3394
        %v3474 = vunpack.c.h.b16 %v3394
        %v3475 = vunpack.c.l.b16 %v3395
        %v3476 = vunpack.c.h.b16 %v3395
        %v3477 = vunpack.c.l.b16 %v3396
        %v3478 = vunpack.c.h.b16 %v3396
        %v3479 = vunpack.c.l.b16 %v3397
        %v3480 = vunpack.c.h.b16 %v3397
        %v3481 = vunpack.c.l.b16 %v3398
        %v3482 = vunpack.c.h.b16 %v3398
        %v3483 = vunpack.c.l.b16 %v3399
        %v3484 = vunpack.c.h.b16 %v3399
        %v3485 = vunpack.c.l.b16 %v3400
        %v3486 = vunpack.c.h.b16 %v3400
        %v3487 = vunpack.c.l.b16 %v3401
        %v3488 = vunpack.c.h.b16 %v3401
        %v3489 = vunpack.c.l.b16 %v3402
        %v3490 = vunpack.c.h.b16 %v3402
        %v3491 = vunpack.c.l.b16 %v3403
        %v3492 = vunpack.c.h.b16 %v3403
        %v3493 = vunpack.c.l.b16 %v3404
        %v3494 = vunpack.c.h.b16 %v3404
        %v3495 = vunpack.c.l.b16 %v3405
        %v3496 = vunpack.c.h.b16 %v3405
        %v3497 = vunpack.c.l.b16 %v3406
        %v3498 = vunpack.c.h.b16 %v3406
        %v3499 = vunpack.c.l.b16 %v3407
        %v3500 = vunpack.c.h.b16 %v3407
        %v3501 = vunpack.c.l.b16 %v3408
        %v3502 = vunpack.c.h.b16 %v3408
        %v3503 = vunpack.c.l.b16 %v3409
        %v3504 = vunpack.c.h.b16 %v3409
        %v3505 = vunpack.c.l.b16 %v3410
        %v3506 = vunpack.c.h.b16 %v3410
        %v3507 = vpack.c.b16 %v3445, %v3443
        %v3508 = vpack.c.b16 %v3446, %v3444
        %v3509 = vpack.c.b16 %v3449, %v3447
        %v3510 = vpack.c.b16 %v3450, %v3448
        %v3511 = vpack.c.b16 %v3453, %v3451
        %v3512 = vpack.c.b16 %v3454, %v3452
        %v3513 = vpack.c.b16 %v3457, %v3455
        %v3514 = vpack.c.b16 %v3458, %v3456
        %v3515 = vpack.c.b16 %v3461, %v3459
        %v3516 = vpack.c.b16 %v3462, %v3460
        %v3517 = vpack.c.b16 %v3465, %v3463
        %v3518 = vpack.c.b16 %v3466, %v3464
        %v3519 = vpack.c.b16 %v3469, %v3467
        %v3520 = vpack.c.b16 %v3470, %v3468
        %v3521 = vpack.c.b16 %v3473, %v3471
        %v3522 = vpack.c.b16 %v3474, %v3472
        %v3523 = vpack.c.b16 %v3477, %v3475
        %v3524 = vpack.c.b16 %v3478, %v3476
        %v3525 = vpack.c.b16 %v3481, %v3479
        %v3526 = vpack.c.b16 %v3482, %v3480
        %v3527 = vpack.c.b16 %v3485, %v3483
        %v3528 = vpack.c.b16 %v3486, %v3484
        %v3529 = vpack.c.b16 %v3489, %v3487
        %v3530 = vpack.c.b16 %v3490, %v3488
        %v3531 = vpack.c.b16 %v3493, %v3491
        %v3532 = vpack.c.b16 %v3494, %v3492
        %v3533 = vpack.c.b16 %v3497, %v3495
        %v3534 = vpack.c.b16 %v3498, %v3496
        %v3535 = vpack.c.b16 %v3501, %v3499
        %v3536 = vpack.c.b16 %v3502, %v3500
        %v3537 = vpack.c.b16 %v3505, %v3503
        %v3538 = vpack.c.b16 %v3506, %v3504
        %3571 = vmatprep.subr.bf16.mxu0 %v3508
        %3572 = vmatpush1.bf16.msra.mxu0 %v3507
        %3573 = vmatprep.subr.bf16.mxu0 %v3510
        %3574 = vmatpush1.bf16.msra.mxu0 %v3509
        %3575 = vmatprep.subr.bf16.mxu0 %v3512
        %3576 = vmatpush1.bf16.msra.mxu0 %v3511
        %3577 = vmatprep.subr.bf16.mxu0 %v3514
        %3578 = vmatpush1.bf16.msra.mxu0 %v3513
        %3579 = vmatprep.subr.bf16.mxu0 %v3516
        %3580 = vmatpush1.bf16.msra.mxu0 %v3515
        %3581 = vmatprep.subr.bf16.mxu0 %v3518
        %3582 = vmatpush1.bf16.msra.mxu0 %v3517
        %3583 = vmatprep.subr.bf16.mxu0 %v3520
        %3584 = vmatpush1.bf16.msra.mxu0 %v3519
        %3585 = vmatprep.subr.bf16.mxu0 %v3522
        %3586 = vmatpush1.bf16.msra.mxu0 %v3521
        %3587 = vmatprep.subr.bf16.mxu0 %v3524
        %3588 = vmatpush1.bf16.msra.mxu0 %v3523
        %3589 = vmatprep.subr.bf16.mxu0 %v3526
        %3590 = vmatpush1.bf16.msra.mxu0 %v3525
        %3591 = vmatprep.subr.bf16.mxu0 %v3528
        %3592 = vmatpush1.bf16.msra.mxu0 %v3527
        %3593 = vmatprep.subr.bf16.mxu0 %v3530
        %3594 = vmatpush1.bf16.msra.mxu0 %v3529
        %3595 = vmatprep.subr.bf16.mxu0 %v3532
        %3596 = vmatpush1.bf16.msra.mxu0 %v3531
        %3597 = vmatprep.subr.bf16.mxu0 %v3534
        %3598 = vmatpush1.bf16.msra.mxu0 %v3533
        %3599 = vmatprep.subr.bf16.mxu0 %v3536
        %3600 = vmatpush1.bf16.msra.mxu0 %v3535
        %3601 = vmatprep.subr.bf16.mxu0 %v3538
        %3602 = vmatpush1.bf16.msra.mxu0 %v3537
        %3603 = vmatprep.mubr.bf16.mxu0 %v3377
        %3604 = vmatmul.mubr.bf16.gmra.mrb[0].mxu0 %v3376
        %v3605 = vpop.f32.mrb[0].mxu0
        %v3606 = vadd.f32 0.0, %v3605
        %v3607 = vpop.f32.mrb[0].mxu0
        %v3608 = vadd.f32 0.0, %v3607
        %v3609 = vpop.f32.mrb[0].mxu0
        %v3610 = vpop.f32.mrb[0].mxu0
        %3611 = vdwg.mxu0
        %v3612 = vadd.f32 %v3344, %v3606
        %v3613 = vadd.f32 %v3345, %v3608
        %v3614 = vld [vmem:[%s3346] sm:$0x66]
        %v3615 = vld [vmem:[%s3346 + $0x8] sm:$0x66]
        %v3619 = vunpack.c.l.s4 1983009808
        %v3620 = vunpack.c.0.s8 %v3619
        %v3621 = vlaneseq
        %v3622 = vshrl.u32 %v3621, 7
        %v3623 = vsub.s32 %v3620, %v3622
        %v3624 = vrot.slane %v3614, %v3623
        %v3625 = vcombine.high %v3624, %v3624
        %v3627 = vunpack.c.l.s4 1983009808
        %v3628 = vunpack.c.0.s8 %v3627
        %v3629 = vlaneseq
        %v3630 = vshrl.u32 %v3629, 7
        %v3631 = vsub.s32 %v3628, %v3630
        %v3632 = vrot.slane %v3615, %v3631
        %v3633 = vcombine.high %v3632, %v3632
        %v3634 = vrot.slane %v3624, 7
        %v3635 = vrot.slane %v3634, 2
        %v3636 = vrot.slane %v3625, 7
        %v3637 = vsel %vm2006, %v3635, %v3636
        %v3638 = vrot.slane %v3632, 7
        %v3639 = vrot.slane %v3638, 2
        %v3640 = vrot.slane %v3633, 7
        %v3641 = vsel %vm2006, %v3639, %v3640
        %v3642 = vcombine.low %v3637, %v3641
        %v3644 = vunpack.c.l.s4 1983009808
        %v3645 = vunpack.c.0.s8 %v3644
        %v3646 = vlaneseq
        %v3647 = vshrl.u32 %v3646, 7
        %v3648 = vsub.s32 %v3645, %v3647
        %v3649 = vrot.slane %v3642, %v3648
        %v3650 = vcombine.high %v3649, %v3649
        %v3653 = vpack.c.bf16 %v3649, %v3649
        %v3654 = vpack.c.bf16 %v3650, %v3650
        %s3655 = scalar_lea.vmem %s4, 1792
        %v3656 = vld [vmem:[%s3655] sm:$0xff]
        %v3657 = vld [vmem:[%s3655 + $0x8] sm:$0xff]
        %v3658 = vld [vmem:[%s3655 + $0x10] sm:$0xff]
        %v3659 = vld [vmem:[%s3655 + $0x18] sm:$0xff]
        %v3660 = vld [vmem:[%s3655 + $0x20] sm:$0xff]
        %v3661 = vld [vmem:[%s3655 + $0x28] sm:$0xff]
        %v3662 = vld [vmem:[%s3655 + $0x30] sm:$0xff]
        %v3663 = vld [vmem:[%s3655 + $0x38] sm:$0xff]
        %v3664 = vld [vmem:[%s3655 + $0x40] sm:$0xff]
        %v3665 = vld [vmem:[%s3655 + $0x48] sm:$0xff]
        %v3666 = vld [vmem:[%s3655 + $0x50] sm:$0xff]
        %v3667 = vld [vmem:[%s3655 + $0x58] sm:$0xff]
        %v3668 = vld [vmem:[%s3655 + $0x60] sm:$0xff]
        %v3669 = vld [vmem:[%s3655 + $0x68] sm:$0xff]
        %v3670 = vld [vmem:[%s3655 + $0x70] sm:$0xff]
        %v3671 = vld [vmem:[%s3655 + $0x78] sm:$0xff]
        %v3672 = vld [vmem:[%s3655 + $0x80] sm:$0xff]
        %v3673 = vld [vmem:[%s3655 + $0x88] sm:$0xff]
        %v3674 = vld [vmem:[%s3655 + $0x90] sm:$0xff]
        %v3675 = vld [vmem:[%s3655 + $0x98] sm:$0xff]
        %v3676 = vld [vmem:[%s3655 + $0xa0] sm:$0xff]
        %v3677 = vld [vmem:[%s3655 + $0xa8] sm:$0xff]
        %v3678 = vld [vmem:[%s3655 + $0xb0] sm:$0xff]
        %v3679 = vld [vmem:[%s3655 + $0xb8] sm:$0xff]
        %v3680 = vld [vmem:[%s3655 + $0xc0] sm:$0xff]
        %v3681 = vld [vmem:[%s3655 + $0xc8] sm:$0xff]
        %v3682 = vld [vmem:[%s3655 + $0xd0] sm:$0xff]
        %v3683 = vld [vmem:[%s3655 + $0xd8] sm:$0xff]
        %v3684 = vld [vmem:[%s3655 + $0xe0] sm:$0xff]
        %v3685 = vld [vmem:[%s3655 + $0xe8] sm:$0xff]
        %v3686 = vld [vmem:[%s3655 + $0xf0] sm:$0xff]
        %v3687 = vld [vmem:[%s3655 + $0xf8] sm:$0xff]
        %v3720 = vunpack.c.l.b16 %v3656
        %v3721 = vunpack.c.h.b16 %v3656
        %v3722 = vunpack.c.l.b16 %v3657
        %v3723 = vunpack.c.h.b16 %v3657
        %v3724 = vunpack.c.l.b16 %v3658
        %v3725 = vunpack.c.h.b16 %v3658
        %v3726 = vunpack.c.l.b16 %v3659
        %v3727 = vunpack.c.h.b16 %v3659
        %v3728 = vunpack.c.l.b16 %v3660
        %v3729 = vunpack.c.h.b16 %v3660
        %v3730 = vunpack.c.l.b16 %v3661
        %v3731 = vunpack.c.h.b16 %v3661
        %v3732 = vunpack.c.l.b16 %v3662
        %v3733 = vunpack.c.h.b16 %v3662
        %v3734 = vunpack.c.l.b16 %v3663
        %v3735 = vunpack.c.h.b16 %v3663
        %v3736 = vunpack.c.l.b16 %v3664
        %v3737 = vunpack.c.h.b16 %v3664
        %v3738 = vunpack.c.l.b16 %v3665
        %v3739 = vunpack.c.h.b16 %v3665
        %v3740 = vunpack.c.l.b16 %v3666
        %v3741 = vunpack.c.h.b16 %v3666
        %v3742 = vunpack.c.l.b16 %v3667
        %v3743 = vunpack.c.h.b16 %v3667
        %v3744 = vunpack.c.l.b16 %v3668
        %v3745 = vunpack.c.h.b16 %v3668
        %v3746 = vunpack.c.l.b16 %v3669
        %v3747 = vunpack.c.h.b16 %v3669
        %v3748 = vunpack.c.l.b16 %v3670
        %v3749 = vunpack.c.h.b16 %v3670
        %v3750 = vunpack.c.l.b16 %v3671
        %v3751 = vunpack.c.h.b16 %v3671
        %v3752 = vunpack.c.l.b16 %v3672
        %v3753 = vunpack.c.h.b16 %v3672
        %v3754 = vunpack.c.l.b16 %v3673
        %v3755 = vunpack.c.h.b16 %v3673
        %v3756 = vunpack.c.l.b16 %v3674
        %v3757 = vunpack.c.h.b16 %v3674
        %v3758 = vunpack.c.l.b16 %v3675
        %v3759 = vunpack.c.h.b16 %v3675
        %v3760 = vunpack.c.l.b16 %v3676
        %v3761 = vunpack.c.h.b16 %v3676
        %v3762 = vunpack.c.l.b16 %v3677
        %v3763 = vunpack.c.h.b16 %v3677
        %v3764 = vunpack.c.l.b16 %v3678
        %v3765 = vunpack.c.h.b16 %v3678
        %v3766 = vunpack.c.l.b16 %v3679
        %v3767 = vunpack.c.h.b16 %v3679
        %v3768 = vunpack.c.l.b16 %v3680
        %v3769 = vunpack.c.h.b16 %v3680
        %v3770 = vunpack.c.l.b16 %v3681
        %v3771 = vunpack.c.h.b16 %v3681
        %v3772 = vunpack.c.l.b16 %v3682
        %v3773 = vunpack.c.h.b16 %v3682
        %v3774 = vunpack.c.l.b16 %v3683
        %v3775 = vunpack.c.h.b16 %v3683
        %v3776 = vunpack.c.l.b16 %v3684
        %v3777 = vunpack.c.h.b16 %v3684
        %v3778 = vunpack.c.l.b16 %v3685
        %v3779 = vunpack.c.h.b16 %v3685
        %v3780 = vunpack.c.l.b16 %v3686
        %v3781 = vunpack.c.h.b16 %v3686
        %v3782 = vunpack.c.l.b16 %v3687
        %v3783 = vunpack.c.h.b16 %v3687
        %v3784 = vpack.c.b16 %v3722, %v3720
        %v3785 = vpack.c.b16 %v3723, %v3721
        %v3786 = vpack.c.b16 %v3726, %v3724
        %v3787 = vpack.c.b16 %v3727, %v3725
        %v3788 = vpack.c.b16 %v3730, %v3728
        %v3789 = vpack.c.b16 %v3731, %v3729
        %v3790 = vpack.c.b16 %v3734, %v3732
        %v3791 = vpack.c.b16 %v3735, %v3733
        %v3792 = vpack.c.b16 %v3738, %v3736
        %v3793 = vpack.c.b16 %v3739, %v3737
        %v3794 = vpack.c.b16 %v3742, %v3740
        %v3795 = vpack.c.b16 %v3743, %v3741
        %v3796 = vpack.c.b16 %v3746, %v3744
        %v3797 = vpack.c.b16 %v3747, %v3745
        %v3798 = vpack.c.b16 %v3750, %v3748
        %v3799 = vpack.c.b16 %v3751, %v3749
        %v3800 = vpack.c.b16 %v3754, %v3752
        %v3801 = vpack.c.b16 %v3755, %v3753
        %v3802 = vpack.c.b16 %v3758, %v3756
        %v3803 = vpack.c.b16 %v3759, %v3757
        %v3804 = vpack.c.b16 %v3762, %v3760
        %v3805 = vpack.c.b16 %v3763, %v3761
        %v3806 = vpack.c.b16 %v3766, %v3764
        %v3807 = vpack.c.b16 %v3767, %v3765
        %v3808 = vpack.c.b16 %v3770, %v3768
        %v3809 = vpack.c.b16 %v3771, %v3769
        %v3810 = vpack.c.b16 %v3774, %v3772
        %v3811 = vpack.c.b16 %v3775, %v3773
        %v3812 = vpack.c.b16 %v3778, %v3776
        %v3813 = vpack.c.b16 %v3779, %v3777
        %v3814 = vpack.c.b16 %v3782, %v3780
        %v3815 = vpack.c.b16 %v3783, %v3781
        %3848 = vmatprep.subr.bf16.mxu0 %v3785
        %3849 = vmatpush1.bf16.msra.mxu0 %v3784
        %3850 = vmatprep.subr.bf16.mxu0 %v3787
        %3851 = vmatpush1.bf16.msra.mxu0 %v3786
        %3852 = vmatprep.subr.bf16.mxu0 %v3789
        %3853 = vmatpush1.bf16.msra.mxu0 %v3788
        %3854 = vmatprep.subr.bf16.mxu0 %v3791
        %3855 = vmatpush1.bf16.msra.mxu0 %v3790
        %3856 = vmatprep.subr.bf16.mxu0 %v3793
        %3857 = vmatpush1.bf16.msra.mxu0 %v3792
        %3858 = vmatprep.subr.bf16.mxu0 %v3795
        %3859 = vmatpush1.bf16.msra.mxu0 %v3794
        %3860 = vmatprep.subr.bf16.mxu0 %v3797
        %3861 = vmatpush1.bf16.msra.mxu0 %v3796
        %3862 = vmatprep.subr.bf16.mxu0 %v3799
        %3863 = vmatpush1.bf16.msra.mxu0 %v3798
        %3864 = vmatprep.subr.bf16.mxu0 %v3801
        %3865 = vmatpush1.bf16.msra.mxu0 %v3800
        %3866 = vmatprep.subr.bf16.mxu0 %v3803
        %3867 = vmatpush1.bf16.msra.mxu0 %v3802
        %3868 = vmatprep.subr.bf16.mxu0 %v3805
        %3869 = vmatpush1.bf16.msra.mxu0 %v3804
        %3870 = vmatprep.subr.bf16.mxu0 %v3807
        %3871 = vmatpush1.bf16.msra.mxu0 %v3806
        %3872 = vmatprep.subr.bf16.mxu0 %v3809
        %3873 = vmatpush1.bf16.msra.mxu0 %v3808
        %3874 = vmatprep.subr.bf16.mxu0 %v3811
        %3875 = vmatpush1.bf16.msra.mxu0 %v3810
        %3876 = vmatprep.subr.bf16.mxu0 %v3813
        %3877 = vmatpush1.bf16.msra.mxu0 %v3812
        %3878 = vmatprep.subr.bf16.mxu0 %v3815
        %3879 = vmatpush1.bf16.msra.mxu0 %v3814
        %3880 = vmatprep.mubr.bf16.mxu0 %v3654
        %3881 = vmatmul.mubr.bf16.gmra.mrb[0].mxu0 %v3653
        %v3882 = vpop.f32.mrb[0].mxu0
        %v3883 = vadd.f32 0.0, %v3882
        %v3884 = vpop.f32.mrb[0].mxu0
        %v3885 = vadd.f32 0.0, %v3884
        %v3886 = vpop.f32.mrb[0].mxu0
        %v3887 = vpop.f32.mrb[0].mxu0
        %3888 = vdwg.mxu0
        %v3889 = vadd.f32 %v3612, %v3883
        %v3890 = vadd.f32 %v3613, %v3885
        %v3891 = vld [vmem:[%s3346] sm:$0xcc]
        %v3892 = vld [vmem:[%s3346 + $0x8] sm:$0xcc]
        %v3896 = vunpack.c.l.s4 1983009808
        %v3897 = vunpack.c.0.s8 %v3896
        %v3898 = vlaneseq
        %v3899 = vshrl.u32 %v3898, 7
        %v3900 = vsub.s32 %v3897, %v3899
        %v3901 = vrot.slane %v3891, %v3900
        %v3902 = vcombine.high %v3901, %v3901
        %v3904 = vunpack.c.l.s4 1983009808
        %v3905 = vunpack.c.0.s8 %v3904
        %v3906 = vlaneseq
        %v3907 = vshrl.u32 %v3906, 7
        %v3908 = vsub.s32 %v3905, %v3907
        %v3909 = vrot.slane %v3892, %v3908
        %v3910 = vcombine.high %v3909, %v3909
        %v3911 = vcombine.low %v3902, %v3910
        %v3913 = vunpack.c.l.s4 1983009808
        %v3914 = vunpack.c.0.s8 %v3913
        %v3915 = vlaneseq
        %v3916 = vshrl.u32 %v3915, 7
        %v3917 = vsub.s32 %v3914, %v3916
        %v3918 = vrot.slane %v3911, %v3917
        %v3919 = vcombine.high %v3918, %v3918
        %v3922 = vpack.c.bf16 %v3918, %v3918
        %v3923 = vpack.c.bf16 %v3919, %v3919
        %s3924 = scalar_lea.vmem %s4, 2048
        %v3925 = vld [vmem:[%s3924] sm:$0xff]
        %v3926 = vld [vmem:[%s3924 + $0x8] sm:$0xff]
        %v3927 = vld [vmem:[%s3924 + $0x10] sm:$0xff]
        %v3928 = vld [vmem:[%s3924 + $0x18] sm:$0xff]
        %v3929 = vld [vmem:[%s3924 + $0x20] sm:$0xff]
        %v3930 = vld [vmem:[%s3924 + $0x28] sm:$0xff]
        %v3931 = vld [vmem:[%s3924 + $0x30] sm:$0xff]
        %v3932 = vld [vmem:[%s3924 + $0x38] sm:$0xff]
        %v3933 = vld [vmem:[%s3924 + $0x40] sm:$0xff]
        %v3934 = vld [vmem:[%s3924 + $0x48] sm:$0xff]
        %v3935 = vld [vmem:[%s3924 + $0x50] sm:$0xff]
        %v3936 = vld [vmem:[%s3924 + $0x58] sm:$0xff]
        %v3937 = vld [vmem:[%s3924 + $0x60] sm:$0xff]
        %v3938 = vld [vmem:[%s3924 + $0x68] sm:$0xff]
        %v3939 = vld [vmem:[%s3924 + $0x70] sm:$0xff]
        %v3940 = vld [vmem:[%s3924 + $0x78] sm:$0xff]
        %v3941 = vld [vmem:[%s3924 + $0x80] sm:$0xff]
        %v3942 = vld [vmem:[%s3924 + $0x88] sm:$0xff]
        %v3943 = vld [vmem:[%s3924 + $0x90] sm:$0xff]
        %v3944 = vld [vmem:[%s3924 + $0x98] sm:$0xff]
        %v3945 = vld [vmem:[%s3924 + $0xa0] sm:$0xff]
        %v3946 = vld [vmem:[%s3924 + $0xa8] sm:$0xff]
        %v3947 = vld [vmem:[%s3924 + $0xb0] sm:$0xff]
        %v3948 = vld [vmem:[%s3924 + $0xb8] sm:$0xff]
        %v3949 = vld [vmem:[%s3924 + $0xc0] sm:$0xff]
        %v3950 = vld [vmem:[%s3924 + $0xc8] sm:$0xff]
        %v3951 = vld [vmem:[%s3924 + $0xd0] sm:$0xff]
        %v3952 = vld [vmem:[%s3924 + $0xd8] sm:$0xff]
        %v3953 = vld [vmem:[%s3924 + $0xe0] sm:$0xff]
        %v3954 = vld [vmem:[%s3924 + $0xe8] sm:$0xff]
        %v3955 = vld [vmem:[%s3924 + $0xf0] sm:$0xff]
        %v3956 = vld [vmem:[%s3924 + $0xf8] sm:$0xff]
        %v3989 = vunpack.c.l.b16 %v3925
        %v3990 = vunpack.c.h.b16 %v3925
        %v3991 = vunpack.c.l.b16 %v3926
        %v3992 = vunpack.c.h.b16 %v3926
        %v3993 = vunpack.c.l.b16 %v3927
        %v3994 = vunpack.c.h.b16 %v3927
        %v3995 = vunpack.c.l.b16 %v3928
        %v3996 = vunpack.c.h.b16 %v3928
        %v3997 = vunpack.c.l.b16 %v3929
        %v3998 = vunpack.c.h.b16 %v3929
        %v3999 = vunpack.c.l.b16 %v3930
        %v4000 = vunpack.c.h.b16 %v3930
        %v4001 = vunpack.c.l.b16 %v3931
        %v4002 = vunpack.c.h.b16 %v3931
        %v4003 = vunpack.c.l.b16 %v3932
        %v4004 = vunpack.c.h.b16 %v3932
        %v4005 = vunpack.c.l.b16 %v3933
        %v4006 = vunpack.c.h.b16 %v3933
        %v4007 = vunpack.c.l.b16 %v3934
        %v4008 = vunpack.c.h.b16 %v3934
        %v4009 = vunpack.c.l.b16 %v3935
        %v4010 = vunpack.c.h.b16 %v3935
        %v4011 = vunpack.c.l.b16 %v3936
        %v4012 = vunpack.c.h.b16 %v3936
        %v4013 = vunpack.c.l.b16 %v3937
        %v4014 = vunpack.c.h.b16 %v3937
        %v4015 = vunpack.c.l.b16 %v3938
        %v4016 = vunpack.c.h.b16 %v3938
        %v4017 = vunpack.c.l.b16 %v3939
        %v4018 = vunpack.c.h.b16 %v3939
        %v4019 = vunpack.c.l.b16 %v3940
        %v4020 = vunpack.c.h.b16 %v3940
        %v4021 = vunpack.c.l.b16 %v3941
        %v4022 = vunpack.c.h.b16 %v3941
        %v4023 = vunpack.c.l.b16 %v3942
        %v4024 = vunpack.c.h.b16 %v3942
        %v4025 = vunpack.c.l.b16 %v3943
        %v4026 = vunpack.c.h.b16 %v3943
        %v4027 = vunpack.c.l.b16 %v3944
        %v4028 = vunpack.c.h.b16 %v3944
        %v4029 = vunpack.c.l.b16 %v3945
        %v4030 = vunpack.c.h.b16 %v3945
        %v4031 = vunpack.c.l.b16 %v3946
        %v4032 = vunpack.c.h.b16 %v3946
        %v4033 = vunpack.c.l.b16 %v3947
        %v4034 = vunpack.c.h.b16 %v3947
        %v4035 = vunpack.c.l.b16 %v3948
        %v4036 = vunpack.c.h.b16 %v3948
        %v4037 = vunpack.c.l.b16 %v3949
        %v4038 = vunpack.c.h.b16 %v3949
        %v4039 = vunpack.c.l.b16 %v3950
        %v4040 = vunpack.c.h.b16 %v3950
        %v4041 = vunpack.c.l.b16 %v3951
        %v4042 = vunpack.c.h.b16 %v3951
        %v4043 = vunpack.c.l.b16 %v3952
        %v4044 = vunpack.c.h.b16 %v3952
        %v4045 = vunpack.c.l.b16 %v3953
        %v4046 = vunpack.c.h.b16 %v3953
        %v4047 = vunpack.c.l.b16 %v3954
        %v4048 = vunpack.c.h.b16 %v3954
        %v4049 = vunpack.c.l.b16 %v3955
        %v4050 = vunpack.c.h.b16 %v3955
        %v4051 = vunpack.c.l.b16 %v3956
        %v4052 = vunpack.c.h.b16 %v3956
        %v4053 = vpack.c.b16 %v3991, %v3989
        %v4054 = vpack.c.b16 %v3992, %v3990
        %v4055 = vpack.c.b16 %v3995, %v3993
        %v4056 = vpack.c.b16 %v3996, %v3994
        %v4057 = vpack.c.b16 %v3999, %v3997
        %v4058 = vpack.c.b16 %v4000, %v3998
        %v4059 = vpack.c.b16 %v4003, %v4001
        %v4060 = vpack.c.b16 %v4004, %v4002
        %v4061 = vpack.c.b16 %v4007, %v4005
        %v4062 = vpack.c.b16 %v4008, %v4006
        %v4063 = vpack.c.b16 %v4011, %v4009
        %v4064 = vpack.c.b16 %v4012, %v4010
        %v4065 = vpack.c.b16 %v4015, %v4013
        %v4066 = vpack.c.b16 %v4016, %v4014
        %v4067 = vpack.c.b16 %v4019, %v4017
        %v4068 = vpack.c.b16 %v4020, %v4018
        %v4069 = vpack.c.b16 %v4023, %v4021
        %v4070 = vpack.c.b16 %v4024, %v4022
        %v4071 = vpack.c.b16 %v4027, %v4025
        %v4072 = vpack.c.b16 %v4028, %v4026
        %v4073 = vpack.c.b16 %v4031, %v4029
        %v4074 = vpack.c.b16 %v4032, %v4030
        %v4075 = vpack.c.b16 %v4035, %v4033
        %v4076 = vpack.c.b16 %v4036, %v4034
        %v4077 = vpack.c.b16 %v4039, %v4037
        %v4078 = vpack.c.b16 %v4040, %v4038
        %v4079 = vpack.c.b16 %v4043, %v4041
        %v4080 = vpack.c.b16 %v4044, %v4042
        %v4081 = vpack.c.b16 %v4047, %v4045
        %v4082 = vpack.c.b16 %v4048, %v4046
        %v4083 = vpack.c.b16 %v4051, %v4049
        %v4084 = vpack.c.b16 %v4052, %v4050
        %4117 = vmatprep.subr.bf16.mxu0 %v4054
        %4118 = vmatpush1.bf16.msra.mxu0 %v4053
        %4119 = vmatprep.subr.bf16.mxu0 %v4056
        %4120 = vmatpush1.bf16.msra.mxu0 %v4055
        %4121 = vmatprep.subr.bf16.mxu0 %v4058
        %4122 = vmatpush1.bf16.msra.mxu0 %v4057
        %4123 = vmatprep.subr.bf16.mxu0 %v4060
        %4124 = vmatpush1.bf16.msra.mxu0 %v4059
        %4125 = vmatprep.subr.bf16.mxu0 %v4062
        %4126 = vmatpush1.bf16.msra.mxu0 %v4061
        %4127 = vmatprep.subr.bf16.mxu0 %v4064
        %4128 = vmatpush1.bf16.msra.mxu0 %v4063
        %4129 = vmatprep.subr.bf16.mxu0 %v4066
        %4130 = vmatpush1.bf16.msra.mxu0 %v4065
        %4131 = vmatprep.subr.bf16.mxu0 %v4068
        %4132 = vmatpush1.bf16.msra.mxu0 %v4067
        %4133 = vmatprep.subr.bf16.mxu0 %v4070
        %4134 = vmatpush1.bf16.msra.mxu0 %v4069
        %4135 = vmatprep.subr.bf16.mxu0 %v4072
        %4136 = vmatpush1.bf16.msra.mxu0 %v4071
        %4137 = vmatprep.subr.bf16.mxu0 %v4074
        %4138 = vmatpush1.bf16.msra.mxu0 %v4073
        %4139 = vmatprep.subr.bf16.mxu0 %v4076
        %4140 = vmatpush1.bf16.msra.mxu0 %v4075
        %4141 = vmatprep.subr.bf16.mxu0 %v4078
        %4142 = vmatpush1.bf16.msra.mxu0 %v4077
        %4143 = vmatprep.subr.bf16.mxu0 %v4080
        %4144 = vmatpush1.bf16.msra.mxu0 %v4079
        %4145 = vmatprep.subr.bf16.mxu0 %v4082
        %4146 = vmatpush1.bf16.msra.mxu0 %v4081
        %4147 = vmatprep.subr.bf16.mxu0 %v4084
        %4148 = vmatpush1.bf16.msra.mxu0 %v4083
        %4149 = vmatprep.mubr.bf16.mxu0 %v3923
        %4150 = vmatmul.mubr.bf16.gmra.mrb[0].mxu0 %v3922
        %v4151 = vpop.f32.mrb[0].mxu0
        %v4152 = vadd.f32 0.0, %v4151
        %v4153 = vpop.f32.mrb[0].mxu0
        %v4154 = vadd.f32 0.0, %v4153
        %v4155 = vpop.f32.mrb[0].mxu0
        %v4156 = vpop.f32.mrb[0].mxu0
        %4157 = vdwg.mxu0
        %v4158 = vadd.f32 %v3889, %v4152
        %v4159 = vadd.f32 %v3890, %v4154
        %v4160 = vmax.f32 %v4158, 0.0
        %v4161 = vmax.f32 %v4159, 0.0
        %vm4162 = vcmask 1043456
        %v4163 = vsel %vm4162, %v4160, 0.0
        %v4164 = vrot.slane %v4163, 4
        %v4165 = vadd.f32 %v4163, %v4164
        %v4166 = vrot.slane %v4165, 2
        %v4167 = vadd.f32 %v4165, %v4166
        %v4168 = vrot.slane %v4167, 1
        %v4169 = vadd.f32 %v4167, %v4168
        %v4170 = vsel %vm4162, %v4161, 0.0
        %v4171 = vrot.slane %v4170, 4
        %v4172 = vadd.f32 %v4170, %v4171
        %v4173 = vrot.slane %v4172, 2
        %v4174 = vadd.f32 %v4172, %v4173
        %v4175 = vrot.slane %v4174, 1
        %v4176 = vadd.f32 %v4174, %v4175
        %v4177 = vrcp.pop 4.0
        %v4178 = vmul.f32 %v4169, %v4177
        %v4179 = vmul.f32 %v4176, %v4177
        %v4180 = vpack.c.bf16 %v4178, %v4178
        %v4181 = vpack.c.bf16 %v4179, %v4179
        %v4182 = vld [vmem:[%s8] sm:$0xf]
        %v4183 = vld [vmem:[%s8 + $0x4] sm:$0xf]
        %v4184 = vld [vmem:[%s8 + $0x8] sm:$0xf]
        %v4185 = vld [vmem:[%s8 + $0xc] sm:$0xf]
        %v4186 = vld [vmem:[%s8 + $0x10] sm:$0xf]
        %v4187 = vld [vmem:[%s8 + $0x14] sm:$0xf]
        %v4188 = vld [vmem:[%s8 + $0x18] sm:$0xf]
        %v4189 = vld [vmem:[%s8 + $0x1c] sm:$0xf]
        %v4190 = vld [vmem:[%s8 + $0x20] sm:$0xf]
        %v4191 = vld [vmem:[%s8 + $0x24] sm:$0xf]
        %v4192 = vld [vmem:[%s8 + $0x28] sm:$0xf]
        %v4193 = vld [vmem:[%s8 + $0x2c] sm:$0xf]
        %v4194 = vld [vmem:[%s8 + $0x30] sm:$0xf]
        %v4195 = vld [vmem:[%s8 + $0x34] sm:$0xf]
        %v4196 = vld [vmem:[%s8 + $0x38] sm:$0xf]
        %v4197 = vld [vmem:[%s8 + $0x3c] sm:$0xf]
        %v4198 = vld [vmem:[%s8 + $0x40] sm:$0xf]
        %v4199 = vld [vmem:[%s8 + $0x44] sm:$0xf]
        %v4200 = vld [vmem:[%s8 + $0x48] sm:$0xf]
        %v4201 = vld [vmem:[%s8 + $0x4c] sm:$0xf]
        %v4202 = vld [vmem:[%s8 + $0x50] sm:$0xf]
        %v4203 = vld [vmem:[%s8 + $0x54] sm:$0xf]
        %v4204 = vld [vmem:[%s8 + $0x58] sm:$0xf]
        %v4205 = vld [vmem:[%s8 + $0x5c] sm:$0xf]
        %v4206 = vld [vmem:[%s8 + $0x60] sm:$0xf]
        %v4207 = vld [vmem:[%s8 + $0x64] sm:$0xf]
        %v4208 = vld [vmem:[%s8 + $0x68] sm:$0xf]
        %v4209 = vld [vmem:[%s8 + $0x6c] sm:$0xf]
        %v4210 = vld [vmem:[%s8 + $0x70] sm:$0xf]
        %v4211 = vld [vmem:[%s8 + $0x74] sm:$0xf]
        %v4212 = vld [vmem:[%s8 + $0x78] sm:$0xf]
        %v4213 = vld [vmem:[%s8 + $0x7c] sm:$0xf]
        %v4214 = vld [vmem:[%s9] sm:$0x1]
        %v4247 = vunpack.c.l.b16 %v4182
        %v4248 = vunpack.c.l.b16 %v4183
        %v4249 = vunpack.c.l.b16 %v4184
        %v4250 = vunpack.c.l.b16 %v4185
        %v4251 = vunpack.c.l.b16 %v4186
        %v4252 = vunpack.c.l.b16 %v4187
        %v4253 = vunpack.c.l.b16 %v4188
        %v4254 = vunpack.c.l.b16 %v4189
        %v4255 = vunpack.c.l.b16 %v4190
        %v4256 = vunpack.c.l.b16 %v4191
        %v4257 = vunpack.c.l.b16 %v4192
        %v4258 = vunpack.c.l.b16 %v4193
        %v4259 = vunpack.c.l.b16 %v4194
        %v4260 = vunpack.c.l.b16 %v4195
        %v4261 = vunpack.c.l.b16 %v4196
        %v4262 = vunpack.c.l.b16 %v4197
        %v4263 = vunpack.c.l.b16 %v4198
        %v4264 = vunpack.c.l.b16 %v4199
        %v4265 = vunpack.c.l.b16 %v4200
        %v4266 = vunpack.c.l.b16 %v4201
        %v4267 = vunpack.c.l.b16 %v4202
        %v4268 = vunpack.c.l.b16 %v4203
        %v4269 = vunpack.c.l.b16 %v4204
        %v4270 = vunpack.c.l.b16 %v4205
        %v4271 = vunpack.c.l.b16 %v4206
        %v4272 = vunpack.c.l.b16 %v4207
        %v4273 = vunpack.c.l.b16 %v4208
        %v4274 = vunpack.c.l.b16 %v4209
        %v4275 = vunpack.c.l.b16 %v4210
        %v4276 = vunpack.c.l.b16 %v4211
        %v4277 = vunpack.c.l.b16 %v4212
        %v4278 = vunpack.c.l.b16 %v4213
        %v4279 = vpack.c.b16 %v4248, %v4247
        %v4280 = vpack.c.b16 %v4250, %v4249
        %v4281 = vpack.c.b16 %v4252, %v4251
        %v4282 = vpack.c.b16 %v4254, %v4253
        %v4283 = vpack.c.b16 %v4256, %v4255
        %v4284 = vpack.c.b16 %v4258, %v4257
        %v4285 = vpack.c.b16 %v4260, %v4259
        %v4286 = vpack.c.b16 %v4262, %v4261
        %v4287 = vpack.c.b16 %v4264, %v4263
        %v4288 = vpack.c.b16 %v4266, %v4265
        %v4289 = vpack.c.b16 %v4268, %v4267
        %v4290 = vpack.c.b16 %v4270, %v4269
        %v4291 = vpack.c.b16 %v4272, %v4271
        %v4292 = vpack.c.b16 %v4274, %v4273
        %v4293 = vpack.c.b16 %v4276, %v4275
        %v4294 = vpack.c.b16 %v4278, %v4277
        %4311 = vmatprep.subr.bf16.mxu0 0
        %4312 = vmatpush1.bf16.msra.mxu0 %v4279
        %4313 = vmatprep.subr.bf16.mxu0 0
        %4314 = vmatpush1.bf16.msra.mxu0 %v4280
        %4315 = vmatprep.subr.bf16.mxu0 0
        %4316 = vmatpush1.bf16.msra.mxu0 %v4281
        %4317 = vmatprep.subr.bf16.mxu0 0
        %4318 = vmatpush1.bf16.msra.mxu0 %v4282
        %4319 = vmatprep.subr.bf16.mxu0 0
        %4320 = vmatpush1.bf16.msra.mxu0 %v4283
        %4321 = vmatprep.subr.bf16.mxu0 0
        %4322 = vmatpush1.bf16.msra.mxu0 %v4284
        %4323 = vmatprep.subr.bf16.mxu0 0
        %4324 = vmatpush1.bf16.msra.mxu0 %v4285
        %4325 = vmatprep.subr.bf16.mxu0 0
        %4326 = vmatpush1.bf16.msra.mxu0 %v4286
        %4327 = vmatprep.subr.bf16.mxu0 0
        %4328 = vmatpush1.bf16.msra.mxu0 %v4287
        %4329 = vmatprep.subr.bf16.mxu0 0
        %4330 = vmatpush1.bf16.msra.mxu0 %v4288
        %4331 = vmatprep.subr.bf16.mxu0 0
        %4332 = vmatpush1.bf16.msra.mxu0 %v4289
        %4333 = vmatprep.subr.bf16.mxu0 0
        %4334 = vmatpush1.bf16.msra.mxu0 %v4290
        %4335 = vmatprep.subr.bf16.mxu0 0
        %4336 = vmatpush1.bf16.msra.mxu0 %v4291
        %4337 = vmatprep.subr.bf16.mxu0 0
        %4338 = vmatpush1.bf16.msra.mxu0 %v4292
        %4339 = vmatprep.subr.bf16.mxu0 0
        %4340 = vmatpush1.bf16.msra.mxu0 %v4293
        %4341 = vmatprep.subr.bf16.mxu0 0
        %4342 = vmatpush1.bf16.msra.mxu0 %v4294
        %4343 = vmatprep.mubr.bf16.mxu0 %v4181
        %4344 = vmatmul.mubr.bf16.gmra.mrb[0].mxu0 %v4180
        %v4345 = vpop.f32.mrb[0].mxu0
        %v4346 = vadd.f32 %v4214, %v4345
        %v4347 = vpop.f32.mrb[0].mxu0
        %v4348 = vpop.f32.mrb[0].mxu0
        %v4349 = vpop.f32.mrb[0].mxu0
        %4350 = vdwg.mxu0
        %v4351 = vmul.f32 %v4346, %v4346
        %v4352 = vsel %vm2000, %v4351, 0.0
        %4353 = vadd.xlane.f32.xlu0 %v4352
        %v4354 = vpop.xlane.xlu0 %4353
        %v4355 = vmax.f32 %v4354, 1e-24
        %v4356 = vrsqrt.pop %v4355
        %v4357 = vmul.f32 %v4346, %v4356
        %4358 = vst [vmem:[%s364] sm:$0x1] %v4357
        %s4359 = sand.u32 %s252, 1
        %s4360 = scalar_lea.sflag [#allocation4], %s4359
        %s4361 = sand.u32 %s252, 1
        %s4362 = scalar_lea.vmem [#allocation3], %s4361
        // Predicated region
        $region61: #{encoder_forward.5} parent=59 // pred_check
          %p4363 = pneg %p262
        $region62: #{encoder_forward.5} parent=59 // pred_check_branch
          %4365 = sbr.rel (%p4363) target = $region64
        $region63: #{encoder_forward.5} parent=59 // pred_region
          %s4367 = ssub.s32 16, 16
          %4368 = vsyncadd %s4360, %s4367
          %s4369 = smul.addr %s24, 16
          %s4370 = scalar_lea.hbm %s10, %s4369
          %s4372 = sshll.u32 %s4362, 4
          %s4373 = int_to_ptr.vmem [resolvable:$true] %s4372
          %4375 = dma.vmem_to_hbm [thread:$0]  %s4373, 16, %s4370, %s4360
        $region64: #{encoder_forward.5} parent=59 // pred_fallthru
          _
      $region60: #{encoder_forward.5} parent=5 // pred_fallthru
        _
      %p4376 = scmp.le.s32.totalorder 2, %s19
      // Predicated region
      $region65: #{encoder_forward.5} parent=5 // pred_check
        %p4377 = pneg %p4376
      $region66: #{encoder_forward.5} parent=5 // pred_check_branch
        %4379 = sbr.rel (%p4377) target = $region68
      $region67: #{encoder_forward.5} parent=5 // pred_region
        %s4380 = ssub.s32 %s19, 2
        // Predicated region
        $region69: #{encoder_forward.5} parent=67 // pred_check
          %p4381 = pneg %p268
        $region70: #{encoder_forward.5} parent=67 // pred_check_branch
          %4383 = sbr.rel (%p4381) target = $region72
        $region71: #{encoder_forward.5} parent=67 // pred_region
          %s4384 = sand.u32 %s253, 1
          %s4385 = scalar_lea.sflag [#allocation4], %s4384
          %s4386 = sand.u32 %s253, 1
          %s4387 = scalar_lea.vmem [#allocation3], %s4386
          %4388 = dma.done %s4385, 16
        $region72: #{encoder_forward.5} parent=67 // pred_fallthru
          _
      $region68: #{encoder_forward.5} parent=5 // pred_fallthru
        _
    $region6: #{encoder_forward.5} parent=1 // loop_footer
      %s23 = sadd.s32 1, %s19
    $region7: #{encoder_forward.5} parent=1 // loop_footer_branch
      %18 = sbr.rel target = $region3
    $region8: #{encoder_forward.5} parent=1 // loop_exit
      _
    %4389 = vsyncpa [#allocation4], 1
    %s4390 = scalar_lea.sflag [#allocation4], 1
    %4391 = vsyncpa %s4390, 1

</llo_original>
